<compile_context>
chip_gen: v6e
topology: v6e:2x2x1
jax: 0.10.0
libtpu: 0.0.40
codegen_flags: <defaults>
</compile_context>

<pallas_src>
import functools
import math

import jax
import jax.numpy as jnp
from jax import lax
from jax.experimental import pallas as pl
from jax.experimental.pallas import tpu as pltpu

LRELU_SLOPE = 0.2
CONV_CLAMP = 256.0
SQRT2 = math.sqrt(2.0)
STYLE_SLOT = 128  # lane-aligned style slot per layer


def _lrelu(x, gain):
    return jnp.where(x >= 0.0, x, LRELU_SLOPE * x) * gain


def _dot_bf16(a, b):
    # Feed the MXU in bf16, accumulate in f32.
    return jnp.dot(a.astype(jnp.bfloat16), b.astype(jnp.bfloat16),
                   preferred_element_type=jnp.float32)


def _bcast_spec(shape):
    nd = len(shape)

    def index_map(i):
        return (0,) * nd

    return pl.BlockSpec(shape, index_map)


def _nearest_upsample_matrix(h, w):
    # (4*h*w, h*w) 0/1 matrix implementing nearest-neighbour 2x upsampling of
    # a flattened (h*w, C) activation via a single matmul.
    oy = jnp.arange(2 * h)[:, None] // 2
    ox = jnp.arange(2 * w)[None, :] // 2
    src = (oy * w + ox).reshape(-1)
    return (src[:, None] == jnp.arange(h * w)[None, :]).astype(jnp.float32)


# ---------------------------------------------------------------------------
# Fused generator kernel: one grid step == one batch element.
# ---------------------------------------------------------------------------
def _generator_kernel(*refs, psi, conv_meta, rgb_meta, n_conv, n_rgb):
    pad_ref = refs[-1]          # VMEM scratch: zero-halo conv input staging
    out_ref = refs[-2]          # (1, 3, HW_final)
    (z_ref, mw0_ref, mb0_ref, mw1_ref, mb1_ref, wavg_ref,
     affw_ref, affb_ref, const_ref, u8_ref, u16_ref) = refs[:11]
    rest = refs[11:-2]
    conv_refs = [rest[4 * i: 4 * i + 4] for i in range(n_conv)]
    rgb_refs = [rest[4 * n_conv + 2 * i: 4 * n_conv + 2 * i + 2]
                for i in range(n_rgb)]

    # Zero the padded staging buffer once per grid step; layers only write the
    # interior, so the 1-pixel halo stays zero for every layer.
    pad_ref[...] = jnp.zeros(pad_ref.shape, pad_ref.dtype)

    # ---- mapping network: pixel-norm -> 2x (FC + lrelu) -> truncation ------
    zlat = z_ref[0].astype(jnp.float32)                          # (1, z_dim)
    zlat = zlat * lax.rsqrt(jnp.mean(zlat * zlat, axis=1, keepdims=True) + 1e-8)
    h = _lrelu(_dot_bf16(zlat, mw0_ref[...]) + mb0_ref[...], SQRT2)
    wlat = _lrelu(_dot_bf16(h, mw1_ref[...]) + mb1_ref[...], SQRT2)
    wavg = wavg_ref[...]
    wlat = wavg + psi * (wlat - wavg)                            # truncation lerp

    # ---- all style affines as a single batched matmul ----------------------
    styles = _dot_bf16(wlat, affw_ref[...]) + affb_ref[...]      # (1, L*128)

    def modconv(x, meta, refs4):
        h_, w_, off, cin = meta
        w_ref, wsq_ref, n_ref, b_ref = refs4
        s = styles[:, off:off + cin]                             # (1, cin)
        xm = x * s                                               # modulate input
        # im2col via zero-halo scratch: one bf16 MXU dot, K = 9*cin.
        pad_ref[1:h_ + 1, 1:w_ + 1, :cin] = xm.reshape(h_, w_, cin)
        cols = [pad_ref[ky:ky + h_, kx:kx + w_, :cin]
                for ky in range(3) for kx in range(3)]
        patches = jnp.concatenate(cols, axis=2).reshape(h_ * w_, 9 * cin)
        y = _dot_bf16(patches, w_ref[...])                       # (HW, cout)
        # demodulate: rsqrt(sum_{k,cin} (w * s)^2 + eps)
        d = lax.rsqrt(jnp.dot(s * s, wsq_ref[...],
                              preferred_element_type=jnp.float32) + 1e-8)
        y = y * d
        y = y + n_ref[...]                                       # noise (HW, 1)
        y = y + b_ref[...]                                       # bias  (1, cout)
        y = _lrelu(y, SQRT2)
        return jnp.clip(y, -CONV_CLAMP, CONV_CLAMP)

    def torgb_t(x, meta, refs2):
        off, cin = meta
        wT_ref, b_ref = refs2
        s = styles[:, off:off + cin]
        xm = (x * s).astype(jnp.bfloat16)
        # (3, cin) contracted with (HW, cin) -> (3, HW): image kept channel-
        # major so the final store is lane-dense with no explicit transpose.
        t = lax.dot_general(wT_ref[...].astype(jnp.bfloat16), xm,
                            dimension_numbers=(((1,), (1,)), ((), ())),
                            preferred_element_type=jnp.float32)
        return jnp.clip(t + b_ref[...], -CONV_CLAMP, CONV_CLAMP)

    def up2(x, u_ref):          # nearest 2x upsample of (HW, C) activations
        return jnp.dot(u_ref[...], x, preferred_element_type=jnp.float32)

    def up2_t(img_t, u_ref):    # same, for the channel-major (3, HW) image
        return lax.dot_general(img_t, u_ref[...],
                               dimension_numbers=(((1,), (1,)), ((), ())),
                               preferred_element_type=jnp.float32)

    # ---- synthesis ----------------------------------------------------------
    x = const_ref[...].astype(jnp.float32)                       # (16, C4)

    # 4x4 block
    x = modconv(x, conv_meta[0], conv_refs[0])
    img_t = torgb_t(x, rgb_meta[0], rgb_refs[0])                 # (3, 16)

    # 8x8 block
    x = up2(x, u8_ref)
    img_t = up2_t(img_t, u8_ref)
    x = modconv(x, conv_meta[1], conv_refs[1])
    x = modconv(x, conv_meta[2], conv_refs[2])
    img_t = img_t + torgb_t(x, rgb_meta[1], rgb_refs[1])         # (3, 64)

    # 16x16 block (final)
    x = up2(x, u16_ref)
    img_t = up2_t(img_t, u16_ref)
    x = modconv(x, conv_meta[3], conv_refs[3])
    x = modconv(x, conv_meta[4], conv_refs[4])
    img_t = img_t + torgb_t(x, rgb_meta[2], rgb_refs[2])         # (3, 256)

    # post_process: Normalize(mean=-1, std=2)  <=>  img = (img + 1) / 2
    out_ref[...] = ((img_t + 1.0) * 0.5)[None].astype(out_ref.dtype)


# ---------------------------------------------------------------------------
# Host-side glue
# ---------------------------------------------------------------------------
def generator_forward(packed, z, psi):
    n, zdim = z.shape
    conv_meta = packed["conv_meta"]
    rgb_meta = packed["rgb_meta"]
    hw_final = packed["final_hw"]
    res_final = packed["final_res"]

    weights = [packed["map_w0"], packed["map_b0"], packed["map_w1"],
               packed["map_b1"], packed["w_avg"], packed["aff_w"],
               packed["aff_b"], packed["const"], packed["u8"], packed["u16"]]
    for c in packed["convs"]:
        weights += [c["w"], c["wsq"], c["noise"], c["b"]]
    for r in packed["rgbs"]:
        weights += [r["wT"], r["b"]]

    z3 = z.reshape(n, 1, zdim)
    in_specs = [pl.BlockSpec((1, 1, zdim), lambda i: (i, 0, 0))]
    in_specs += [_bcast_spec(a.shape) for a in weights]
    out_spec = pl.BlockSpec((1, 3, hw_final), lambda i: (i, 0, 0))

    max_h = max(m[0] for m in conv_meta)
    max_cin = max(m[3] for m in conv_meta)

    kernel = functools.partial(
        _generator_kernel,
        psi=float(psi),
        conv_meta=conv_meta,
        rgb_meta=rgb_meta,
        n_conv=len(packed["convs"]),
        n_rgb=len(packed["rgbs"]),
    )

    grid_spec = pltpu.PrefetchScalarGridSpec(
        num_scalar_prefetch=0,
        grid=(n,),
        in_specs=in_specs,
        out_specs=out_spec,
        scratch_shapes=[
            pltpu.VMEM((max_h + 2, max_h + 2, max_cin), jnp.float32)],
    )

    out = pl.pallas_call(
        kernel,
        out_shape=jax.ShapeDtypeStruct((n, 3, hw_final), jnp.float32),
        grid_spec=grid_spec,
        compiler_params=pltpu.CompilerParams(
            dimension_semantics=("parallel",)),
    )(z3, *weights)

    # (N, 3, H*W) -> (N, 3, H, W): row-major reshape only, no transpose.
    return out.reshape(n, 3, res_final, res_final)


def init_params(key, z_dim=64, w_dim=64, channels=None):
    """Deterministic synthetic StyleGAN2 weights, pre-packed for the kernel."""
    if channels is None:
        channels = {4: 64, 8: 32, 16: 16}
    keys = iter(jax.random.split(key, 64))

    def nrm(shape, scale=1.0):
        return jax.random.normal(next(keys), shape, jnp.float32) * scale

    conv_cfg = [  # (cin, cout, res)
        (channels[4], channels[4], 4),
        (channels[4], channels[8], 8),
        (channels[8], channels[8], 8),
        (channels[8], channels[16], 16),
        (channels[16], channels[16], 16),
    ]
    rgb_cfg = [(channels[4], 4), (channels[8], 8), (channels[16], 16)]

    packed = dict(
        z_dim=z_dim,
        map_w0=nrm((z_dim, w_dim), 1.0 / math.sqrt(z_dim)),
        map_b0=nrm((1, w_dim), 0.01),
        map_w1=nrm((w_dim, w_dim), 1.0 / math.sqrt(w_dim)),
        map_b1=nrm((1, w_dim), 0.01),
        w_avg=nrm((1, w_dim), 0.05),
        const=nrm((16, channels[4]), 1.0),       # (4*4, C4) flattened HW x C
    )

    aff_ws, aff_bs = [], []
    convs, conv_meta = [], []
    rgbs, rgb_meta = [], []

    def add_affine(cin, gain=1.0):
        aw = nrm((w_dim, cin), 1.0 / math.sqrt(w_dim)) * gain
        ab = jnp.ones((1, cin), jnp.float32) * gain
        aff_ws.append(jnp.pad(aw, ((0, 0), (0, STYLE_SLOT - cin))))
        aff_bs.append(jnp.pad(ab, ((0, 0), (0, STYLE_SLOT - cin))))
        return (len(aff_ws) - 1) * STYLE_SLOT    # lane offset of this slot

    for cin, cout, res in conv_cfg:
        off = add_affine(cin)
        weight = nrm((3, 3, cin, cout), 1.0)
        noise = nrm((res, res), 1.0) * 0.1       # noise_const * noise_strength
        convs.append(dict(
            w=weight.reshape(9 * cin, cout),     # im2col weight, K = 9*cin
            wsq=jnp.sum(weight * weight, axis=(0, 1)),   # (cin, cout)
            noise=noise.reshape(res * res, 1),
            b=nrm((1, cout), 0.01),
        ))
        conv_meta.append((res, res, off, cin))

    for cin, _res in rgb_cfg:
        # ToRGBLayer weight_gain (1/sqrt(cin)) folded into the style affine.
        off = add_affine(cin, gain=1.0 / math.sqrt(cin))
        rgbs.append(dict(
            wT=jnp.transpose(nrm((cin, 3), 1.0)),        # (3, cin) channel-major
            b=nrm((3, 1), 0.01),
        ))
        rgb_meta.append((off, cin))

    packed.update(
        aff_w=jnp.concatenate(aff_ws, axis=1),   # (w_dim, n_layers*128)
        aff_b=jnp.concatenate(aff_bs, axis=1),
        convs=convs,
        rgbs=rgbs,
        conv_meta=tuple(conv_meta),
        rgb_meta=tuple(rgb_meta),
        u8=_nearest_upsample_matrix(4, 4),       # (64, 16)
        u16=_nearest_upsample_matrix(8, 8),      # (256, 64)
        final_res=16,
        final_hw=256,
    )
    return packed


class DiffusionStyleGAN2Wrapper:
    """JAX/Pallas re-implementation of the PyTorch wrapper's forward().

    The pretrained FFHQ checkpoint cannot be loaded here, so a structurally
    faithful miniature StyleGAN2 generator with synthetic weights is used.
    """

    def __init__(self, params, sample_truncation, training=False):
        self.params = params
        self.sample_truncation = sample_truncation
        self.training = training
        self.latent_dim = params["z_dim"]
        psi = 1.0 if self.training else self.sample_truncation
        self._forward = jax.jit(lambda zz: generator_forward(self.params, zz, psi))

    def __call__(self, z):
        return self._forward(z)


if __name__ == "__main__":
    key = jax.random.PRNGKey(0)
    pkey, zkey = jax.random.split(key)
    params = init_params(pkey)
    z = jax.random.normal(zkey, (2, 64), jnp.float32)

    wrapper = DiffusionStyleGAN2Wrapper(params, sample_truncation=0.7, training=False)
    img = wrapper(z)
    img = jax.block_until_ready(img)

    assert img.shape == (2, 3, 16, 16), img.shape
    assert img.dtype == jnp.float32
    assert bool(jnp.all(jnp.isfinite(img)))
    print("KERNEL_OK")
</pallas_src>

<mosaic_0001>
module attributes {stable_mosaic.version = 11 : i64} {
  func.func @_generator_kernel(%arg0: i32, %arg1: memref<1x1x64xf32, #tpu.memory_space<vmem>>, %arg2: memref<64x64xf32, #tpu.memory_space<vmem>>, %arg3: memref<1x64xf32, #tpu.memory_space<vmem>>, %arg4: memref<64x64xf32, #tpu.memory_space<vmem>>, %arg5: memref<1x64xf32, #tpu.memory_space<vmem>>, %arg6: memref<1x64xf32, #tpu.memory_space<vmem>>, %arg7: memref<64x1024xf32, #tpu.memory_space<vmem>>, %arg8: memref<1x1024xf32, #tpu.memory_space<vmem>>, %arg9: memref<16x64xf32, #tpu.memory_space<vmem>>, %arg10: memref<64x16xf32, #tpu.memory_space<vmem>>, %arg11: memref<256x64xf32, #tpu.memory_space<vmem>>, %arg12: memref<576x64xf32, #tpu.memory_space<vmem>>, %arg13: memref<64x64xf32, #tpu.memory_space<vmem>>, %arg14: memref<16x1xf32, #tpu.memory_space<vmem>>, %arg15: memref<1x64xf32, #tpu.memory_space<vmem>>, %arg16: memref<576x32xf32, #tpu.memory_space<vmem>>, %arg17: memref<64x32xf32, #tpu.memory_space<vmem>>, %arg18: memref<64x1xf32, #tpu.memory_space<vmem>>, %arg19: memref<1x32xf32, #tpu.memory_space<vmem>>, %arg20: memref<288x32xf32, #tpu.memory_space<vmem>>, %arg21: memref<32x32xf32, #tpu.memory_space<vmem>>, %arg22: memref<64x1xf32, #tpu.memory_space<vmem>>, %arg23: memref<1x32xf32, #tpu.memory_space<vmem>>, %arg24: memref<288x16xf32, #tpu.memory_space<vmem>>, %arg25: memref<32x16xf32, #tpu.memory_space<vmem>>, %arg26: memref<256x1xf32, #tpu.memory_space<vmem>>, %arg27: memref<1x16xf32, #tpu.memory_space<vmem>>, %arg28: memref<144x16xf32, #tpu.memory_space<vmem>>, %arg29: memref<16x16xf32, #tpu.memory_space<vmem>>, %arg30: memref<256x1xf32, #tpu.memory_space<vmem>>, %arg31: memref<1x16xf32, #tpu.memory_space<vmem>>, %arg32: memref<3x64xf32, #tpu.memory_space<vmem>>, %arg33: memref<3x1xf32, #tpu.memory_space<vmem>>, %arg34: memref<3x32xf32, #tpu.memory_space<vmem>>, %arg35: memref<3x1xf32, #tpu.memory_space<vmem>>, %arg36: memref<3x16xf32, #tpu.memory_space<vmem>>, %arg37: memref<3x1xf32, #tpu.memory_space<vmem>>, %arg38: memref<1x3x256xf32, #tpu.memory_space<vmem>>, %arg39: memref<18x18x64xf32, #tpu.memory_space<vmem>>) attributes {dimension_semantics = [#tpu.dimension_semantics<parallel>], iteration_bounds = array<i64: 2>, scalar_prefetch = 0 : i64, scratch_operands = 1 : i64, tpu.core_type = #tpu.core_type<tc>, window_params = [{transform_indices = @transform_0, window_bounds = array<i64: 1, 1, 64>}, {pipeline_mode = #tpu.pipeline_mode<synchronous>, transform_indices = @transform_1, window_bounds = array<i64: 64, 64>}, {pipeline_mode = #tpu.pipeline_mode<synchronous>, transform_indices = @transform_2, window_bounds = array<i64: 1, 64>}, {pipeline_mode = #tpu.pipeline_mode<synchronous>, transform_indices = @transform_3, window_bounds = array<i64: 64, 64>}, {pipeline_mode = #tpu.pipeline_mode<synchronous>, transform_indices = @transform_4, window_bounds = array<i64: 1, 64>}, {pipeline_mode = #tpu.pipeline_mode<synchronous>, transform_indices = @transform_5, window_bounds = array<i64: 1, 64>}, {pipeline_mode = #tpu.pipeline_mode<synchronous>, transform_indices = @transform_6, window_bounds = array<i64: 64, 1024>}, {pipeline_mode = #tpu.pipeline_mode<synchronous>, transform_indices = @transform_7, window_bounds = array<i64: 1, 1024>}, {pipeline_mode = #tpu.pipeline_mode<synchronous>, transform_indices = @transform_8, window_bounds = array<i64: 16, 64>}, {pipeline_mode = #tpu.pipeline_mode<synchronous>, transform_indices = @transform_9, window_bounds = array<i64: 64, 16>}, {pipeline_mode = #tpu.pipeline_mode<synchronous>, transform_indices = @transform_10, window_bounds = array<i64: 256, 64>}, {pipeline_mode = #tpu.pipeline_mode<synchronous>, transform_indices = @transform_11, window_bounds = array<i64: 576, 64>}, {pipeline_mode = #tpu.pipeline_mode<synchronous>, transform_indices = @transform_12, window_bounds = array<i64: 64, 64>}, {pipeline_mode = #tpu.pipeline_mode<synchronous>, transform_indices = @transform_13, window_bounds = array<i64: 16, 1>}, {pipeline_mode = #tpu.pipeline_mode<synchronous>, transform_indices = @transform_14, window_bounds = array<i64: 1, 64>}, {pipeline_mode = #tpu.pipeline_mode<synchronous>, transform_indices = @transform_15, window_bounds = array<i64: 576, 32>}, {pipeline_mode = #tpu.pipeline_mode<synchronous>, transform_indices = @transform_16, window_bounds = array<i64: 64, 32>}, {pipeline_mode = #tpu.pipeline_mode<synchronous>, transform_indices = @transform_17, window_bounds = array<i64: 64, 1>}, {pipeline_mode = #tpu.pipeline_mode<synchronous>, transform_indices = @transform_18, window_bounds = array<i64: 1, 32>}, {pipeline_mode = #tpu.pipeline_mode<synchronous>, transform_indices = @transform_19, window_bounds = array<i64: 288, 32>}, {pipeline_mode = #tpu.pipeline_mode<synchronous>, transform_indices = @transform_20, window_bounds = array<i64: 32, 32>}, {pipeline_mode = #tpu.pipeline_mode<synchronous>, transform_indices = @transform_21, window_bounds = array<i64: 64, 1>}, {pipeline_mode = #tpu.pipeline_mode<synchronous>, transform_indices = @transform_22, window_bounds = array<i64: 1, 32>}, {pipeline_mode = #tpu.pipeline_mode<synchronous>, transform_indices = @transform_23, window_bounds = array<i64: 288, 16>}, {pipeline_mode = #tpu.pipeline_mode<synchronous>, transform_indices = @transform_24, window_bounds = array<i64: 32, 16>}, {pipeline_mode = #tpu.pipeline_mode<synchronous>, transform_indices = @transform_25, window_bounds = array<i64: 256, 1>}, {pipeline_mode = #tpu.pipeline_mode<synchronous>, transform_indices = @transform_26, window_bounds = array<i64: 1, 16>}, {pipeline_mode = #tpu.pipeline_mode<synchronous>, transform_indices = @transform_27, window_bounds = array<i64: 144, 16>}, {pipeline_mode = #tpu.pipeline_mode<synchronous>, transform_indices = @transform_28, window_bounds = array<i64: 16, 16>}, {pipeline_mode = #tpu.pipeline_mode<synchronous>, transform_indices = @transform_29, window_bounds = array<i64: 256, 1>}, {pipeline_mode = #tpu.pipeline_mode<synchronous>, transform_indices = @transform_30, window_bounds = array<i64: 1, 16>}, {pipeline_mode = #tpu.pipeline_mode<synchronous>, transform_indices = @transform_31, window_bounds = array<i64: 3, 64>}, {pipeline_mode = #tpu.pipeline_mode<synchronous>, transform_indices = @transform_32, window_bounds = array<i64: 3, 1>}, {pipeline_mode = #tpu.pipeline_mode<synchronous>, transform_indices = @transform_33, window_bounds = array<i64: 3, 32>}, {pipeline_mode = #tpu.pipeline_mode<synchronous>, transform_indices = @transform_34, window_bounds = array<i64: 3, 1>}, {pipeline_mode = #tpu.pipeline_mode<synchronous>, transform_indices = @transform_35, window_bounds = array<i64: 3, 16>}, {pipeline_mode = #tpu.pipeline_mode<synchronous>, transform_indices = @transform_36, window_bounds = array<i64: 3, 1>}, {transform_indices = @transform_37, window_bounds = array<i64: 1, 3, 256>}]} {
    %cst = arith.constant 0.000000e+00 : f32
    %0 = vector.broadcast %cst : f32 to vector<18x18x64xf32>
    %c0 = arith.constant 0 : index
    %c0_0 = arith.constant 0 : index
    %c0_1 = arith.constant 0 : index
    %1 = vector.load %arg39[%c0, %c0_0, %c0_1] : memref<18x18x64xf32, #tpu.memory_space<vmem>>, vector<18x18x64xf32>
    tpu.vector_store %arg39[%c0, %c0_0, %c0_1], %0 {strides = array<i32>} : memref<18x18x64xf32, #tpu.memory_space<vmem>>, vector<18x18x64xf32>,
    %c0_2 = arith.constant 0 : index
    %c0_3 = arith.constant 0 : index
    %c0_4 = arith.constant 0 : index
    %2 = vector.load %arg1[%c0_2, %c0_3, %c0_4] : memref<1x1x64xf32, #tpu.memory_space<vmem>>, vector<1x1x64xf32>
    %3 = vector.shape_cast %2 : vector<1x1x64xf32> to vector<1x64xf32>
    %4 = arith.mulf %3, %3 : vector<1x64xf32>
    %cst_5 = arith.constant dense<0.000000e+00> : vector<1xf32>
    %5 = vector.multi_reduction <add>, %4, %cst_5 [1] : vector<1x64xf32> to vector<1xf32>
    %6 = vector.shape_cast %5 : vector<1xf32> to vector<1x1xf32>
    %cst_6 = arith.constant 6.400000e+01 : f32
    %7 = vector.broadcast %cst_6 : f32 to vector<1x1xf32>
    %8 = arith.divf %6, %7 : vector<1x1xf32>
    %cst_7 = arith.constant 9.99999993E-9 : f32
    %9 = vector.broadcast %cst_7 : f32 to vector<1x1xf32>
    %10 = arith.addf %8, %9 : vector<1x1xf32>
    %11 = math.rsqrt %10 : vector<1x1xf32>
    %12 = vector.broadcast %11 : vector<1x1xf32> to vector<1x64xf32>
    %13 = arith.mulf %3, %12 : vector<1x64xf32>
    %c0_8 = arith.constant 0 : index
    %c0_9 = arith.constant 0 : index
    %14 = vector.load %arg2[%c0_8, %c0_9] : memref<64x64xf32, #tpu.memory_space<vmem>>, vector<64x64xf32>
    %15 = arith.truncf %13 : vector<1x64xf32> to vector<1x64xbf16>
    %16 = arith.truncf %14 : vector<64x64xf32> to vector<64x64xbf16>
    %cst_10 = arith.constant dense<0.000000e+00> : vector<1x64xf32>
    %17 = tpu.matmul %15, %16, %cst_10 {dimension_numbers = #tpu.dot_dimension_numbers<[1], [0], [0], [1], [0, 0, 1, 1], [], []>} : vector<1x64xbf16>, vector<64x64xbf16>, vector<1x64xf32> -> vector<1x64xf32>
    %c0_11 = arith.constant 0 : index
    %c0_12 = arith.constant 0 : index
    %18 = vector.load %arg3[%c0_11, %c0_12] : memref<1x64xf32, #tpu.memory_space<vmem>>, vector<1x64xf32>
    %19 = arith.addf %17, %18 : vector<1x64xf32>
    %cst_13 = arith.constant 0.000000e+00 : f32
    %20 = vector.broadcast %cst_13 : f32 to vector<1x64xf32>
    %21 = arith.cmpf oge, %19, %20 : vector<1x64xf32>
    %cst_14 = arith.constant 2.000000e-01 : f32
    %22 = vector.broadcast %cst_14 : f32 to vector<1x64xf32>
    %23 = arith.mulf %22, %19 : vector<1x64xf32>
    %24 = arith.select %21, %19, %23 : vector<1x64xi1>, vector<1x64xf32>
    %cst_15 = arith.constant 1.41421354 : f32
    %25 = vector.broadcast %cst_15 : f32 to vector<1x64xf32>
    %26 = arith.mulf %24, %25 : vector<1x64xf32>
    %c0_16 = arith.constant 0 : index
    %c0_17 = arith.constant 0 : index
    %27 = vector.load %arg4[%c0_16, %c0_17] : memref<64x64xf32, #tpu.memory_space<vmem>>, vector<64x64xf32>
    %28 = arith.truncf %26 : vector<1x64xf32> to vector<1x64xbf16>
    %29 = arith.truncf %27 : vector<64x64xf32> to vector<64x64xbf16>
    %cst_18 = arith.constant dense<0.000000e+00> : vector<1x64xf32>
    %30 = tpu.matmul %28, %29, %cst_18 {dimension_numbers = #tpu.dot_dimension_numbers<[1], [0], [0], [1], [0, 0, 1, 1], [], []>} : vector<1x64xbf16>, vector<64x64xbf16>, vector<1x64xf32> -> vector<1x64xf32>
    %c0_19 = arith.constant 0 : index
    %c0_20 = arith.constant 0 : index
    %31 = vector.load %arg5[%c0_19, %c0_20] : memref<1x64xf32, #tpu.memory_space<vmem>>, vector<1x64xf32>
    %32 = arith.addf %30, %31 : vector<1x64xf32>
    %cst_21 = arith.constant 0.000000e+00 : f32
    %33 = vector.broadcast %cst_21 : f32 to vector<1x64xf32>
    %34 = arith.cmpf oge, %32, %33 : vector<1x64xf32>
    %cst_22 = arith.constant 2.000000e-01 : f32
    %35 = vector.broadcast %cst_22 : f32 to vector<1x64xf32>
    %36 = arith.mulf %35, %32 : vector<1x64xf32>
    %37 = arith.select %34, %32, %36 : vector<1x64xi1>, vector<1x64xf32>
    %cst_23 = arith.constant 1.41421354 : f32
    %38 = vector.broadcast %cst_23 : f32 to vector<1x64xf32>
    %39 = arith.mulf %37, %38 : vector<1x64xf32>
    %c0_24 = arith.constant 0 : index
    %c0_25 = arith.constant 0 : index
    %40 = vector.load %arg6[%c0_24, %c0_25] : memref<1x64xf32, #tpu.memory_space<vmem>>, vector<1x64xf32>
    %41 = arith.subf %39, %40 : vector<1x64xf32>
    %cst_26 = arith.constant 0.699999988 : f32
    %42 = vector.broadcast %cst_26 : f32 to vector<1x64xf32>
    %43 = arith.mulf %42, %41 : vector<1x64xf32>
    %44 = arith.addf %40, %43 : vector<1x64xf32>
    %c0_27 = arith.constant 0 : index
    %c0_28 = arith.constant 0 : index
    %45 = vector.load %arg7[%c0_27, %c0_28] : memref<64x1024xf32, #tpu.memory_space<vmem>>, vector<64x1024xf32>
    %46 = arith.truncf %44 : vector<1x64xf32> to vector<1x64xbf16>
    %47 = arith.truncf %45 : vector<64x1024xf32> to vector<64x1024xbf16>
    %cst_29 = arith.constant dense<0.000000e+00> : vector<1x1024xf32>
    %48 = tpu.matmul %46, %47, %cst_29 {dimension_numbers = #tpu.dot_dimension_numbers<[1], [0], [0], [1], [0, 0, 1, 1], [], []>} : vector<1x64xbf16>, vector<64x1024xbf16>, vector<1x1024xf32> -> vector<1x1024xf32>
    %c0_30 = arith.constant 0 : index
    %c0_31 = arith.constant 0 : index
    %49 = vector.load %arg8[%c0_30, %c0_31] : memref<1x1024xf32, #tpu.memory_space<vmem>>, vector<1x1024xf32>
    %50 = arith.addf %48, %49 : vector<1x1024xf32>
    %c0_32 = arith.constant 0 : index
    %c0_33 = arith.constant 0 : index
    %51 = vector.load %arg9[%c0_32, %c0_33] : memref<16x64xf32, #tpu.memory_space<vmem>>, vector<16x64xf32>
    %52 = vector.extract_strided_slice %50 {offsets = [0, 0], sizes = [1, 64], strides = [1, 1]} : vector<1x1024xf32> to vector<1x64xf32>
    %53 = vector.broadcast %52 : vector<1x64xf32> to vector<16x64xf32>
    %54 = arith.mulf %51, %53 : vector<16x64xf32>
    %55 = vector.shape_cast %54 : vector<16x64xf32> to vector<4x4x64xf32>
    %c1 = arith.constant 1 : index
    %c1_34 = arith.constant 1 : index
    %c0_35 = arith.constant 0 : index
    %56 = vector.load %arg39[%c1, %c1_34, %c0_35] : memref<18x18x64xf32, #tpu.memory_space<vmem>>, vector<4x4x64xf32>
    tpu.vector_store %arg39[%c1, %c1_34, %c0_35], %55 {strides = array<i32>} : memref<18x18x64xf32, #tpu.memory_space<vmem>>, vector<4x4x64xf32>,
    %c0_36 = arith.constant 0 : index
    %c0_37 = arith.constant 0 : index
    %c0_38 = arith.constant 0 : index
    %57 = vector.load %arg39[%c0_36, %c0_37, %c0_38] : memref<18x18x64xf32, #tpu.memory_space<vmem>>, vector<4x4x64xf32>
    %c0_39 = arith.constant 0 : index
    %c1_40 = arith.constant 1 : index
    %c0_41 = arith.constant 0 : index
    %58 = vector.load %arg39[%c0_39, %c1_40, %c0_41] : memref<18x18x64xf32, #tpu.memory_space<vmem>>, vector<4x4x64xf32>
    %c0_42 = arith.constant 0 : index
    %c2 = arith.constant 2 : index
    %c0_43 = arith.constant 0 : index
    %59 = vector.load %arg39[%c0_42, %c2, %c0_43] : memref<18x18x64xf32, #tpu.memory_space<vmem>>, vector<4x4x64xf32>
    %c1_44 = arith.constant 1 : index
    %c0_45 = arith.constant 0 : index
    %c0_46 = arith.constant 0 : index
    %60 = vector.load %arg39[%c1_44, %c0_45, %c0_46] : memref<18x18x64xf32, #tpu.memory_space<vmem>>, vector<4x4x64xf32>
    %c1_47 = arith.constant 1 : index
    %c1_48 = arith.constant 1 : index
    %c0_49 = arith.constant 0 : index
    %61 = vector.load %arg39[%c1_47, %c1_48, %c0_49] : memref<18x18x64xf32, #tpu.memory_space<vmem>>, vector<4x4x64xf32>
    %c1_50 = arith.constant 1 : index
    %c2_51 = arith.constant 2 : index
    %c0_52 = arith.constant 0 : index
    %62 = vector.load %arg39[%c1_50, %c2_51, %c0_52] : memref<18x18x64xf32, #tpu.memory_space<vmem>>, vector<4x4x64xf32>
    %c2_53 = arith.constant 2 : index
    %c0_54 = arith.constant 0 : index
    %c0_55 = arith.constant 0 : index
    %63 = vector.load %arg39[%c2_53, %c0_54, %c0_55] : memref<18x18x64xf32, #tpu.memory_space<vmem>>, vector<4x4x64xf32>
    %c2_56 = arith.constant 2 : index
    %c1_57 = arith.constant 1 : index
    %c0_58 = arith.constant 0 : index
    %64 = vector.load %arg39[%c2_56, %c1_57, %c0_58] : memref<18x18x64xf32, #tpu.memory_space<vmem>>, vector<4x4x64xf32>
    %c2_59 = arith.constant 2 : index
    %c2_60 = arith.constant 2 : index
    %c0_61 = arith.constant 0 : index
    %65 = vector.load %arg39[%c2_59, %c2_60, %c0_61] : memref<18x18x64xf32, #tpu.memory_space<vmem>>, vector<4x4x64xf32>
    %66 = tpu.concatenate %57, %58, %59, %60, %61, %62, %63, %64, %65 in 2 : vector<4x4x64xf32>, vector<4x4x64xf32>, vector<4x4x64xf32>, vector<4x4x64xf32>, vector<4x4x64xf32>, vector<4x4x64xf32>, vector<4x4x64xf32>, vector<4x4x64xf32>, vector<4x4x64xf32> -> vector<4x4x576xf32>
    %67 = vector.shape_cast %66 : vector<4x4x576xf32> to vector<16x576xf32>
    %c0_62 = arith.constant 0 : index
    %c0_63 = arith.constant 0 : index
    %68 = vector.load %arg12[%c0_62, %c0_63] : memref<576x64xf32, #tpu.memory_space<vmem>>, vector<576x64xf32>
    %69 = arith.truncf %67 : vector<16x576xf32> to vector<16x576xbf16>
    %70 = arith.truncf %68 : vector<576x64xf32> to vector<576x64xbf16>
    %cst_64 = arith.constant dense<0.000000e+00> : vector<16x64xf32>
    %71 = tpu.matmul %69, %70, %cst_64 {dimension_numbers = #tpu.dot_dimension_numbers<[1], [0], [0], [1], [0, 0, 1, 1], [], []>} : vector<16x576xbf16>, vector<576x64xbf16>, vector<16x64xf32> -> vector<16x64xf32>
    %72 = arith.mulf %52, %52 : vector<1x64xf32>
    %c0_65 = arith.constant 0 : index
    %c0_66 = arith.constant 0 : index
    %73 = vector.load %arg13[%c0_65, %c0_66] : memref<64x64xf32, #tpu.memory_space<vmem>>, vector<64x64xf32>
    %cst_67 = arith.constant dense<0.000000e+00> : vector<1x64xf32>
    %74 = tpu.matmul %72, %73, %cst_67 {dimension_numbers = #tpu.dot_dimension_numbers<[1], [0], [0], [1], [0, 0, 1, 1], [], []>} : vector<1x64xf32>, vector<64x64xf32>, vector<1x64xf32> -> vector<1x64xf32>
    %cst_68 = arith.constant 9.99999993E-9 : f32
    %75 = vector.broadcast %cst_68 : f32 to vector<1x64xf32>
    %76 = arith.addf %74, %75 : vector<1x64xf32>
    %77 = math.rsqrt %76 : vector<1x64xf32>
    %78 = vector.broadcast %77 : vector<1x64xf32> to vector<16x64xf32>
    %79 = arith.mulf %71, %78 : vector<16x64xf32>
    %c0_69 = arith.constant 0 : index
    %c0_70 = arith.constant 0 : index
    %80 = vector.load %arg14[%c0_69, %c0_70] : memref<16x1xf32, #tpu.memory_space<vmem>>, vector<16x1xf32>
    %81 = vector.broadcast %80 : vector<16x1xf32> to vector<16x64xf32>
    %82 = arith.addf %79, %81 : vector<16x64xf32>
    %c0_71 = arith.constant 0 : index
    %c0_72 = arith.constant 0 : index
    %83 = vector.load %arg15[%c0_71, %c0_72] : memref<1x64xf32, #tpu.memory_space<vmem>>, vector<1x64xf32>
    %84 = vector.broadcast %83 : vector<1x64xf32> to vector<16x64xf32>
    %85 = arith.addf %82, %84 : vector<16x64xf32>
    %cst_73 = arith.constant 0.000000e+00 : f32
    %86 = vector.broadcast %cst_73 : f32 to vector<16x64xf32>
    %87 = arith.cmpf oge, %85, %86 : vector<16x64xf32>
    %cst_74 = arith.constant 2.000000e-01 : f32
    %88 = vector.broadcast %cst_74 : f32 to vector<16x64xf32>
    %89 = arith.mulf %88, %85 : vector<16x64xf32>
    %90 = arith.select %87, %85, %89 : vector<16x64xi1>, vector<16x64xf32>
    %cst_75 = arith.constant 1.41421354 : f32
    %91 = vector.broadcast %cst_75 : f32 to vector<16x64xf32>
    %92 = arith.mulf %90, %91 : vector<16x64xf32>
    %cst_76 = arith.constant -2.560000e+02 : f32
    %cst_77 = arith.constant 2.560000e+02 : f32
    %93 = vector.broadcast %cst_76 : f32 to vector<16x64xf32>
    %94 = arith.maximumf %93, %92 : vector<16x64xf32>
    %95 = vector.broadcast %cst_77 : f32 to vector<16x64xf32>
    %96 = arith.minimumf %95, %94 : vector<16x64xf32>
    %97 = vector.extract_strided_slice %50 {offsets = [0, 640], sizes = [1, 64], strides = [1, 1]} : vector<1x1024xf32> to vector<1x64xf32>
    %98 = vector.broadcast %97 : vector<1x64xf32> to vector<16x64xf32>
    %99 = arith.mulf %96, %98 : vector<16x64xf32>
    %100 = arith.truncf %99 : vector<16x64xf32> to vector<16x64xbf16>
    %c0_78 = arith.constant 0 : index
    %c0_79 = arith.constant 0 : index
    %101 = vector.load %arg32[%c0_78, %c0_79] : memref<3x64xf32, #tpu.memory_space<vmem>>, vector<3x64xf32>
    %102 = arith.truncf %101 : vector<3x64xf32> to vector<3x64xbf16>
    %cst_80 = arith.constant dense<0.000000e+00> : vector<3x16xf32>
    %103 = tpu.matmul %102, %100, %cst_80 {dimension_numbers = #tpu.dot_dimension_numbers<[1], [1], [0], [0], [0, 0, 1, 0], [], []>} : vector<3x64xbf16>, vector<16x64xbf16>, vector<3x16xf32> -> vector<3x16xf32>
    %c0_81 = arith.constant 0 : index
    %c0_82 = arith.constant 0 : index
    %104 = vector.load %arg33[%c0_81, %c0_82] : memref<3x1xf32, #tpu.memory_space<vmem>>, vector<3x1xf32>
    %105 = vector.broadcast %104 : vector<3x1xf32> to vector<3x16xf32>
    %106 = arith.addf %103, %105 : vector<3x16xf32>
    %cst_83 = arith.constant -2.560000e+02 : f32
    %cst_84 = arith.constant 2.560000e+02 : f32
    %107 = vector.broadcast %cst_83 : f32 to vector<3x16xf32>
    %108 = arith.maximumf %107, %106 : vector<3x16xf32>
    %109 = vector.broadcast %cst_84 : f32 to vector<3x16xf32>
    %110 = arith.minimumf %109, %108 : vector<3x16xf32>
    %c0_85 = arith.constant 0 : index
    %c0_86 = arith.constant 0 : index
    %111 = vector.load %arg10[%c0_85, %c0_86] : memref<64x16xf32, #tpu.memory_space<vmem>>, vector<64x16xf32>
    %cst_87 = arith.constant dense<0.000000e+00> : vector<64x64xf32>
    %112 = tpu.matmul %111, %96, %cst_87 {dimension_numbers = #tpu.dot_dimension_numbers<[1], [0], [0], [1], [0, 0, 1, 1], [], []>} : vector<64x16xf32>, vector<16x64xf32>, vector<64x64xf32> -> vector<64x64xf32>
    %c0_88 = arith.constant 0 : index
    %c0_89 = arith.constant 0 : index
    %113 = vector.load %arg10[%c0_88, %c0_89] : memref<64x16xf32, #tpu.memory_space<vmem>>, vector<64x16xf32>
    %cst_90 = arith.constant dense<0.000000e+00> : vector<3x64xf32>
    %114 = tpu.matmul %110, %113, %cst_90 {dimension_numbers = #tpu.dot_dimension_numbers<[1], [1], [0], [0], [0, 0, 1, 0], [], []>} : vector<3x16xf32>, vector<64x16xf32>, vector<3x64xf32> -> vector<3x64xf32>
    %115 = vector.extract_strided_slice %50 {offsets = [0, 128], sizes = [1, 64], strides = [1, 1]} : vector<1x1024xf32> to vector<1x64xf32>
    %116 = vector.broadcast %115 : vector<1x64xf32> to vector<64x64xf32>
    %117 = arith.mulf %112, %116 : vector<64x64xf32>
    %118 = vector.shape_cast %117 : vector<64x64xf32> to vector<8x8x64xf32>
    %c1_91 = arith.constant 1 : index
    %c1_92 = arith.constant 1 : index
    %c0_93 = arith.constant 0 : index
    %119 = vector.load %arg39[%c1_91, %c1_92, %c0_93] : memref<18x18x64xf32, #tpu.memory_space<vmem>>, vector<8x8x64xf32>
    tpu.vector_store %arg39[%c1_91, %c1_92, %c0_93], %118 {strides = array<i32>} : memref<18x18x64xf32, #tpu.memory_space<vmem>>, vector<8x8x64xf32>,
    %c0_94 = arith.constant 0 : index
    %c0_95 = arith.constant 0 : index
    %c0_96 = arith.constant 0 : index
    %120 = vector.load %arg39[%c0_94, %c0_95, %c0_96] : memref<18x18x64xf32, #tpu.memory_space<vmem>>, vector<8x8x64xf32>
    %c0_97 = arith.constant 0 : index
    %c1_98 = arith.constant 1 : index
    %c0_99 = arith.constant 0 : index
    %121 = vector.load %arg39[%c0_97, %c1_98, %c0_99] : memref<18x18x64xf32, #tpu.memory_space<vmem>>, vector<8x8x64xf32>
    %c0_100 = arith.constant 0 : index
    %c2_101 = arith.constant 2 : index
    %c0_102 = arith.constant 0 : index
    %122 = vector.load %arg39[%c0_100, %c2_101, %c0_102] : memref<18x18x64xf32, #tpu.memory_space<vmem>>, vector<8x8x64xf32>
    %c1_103 = arith.constant 1 : index
    %c0_104 = arith.constant 0 : index
    %c0_105 = arith.constant 0 : index
    %123 = vector.load %arg39[%c1_103, %c0_104, %c0_105] : memref<18x18x64xf32, #tpu.memory_space<vmem>>, vector<8x8x64xf32>
    %c1_106 = arith.constant 1 : index
    %c1_107 = arith.constant 1 : index
    %c0_108 = arith.constant 0 : index
    %124 = vector.load %arg39[%c1_106, %c1_107, %c0_108] : memref<18x18x64xf32, #tpu.memory_space<vmem>>, vector<8x8x64xf32>
    %c1_109 = arith.constant 1 : index
    %c2_110 = arith.constant 2 : index
    %c0_111 = arith.constant 0 : index
    %125 = vector.load %arg39[%c1_109, %c2_110, %c0_111] : memref<18x18x64xf32, #tpu.memory_space<vmem>>, vector<8x8x64xf32>
    %c2_112 = arith.constant 2 : index
    %c0_113 = arith.constant 0 : index
    %c0_114 = arith.constant 0 : index
    %126 = vector.load %arg39[%c2_112, %c0_113, %c0_114] : memref<18x18x64xf32, #tpu.memory_space<vmem>>, vector<8x8x64xf32>
    %c2_115 = arith.constant 2 : index
    %c1_116 = arith.constant 1 : index
    %c0_117 = arith.constant 0 : index
    %127 = vector.load %arg39[%c2_115, %c1_116, %c0_117] : memref<18x18x64xf32, #tpu.memory_space<vmem>>, vector<8x8x64xf32>
    %c2_118 = arith.constant 2 : index
    %c2_119 = arith.constant 2 : index
    %c0_120 = arith.constant 0 : index
    %128 = vector.load %arg39[%c2_118, %c2_119, %c0_120] : memref<18x18x64xf32, #tpu.memory_space<vmem>>, vector<8x8x64xf32>
    %129 = tpu.concatenate %120, %121, %122, %123, %124, %125, %126, %127, %128 in 2 : vector<8x8x64xf32>, vector<8x8x64xf32>, vector<8x8x64xf32>, vector<8x8x64xf32>, vector<8x8x64xf32>, vector<8x8x64xf32>, vector<8x8x64xf32>, vector<8x8x64xf32>, vector<8x8x64xf32> -> vector<8x8x576xf32>
    %130 = vector.shape_cast %129 : vector<8x8x576xf32> to vector<64x576xf32>
    %c0_121 = arith.constant 0 : index
    %c0_122 = arith.constant 0 : index
    %131 = vector.load %arg16[%c0_121, %c0_122] : memref<576x32xf32, #tpu.memory_space<vmem>>, vector<576x32xf32>
    %132 = arith.truncf %130 : vector<64x576xf32> to vector<64x576xbf16>
    %133 = arith.truncf %131 : vector<576x32xf32> to vector<576x32xbf16>
    %cst_123 = arith.constant dense<0.000000e+00> : vector<64x32xf32>
    %134 = tpu.matmul %132, %133, %cst_123 {dimension_numbers = #tpu.dot_dimension_numbers<[1], [0], [0], [1], [0, 0, 1, 1], [], []>} : vector<64x576xbf16>, vector<576x32xbf16>, vector<64x32xf32> -> vector<64x32xf32>
    %135 = arith.mulf %115, %115 : vector<1x64xf32>
    %c0_124 = arith.constant 0 : index
    %c0_125 = arith.constant 0 : index
    %136 = vector.load %arg17[%c0_124, %c0_125] : memref<64x32xf32, #tpu.memory_space<vmem>>, vector<64x32xf32>
    %cst_126 = arith.constant dense<0.000000e+00> : vector<1x32xf32>
    %137 = tpu.matmul %135, %136, %cst_126 {dimension_numbers = #tpu.dot_dimension_numbers<[1], [0], [0], [1], [0, 0, 1, 1], [], []>} : vector<1x64xf32>, vector<64x32xf32>, vector<1x32xf32> -> vector<1x32xf32>
    %cst_127 = arith.constant 9.99999993E-9 : f32
    %138 = vector.broadcast %cst_127 : f32 to vector<1x32xf32>
    %139 = arith.addf %137, %138 : vector<1x32xf32>
    %140 = math.rsqrt %139 : vector<1x32xf32>
    %141 = vector.broadcast %140 : vector<1x32xf32> to vector<64x32xf32>
    %142 = arith.mulf %134, %141 : vector<64x32xf32>
    %c0_128 = arith.constant 0 : index
    %c0_129 = arith.constant 0 : index
    %143 = vector.load %arg18[%c0_128, %c0_129] : memref<64x1xf32, #tpu.memory_space<vmem>>, vector<64x1xf32>
    %144 = vector.broadcast %143 : vector<64x1xf32> to vector<64x32xf32>
    %145 = arith.addf %142, %144 : vector<64x32xf32>
    %c0_130 = arith.constant 0 : index
    %c0_131 = arith.constant 0 : index
    %146 = vector.load %arg19[%c0_130, %c0_131] : memref<1x32xf32, #tpu.memory_space<vmem>>, vector<1x32xf32>
    %147 = vector.broadcast %146 : vector<1x32xf32> to vector<64x32xf32>
    %148 = arith.addf %145, %147 : vector<64x32xf32>
    %cst_132 = arith.constant 0.000000e+00 : f32
    %149 = vector.broadcast %cst_132 : f32 to vector<64x32xf32>
    %150 = arith.cmpf oge, %148, %149 : vector<64x32xf32>
    %cst_133 = arith.constant 2.000000e-01 : f32
    %151 = vector.broadcast %cst_133 : f32 to vector<64x32xf32>
    %152 = arith.mulf %151, %148 : vector<64x32xf32>
    %153 = arith.select %150, %148, %152 : vector<64x32xi1>, vector<64x32xf32>
    %cst_134 = arith.constant 1.41421354 : f32
    %154 = vector.broadcast %cst_134 : f32 to vector<64x32xf32>
    %155 = arith.mulf %153, %154 : vector<64x32xf32>
    %cst_135 = arith.constant -2.560000e+02 : f32
    %cst_136 = arith.constant 2.560000e+02 : f32
    %156 = vector.broadcast %cst_135 : f32 to vector<64x32xf32>
    %157 = arith.maximumf %156, %155 : vector<64x32xf32>
    %158 = vector.broadcast %cst_136 : f32 to vector<64x32xf32>
    %159 = arith.minimumf %158, %157 : vector<64x32xf32>
    %160 = vector.extract_strided_slice %50 {offsets = [0, 256], sizes = [1, 32], strides = [1, 1]} : vector<1x1024xf32> to vector<1x32xf32>
    %161 = vector.broadcast %160 : vector<1x32xf32> to vector<64x32xf32>
    %162 = arith.mulf %159, %161 : vector<64x32xf32>
    %163 = vector.shape_cast %162 : vector<64x32xf32> to vector<8x8x32xf32>
    %c1_137 = arith.constant 1 : index
    %c1_138 = arith.constant 1 : index
    %c0_139 = arith.constant 0 : index
    %164 = vector.load %arg39[%c1_137, %c1_138, %c0_139] : memref<18x18x64xf32, #tpu.memory_space<vmem>>, vector<8x8x32xf32>
    tpu.vector_store %arg39[%c1_137, %c1_138, %c0_139], %163 {strides = array<i32>} : memref<18x18x64xf32, #tpu.memory_space<vmem>>, vector<8x8x32xf32>,
    %c0_140 = arith.constant 0 : index
    %c0_141 = arith.constant 0 : index
    %c0_142 = arith.constant 0 : index
    %165 = vector.load %arg39[%c0_140, %c0_141, %c0_142] : memref<18x18x64xf32, #tpu.memory_space<vmem>>, vector<8x8x32xf32>
    %c0_143 = arith.constant 0 : index
    %c1_144 = arith.constant 1 : index
    %c0_145 = arith.constant 0 : index
    %166 = vector.load %arg39[%c0_143, %c1_144, %c0_145] : memref<18x18x64xf32, #tpu.memory_space<vmem>>, vector<8x8x32xf32>
    %c0_146 = arith.constant 0 : index
    %c2_147 = arith.constant 2 : index
    %c0_148 = arith.constant 0 : index
    %167 = vector.load %arg39[%c0_146, %c2_147, %c0_148] : memref<18x18x64xf32, #tpu.memory_space<vmem>>, vector<8x8x32xf32>
    %c1_149 = arith.constant 1 : index
    %c0_150 = arith.constant 0 : index
    %c0_151 = arith.constant 0 : index
    %168 = vector.load %arg39[%c1_149, %c0_150, %c0_151] : memref<18x18x64xf32, #tpu.memory_space<vmem>>, vector<8x8x32xf32>
    %c1_152 = arith.constant 1 : index
    %c1_153 = arith.constant 1 : index
    %c0_154 = arith.constant 0 : index
    %169 = vector.load %arg39[%c1_152, %c1_153, %c0_154] : memref<18x18x64xf32, #tpu.memory_space<vmem>>, vector<8x8x32xf32>
    %c1_155 = arith.constant 1 : index
    %c2_156 = arith.constant 2 : index
    %c0_157 = arith.constant 0 : index
    %170 = vector.load %arg39[%c1_155, %c2_156, %c0_157] : memref<18x18x64xf32, #tpu.memory_space<vmem>>, vector<8x8x32xf32>
    %c2_158 = arith.constant 2 : index
    %c0_159 = arith.constant 0 : index
    %c0_160 = arith.constant 0 : index
    %171 = vector.load %arg39[%c2_158, %c0_159, %c0_160] : memref<18x18x64xf32, #tpu.memory_space<vmem>>, vector<8x8x32xf32>
    %c2_161 = arith.constant 2 : index
    %c1_162 = arith.constant 1 : index
    %c0_163 = arith.constant 0 : index
    %172 = vector.load %arg39[%c2_161, %c1_162, %c0_163] : memref<18x18x64xf32, #tpu.memory_space<vmem>>, vector<8x8x32xf32>
    %c2_164 = arith.constant 2 : index
    %c2_165 = arith.constant 2 : index
    %c0_166 = arith.constant 0 : index
    %173 = vector.load %arg39[%c2_164, %c2_165, %c0_166] : memref<18x18x64xf32, #tpu.memory_space<vmem>>, vector<8x8x32xf32>
    %174 = tpu.concatenate %165, %166, %167, %168, %169, %170, %171, %172, %173 in 2 : vector<8x8x32xf32>, vector<8x8x32xf32>, vector<8x8x32xf32>, vector<8x8x32xf32>, vector<8x8x32xf32>, vector<8x8x32xf32>, vector<8x8x32xf32>, vector<8x8x32xf32>, vector<8x8x32xf32> -> vector<8x8x288xf32>
    %175 = vector.shape_cast %174 : vector<8x8x288xf32> to vector<64x288xf32>
    %c0_167 = arith.constant 0 : index
    %c0_168 = arith.constant 0 : index
    %176 = vector.load %arg20[%c0_167, %c0_168] : memref<288x32xf32, #tpu.memory_space<vmem>>, vector<288x32xf32>
    %177 = arith.truncf %175 : vector<64x288xf32> to vector<64x288xbf16>
    %178 = arith.truncf %176 : vector<288x32xf32> to vector<288x32xbf16>
    %cst_169 = arith.constant dense<0.000000e+00> : vector<64x32xf32>
    %179 = tpu.matmul %177, %178, %cst_169 {dimension_numbers = #tpu.dot_dimension_numbers<[1], [0], [0], [1], [0, 0, 1, 1], [], []>} : vector<64x288xbf16>, vector<288x32xbf16>, vector<64x32xf32> -> vector<64x32xf32>
    %180 = arith.mulf %160, %160 : vector<1x32xf32>
    %c0_170 = arith.constant 0 : index
    %c0_171 = arith.constant 0 : index
    %181 = vector.load %arg21[%c0_170, %c0_171] : memref<32x32xf32, #tpu.memory_space<vmem>>, vector<32x32xf32>
    %cst_172 = arith.constant dense<0.000000e+00> : vector<1x32xf32>
    %182 = tpu.matmul %180, %181, %cst_172 {dimension_numbers = #tpu.dot_dimension_numbers<[1], [0], [0], [1], [0, 0, 1, 1], [], []>} : vector<1x32xf32>, vector<32x32xf32>, vector<1x32xf32> -> vector<1x32xf32>
    %cst_173 = arith.constant 9.99999993E-9 : f32
    %183 = vector.broadcast %cst_173 : f32 to vector<1x32xf32>
    %184 = arith.addf %182, %183 : vector<1x32xf32>
    %185 = math.rsqrt %184 : vector<1x32xf32>
    %186 = vector.broadcast %185 : vector<1x32xf32> to vector<64x32xf32>
    %187 = arith.mulf %179, %186 : vector<64x32xf32>
    %c0_174 = arith.constant 0 : index
    %c0_175 = arith.constant 0 : index
    %188 = vector.load %arg22[%c0_174, %c0_175] : memref<64x1xf32, #tpu.memory_space<vmem>>, vector<64x1xf32>
    %189 = vector.broadcast %188 : vector<64x1xf32> to vector<64x32xf32>
    %190 = arith.addf %187, %189 : vector<64x32xf32>
    %c0_176 = arith.constant 0 : index
    %c0_177 = arith.constant 0 : index
    %191 = vector.load %arg23[%c0_176, %c0_177] : memref<1x32xf32, #tpu.memory_space<vmem>>, vector<1x32xf32>
    %192 = vector.broadcast %191 : vector<1x32xf32> to vector<64x32xf32>
    %193 = arith.addf %190, %192 : vector<64x32xf32>
    %cst_178 = arith.constant 0.000000e+00 : f32
    %194 = vector.broadcast %cst_178 : f32 to vector<64x32xf32>
    %195 = arith.cmpf oge, %193, %194 : vector<64x32xf32>
    %cst_179 = arith.constant 2.000000e-01 : f32
    %196 = vector.broadcast %cst_179 : f32 to vector<64x32xf32>
    %197 = arith.mulf %196, %193 : vector<64x32xf32>
    %198 = arith.select %195, %193, %197 : vector<64x32xi1>, vector<64x32xf32>
    %cst_180 = arith.constant 1.41421354 : f32
    %199 = vector.broadcast %cst_180 : f32 to vector<64x32xf32>
    %200 = arith.mulf %198, %199 : vector<64x32xf32>
    %cst_181 = arith.constant -2.560000e+02 : f32
    %cst_182 = arith.constant 2.560000e+02 : f32
    %201 = vector.broadcast %cst_181 : f32 to vector<64x32xf32>
    %202 = arith.maximumf %201, %200 : vector<64x32xf32>
    %203 = vector.broadcast %cst_182 : f32 to vector<64x32xf32>
    %204 = arith.minimumf %203, %202 : vector<64x32xf32>
    %205 = vector.extract_strided_slice %50 {offsets = [0, 768], sizes = [1, 32], strides = [1, 1]} : vector<1x1024xf32> to vector<1x32xf32>
    %206 = vector.broadcast %205 : vector<1x32xf32> to vector<64x32xf32>
    %207 = arith.mulf %204, %206 : vector<64x32xf32>
    %208 = arith.truncf %207 : vector<64x32xf32> to vector<64x32xbf16>
    %c0_183 = arith.constant 0 : index
    %c0_184 = arith.constant 0 : index
    %209 = vector.load %arg34[%c0_183, %c0_184] : memref<3x32xf32, #tpu.memory_space<vmem>>, vector<3x32xf32>
    %210 = arith.truncf %209 : vector<3x32xf32> to vector<3x32xbf16>
    %cst_185 = arith.constant dense<0.000000e+00> : vector<3x64xf32>
    %211 = tpu.matmul %210, %208, %cst_185 {dimension_numbers = #tpu.dot_dimension_numbers<[1], [1], [0], [0], [0, 0, 1, 0], [], []>} : vector<3x32xbf16>, vector<64x32xbf16>, vector<3x64xf32> -> vector<3x64xf32>
    %c0_186 = arith.constant 0 : index
    %c0_187 = arith.constant 0 : index
    %212 = vector.load %arg35[%c0_186, %c0_187] : memref<3x1xf32, #tpu.memory_space<vmem>>, vector<3x1xf32>
    %213 = vector.broadcast %212 : vector<3x1xf32> to vector<3x64xf32>
    %214 = arith.addf %211, %213 : vector<3x64xf32>
    %cst_188 = arith.constant -2.560000e+02 : f32
    %cst_189 = arith.constant 2.560000e+02 : f32
    %215 = vector.broadcast %cst_188 : f32 to vector<3x64xf32>
    %216 = arith.maximumf %215, %214 : vector<3x64xf32>
    %217 = vector.broadcast %cst_189 : f32 to vector<3x64xf32>
    %218 = arith.minimumf %217, %216 : vector<3x64xf32>
    %219 = arith.addf %114, %218 : vector<3x64xf32>
    %c0_190 = arith.constant 0 : index
    %c0_191 = arith.constant 0 : index
    %220 = vector.load %arg11[%c0_190, %c0_191] : memref<256x64xf32, #tpu.memory_space<vmem>>, vector<256x64xf32>
    %cst_192 = arith.constant dense<0.000000e+00> : vector<256x32xf32>
    %221 = tpu.matmul %220, %204, %cst_192 {dimension_numbers = #tpu.dot_dimension_numbers<[1], [0], [0], [1], [0, 0, 1, 1], [], []>} : vector<256x64xf32>, vector<64x32xf32>, vector<256x32xf32> -> vector<256x32xf32>
    %c0_193 = arith.constant 0 : index
    %c0_194 = arith.constant 0 : index
    %222 = vector.load %arg11[%c0_193, %c0_194] : memref<256x64xf32, #tpu.memory_space<vmem>>, vector<256x64xf32>
    %cst_195 = arith.constant dense<0.000000e+00> : vector<3x256xf32>
    %223 = tpu.matmul %219, %222, %cst_195 {dimension_numbers = #tpu.dot_dimension_numbers<[1], [1], [0], [0], [0, 0, 1, 0], [], []>} : vector<3x64xf32>, vector<256x64xf32>, vector<3x256xf32> -> vector<3x256xf32>
    %224 = vector.extract_strided_slice %50 {offsets = [0, 384], sizes = [1, 32], strides = [1, 1]} : vector<1x1024xf32> to vector<1x32xf32>
    %225 = vector.broadcast %224 : vector<1x32xf32> to vector<256x32xf32>
    %226 = arith.mulf %221, %225 : vector<256x32xf32>
    %227 = vector.shape_cast %226 : vector<256x32xf32> to vector<16x16x32xf32>
    %c1_196 = arith.constant 1 : index
    %c1_197 = arith.constant 1 : index
    %c0_198 = arith.constant 0 : index
    %228 = vector.load %arg39[%c1_196, %c1_197, %c0_198] : memref<18x18x64xf32, #tpu.memory_space<vmem>>, vector<16x16x32xf32>
    tpu.vector_store %arg39[%c1_196, %c1_197, %c0_198], %227 {strides = array<i32>} : memref<18x18x64xf32, #tpu.memory_space<vmem>>, vector<16x16x32xf32>,
    %c0_199 = arith.constant 0 : index
    %c0_200 = arith.constant 0 : index
    %c0_201 = arith.constant 0 : index
    %229 = vector.load %arg39[%c0_199, %c0_200, %c0_201] : memref<18x18x64xf32, #tpu.memory_space<vmem>>, vector<16x16x32xf32>
    %c0_202 = arith.constant 0 : index
    %c1_203 = arith.constant 1 : index
    %c0_204 = arith.constant 0 : index
    %230 = vector.load %arg39[%c0_202, %c1_203, %c0_204] : memref<18x18x64xf32, #tpu.memory_space<vmem>>, vector<16x16x32xf32>
    %c0_205 = arith.constant 0 : index
    %c2_206 = arith.constant 2 : index
    %c0_207 = arith.constant 0 : index
    %231 = vector.load %arg39[%c0_205, %c2_206, %c0_207] : memref<18x18x64xf32, #tpu.memory_space<vmem>>, vector<16x16x32xf32>
    %c1_208 = arith.constant 1 : index
    %c0_209 = arith.constant 0 : index
    %c0_210 = arith.constant 0 : index
    %232 = vector.load %arg39[%c1_208, %c0_209, %c0_210] : memref<18x18x64xf32, #tpu.memory_space<vmem>>, vector<16x16x32xf32>
    %c1_211 = arith.constant 1 : index
    %c1_212 = arith.constant 1 : index
    %c0_213 = arith.constant 0 : index
    %233 = vector.load %arg39[%c1_211, %c1_212, %c0_213] : memref<18x18x64xf32, #tpu.memory_space<vmem>>, vector<16x16x32xf32>
    %c1_214 = arith.constant 1 : index
    %c2_215 = arith.constant 2 : index
    %c0_216 = arith.constant 0 : index
    %234 = vector.load %arg39[%c1_214, %c2_215, %c0_216] : memref<18x18x64xf32, #tpu.memory_space<vmem>>, vector<16x16x32xf32>
    %c2_217 = arith.constant 2 : index
    %c0_218 = arith.constant 0 : index
    %c0_219 = arith.constant 0 : index
    %235 = vector.load %arg39[%c2_217, %c0_218, %c0_219] : memref<18x18x64xf32, #tpu.memory_space<vmem>>, vector<16x16x32xf32>
    %c2_220 = arith.constant 2 : index
    %c1_221 = arith.constant 1 : index
    %c0_222 = arith.constant 0 : index
    %236 = vector.load %arg39[%c2_220, %c1_221, %c0_222] : memref<18x18x64xf32, #tpu.memory_space<vmem>>, vector<16x16x32xf32>
    %c2_223 = arith.constant 2 : index
    %c2_224 = arith.constant 2 : index
    %c0_225 = arith.constant 0 : index
    %237 = vector.load %arg39[%c2_223, %c2_224, %c0_225] : memref<18x18x64xf32, #tpu.memory_space<vmem>>, vector<16x16x32xf32>
    %238 = tpu.concatenate %229, %230, %231, %232, %233, %234, %235, %236, %237 in 2 : vector<16x16x32xf32>, vector<16x16x32xf32>, vector<16x16x32xf32>, vector<16x16x32xf32>, vector<16x16x32xf32>, vector<16x16x32xf32>, vector<16x16x32xf32>, vector<16x16x32xf32>, vector<16x16x32xf32> -> vector<16x16x288xf32>
    %239 = vector.shape_cast %238 : vector<16x16x288xf32> to vector<256x288xf32>
    %c0_226 = arith.constant 0 : index
    %c0_227 = arith.constant 0 : index
    %240 = vector.load %arg24[%c0_226, %c0_227] : memref<288x16xf32, #tpu.memory_space<vmem>>, vector<288x16xf32>
    %241 = arith.truncf %239 : vector<256x288xf32> to vector<256x288xbf16>
    %242 = arith.truncf %240 : vector<288x16xf32> to vector<288x16xbf16>
    %cst_228 = arith.constant dense<0.000000e+00> : vector<256x16xf32>
    %243 = tpu.matmul %241, %242, %cst_228 {dimension_numbers = #tpu.dot_dimension_numbers<[1], [0], [0], [1], [0, 0, 1, 1], [], []>} : vector<256x288xbf16>, vector<288x16xbf16>, vector<256x16xf32> -> vector<256x16xf32>
    %244 = arith.mulf %224, %224 : vector<1x32xf32>
    %c0_229 = arith.constant 0 : index
    %c0_230 = arith.constant 0 : index
    %245 = vector.load %arg25[%c0_229, %c0_230] : memref<32x16xf32, #tpu.memory_space<vmem>>, vector<32x16xf32>
    %cst_231 = arith.constant dense<0.000000e+00> : vector<1x16xf32>
    %246 = tpu.matmul %244, %245, %cst_231 {dimension_numbers = #tpu.dot_dimension_numbers<[1], [0], [0], [1], [0, 0, 1, 1], [], []>} : vector<1x32xf32>, vector<32x16xf32>, vector<1x16xf32> -> vector<1x16xf32>
    %cst_232 = arith.constant 9.99999993E-9 : f32
    %247 = vector.broadcast %cst_232 : f32 to vector<1x16xf32>
    %248 = arith.addf %246, %247 : vector<1x16xf32>
    %249 = math.rsqrt %248 : vector<1x16xf32>
    %250 = vector.broadcast %249 : vector<1x16xf32> to vector<256x16xf32>
    %251 = arith.mulf %243, %250 : vector<256x16xf32>
    %c0_233 = arith.constant 0 : index
    %c0_234 = arith.constant 0 : index
    %252 = vector.load %arg26[%c0_233, %c0_234] : memref<256x1xf32, #tpu.memory_space<vmem>>, vector<256x1xf32>
    %253 = vector.broadcast %252 : vector<256x1xf32> to vector<256x16xf32>
    %254 = arith.addf %251, %253 : vector<256x16xf32>
    %c0_235 = arith.constant 0 : index
    %c0_236 = arith.constant 0 : index
    %255 = vector.load %arg27[%c0_235, %c0_236] : memref<1x16xf32, #tpu.memory_space<vmem>>, vector<1x16xf32>
    %256 = vector.broadcast %255 : vector<1x16xf32> to vector<256x16xf32>
    %257 = arith.addf %254, %256 : vector<256x16xf32>
    %cst_237 = arith.constant 0.000000e+00 : f32
    %258 = vector.broadcast %cst_237 : f32 to vector<256x16xf32>
    %259 = arith.cmpf oge, %257, %258 : vector<256x16xf32>
    %cst_238 = arith.constant 2.000000e-01 : f32
    %260 = vector.broadcast %cst_238 : f32 to vector<256x16xf32>
    %261 = arith.mulf %260, %257 : vector<256x16xf32>
    %262 = arith.select %259, %257, %261 : vector<256x16xi1>, vector<256x16xf32>
    %cst_239 = arith.constant 1.41421354 : f32
    %263 = vector.broadcast %cst_239 : f32 to vector<256x16xf32>
    %264 = arith.mulf %262, %263 : vector<256x16xf32>
    %cst_240 = arith.constant -2.560000e+02 : f32
    %cst_241 = arith.constant 2.560000e+02 : f32
    %265 = vector.broadcast %cst_240 : f32 to vector<256x16xf32>
    %266 = arith.maximumf %265, %264 : vector<256x16xf32>
    %267 = vector.broadcast %cst_241 : f32 to vector<256x16xf32>
    %268 = arith.minimumf %267, %266 : vector<256x16xf32>
    %269 = vector.extract_strided_slice %50 {offsets = [0, 512], sizes = [1, 16], strides = [1, 1]} : vector<1x1024xf32> to vector<1x16xf32>
    %270 = vector.broadcast %269 : vector<1x16xf32> to vector<256x16xf32>
    %271 = arith.mulf %268, %270 : vector<256x16xf32>
    %272 = vector.shape_cast %271 : vector<256x16xf32> to vector<16x16x16xf32>
    %c1_242 = arith.constant 1 : index
    %c1_243 = arith.constant 1 : index
    %c0_244 = arith.constant 0 : index
    %273 = vector.load %arg39[%c1_242, %c1_243, %c0_244] : memref<18x18x64xf32, #tpu.memory_space<vmem>>, vector<16x16x16xf32>
    tpu.vector_store %arg39[%c1_242, %c1_243, %c0_244], %272 {strides = array<i32>} : memref<18x18x64xf32, #tpu.memory_space<vmem>>, vector<16x16x16xf32>,
    %c0_245 = arith.constant 0 : index
    %c0_246 = arith.constant 0 : index
    %c0_247 = arith.constant 0 : index
    %274 = vector.load %arg39[%c0_245, %c0_246, %c0_247] : memref<18x18x64xf32, #tpu.memory_space<vmem>>, vector<16x16x16xf32>
    %c0_248 = arith.constant 0 : index
    %c1_249 = arith.constant 1 : index
    %c0_250 = arith.constant 0 : index
    %275 = vector.load %arg39[%c0_248, %c1_249, %c0_250] : memref<18x18x64xf32, #tpu.memory_space<vmem>>, vector<16x16x16xf32>
    %c0_251 = arith.constant 0 : index
    %c2_252 = arith.constant 2 : index
    %c0_253 = arith.constant 0 : index
    %276 = vector.load %arg39[%c0_251, %c2_252, %c0_253] : memref<18x18x64xf32, #tpu.memory_space<vmem>>, vector<16x16x16xf32>
    %c1_254 = arith.constant 1 : index
    %c0_255 = arith.constant 0 : index
    %c0_256 = arith.constant 0 : index
    %277 = vector.load %arg39[%c1_254, %c0_255, %c0_256] : memref<18x18x64xf32, #tpu.memory_space<vmem>>, vector<16x16x16xf32>
    %c1_257 = arith.constant 1 : index
    %c1_258 = arith.constant 1 : index
    %c0_259 = arith.constant 0 : index
    %278 = vector.load %arg39[%c1_257, %c1_258, %c0_259] : memref<18x18x64xf32, #tpu.memory_space<vmem>>, vector<16x16x16xf32>
    %c1_260 = arith.constant 1 : index
    %c2_261 = arith.constant 2 : index
    %c0_262 = arith.constant 0 : index
    %279 = vector.load %arg39[%c1_260, %c2_261, %c0_262] : memref<18x18x64xf32, #tpu.memory_space<vmem>>, vector<16x16x16xf32>
    %c2_263 = arith.constant 2 : index
    %c0_264 = arith.constant 0 : index
    %c0_265 = arith.constant 0 : index
    %280 = vector.load %arg39[%c2_263, %c0_264, %c0_265] : memref<18x18x64xf32, #tpu.memory_space<vmem>>, vector<16x16x16xf32>
    %c2_266 = arith.constant 2 : index
    %c1_267 = arith.constant 1 : index
    %c0_268 = arith.constant 0 : index
    %281 = vector.load %arg39[%c2_266, %c1_267, %c0_268] : memref<18x18x64xf32, #tpu.memory_space<vmem>>, vector<16x16x16xf32>
    %c2_269 = arith.constant 2 : index
    %c2_270 = arith.constant 2 : index
    %c0_271 = arith.constant 0 : index
    %282 = vector.load %arg39[%c2_269, %c2_270, %c0_271] : memref<18x18x64xf32, #tpu.memory_space<vmem>>, vector<16x16x16xf32>
    %283 = tpu.concatenate %274, %275, %276, %277, %278, %279, %280, %281, %282 in 2 : vector<16x16x16xf32>, vector<16x16x16xf32>, vector<16x16x16xf32>, vector<16x16x16xf32>, vector<16x16x16xf32>, vector<16x16x16xf32>, vector<16x16x16xf32>, vector<16x16x16xf32>, vector<16x16x16xf32> -> vector<16x16x144xf32>
    %284 = vector.shape_cast %283 : vector<16x16x144xf32> to vector<256x144xf32>
    %c0_272 = arith.constant 0 : index
    %c0_273 = arith.constant 0 : index
    %285 = vector.load %arg28[%c0_272, %c0_273] : memref<144x16xf32, #tpu.memory_space<vmem>>, vector<144x16xf32>
    %286 = arith.truncf %284 : vector<256x144xf32> to vector<256x144xbf16>
    %287 = arith.truncf %285 : vector<144x16xf32> to vector<144x16xbf16>
    %cst_274 = arith.constant dense<0.000000e+00> : vector<256x16xf32>
    %288 = tpu.matmul %286, %287, %cst_274 {dimension_numbers = #tpu.dot_dimension_numbers<[1], [0], [0], [1], [0, 0, 1, 1], [], []>} : vector<256x144xbf16>, vector<144x16xbf16>, vector<256x16xf32> -> vector<256x16xf32>
    %289 = arith.mulf %269, %269 : vector<1x16xf32>
    %c0_275 = arith.constant 0 : index
    %c0_276 = arith.constant 0 : index
    %290 = vector.load %arg29[%c0_275, %c0_276] : memref<16x16xf32, #tpu.memory_space<vmem>>, vector<16x16xf32>
    %cst_277 = arith.constant dense<0.000000e+00> : vector<1x16xf32>
    %291 = tpu.matmul %289, %290, %cst_277 {dimension_numbers = #tpu.dot_dimension_numbers<[1], [0], [0], [1], [0, 0, 1, 1], [], []>} : vector<1x16xf32>, vector<16x16xf32>, vector<1x16xf32> -> vector<1x16xf32>
    %cst_278 = arith.constant 9.99999993E-9 : f32
    %292 = vector.broadcast %cst_278 : f32 to vector<1x16xf32>
    %293 = arith.addf %291, %292 : vector<1x16xf32>
    %294 = math.rsqrt %293 : vector<1x16xf32>
    %295 = vector.broadcast %294 : vector<1x16xf32> to vector<256x16xf32>
    %296 = arith.mulf %288, %295 : vector<256x16xf32>
    %c0_279 = arith.constant 0 : index
    %c0_280 = arith.constant 0 : index
    %297 = vector.load %arg30[%c0_279, %c0_280] : memref<256x1xf32, #tpu.memory_space<vmem>>, vector<256x1xf32>
    %298 = vector.broadcast %297 : vector<256x1xf32> to vector<256x16xf32>
    %299 = arith.addf %296, %298 : vector<256x16xf32>
    %c0_281 = arith.constant 0 : index
    %c0_282 = arith.constant 0 : index
    %300 = vector.load %arg31[%c0_281, %c0_282] : memref<1x16xf32, #tpu.memory_space<vmem>>, vector<1x16xf32>
    %301 = vector.broadcast %300 : vector<1x16xf32> to vector<256x16xf32>
    %302 = arith.addf %299, %301 : vector<256x16xf32>
    %cst_283 = arith.constant 0.000000e+00 : f32
    %303 = vector.broadcast %cst_283 : f32 to vector<256x16xf32>
    %304 = arith.cmpf oge, %302, %303 : vector<256x16xf32>
    %cst_284 = arith.constant 2.000000e-01 : f32
    %305 = vector.broadcast %cst_284 : f32 to vector<256x16xf32>
    %306 = arith.mulf %305, %302 : vector<256x16xf32>
    %307 = arith.select %304, %302, %306 : vector<256x16xi1>, vector<256x16xf32>
    %cst_285 = arith.constant 1.41421354 : f32
    %308 = vector.broadcast %cst_285 : f32 to vector<256x16xf32>
    %309 = arith.mulf %307, %308 : vector<256x16xf32>
    %cst_286 = arith.constant -2.560000e+02 : f32
    %cst_287 = arith.constant 2.560000e+02 : f32
    %310 = vector.broadcast %cst_286 : f32 to vector<256x16xf32>
    %311 = arith.maximumf %310, %309 : vector<256x16xf32>
    %312 = vector.broadcast %cst_287 : f32 to vector<256x16xf32>
    %313 = arith.minimumf %312, %311 : vector<256x16xf32>
    %314 = vector.extract_strided_slice %50 {offsets = [0, 896], sizes = [1, 16], strides = [1, 1]} : vector<1x1024xf32> to vector<1x16xf32>
    %315 = vector.broadcast %314 : vector<1x16xf32> to vector<256x16xf32>
    %316 = arith.mulf %313, %315 : vector<256x16xf32>
    %317 = arith.truncf %316 : vector<256x16xf32> to vector<256x16xbf16>
    %c0_288 = arith.constant 0 : index
    %c0_289 = arith.constant 0 : index
    %318 = vector.load %arg36[%c0_288, %c0_289] : memref<3x16xf32, #tpu.memory_space<vmem>>, vector<3x16xf32>
    %319 = arith.truncf %318 : vector<3x16xf32> to vector<3x16xbf16>
    %cst_290 = arith.constant dense<0.000000e+00> : vector<3x256xf32>
    %320 = tpu.matmul %319, %317, %cst_290 {dimension_numbers = #tpu.dot_dimension_numbers<[1], [1], [0], [0], [0, 0, 1, 0], [], []>} : vector<3x16xbf16>, vector<256x16xbf16>, vector<3x256xf32> -> vector<3x256xf32>
    %c0_291 = arith.constant 0 : index
    %c0_292 = arith.constant 0 : index
    %321 = vector.load %arg37[%c0_291, %c0_292] : memref<3x1xf32, #tpu.memory_space<vmem>>, vector<3x1xf32>
    %322 = vector.broadcast %321 : vector<3x1xf32> to vector<3x256xf32>
    %323 = arith.addf %320, %322 : vector<3x256xf32>
    %cst_293 = arith.constant -2.560000e+02 : f32
    %cst_294 = arith.constant 2.560000e+02 : f32
    %324 = vector.broadcast %cst_293 : f32 to vector<3x256xf32>
    %325 = arith.maximumf %324, %323 : vector<3x256xf32>
    %326 = vector.broadcast %cst_294 : f32 to vector<3x256xf32>
    %327 = arith.minimumf %326, %325 : vector<3x256xf32>
    %328 = arith.addf %223, %327 : vector<3x256xf32>
    %cst_295 = arith.constant 1.000000e+00 : f32
    %329 = vector.broadcast %cst_295 : f32 to vector<3x256xf32>
    %330 = arith.addf %328, %329 : vector<3x256xf32>
    %cst_296 = arith.constant 5.000000e-01 : f32
    %331 = vector.broadcast %cst_296 : f32 to vector<3x256xf32>
    %332 = arith.mulf %330, %331 : vector<3x256xf32>
    %333 = vector.shape_cast %332 : vector<3x256xf32> to vector<1x3x256xf32>
    %c0_297 = arith.constant 0 : index
    %c0_298 = arith.constant 0 : index
    %c0_299 = arith.constant 0 : index
    %334 = vector.load %arg38[%c0_297, %c0_298, %c0_299] : memref<1x3x256xf32, #tpu.memory_space<vmem>>, vector<1x3x256xf32>
    tpu.vector_store %arg38[%c0_297, %c0_298, %c0_299], %333 {strides = array<i32>} : memref<1x3x256xf32, #tpu.memory_space<vmem>>, vector<1x3x256xf32>,
    return
  }
  func.func @transform_0(%arg0: i32) -> (i32, i32, i32) {
    %c0_i32 = arith.constant 0 : i32
    %c0_i32_0 = arith.constant 0 : i32
    %c0_i32_1 = arith.constant 0 : i32
    return %arg0, %c0_i32, %c0_i32_0 : i32, i32, i32
  }
  func.func @transform_1(%arg0: i32) -> (i32, i32) {
    %c0_i32 = arith.constant 0 : i32
    %c0_i32_0 = arith.constant 0 : i32
    %c0_i32_1 = arith.constant 0 : i32
    return %c0_i32, %c0_i32_0 : i32, i32
  }
  func.func @transform_2(%arg0: i32) -> (i32, i32) {
    %c0_i32 = arith.constant 0 : i32
    %c0_i32_0 = arith.constant 0 : i32
    %c0_i32_1 = arith.constant 0 : i32
    return %c0_i32, %c0_i32_0 : i32, i32
  }
  func.func @transform_3(%arg0: i32) -> (i32, i32) {
    %c0_i32 = arith.constant 0 : i32
    %c0_i32_0 = arith.constant 0 : i32
    %c0_i32_1 = arith.constant 0 : i32
    return %c0_i32, %c0_i32_0 : i32, i32
  }
  func.func @transform_4(%arg0: i32) -> (i32, i32) {
    %c0_i32 = arith.constant 0 : i32
    %c0_i32_0 = arith.constant 0 : i32
    %c0_i32_1 = arith.constant 0 : i32
    return %c0_i32, %c0_i32_0 : i32, i32
  }
  func.func @transform_5(%arg0: i32) -> (i32, i32) {
    %c0_i32 = arith.constant 0 : i32
    %c0_i32_0 = arith.constant 0 : i32
    %c0_i32_1 = arith.constant 0 : i32
    return %c0_i32, %c0_i32_0 : i32, i32
  }
  func.func @transform_6(%arg0: i32) -> (i32, i32) {
    %c0_i32 = arith.constant 0 : i32
    %c0_i32_0 = arith.constant 0 : i32
    %c0_i32_1 = arith.constant 0 : i32
    return %c0_i32, %c0_i32_0 : i32, i32
  }
  func.func @transform_7(%arg0: i32) -> (i32, i32) {
    %c0_i32 = arith.constant 0 : i32
    %c0_i32_0 = arith.constant 0 : i32
    %c0_i32_1 = arith.constant 0 : i32
    return %c0_i32, %c0_i32_0 : i32, i32
  }
  func.func @transform_8(%arg0: i32) -> (i32, i32) {
    %c0_i32 = arith.constant 0 : i32
    %c0_i32_0 = arith.constant 0 : i32
    %c0_i32_1 = arith.constant 0 : i32
    return %c0_i32, %c0_i32_0 : i32, i32
  }
  func.func @transform_9(%arg0: i32) -> (i32, i32) {
    %c0_i32 = arith.constant 0 : i32
    %c0_i32_0 = arith.constant 0 : i32
    %c0_i32_1 = arith.constant 0 : i32
    return %c0_i32, %c0_i32_0 : i32, i32
  }
  func.func @transform_10(%arg0: i32) -> (i32, i32) {
    %c0_i32 = arith.constant 0 : i32
    %c0_i32_0 = arith.constant 0 : i32
    %c0_i32_1 = arith.constant 0 : i32
    return %c0_i32, %c0_i32_0 : i32, i32
  }
  func.func @transform_11(%arg0: i32) -> (i32, i32) {
    %c0_i32 = arith.constant 0 : i32
    %c0_i32_0 = arith.constant 0 : i32
    %c0_i32_1 = arith.constant 0 : i32
    return %c0_i32, %c0_i32_0 : i32, i32
  }
  func.func @transform_12(%arg0: i32) -> (i32, i32) {
    %c0_i32 = arith.constant 0 : i32
    %c0_i32_0 = arith.constant 0 : i32
    %c0_i32_1 = arith.constant 0 : i32
    return %c0_i32, %c0_i32_0 : i32, i32
  }
  func.func @transform_13(%arg0: i32) -> (i32, i32) {
    %c0_i32 = arith.constant 0 : i32
    %c0_i32_0 = arith.constant 0 : i32
    %c0_i32_1 = arith.constant 0 : i32
    return %c0_i32, %c0_i32_0 : i32, i32
  }
  func.func @transform_14(%arg0: i32) -> (i32, i32) {
    %c0_i32 = arith.constant 0 : i32
    %c0_i32_0 = arith.constant 0 : i32
    %c0_i32_1 = arith.constant 0 : i32
    return %c0_i32, %c0_i32_0 : i32, i32
  }
  func.func @transform_15(%arg0: i32) -> (i32, i32) {
    %c0_i32 = arith.constant 0 : i32
    %c0_i32_0 = arith.constant 0 : i32
    %c0_i32_1 = arith.constant 0 : i32
    return %c0_i32, %c0_i32_0 : i32, i32
  }
  func.func @transform_16(%arg0: i32) -> (i32, i32) {
    %c0_i32 = arith.constant 0 : i32
    %c0_i32_0 = arith.constant 0 : i32
    %c0_i32_1 = arith.constant 0 : i32
    return %c0_i32, %c0_i32_0 : i32, i32
  }
  func.func @transform_17(%arg0: i32) -> (i32, i32) {
    %c0_i32 = arith.constant 0 : i32
    %c0_i32_0 = arith.constant 0 : i32
    %c0_i32_1 = arith.constant 0 : i32
    return %c0_i32, %c0_i32_0 : i32, i32
  }
  func.func @transform_18(%arg0: i32) -> (i32, i32) {
    %c0_i32 = arith.constant 0 : i32
    %c0_i32_0 = arith.constant 0 : i32
    %c0_i32_1 = arith.constant 0 : i32
    return %c0_i32, %c0_i32_0 : i32, i32
  }
  func.func @transform_19(%arg0: i32) -> (i32, i32) {
    %c0_i32 = arith.constant 0 : i32
    %c0_i32_0 = arith.constant 0 : i32
    %c0_i32_1 = arith.constant 0 : i32
    return %c0_i32, %c0_i32_0 : i32, i32
  }
  func.func @transform_20(%arg0: i32) -> (i32, i32) {
    %c0_i32 = arith.constant 0 : i32
    %c0_i32_0 = arith.constant 0 : i32
    %c0_i32_1 = arith.constant 0 : i32
    return %c0_i32, %c0_i32_0 : i32, i32
  }
  func.func @transform_21(%arg0: i32) -> (i32, i32) {
    %c0_i32 = arith.constant 0 : i32
    %c0_i32_0 = arith.constant 0 : i32
    %c0_i32_1 = arith.constant 0 : i32
    return %c0_i32, %c0_i32_0 : i32, i32
  }
  func.func @transform_22(%arg0: i32) -> (i32, i32) {
    %c0_i32 = arith.constant 0 : i32
    %c0_i32_0 = arith.constant 0 : i32
    %c0_i32_1 = arith.constant 0 : i32
    return %c0_i32, %c0_i32_0 : i32, i32
  }
  func.func @transform_23(%arg0: i32) -> (i32, i32) {
    %c0_i32 = arith.constant 0 : i32
    %c0_i32_0 = arith.constant 0 : i32
    %c0_i32_1 = arith.constant 0 : i32
    return %c0_i32, %c0_i32_0 : i32, i32
  }
  func.func @transform_24(%arg0: i32) -> (i32, i32) {
    %c0_i32 = arith.constant 0 : i32
    %c0_i32_0 = arith.constant 0 : i32
    %c0_i32_1 = arith.constant 0 : i32
    return %c0_i32, %c0_i32_0 : i32, i32
  }
  func.func @transform_25(%arg0: i32) -> (i32, i32) {
    %c0_i32 = arith.constant 0 : i32
    %c0_i32_0 = arith.constant 0 : i32
    %c0_i32_1 = arith.constant 0 : i32
    return %c0_i32, %c0_i32_0 : i32, i32
  }
  func.func @transform_26(%arg0: i32) -> (i32, i32) {
    %c0_i32 = arith.constant 0 : i32
    %c0_i32_0 = arith.constant 0 : i32
    %c0_i32_1 = arith.constant 0 : i32
    return %c0_i32, %c0_i32_0 : i32, i32
  }
  func.func @transform_27(%arg0: i32) -> (i32, i32) {
    %c0_i32 = arith.constant 0 : i32
    %c0_i32_0 = arith.constant 0 : i32
    %c0_i32_1 = arith.constant 0 : i32
    return %c0_i32, %c0_i32_0 : i32, i32
  }
  func.func @transform_28(%arg0: i32) -> (i32, i32) {
    %c0_i32 = arith.constant 0 : i32
    %c0_i32_0 = arith.constant 0 : i32
    %c0_i32_1 = arith.constant 0 : i32
    return %c0_i32, %c0_i32_0 : i32, i32
  }
  func.func @transform_29(%arg0: i32) -> (i32, i32) {
    %c0_i32 = arith.constant 0 : i32
    %c0_i32_0 = arith.constant 0 : i32
    %c0_i32_1 = arith.constant 0 : i32
    return %c0_i32, %c0_i32_0 : i32, i32
  }
  func.func @transform_30(%arg0: i32) -> (i32, i32) {
    %c0_i32 = arith.constant 0 : i32
    %c0_i32_0 = arith.constant 0 : i32
    %c0_i32_1 = arith.constant 0 : i32
    return %c0_i32, %c0_i32_0 : i32, i32
  }
  func.func @transform_31(%arg0: i32) -> (i32, i32) {
    %c0_i32 = arith.constant 0 : i32
    %c0_i32_0 = arith.constant 0 : i32
    %c0_i32_1 = arith.constant 0 : i32
    return %c0_i32, %c0_i32_0 : i32, i32
  }
  func.func @transform_32(%arg0: i32) -> (i32, i32) {
    %c0_i32 = arith.constant 0 : i32
    %c0_i32_0 = arith.constant 0 : i32
    %c0_i32_1 = arith.constant 0 : i32
    return %c0_i32, %c0_i32_0 : i32, i32
  }
  func.func @transform_33(%arg0: i32) -> (i32, i32) {
    %c0_i32 = arith.constant 0 : i32
    %c0_i32_0 = arith.constant 0 : i32
    %c0_i32_1 = arith.constant 0 : i32
    return %c0_i32, %c0_i32_0 : i32, i32
  }
  func.func @transform_34(%arg0: i32) -> (i32, i32) {
    %c0_i32 = arith.constant 0 : i32
    %c0_i32_0 = arith.constant 0 : i32
    %c0_i32_1 = arith.constant 0 : i32
    return %c0_i32, %c0_i32_0 : i32, i32
  }
  func.func @transform_35(%arg0: i32) -> (i32, i32) {
    %c0_i32 = arith.constant 0 : i32
    %c0_i32_0 = arith.constant 0 : i32
    %c0_i32_1 = arith.constant 0 : i32
    return %c0_i32, %c0_i32_0 : i32, i32
  }
  func.func @transform_36(%arg0: i32) -> (i32, i32) {
    %c0_i32 = arith.constant 0 : i32
    %c0_i32_0 = arith.constant 0 : i32
    %c0_i32_1 = arith.constant 0 : i32
    return %c0_i32, %c0_i32_0 : i32, i32
  }
  func.func @transform_37(%arg0: i32) -> (i32, i32, i32) {
    %c0_i32 = arith.constant 0 : i32
    %c0_i32_0 = arith.constant 0 : i32
    %c0_i32_1 = arith.constant 0 : i32
    return %arg0, %c0_i32, %c0_i32_0 : i32, i32, i32
  }
}

</mosaic_0001>

<llo_original>
// kernel: _lambda_.1
$region0: #{_lambda_.1}
  #allocation0 [shape = 'u32[]', space=smem, size = 0x4, offset = 0x4, fixed_abs, tag = 'smem constant byte address 0x4 - core index']
  #allocation1 [shape = 'u32[144,128]{1,0:T(1,128)}', space=vmem, size = 0x12000, scoped, tag = 'internal scratch']
  #allocation2 [shape = 'f32[18,18,64]{2,1,0:T(8,128)}', space=vmem, size = 0x36000, scoped, tag = 'scratch operand']
  %s0 = inlined_call_operand.smem [shape: u32[38], index: -1, kind: input, shape index: {}]
  %s1 = sld [smem:[%s0]]
  %s2 = scalar_lea.smem %s0, 1
  %s3 = sld [smem:[%s2]]
  %s4 = scalar_lea.smem %s0, 2
  %s5 = sld [smem:[%s4]]
  %s6 = scalar_lea.smem %s0, 3
  %s7 = sld [smem:[%s6]]
  %s8 = scalar_lea.smem %s0, 4
  %s9 = sld [smem:[%s8]]
  %s10 = scalar_lea.smem %s0, 5
  %s11 = sld [smem:[%s10]]
  %s12 = scalar_lea.smem %s0, 6
  %s13 = sld [smem:[%s12]]
  %s14 = scalar_lea.smem %s0, 7
  %s15 = sld [smem:[%s14]]
  %s16 = scalar_lea.smem %s0, 8
  %s17 = sld [smem:[%s16]]
  %s18 = scalar_lea.smem %s0, 9
  %s19 = sld [smem:[%s18]]
  %s20 = scalar_lea.smem %s0, 10
  %s21 = sld [smem:[%s20]]
  %s22 = scalar_lea.smem %s0, 11
  %s23 = sld [smem:[%s22]]
  %s24 = scalar_lea.smem %s0, 12
  %s25 = sld [smem:[%s24]]
  %s26 = scalar_lea.smem %s0, 13
  %s27 = sld [smem:[%s26]]
  %s28 = scalar_lea.smem %s0, 14
  %s29 = sld [smem:[%s28]]
  %s30 = scalar_lea.smem %s0, 15
  %s31 = sld [smem:[%s30]]
  %s32 = scalar_lea.smem %s0, 16
  %s33 = sld [smem:[%s32]]
  %s34 = scalar_lea.smem %s0, 17
  %s35 = sld [smem:[%s34]]
  %s36 = scalar_lea.smem %s0, 18
  %s37 = sld [smem:[%s36]]
  %s38 = scalar_lea.smem %s0, 19
  %s39 = sld [smem:[%s38]]
  %s40 = scalar_lea.smem %s0, 20
  %s41 = sld [smem:[%s40]]
  %s42 = scalar_lea.smem %s0, 21
  %s43 = sld [smem:[%s42]]
  %s44 = scalar_lea.smem %s0, 22
  %s45 = sld [smem:[%s44]]
  %s46 = scalar_lea.smem %s0, 23
  %s47 = sld [smem:[%s46]]
  %s48 = scalar_lea.smem %s0, 24
  %s49 = sld [smem:[%s48]]
  %s50 = scalar_lea.smem %s0, 25
  %s51 = sld [smem:[%s50]]
  %s52 = scalar_lea.smem %s0, 26
  %s53 = sld [smem:[%s52]]
  %s54 = scalar_lea.smem %s0, 27
  %s55 = sld [smem:[%s54]]
  %s56 = scalar_lea.smem %s0, 28
  %s57 = sld [smem:[%s56]]
  %s58 = scalar_lea.smem %s0, 29
  %s59 = sld [smem:[%s58]]
  %s60 = scalar_lea.smem %s0, 30
  %s61 = sld [smem:[%s60]]
  %s62 = scalar_lea.smem %s0, 31
  %s63 = sld [smem:[%s62]]
  %s64 = scalar_lea.smem %s0, 32
  %s65 = sld [smem:[%s64]]
  %s66 = scalar_lea.smem %s0, 33
  %s67 = sld [smem:[%s66]]
  %s68 = scalar_lea.smem %s0, 34
  %s69 = sld [smem:[%s68]]
  %s70 = scalar_lea.smem %s0, 35
  %s71 = sld [smem:[%s70]]
  %s72 = scalar_lea.smem %s0, 36
  %s73 = sld [smem:[%s72]]
  %s74 = scalar_lea.smem %s0, 37
  %s75 = sld [smem:[%s74]]
  %s76 = sld [smem:[#allocation0]]
  $region309: #{_lambda_.1} parent=0
    _
  %s78 = ssub.s32 1, %s76
  %s79 = scalar_select 0, %s78, %s76
  $region1: #{_lambda_.1} parent=0
    #allocation3 [shape = 'u8[1024]{0}', space=vmem, size = 0x400, scoped, tag = 'input window, operand 0']
    #allocation4 [shape = 's32[2]{0}', space=sflag, size = 0x8, scoped, tag = 'scoped memory for _lambda_.1']
    #allocation5 [shape = 'u8[32768]{0}', space=vmem, size = 0x8000, scoped, tag = 'input window, operand 1, single buffered']
    #allocation6 [shape = 's32[1]{0}', space=sflag, size = 0x4, scoped, tag = 'scoped memory for _lambda_.1']
    #allocation7 [shape = 'u8[512]{0}', space=vmem, size = 0x400, scoped, tag = 'input window, operand 2, single buffered']
    #allocation8 [shape = 'u8[32768]{0}', space=vmem, size = 0x8000, scoped, tag = 'input window, operand 3, single buffered']
    #allocation9 [shape = 's32[1]{0}', space=sflag, size = 0x4, scoped, tag = 'scoped memory for _lambda_.1']
    #allocation10 [shape = 'u8[512]{0}', space=vmem, size = 0x400, scoped, tag = 'input window, operand 4, single buffered']
    #allocation11 [shape = 'u8[512]{0}', space=vmem, size = 0x400, scoped, tag = 'input window, operand 5, single buffered']
    #allocation12 [shape = 's32[1]{0}', space=sflag, size = 0x4, scoped, tag = 'scoped memory for _lambda_.1']
    #allocation13 [shape = 'u8[262144]{0}', space=vmem, size = 0x40000, scoped, tag = 'input window, operand 6, single buffered']
    #allocation14 [shape = 'u8[4096]{0}', space=vmem, size = 0x1000, scoped, tag = 'input window, operand 7, single buffered']
    #allocation15 [shape = 's32[1]{0}', space=sflag, size = 0x4, scoped, tag = 'scoped memory for _lambda_.1']
    #allocation16 [shape = 'u8[8192]{0}', space=vmem, size = 0x2000, scoped, tag = 'input window, operand 8, single buffered']
    #allocation17 [shape = 'u8[32768]{0}', space=vmem, size = 0x8000, scoped, tag = 'input window, operand 9, single buffered']
    #allocation18 [shape = 's32[1]{0}', space=sflag, size = 0x4, scoped, tag = 'scoped memory for _lambda_.1']
    #allocation19 [shape = 'u8[131072]{0}', space=vmem, size = 0x20000, scoped, tag = 'input window, operand 10, single buffered']
    #allocation20 [shape = 'u8[294912]{0}', space=vmem, size = 0x48000, scoped, tag = 'input window, operand 11, single buffered']
    #allocation21 [shape = 's32[1]{0}', space=sflag, size = 0x4, scoped, tag = 'scoped memory for _lambda_.1']
    #allocation22 [shape = 'u8[32768]{0}', space=vmem, size = 0x8000, scoped, tag = 'input window, operand 12, single buffered']
    #allocation23 [shape = 'u8[8192]{0}', space=vmem, size = 0x2000, scoped, tag = 'input window, operand 13, single buffered']
    #allocation24 [shape = 's32[1]{0}', space=sflag, size = 0x4, scoped, tag = 'scoped memory for _lambda_.1']
    #allocation25 [shape = 'u8[512]{0}', space=vmem, size = 0x400, scoped, tag = 'input window, operand 14, single buffered']
    #allocation26 [shape = 'u8[294912]{0}', space=vmem, size = 0x48000, scoped, tag = 'input window, operand 15, single buffered']
    #allocation27 [shape = 's32[1]{0}', space=sflag, size = 0x4, scoped, tag = 'scoped memory for _lambda_.1']
    #allocation28 [shape = 'u8[32768]{0}', space=vmem, size = 0x8000, scoped, tag = 'input window, operand 16, single buffered']
    #allocation29 [shape = 'u8[32768]{0}', space=vmem, size = 0x8000, scoped, tag = 'input window, operand 17, single buffered']
    #allocation30 [shape = 's32[1]{0}', space=sflag, size = 0x4, scoped, tag = 'scoped memory for _lambda_.1']
    #allocation31 [shape = 'u8[512]{0}', space=vmem, size = 0x400, scoped, tag = 'input window, operand 18, single buffered']
    #allocation32 [shape = 'u8[147456]{0}', space=vmem, size = 0x24000, scoped, tag = 'input window, operand 19, single buffered']
    #allocation33 [shape = 's32[1]{0}', space=sflag, size = 0x4, scoped, tag = 'scoped memory for _lambda_.1']
    #allocation34 [shape = 'u8[16384]{0}', space=vmem, size = 0x4000, scoped, tag = 'input window, operand 20, single buffered']
    #allocation35 [shape = 'u8[32768]{0}', space=vmem, size = 0x8000, scoped, tag = 'input window, operand 21, single buffered']
    #allocation36 [shape = 's32[1]{0}', space=sflag, size = 0x4, scoped, tag = 'scoped memory for _lambda_.1']
    #allocation37 [shape = 'u8[512]{0}', space=vmem, size = 0x400, scoped, tag = 'input window, operand 22, single buffered']
    #allocation38 [shape = 'u8[147456]{0}', space=vmem, size = 0x24000, scoped, tag = 'input window, operand 23, single buffered']
    #allocation39 [shape = 's32[1]{0}', space=sflag, size = 0x4, scoped, tag = 'scoped memory for _lambda_.1']
    #allocation40 [shape = 'u8[131072]{0}', space=vmem, size = 0x20000, scoped, tag = 'input window, operand 25, single buffered']
    #allocation41 [shape = 'u8[512]{0}', space=vmem, size = 0x400, scoped, tag = 'input window, operand 26, single buffered']
    #allocation42 [shape = 's32[1]{0}', space=sflag, size = 0x4, scoped, tag = 'scoped memory for _lambda_.1']
    #allocation43 [shape = 'u8[73728]{0}', space=vmem, size = 0x12000, scoped, tag = 'input window, operand 27, single buffered']
    #allocation44 [shape = 'u8[131072]{0}', space=vmem, size = 0x20000, scoped, tag = 'input window, operand 29, single buffered']
    #allocation45 [shape = 's32[1]{0}', space=sflag, size = 0x4, scoped, tag = 'scoped memory for _lambda_.1']
    #allocation46 [shape = 'u8[512]{0}', space=vmem, size = 0x400, scoped, tag = 'input window, operand 30, single buffered']
    #allocation47 [shape = 'u8[2048]{0}', space=vmem, size = 0x800, scoped, tag = 'input window, operand 31, single buffered']
    #allocation48 [shape = 's32[1]{0}', space=sflag, size = 0x4, scoped, tag = 'scoped memory for _lambda_.1']
    #allocation49 [shape = 'u8[2048]{0}', space=vmem, size = 0x800, scoped, tag = 'input window, operand 32, single buffered']
    #allocation50 [shape = 'u8[2048]{0}', space=vmem, size = 0x800, scoped, tag = 'input window, operand 33, single buffered']
    #allocation51 [shape = 's32[1]{0}', space=sflag, size = 0x4, scoped, tag = 'scoped memory for _lambda_.1']
    %80 = vsyncpa [#allocation4], 0
    %s81 = scalar_lea.sflag [#allocation4], 1
    %82 = vsyncpa %s81, 0
    %83 = vsyncpa [#allocation6], 0
    %84 = vsyncpa [#allocation9], 0
    %85 = vsyncpa [#allocation12], 0
    %86 = vsyncpa [#allocation15], 0
    %87 = vsyncpa [#allocation18], 0
    %88 = vsyncpa [#allocation21], 0
    %89 = vsyncpa [#allocation24], 0
    %90 = vsyncpa [#allocation27], 0
    %91 = vsyncpa [#allocation30], 0
    %92 = vsyncpa [#allocation33], 0
    %93 = vsyncpa [#allocation36], 0
    %94 = vsyncpa [#allocation39], 0
    %95 = vsyncpa [#allocation42], 0
    %96 = vsyncpa [#allocation45], 0
    %97 = vsyncpa [#allocation48], 0
    %98 = vsyncpa [#allocation51], 0
    loop: start=0, step=1, limit=4
    $region2: #{_lambda_.1} parent=1 // loop_pre_header
      _
    $region3: #{_lambda_.1} parent=1 // loop_header
      %s100 = sphi 0, %s104
      %p101 = scmp.ge.s32.totalorder %s100, 4
      %s110 = sphi 0, %s112
      %s113 = sphi 0, %s110
      %s114 = sphi 0, %s113
      %s130 = sphi 0, %s114
      %s134 = sphi 0, %s134
      %s136 = sphi 0, %s134
      %s137 = sphi 0, %s136
      %s151 = sphi 0, %s137
      %s155 = sphi 0, %s155
      %s157 = sphi 0, %s155
      %s158 = sphi 0, %s157
      %s172 = sphi 0, %s158
      %s176 = sphi 0, %s176
      %s178 = sphi 0, %s176
      %s179 = sphi 0, %s178
      %s193 = sphi 0, %s179
      %s197 = sphi 0, %s197
      %s199 = sphi 0, %s197
      %s200 = sphi 0, %s199
      %s214 = sphi 0, %s200
      %s218 = sphi 0, %s218
      %s220 = sphi 0, %s218
      %s221 = sphi 0, %s220
      %s235 = sphi 0, %s221
      %s239 = sphi 0, %s239
      %s241 = sphi 0, %s239
      %s242 = sphi 0, %s241
      %s256 = sphi 0, %s242
      %s260 = sphi 0, %s260
      %s262 = sphi 0, %s260
      %s263 = sphi 0, %s262
      %s277 = sphi 0, %s263
      %s281 = sphi 0, %s281
      %s283 = sphi 0, %s281
      %s284 = sphi 0, %s283
      %s298 = sphi 0, %s284
      %s302 = sphi 0, %s302
      %s304 = sphi 0, %s302
      %s305 = sphi 0, %s304
      %s319 = sphi 0, %s305
      %s323 = sphi 0, %s323
      %s325 = sphi 0, %s323
      %s326 = sphi 0, %s325
      %s340 = sphi 0, %s326
      %s344 = sphi 0, %s344
      %s346 = sphi 0, %s344
      %s347 = sphi 0, %s346
      %s361 = sphi 0, %s347
      %s365 = sphi 0, %s365
      %s367 = sphi 0, %s365
      %s368 = sphi 0, %s367
      %s382 = sphi 0, %s368
      %s386 = sphi 0, %s386
      %s388 = sphi 0, %s386
      %s389 = sphi 0, %s388
      %s403 = sphi 0, %s389
      %s407 = sphi 0, %s407
      %s409 = sphi 0, %s407
      %s410 = sphi 0, %s409
      %s424 = sphi 0, %s410
      %s428 = sphi 0, %s428
      %s430 = sphi 0, %s428
      %s431 = sphi 0, %s430
      %s445 = sphi 0, %s431
      %s449 = sphi 0, %s449
      %s451 = sphi 0, %s449
      %s452 = sphi 0, %s451
      %s466 = sphi 0, %s452
      %s470 = sphi 0, %s470
      %s472 = sphi 0, %s470
      %s473 = sphi 0, %s472
      %s487 = sphi 0, %s473
      %s491 = sphi 0, %s491
      %s493 = sphi 0, %s491
      %s494 = sphi 0, %s493
      %s508 = sphi 0, %s494
      %s512 = sphi 0, %s512
      %s514 = sphi 0, %s512
      %s515 = sphi 0, %s514
      %s529 = sphi 0, %s515
      %s533 = sphi 0, %s533
      %s535 = sphi 0, %s533
      %s536 = sphi 0, %s535
      %s550 = sphi 0, %s536
      %s554 = sphi 0, %s554
      %s556 = sphi 0, %s554
      %s557 = sphi 0, %s556
      %s571 = sphi 0, %s557
      %s575 = sphi 0, %s575
      %s577 = sphi 0, %s575
      %s578 = sphi 0, %s577
      %s592 = sphi 0, %s578
      %s596 = sphi 0, %s596
      %s598 = sphi 0, %s596
      %s599 = sphi 0, %s598
      %s613 = sphi 0, %s599
      %s617 = sphi 0, %s617
      %s619 = sphi 0, %s617
      %s620 = sphi 0, %s619
      %s634 = sphi 0, %s620
      %s638 = sphi 0, %s638
      %s640 = sphi 0, %s638
      %s641 = sphi 0, %s640
      %s655 = sphi 0, %s641
      %s659 = sphi 0, %s659
      %s661 = sphi 0, %s659
      %s662 = sphi 0, %s661
      %s676 = sphi 0, %s662
      %s680 = sphi 0, %s680
      %s682 = sphi 0, %s680
      %s683 = sphi 0, %s682
      %s697 = sphi 0, %s683
      %s701 = sphi 0, %s701
      %s703 = sphi 0, %s701
      %s704 = sphi 0, %s703
      %s718 = sphi 0, %s704
      %s722 = sphi 0, %s722
      %s724 = sphi 0, %s722
      %s725 = sphi 0, %s724
      %s739 = sphi 0, %s725
      %s743 = sphi 0, %s743
      %s745 = sphi 0, %s743
      %s746 = sphi 0, %s745
      %s760 = sphi 0, %s746
      %s764 = sphi 0, %s764
      %s766 = sphi 0, %s764
      %s767 = sphi 0, %s766
      %s781 = sphi 0, %s767
      %s785 = sphi 0, %s785
      %s787 = sphi 0, %s785
      %s788 = sphi 0, %s787
      %s802 = sphi 0, %s788
      %s806 = sphi 0, %s806
      %s808 = sphi 0, %s806
      %s809 = sphi 0, %s808
      %s823 = sphi 0, %s809
      %s827 = sphi 0, %s827
      %s829 = sphi 0, %s827
      %s830 = sphi 0, %s829
      %s844 = sphi 0, %s830
      %s848 = sphi 0, %s848
      %s850 = sphi 0, %s848
      %s851 = sphi 0, %s850
      %s865 = sphi 0, %s851
      %s869 = sphi 0, %s869
      %s871 = sphi 0, %s869
      %s872 = sphi 0, %s871
      %s886 = sphi 0, %s872
      %s892 = sphi 0, %s894
      %s895 = sphi 0, %s892
      %s896 = sphi 0, %s895
      %s912 = sphi 0, %s896
    $region4: #{_lambda_.1} parent=1 // loop_header_branch
      %103 = sbr.rel (%p101) target = $region8
    $region5: #{_lambda_.1} parent=1 // loop_body
      %s105 = ssub.s32 %s100, 1
      %s106 = ssub.s32 %s100, 2
      %s107 = sadd.s32 %s100, 1
      %s108 = ssub.s32 %s100, %s107
      %p109 = scmp.eq.s32.totalorder %s108, 0
      %s111 = sadd.s32 %s110, 1
      %s112 = scalar_select %p109, %s110, %s111
      %p115 = pneg %p109
      %p116 = scmp.eq.s32.totalorder %s100, 1
      %p117 = por %p115, %p116
      %p118 = scmp.ne.s32.totalorder %s110, %s113
      %p119 = scmp.eq.s32.totalorder %s100, 0
      %p120 = por %p118, %p119
      %p121 = scmp.ne.s32.totalorder %s110, %s113
      %p122 = scmp.eq.s32.totalorder %s105, 1
      %p123 = por %p121, %p122
      %p124 = scmp.ne.s32.totalorder %s113, %s114
      %p125 = scmp.eq.s32.totalorder %s105, 0
      %p126 = por %p124, %p125
      %p127 = scmp.ne.s32.totalorder %s113, %s114
      %p128 = scmp.eq.s32.totalorder %s106, 1
      %p129 = por %p127, %p128
      %p131 = scmp.ne.s32.totalorder %s114, %s130
      %p132 = scmp.eq.s32.totalorder %s106, 0
      %p133 = por %p131, %p132
      %s135 = sadd.s32 %s134, 1
      %p138 = scmp.eq.s32.totalorder %s100, 1
      %p139 = scmp.ne.s32.totalorder %s134, %s136
      %p140 = scmp.eq.s32.totalorder %s100, 0
      %p141 = por %p139, %p140
      %p142 = scmp.ne.s32.totalorder %s134, %s136
      %p143 = scmp.eq.s32.totalorder %s105, 1
      %p144 = por %p142, %p143
      %p145 = scmp.ne.s32.totalorder %s136, %s137
      %p146 = scmp.eq.s32.totalorder %s105, 0
      %p147 = por %p145, %p146
      %p148 = scmp.ne.s32.totalorder %s136, %s137
      %p149 = scmp.eq.s32.totalorder %s106, 1
      %p150 = por %p148, %p149
      %p152 = scmp.ne.s32.totalorder %s137, %s151
      %p153 = scmp.eq.s32.totalorder %s106, 0
      %p154 = por %p152, %p153
      %s156 = sadd.s32 %s155, 1
      %p159 = scmp.eq.s32.totalorder %s100, 1
      %p160 = scmp.ne.s32.totalorder %s155, %s157
      %p161 = scmp.eq.s32.totalorder %s100, 0
      %p162 = por %p160, %p161
      %p163 = scmp.ne.s32.totalorder %s155, %s157
      %p164 = scmp.eq.s32.totalorder %s105, 1
      %p165 = por %p163, %p164
      %p166 = scmp.ne.s32.totalorder %s157, %s158
      %p167 = scmp.eq.s32.totalorder %s105, 0
      %p168 = por %p166, %p167
      %p169 = scmp.ne.s32.totalorder %s157, %s158
      %p170 = scmp.eq.s32.totalorder %s106, 1
      %p171 = por %p169, %p170
      %p173 = scmp.ne.s32.totalorder %s158, %s172
      %p174 = scmp.eq.s32.totalorder %s106, 0
      %p175 = por %p173, %p174
      %s177 = sadd.s32 %s176, 1
      %p180 = scmp.eq.s32.totalorder %s100, 1
      %p181 = scmp.ne.s32.totalorder %s176, %s178
      %p182 = scmp.eq.s32.totalorder %s100, 0
      %p183 = por %p181, %p182
      %p184 = scmp.ne.s32.totalorder %s176, %s178
      %p185 = scmp.eq.s32.totalorder %s105, 1
      %p186 = por %p184, %p185
      %p187 = scmp.ne.s32.totalorder %s178, %s179
      %p188 = scmp.eq.s32.totalorder %s105, 0
      %p189 = por %p187, %p188
      %p190 = scmp.ne.s32.totalorder %s178, %s179
      %p191 = scmp.eq.s32.totalorder %s106, 1
      %p192 = por %p190, %p191
      %p194 = scmp.ne.s32.totalorder %s179, %s193
      %p195 = scmp.eq.s32.totalorder %s106, 0
      %p196 = por %p194, %p195
      %s198 = sadd.s32 %s197, 1
      %p201 = scmp.eq.s32.totalorder %s100, 1
      %p202 = scmp.ne.s32.totalorder %s197, %s199
      %p203 = scmp.eq.s32.totalorder %s100, 0
      %p204 = por %p202, %p203
      %p205 = scmp.ne.s32.totalorder %s197, %s199
      %p206 = scmp.eq.s32.totalorder %s105, 1
      %p207 = por %p205, %p206
      %p208 = scmp.ne.s32.totalorder %s199, %s200
      %p209 = scmp.eq.s32.totalorder %s105, 0
      %p210 = por %p208, %p209
      %p211 = scmp.ne.s32.totalorder %s199, %s200
      %p212 = scmp.eq.s32.totalorder %s106, 1
      %p213 = por %p211, %p212
      %p215 = scmp.ne.s32.totalorder %s200, %s214
      %p216 = scmp.eq.s32.totalorder %s106, 0
      %p217 = por %p215, %p216
      %s219 = sadd.s32 %s218, 1
      %p222 = scmp.eq.s32.totalorder %s100, 1
      %p223 = scmp.ne.s32.totalorder %s218, %s220
      %p224 = scmp.eq.s32.totalorder %s100, 0
      %p225 = por %p223, %p224
      %p226 = scmp.ne.s32.totalorder %s218, %s220
      %p227 = scmp.eq.s32.totalorder %s105, 1
      %p228 = por %p226, %p227
      %p229 = scmp.ne.s32.totalorder %s220, %s221
      %p230 = scmp.eq.s32.totalorder %s105, 0
      %p231 = por %p229, %p230
      %p232 = scmp.ne.s32.totalorder %s220, %s221
      %p233 = scmp.eq.s32.totalorder %s106, 1
      %p234 = por %p232, %p233
      %p236 = scmp.ne.s32.totalorder %s221, %s235
      %p237 = scmp.eq.s32.totalorder %s106, 0
      %p238 = por %p236, %p237
      %s240 = sadd.s32 %s239, 1
      %p243 = scmp.eq.s32.totalorder %s100, 1
      %p244 = scmp.ne.s32.totalorder %s239, %s241
      %p245 = scmp.eq.s32.totalorder %s100, 0
      %p246 = por %p244, %p245
      %p247 = scmp.ne.s32.totalorder %s239, %s241
      %p248 = scmp.eq.s32.totalorder %s105, 1
      %p249 = por %p247, %p248
      %p250 = scmp.ne.s32.totalorder %s241, %s242
      %p251 = scmp.eq.s32.totalorder %s105, 0
      %p252 = por %p250, %p251
      %p253 = scmp.ne.s32.totalorder %s241, %s242
      %p254 = scmp.eq.s32.totalorder %s106, 1
      %p255 = por %p253, %p254
      %p257 = scmp.ne.s32.totalorder %s242, %s256
      %p258 = scmp.eq.s32.totalorder %s106, 0
      %p259 = por %p257, %p258
      %s261 = sadd.s32 %s260, 1
      %p264 = scmp.eq.s32.totalorder %s100, 1
      %p265 = scmp.ne.s32.totalorder %s260, %s262
      %p266 = scmp.eq.s32.totalorder %s100, 0
      %p267 = por %p265, %p266
      %p268 = scmp.ne.s32.totalorder %s260, %s262
      %p269 = scmp.eq.s32.totalorder %s105, 1
      %p270 = por %p268, %p269
      %p271 = scmp.ne.s32.totalorder %s262, %s263
      %p272 = scmp.eq.s32.totalorder %s105, 0
      %p273 = por %p271, %p272
      %p274 = scmp.ne.s32.totalorder %s262, %s263
      %p275 = scmp.eq.s32.totalorder %s106, 1
      %p276 = por %p274, %p275
      %p278 = scmp.ne.s32.totalorder %s263, %s277
      %p279 = scmp.eq.s32.totalorder %s106, 0
      %p280 = por %p278, %p279
      %s282 = sadd.s32 %s281, 1
      %p285 = scmp.eq.s32.totalorder %s100, 1
      %p286 = scmp.ne.s32.totalorder %s281, %s283
      %p287 = scmp.eq.s32.totalorder %s100, 0
      %p288 = por %p286, %p287
      %p289 = scmp.ne.s32.totalorder %s281, %s283
      %p290 = scmp.eq.s32.totalorder %s105, 1
      %p291 = por %p289, %p290
      %p292 = scmp.ne.s32.totalorder %s283, %s284
      %p293 = scmp.eq.s32.totalorder %s105, 0
      %p294 = por %p292, %p293
      %p295 = scmp.ne.s32.totalorder %s283, %s284
      %p296 = scmp.eq.s32.totalorder %s106, 1
      %p297 = por %p295, %p296
      %p299 = scmp.ne.s32.totalorder %s284, %s298
      %p300 = scmp.eq.s32.totalorder %s106, 0
      %p301 = por %p299, %p300
      %s303 = sadd.s32 %s302, 1
      %p306 = scmp.eq.s32.totalorder %s100, 1
      %p307 = scmp.ne.s32.totalorder %s302, %s304
      %p308 = scmp.eq.s32.totalorder %s100, 0
      %p309 = por %p307, %p308
      %p310 = scmp.ne.s32.totalorder %s302, %s304
      %p311 = scmp.eq.s32.totalorder %s105, 1
      %p312 = por %p310, %p311
      %p313 = scmp.ne.s32.totalorder %s304, %s305
      %p314 = scmp.eq.s32.totalorder %s105, 0
      %p315 = por %p313, %p314
      %p316 = scmp.ne.s32.totalorder %s304, %s305
      %p317 = scmp.eq.s32.totalorder %s106, 1
      %p318 = por %p316, %p317
      %p320 = scmp.ne.s32.totalorder %s305, %s319
      %p321 = scmp.eq.s32.totalorder %s106, 0
      %p322 = por %p320, %p321
      %s324 = sadd.s32 %s323, 1
      %p327 = scmp.eq.s32.totalorder %s100, 1
      %p328 = scmp.ne.s32.totalorder %s323, %s325
      %p329 = scmp.eq.s32.totalorder %s100, 0
      %p330 = por %p328, %p329
      %p331 = scmp.ne.s32.totalorder %s323, %s325
      %p332 = scmp.eq.s32.totalorder %s105, 1
      %p333 = por %p331, %p332
      %p334 = scmp.ne.s32.totalorder %s325, %s326
      %p335 = scmp.eq.s32.totalorder %s105, 0
      %p336 = por %p334, %p335
      %p337 = scmp.ne.s32.totalorder %s325, %s326
      %p338 = scmp.eq.s32.totalorder %s106, 1
      %p339 = por %p337, %p338
      %p341 = scmp.ne.s32.totalorder %s326, %s340
      %p342 = scmp.eq.s32.totalorder %s106, 0
      %p343 = por %p341, %p342
      %s345 = sadd.s32 %s344, 1
      %p348 = scmp.eq.s32.totalorder %s100, 1
      %p349 = scmp.ne.s32.totalorder %s344, %s346
      %p350 = scmp.eq.s32.totalorder %s100, 0
      %p351 = por %p349, %p350
      %p352 = scmp.ne.s32.totalorder %s344, %s346
      %p353 = scmp.eq.s32.totalorder %s105, 1
      %p354 = por %p352, %p353
      %p355 = scmp.ne.s32.totalorder %s346, %s347
      %p356 = scmp.eq.s32.totalorder %s105, 0
      %p357 = por %p355, %p356
      %p358 = scmp.ne.s32.totalorder %s346, %s347
      %p359 = scmp.eq.s32.totalorder %s106, 1
      %p360 = por %p358, %p359
      %p362 = scmp.ne.s32.totalorder %s347, %s361
      %p363 = scmp.eq.s32.totalorder %s106, 0
      %p364 = por %p362, %p363
      %s366 = sadd.s32 %s365, 1
      %p369 = scmp.eq.s32.totalorder %s100, 1
      %p370 = scmp.ne.s32.totalorder %s365, %s367
      %p371 = scmp.eq.s32.totalorder %s100, 0
      %p372 = por %p370, %p371
      %p373 = scmp.ne.s32.totalorder %s365, %s367
      %p374 = scmp.eq.s32.totalorder %s105, 1
      %p375 = por %p373, %p374
      %p376 = scmp.ne.s32.totalorder %s367, %s368
      %p377 = scmp.eq.s32.totalorder %s105, 0
      %p378 = por %p376, %p377
      %p379 = scmp.ne.s32.totalorder %s367, %s368
      %p380 = scmp.eq.s32.totalorder %s106, 1
      %p381 = por %p379, %p380
      %p383 = scmp.ne.s32.totalorder %s368, %s382
      %p384 = scmp.eq.s32.totalorder %s106, 0
      %p385 = por %p383, %p384
      %s387 = sadd.s32 %s386, 1
      %p390 = scmp.eq.s32.totalorder %s100, 1
      %p391 = scmp.ne.s32.totalorder %s386, %s388
      %p392 = scmp.eq.s32.totalorder %s100, 0
      %p393 = por %p391, %p392
      %p394 = scmp.ne.s32.totalorder %s386, %s388
      %p395 = scmp.eq.s32.totalorder %s105, 1
      %p396 = por %p394, %p395
      %p397 = scmp.ne.s32.totalorder %s388, %s389
      %p398 = scmp.eq.s32.totalorder %s105, 0
      %p399 = por %p397, %p398
      %p400 = scmp.ne.s32.totalorder %s388, %s389
      %p401 = scmp.eq.s32.totalorder %s106, 1
      %p402 = por %p400, %p401
      %p404 = scmp.ne.s32.totalorder %s389, %s403
      %p405 = scmp.eq.s32.totalorder %s106, 0
      %p406 = por %p404, %p405
      %s408 = sadd.s32 %s407, 1
      %p411 = scmp.eq.s32.totalorder %s100, 1
      %p412 = scmp.ne.s32.totalorder %s407, %s409
      %p413 = scmp.eq.s32.totalorder %s100, 0
      %p414 = por %p412, %p413
      %p415 = scmp.ne.s32.totalorder %s407, %s409
      %p416 = scmp.eq.s32.totalorder %s105, 1
      %p417 = por %p415, %p416
      %p418 = scmp.ne.s32.totalorder %s409, %s410
      %p419 = scmp.eq.s32.totalorder %s105, 0
      %p420 = por %p418, %p419
      %p421 = scmp.ne.s32.totalorder %s409, %s410
      %p422 = scmp.eq.s32.totalorder %s106, 1
      %p423 = por %p421, %p422
      %p425 = scmp.ne.s32.totalorder %s410, %s424
      %p426 = scmp.eq.s32.totalorder %s106, 0
      %p427 = por %p425, %p426
      %s429 = sadd.s32 %s428, 1
      %p432 = scmp.eq.s32.totalorder %s100, 1
      %p433 = scmp.ne.s32.totalorder %s428, %s430
      %p434 = scmp.eq.s32.totalorder %s100, 0
      %p435 = por %p433, %p434
      %p436 = scmp.ne.s32.totalorder %s428, %s430
      %p437 = scmp.eq.s32.totalorder %s105, 1
      %p438 = por %p436, %p437
      %p439 = scmp.ne.s32.totalorder %s430, %s431
      %p440 = scmp.eq.s32.totalorder %s105, 0
      %p441 = por %p439, %p440
      %p442 = scmp.ne.s32.totalorder %s430, %s431
      %p443 = scmp.eq.s32.totalorder %s106, 1
      %p444 = por %p442, %p443
      %p446 = scmp.ne.s32.totalorder %s431, %s445
      %p447 = scmp.eq.s32.totalorder %s106, 0
      %p448 = por %p446, %p447
      %s450 = sadd.s32 %s449, 1
      %p453 = scmp.eq.s32.totalorder %s100, 1
      %p454 = scmp.ne.s32.totalorder %s449, %s451
      %p455 = scmp.eq.s32.totalorder %s100, 0
      %p456 = por %p454, %p455
      %p457 = scmp.ne.s32.totalorder %s449, %s451
      %p458 = scmp.eq.s32.totalorder %s105, 1
      %p459 = por %p457, %p458
      %p460 = scmp.ne.s32.totalorder %s451, %s452
      %p461 = scmp.eq.s32.totalorder %s105, 0
      %p462 = por %p460, %p461
      %p463 = scmp.ne.s32.totalorder %s451, %s452
      %p464 = scmp.eq.s32.totalorder %s106, 1
      %p465 = por %p463, %p464
      %p467 = scmp.ne.s32.totalorder %s452, %s466
      %p468 = scmp.eq.s32.totalorder %s106, 0
      %p469 = por %p467, %p468
      %s471 = sadd.s32 %s470, 1
      %p474 = scmp.eq.s32.totalorder %s100, 1
      %p475 = scmp.ne.s32.totalorder %s470, %s472
      %p476 = scmp.eq.s32.totalorder %s100, 0
      %p477 = por %p475, %p476
      %p478 = scmp.ne.s32.totalorder %s470, %s472
      %p479 = scmp.eq.s32.totalorder %s105, 1
      %p480 = por %p478, %p479
      %p481 = scmp.ne.s32.totalorder %s472, %s473
      %p482 = scmp.eq.s32.totalorder %s105, 0
      %p483 = por %p481, %p482
      %p484 = scmp.ne.s32.totalorder %s472, %s473
      %p485 = scmp.eq.s32.totalorder %s106, 1
      %p486 = por %p484, %p485
      %p488 = scmp.ne.s32.totalorder %s473, %s487
      %p489 = scmp.eq.s32.totalorder %s106, 0
      %p490 = por %p488, %p489
      %s492 = sadd.s32 %s491, 1
      %p495 = scmp.eq.s32.totalorder %s100, 1
      %p496 = scmp.ne.s32.totalorder %s491, %s493
      %p497 = scmp.eq.s32.totalorder %s100, 0
      %p498 = por %p496, %p497
      %p499 = scmp.ne.s32.totalorder %s491, %s493
      %p500 = scmp.eq.s32.totalorder %s105, 1
      %p501 = por %p499, %p500
      %p502 = scmp.ne.s32.totalorder %s493, %s494
      %p503 = scmp.eq.s32.totalorder %s105, 0
      %p504 = por %p502, %p503
      %p505 = scmp.ne.s32.totalorder %s493, %s494
      %p506 = scmp.eq.s32.totalorder %s106, 1
      %p507 = por %p505, %p506
      %p509 = scmp.ne.s32.totalorder %s494, %s508
      %p510 = scmp.eq.s32.totalorder %s106, 0
      %p511 = por %p509, %p510
      %s513 = sadd.s32 %s512, 1
      %p516 = scmp.eq.s32.totalorder %s100, 1
      %p517 = scmp.ne.s32.totalorder %s512, %s514
      %p518 = scmp.eq.s32.totalorder %s100, 0
      %p519 = por %p517, %p518
      %p520 = scmp.ne.s32.totalorder %s512, %s514
      %p521 = scmp.eq.s32.totalorder %s105, 1
      %p522 = por %p520, %p521
      %p523 = scmp.ne.s32.totalorder %s514, %s515
      %p524 = scmp.eq.s32.totalorder %s105, 0
      %p525 = por %p523, %p524
      %p526 = scmp.ne.s32.totalorder %s514, %s515
      %p527 = scmp.eq.s32.totalorder %s106, 1
      %p528 = por %p526, %p527
      %p530 = scmp.ne.s32.totalorder %s515, %s529
      %p531 = scmp.eq.s32.totalorder %s106, 0
      %p532 = por %p530, %p531
      %s534 = sadd.s32 %s533, 1
      %p537 = scmp.eq.s32.totalorder %s100, 1
      %p538 = scmp.ne.s32.totalorder %s533, %s535
      %p539 = scmp.eq.s32.totalorder %s100, 0
      %p540 = por %p538, %p539
      %p541 = scmp.ne.s32.totalorder %s533, %s535
      %p542 = scmp.eq.s32.totalorder %s105, 1
      %p543 = por %p541, %p542
      %p544 = scmp.ne.s32.totalorder %s535, %s536
      %p545 = scmp.eq.s32.totalorder %s105, 0
      %p546 = por %p544, %p545
      %p547 = scmp.ne.s32.totalorder %s535, %s536
      %p548 = scmp.eq.s32.totalorder %s106, 1
      %p549 = por %p547, %p548
      %p551 = scmp.ne.s32.totalorder %s536, %s550
      %p552 = scmp.eq.s32.totalorder %s106, 0
      %p553 = por %p551, %p552
      %s555 = sadd.s32 %s554, 1
      %p558 = scmp.eq.s32.totalorder %s100, 1
      %p559 = scmp.ne.s32.totalorder %s554, %s556
      %p560 = scmp.eq.s32.totalorder %s100, 0
      %p561 = por %p559, %p560
      %p562 = scmp.ne.s32.totalorder %s554, %s556
      %p563 = scmp.eq.s32.totalorder %s105, 1
      %p564 = por %p562, %p563
      %p565 = scmp.ne.s32.totalorder %s556, %s557
      %p566 = scmp.eq.s32.totalorder %s105, 0
      %p567 = por %p565, %p566
      %p568 = scmp.ne.s32.totalorder %s556, %s557
      %p569 = scmp.eq.s32.totalorder %s106, 1
      %p570 = por %p568, %p569
      %p572 = scmp.ne.s32.totalorder %s557, %s571
      %p573 = scmp.eq.s32.totalorder %s106, 0
      %p574 = por %p572, %p573
      %s576 = sadd.s32 %s575, 1
      %p579 = scmp.eq.s32.totalorder %s100, 1
      %p580 = scmp.ne.s32.totalorder %s575, %s577
      %p581 = scmp.eq.s32.totalorder %s100, 0
      %p582 = por %p580, %p581
      %p583 = scmp.ne.s32.totalorder %s575, %s577
      %p584 = scmp.eq.s32.totalorder %s105, 1
      %p585 = por %p583, %p584
      %p586 = scmp.ne.s32.totalorder %s577, %s578
      %p587 = scmp.eq.s32.totalorder %s105, 0
      %p588 = por %p586, %p587
      %p589 = scmp.ne.s32.totalorder %s577, %s578
      %p590 = scmp.eq.s32.totalorder %s106, 1
      %p591 = por %p589, %p590
      %p593 = scmp.ne.s32.totalorder %s578, %s592
      %p594 = scmp.eq.s32.totalorder %s106, 0
      %p595 = por %p593, %p594
      %s597 = sadd.s32 %s596, 1
      %p600 = scmp.eq.s32.totalorder %s100, 1
      %p601 = scmp.ne.s32.totalorder %s596, %s598
      %p602 = scmp.eq.s32.totalorder %s100, 0
      %p603 = por %p601, %p602
      %p604 = scmp.ne.s32.totalorder %s596, %s598
      %p605 = scmp.eq.s32.totalorder %s105, 1
      %p606 = por %p604, %p605
      %p607 = scmp.ne.s32.totalorder %s598, %s599
      %p608 = scmp.eq.s32.totalorder %s105, 0
      %p609 = por %p607, %p608
      %p610 = scmp.ne.s32.totalorder %s598, %s599
      %p611 = scmp.eq.s32.totalorder %s106, 1
      %p612 = por %p610, %p611
      %p614 = scmp.ne.s32.totalorder %s599, %s613
      %p615 = scmp.eq.s32.totalorder %s106, 0
      %p616 = por %p614, %p615
      %s618 = sadd.s32 %s617, 1
      %p621 = scmp.eq.s32.totalorder %s100, 1
      %p622 = scmp.ne.s32.totalorder %s617, %s619
      %p623 = scmp.eq.s32.totalorder %s100, 0
      %p624 = por %p622, %p623
      %p625 = scmp.ne.s32.totalorder %s617, %s619
      %p626 = scmp.eq.s32.totalorder %s105, 1
      %p627 = por %p625, %p626
      %p628 = scmp.ne.s32.totalorder %s619, %s620
      %p629 = scmp.eq.s32.totalorder %s105, 0
      %p630 = por %p628, %p629
      %p631 = scmp.ne.s32.totalorder %s619, %s620
      %p632 = scmp.eq.s32.totalorder %s106, 1
      %p633 = por %p631, %p632
      %p635 = scmp.ne.s32.totalorder %s620, %s634
      %p636 = scmp.eq.s32.totalorder %s106, 0
      %p637 = por %p635, %p636
      %s639 = sadd.s32 %s638, 1
      %p642 = scmp.eq.s32.totalorder %s100, 1
      %p643 = scmp.ne.s32.totalorder %s638, %s640
      %p644 = scmp.eq.s32.totalorder %s100, 0
      %p645 = por %p643, %p644
      %p646 = scmp.ne.s32.totalorder %s638, %s640
      %p647 = scmp.eq.s32.totalorder %s105, 1
      %p648 = por %p646, %p647
      %p649 = scmp.ne.s32.totalorder %s640, %s641
      %p650 = scmp.eq.s32.totalorder %s105, 0
      %p651 = por %p649, %p650
      %p652 = scmp.ne.s32.totalorder %s640, %s641
      %p653 = scmp.eq.s32.totalorder %s106, 1
      %p654 = por %p652, %p653
      %p656 = scmp.ne.s32.totalorder %s641, %s655
      %p657 = scmp.eq.s32.totalorder %s106, 0
      %p658 = por %p656, %p657
      %s660 = sadd.s32 %s659, 1
      %p663 = scmp.eq.s32.totalorder %s100, 1
      %p664 = scmp.ne.s32.totalorder %s659, %s661
      %p665 = scmp.eq.s32.totalorder %s100, 0
      %p666 = por %p664, %p665
      %p667 = scmp.ne.s32.totalorder %s659, %s661
      %p668 = scmp.eq.s32.totalorder %s105, 1
      %p669 = por %p667, %p668
      %p670 = scmp.ne.s32.totalorder %s661, %s662
      %p671 = scmp.eq.s32.totalorder %s105, 0
      %p672 = por %p670, %p671
      %p673 = scmp.ne.s32.totalorder %s661, %s662
      %p674 = scmp.eq.s32.totalorder %s106, 1
      %p675 = por %p673, %p674
      %p677 = scmp.ne.s32.totalorder %s662, %s676
      %p678 = scmp.eq.s32.totalorder %s106, 0
      %p679 = por %p677, %p678
      %s681 = sadd.s32 %s680, 1
      %p684 = scmp.eq.s32.totalorder %s100, 1
      %p685 = scmp.ne.s32.totalorder %s680, %s682
      %p686 = scmp.eq.s32.totalorder %s100, 0
      %p687 = por %p685, %p686
      %p688 = scmp.ne.s32.totalorder %s680, %s682
      %p689 = scmp.eq.s32.totalorder %s105, 1
      %p690 = por %p688, %p689
      %p691 = scmp.ne.s32.totalorder %s682, %s683
      %p692 = scmp.eq.s32.totalorder %s105, 0
      %p693 = por %p691, %p692
      %p694 = scmp.ne.s32.totalorder %s682, %s683
      %p695 = scmp.eq.s32.totalorder %s106, 1
      %p696 = por %p694, %p695
      %p698 = scmp.ne.s32.totalorder %s683, %s697
      %p699 = scmp.eq.s32.totalorder %s106, 0
      %p700 = por %p698, %p699
      %s702 = sadd.s32 %s701, 1
      %p705 = scmp.eq.s32.totalorder %s100, 1
      %p706 = scmp.ne.s32.totalorder %s701, %s703
      %p707 = scmp.eq.s32.totalorder %s100, 0
      %p708 = por %p706, %p707
      %p709 = scmp.ne.s32.totalorder %s701, %s703
      %p710 = scmp.eq.s32.totalorder %s105, 1
      %p711 = por %p709, %p710
      %p712 = scmp.ne.s32.totalorder %s703, %s704
      %p713 = scmp.eq.s32.totalorder %s105, 0
      %p714 = por %p712, %p713
      %p715 = scmp.ne.s32.totalorder %s703, %s704
      %p716 = scmp.eq.s32.totalorder %s106, 1
      %p717 = por %p715, %p716
      %p719 = scmp.ne.s32.totalorder %s704, %s718
      %p720 = scmp.eq.s32.totalorder %s106, 0
      %p721 = por %p719, %p720
      %s723 = sadd.s32 %s722, 1
      %p726 = scmp.eq.s32.totalorder %s100, 1
      %p727 = scmp.ne.s32.totalorder %s722, %s724
      %p728 = scmp.eq.s32.totalorder %s100, 0
      %p729 = por %p727, %p728
      %p730 = scmp.ne.s32.totalorder %s722, %s724
      %p731 = scmp.eq.s32.totalorder %s105, 1
      %p732 = por %p730, %p731
      %p733 = scmp.ne.s32.totalorder %s724, %s725
      %p734 = scmp.eq.s32.totalorder %s105, 0
      %p735 = por %p733, %p734
      %p736 = scmp.ne.s32.totalorder %s724, %s725
      %p737 = scmp.eq.s32.totalorder %s106, 1
      %p738 = por %p736, %p737
      %p740 = scmp.ne.s32.totalorder %s725, %s739
      %p741 = scmp.eq.s32.totalorder %s106, 0
      %p742 = por %p740, %p741
      %s744 = sadd.s32 %s743, 1
      %p747 = scmp.eq.s32.totalorder %s100, 1
      %p748 = scmp.ne.s32.totalorder %s743, %s745
      %p749 = scmp.eq.s32.totalorder %s100, 0
      %p750 = por %p748, %p749
      %p751 = scmp.ne.s32.totalorder %s743, %s745
      %p752 = scmp.eq.s32.totalorder %s105, 1
      %p753 = por %p751, %p752
      %p754 = scmp.ne.s32.totalorder %s745, %s746
      %p755 = scmp.eq.s32.totalorder %s105, 0
      %p756 = por %p754, %p755
      %p757 = scmp.ne.s32.totalorder %s745, %s746
      %p758 = scmp.eq.s32.totalorder %s106, 1
      %p759 = por %p757, %p758
      %p761 = scmp.ne.s32.totalorder %s746, %s760
      %p762 = scmp.eq.s32.totalorder %s106, 0
      %p763 = por %p761, %p762
      %s765 = sadd.s32 %s764, 1
      %p768 = scmp.eq.s32.totalorder %s100, 1
      %p769 = scmp.ne.s32.totalorder %s764, %s766
      %p770 = scmp.eq.s32.totalorder %s100, 0
      %p771 = por %p769, %p770
      %p772 = scmp.ne.s32.totalorder %s764, %s766
      %p773 = scmp.eq.s32.totalorder %s105, 1
      %p774 = por %p772, %p773
      %p775 = scmp.ne.s32.totalorder %s766, %s767
      %p776 = scmp.eq.s32.totalorder %s105, 0
      %p777 = por %p775, %p776
      %p778 = scmp.ne.s32.totalorder %s766, %s767
      %p779 = scmp.eq.s32.totalorder %s106, 1
      %p780 = por %p778, %p779
      %p782 = scmp.ne.s32.totalorder %s767, %s781
      %p783 = scmp.eq.s32.totalorder %s106, 0
      %p784 = por %p782, %p783
      %s786 = sadd.s32 %s785, 1
      %p789 = scmp.eq.s32.totalorder %s100, 1
      %p790 = scmp.ne.s32.totalorder %s785, %s787
      %p791 = scmp.eq.s32.totalorder %s100, 0
      %p792 = por %p790, %p791
      %p793 = scmp.ne.s32.totalorder %s785, %s787
      %p794 = scmp.eq.s32.totalorder %s105, 1
      %p795 = por %p793, %p794
      %p796 = scmp.ne.s32.totalorder %s787, %s788
      %p797 = scmp.eq.s32.totalorder %s105, 0
      %p798 = por %p796, %p797
      %p799 = scmp.ne.s32.totalorder %s787, %s788
      %p800 = scmp.eq.s32.totalorder %s106, 1
      %p801 = por %p799, %p800
      %p803 = scmp.ne.s32.totalorder %s788, %s802
      %p804 = scmp.eq.s32.totalorder %s106, 0
      %p805 = por %p803, %p804
      %s807 = sadd.s32 %s806, 1
      %p810 = scmp.eq.s32.totalorder %s100, 1
      %p811 = scmp.ne.s32.totalorder %s806, %s808
      %p812 = scmp.eq.s32.totalorder %s100, 0
      %p813 = por %p811, %p812
      %p814 = scmp.ne.s32.totalorder %s806, %s808
      %p815 = scmp.eq.s32.totalorder %s105, 1
      %p816 = por %p814, %p815
      %p817 = scmp.ne.s32.totalorder %s808, %s809
      %p818 = scmp.eq.s32.totalorder %s105, 0
      %p819 = por %p817, %p818
      %p820 = scmp.ne.s32.totalorder %s808, %s809
      %p821 = scmp.eq.s32.totalorder %s106, 1
      %p822 = por %p820, %p821
      %p824 = scmp.ne.s32.totalorder %s809, %s823
      %p825 = scmp.eq.s32.totalorder %s106, 0
      %p826 = por %p824, %p825
      %s828 = sadd.s32 %s827, 1
      %p831 = scmp.eq.s32.totalorder %s100, 1
      %p832 = scmp.ne.s32.totalorder %s827, %s829
      %p833 = scmp.eq.s32.totalorder %s100, 0
      %p834 = por %p832, %p833
      %p835 = scmp.ne.s32.totalorder %s827, %s829
      %p836 = scmp.eq.s32.totalorder %s105, 1
      %p837 = por %p835, %p836
      %p838 = scmp.ne.s32.totalorder %s829, %s830
      %p839 = scmp.eq.s32.totalorder %s105, 0
      %p840 = por %p838, %p839
      %p841 = scmp.ne.s32.totalorder %s829, %s830
      %p842 = scmp.eq.s32.totalorder %s106, 1
      %p843 = por %p841, %p842
      %p845 = scmp.ne.s32.totalorder %s830, %s844
      %p846 = scmp.eq.s32.totalorder %s106, 0
      %p847 = por %p845, %p846
      %s849 = sadd.s32 %s848, 1
      %p852 = scmp.eq.s32.totalorder %s100, 1
      %p853 = scmp.ne.s32.totalorder %s848, %s850
      %p854 = scmp.eq.s32.totalorder %s100, 0
      %p855 = por %p853, %p854
      %p856 = scmp.ne.s32.totalorder %s848, %s850
      %p857 = scmp.eq.s32.totalorder %s105, 1
      %p858 = por %p856, %p857
      %p859 = scmp.ne.s32.totalorder %s850, %s851
      %p860 = scmp.eq.s32.totalorder %s105, 0
      %p861 = por %p859, %p860
      %p862 = scmp.ne.s32.totalorder %s850, %s851
      %p863 = scmp.eq.s32.totalorder %s106, 1
      %p864 = por %p862, %p863
      %p866 = scmp.ne.s32.totalorder %s851, %s865
      %p867 = scmp.eq.s32.totalorder %s106, 0
      %p868 = por %p866, %p867
      %s870 = sadd.s32 %s869, 1
      %p873 = scmp.eq.s32.totalorder %s100, 1
      %p874 = scmp.ne.s32.totalorder %s869, %s871
      %p875 = scmp.eq.s32.totalorder %s100, 0
      %p876 = por %p874, %p875
      %p877 = scmp.ne.s32.totalorder %s869, %s871
      %p878 = scmp.eq.s32.totalorder %s105, 1
      %p879 = por %p877, %p878
      %p880 = scmp.ne.s32.totalorder %s871, %s872
      %p881 = scmp.eq.s32.totalorder %s105, 0
      %p882 = por %p880, %p881
      %p883 = scmp.ne.s32.totalorder %s871, %s872
      %p884 = scmp.eq.s32.totalorder %s106, 1
      %p885 = por %p883, %p884
      %p887 = scmp.ne.s32.totalorder %s872, %s886
      %p888 = scmp.eq.s32.totalorder %s106, 0
      %p889 = por %p887, %p888
      %s890 = ssub.s32 %s100, %s107
      %p891 = scmp.eq.s32.totalorder %s890, 0
      %s893 = sadd.s32 %s892, 1
      %s894 = scalar_select %p891, %s892, %s893
      %p897 = pneg %p891
      %p898 = scmp.eq.s32.totalorder %s100, 1
      %p899 = por %p897, %p898
      %p900 = scmp.ne.s32.totalorder %s892, %s895
      %p901 = scmp.eq.s32.totalorder %s100, 0
      %p902 = por %p900, %p901
      %p903 = scmp.ne.s32.totalorder %s892, %s895
      %p904 = scmp.eq.s32.totalorder %s105, 1
      %p905 = por %p903, %p904
      %p906 = scmp.ne.s32.totalorder %s895, %s896
      %p907 = scmp.eq.s32.totalorder %s105, 0
      %p908 = por %p906, %p907
      %p909 = scmp.ne.s32.totalorder %s895, %s896
      %p910 = scmp.eq.s32.totalorder %s106, 1
      %p911 = por %p909, %p910
      %p913 = scmp.ne.s32.totalorder %s896, %s912
      %p914 = scmp.eq.s32.totalorder %s106, 0
      %p915 = por %p913, %p914
      %p916 = scmp.le.s32.totalorder 1, %s100
      %p917 = scmp.lt.s32.totalorder %s100, 3
      %p918 = pnand %p916, %p917
      %p919 = pneg %p918
      // Predicated region
      $region9: #{_lambda_.1} parent=5 // pred_check
        _
      $region10: #{_lambda_.1} parent=5 // pred_check_branch
        %921 = sbr.rel (%p918) target = $region12
      $region11: #{_lambda_.1} parent=5 // pred_region
        %s922 = ssub.s32 %s100, 1
        // Predicated region
        $region13: #{_lambda_.1} parent=11 // pred_check
          %p923 = pneg %p147
        $region14: #{_lambda_.1} parent=11 // pred_check_branch
          %925 = sbr.rel (%p923) target = $region16
        $region15: #{_lambda_.1} parent=11 // pred_region
          %s927 = ssub.s32 1024, 1024
          %928 = vsyncadd [#allocation6], %s927
          %s929 = sshll.u32 [#allocation5], 4
          %s930 = int_to_ptr.vmem [resolvable:$true] %s929
          %935 = dma.hbm_to_vmem [thread:$0]  %s3, 1024, %s930, [#allocation6], 128, 128, 8
        $region16: #{_lambda_.1} parent=11 // pred_fallthru
          _
        // Predicated region
        $region17: #{_lambda_.1} parent=11 // pred_check
          %p936 = pneg %p168
        $region18: #{_lambda_.1} parent=11 // pred_check_branch
          %938 = sbr.rel (%p936) target = $region20
        $region19: #{_lambda_.1} parent=11 // pred_region
          %s940 = ssub.s32 16, 16
          %941 = vsyncadd [#allocation6], %s940
          %s943 = sshll.u32 [#allocation7], 4
          %s944 = int_to_ptr.vmem [resolvable:$true] %s943
          %946 = dma.hbm_to_vmem [thread:$0]  %s5, 16, %s944, [#allocation6]
        $region20: #{_lambda_.1} parent=11 // pred_fallthru
          _
        // Predicated region
        $region21: #{_lambda_.1} parent=11 // pred_check
          %p947 = pneg %p189
        $region22: #{_lambda_.1} parent=11 // pred_check_branch
          %949 = sbr.rel (%p947) target = $region24
        $region23: #{_lambda_.1} parent=11 // pred_region
          %s951 = ssub.s32 1024, 1024
          %952 = vsyncadd [#allocation9], %s951
          %s953 = sshll.u32 [#allocation8], 4
          %s954 = int_to_ptr.vmem [resolvable:$true] %s953
          %959 = dma.hbm_to_vmem [thread:$0]  %s7, 1024, %s954, [#allocation9], 128, 128, 8
        $region24: #{_lambda_.1} parent=11 // pred_fallthru
          _
        // Predicated region
        $region25: #{_lambda_.1} parent=11 // pred_check
          %p960 = pneg %p210
        $region26: #{_lambda_.1} parent=11 // pred_check_branch
          %962 = sbr.rel (%p960) target = $region28
        $region27: #{_lambda_.1} parent=11 // pred_region
          %s964 = ssub.s32 16, 16
          %965 = vsyncadd [#allocation9], %s964
          %s967 = sshll.u32 [#allocation10], 4
          %s968 = int_to_ptr.vmem [resolvable:$true] %s967
          %970 = dma.hbm_to_vmem [thread:$0]  %s9, 16, %s968, [#allocation9]
        $region28: #{_lambda_.1} parent=11 // pred_fallthru
          _
        // Predicated region
        $region29: #{_lambda_.1} parent=11 // pred_check
          %p971 = pneg %p231
        $region30: #{_lambda_.1} parent=11 // pred_check_branch
          %973 = sbr.rel (%p971) target = $region32
        $region31: #{_lambda_.1} parent=11 // pred_region
          %s975 = ssub.s32 16, 16
          %976 = vsyncadd [#allocation12], %s975
          %s978 = sshll.u32 [#allocation11], 4
          %s979 = int_to_ptr.vmem [resolvable:$true] %s978
          %981 = dma.hbm_to_vmem [thread:$0]  %s11, 16, %s979, [#allocation12]
        $region32: #{_lambda_.1} parent=11 // pred_fallthru
          _
        // Predicated region
        $region33: #{_lambda_.1} parent=11 // pred_check
          %p982 = pneg %p252
        $region34: #{_lambda_.1} parent=11 // pred_check_branch
          %984 = sbr.rel (%p982) target = $region36
        $region35: #{_lambda_.1} parent=11 // pred_region
          %s986 = ssub.s32 8192, 8192
          %987 = vsyncadd [#allocation12], %s986
          %s988 = sshll.u32 [#allocation13], 4
          %s989 = int_to_ptr.vmem [resolvable:$true] %s988
          %994 = dma.hbm_to_vmem [thread:$0]  %s13, 8192, %s989, [#allocation12], 1024, 1024, 64
        $region36: #{_lambda_.1} parent=11 // pred_fallthru
          _
        // Predicated region
        $region37: #{_lambda_.1} parent=11 // pred_check
          %p995 = pneg %p273
        $region38: #{_lambda_.1} parent=11 // pred_check_branch
          %997 = sbr.rel (%p995) target = $region40
        $region39: #{_lambda_.1} parent=11 // pred_region
          %s999 = ssub.s32 128, 128
          %1000 = vsyncadd [#allocation15], %s999
          %s1002 = sshll.u32 [#allocation14], 4
          %s1003 = int_to_ptr.vmem [resolvable:$true] %s1002
          %1005 = dma.hbm_to_vmem [thread:$0]  %s15, 128, %s1003, [#allocation15]
        $region40: #{_lambda_.1} parent=11 // pred_fallthru
          _
        // Predicated region
        $region41: #{_lambda_.1} parent=11 // pred_check
          %p1006 = pneg %p294
        $region42: #{_lambda_.1} parent=11 // pred_check_branch
          %1008 = sbr.rel (%p1006) target = $region44
        $region43: #{_lambda_.1} parent=11 // pred_region
          %s1010 = ssub.s32 256, 256
          %1011 = vsyncadd [#allocation15], %s1010
          %s1012 = sshll.u32 [#allocation16], 4
          %s1013 = int_to_ptr.vmem [resolvable:$true] %s1012
          %1018 = dma.hbm_to_vmem [thread:$0]  %s17, 256, %s1013, [#allocation15], 128, 128, 8
        $region44: #{_lambda_.1} parent=11 // pred_fallthru
          _
        // Predicated region
        $region45: #{_lambda_.1} parent=11 // pred_check
          %p1019 = pneg %p315
        $region46: #{_lambda_.1} parent=11 // pred_check_branch
          %1021 = sbr.rel (%p1019) target = $region48
        $region47: #{_lambda_.1} parent=11 // pred_region
          %s1023 = ssub.s32 1024, 1024
          %1024 = vsyncadd [#allocation18], %s1023
          %s1025 = sshll.u32 [#allocation17], 4
          %s1026 = int_to_ptr.vmem [resolvable:$true] %s1025
          %1031 = dma.hbm_to_vmem [thread:$0]  %s19, 1024, %s1026, [#allocation18], 128, 128, 8
        $region48: #{_lambda_.1} parent=11 // pred_fallthru
          _
        // Predicated region
        $region49: #{_lambda_.1} parent=11 // pred_check
          %p1032 = pneg %p336
        $region50: #{_lambda_.1} parent=11 // pred_check_branch
          %1034 = sbr.rel (%p1032) target = $region52
        $region51: #{_lambda_.1} parent=11 // pred_region
          %s1036 = ssub.s32 4096, 4096
          %1037 = vsyncadd [#allocation18], %s1036
          %s1038 = sshll.u32 [#allocation19], 4
          %s1039 = int_to_ptr.vmem [resolvable:$true] %s1038
          %1044 = dma.hbm_to_vmem [thread:$0]  %s21, 4096, %s1039, [#allocation18], 128, 128, 8
        $region52: #{_lambda_.1} parent=11 // pred_fallthru
          _
        // Predicated region
        $region53: #{_lambda_.1} parent=11 // pred_check
          %p1045 = pneg %p357
        $region54: #{_lambda_.1} parent=11 // pred_check_branch
          %1047 = sbr.rel (%p1045) target = $region56
        $region55: #{_lambda_.1} parent=11 // pred_region
          %s1049 = ssub.s32 9216, 9216
          %1050 = vsyncadd [#allocation21], %s1049
          %s1051 = sshll.u32 [#allocation20], 4
          %s1052 = int_to_ptr.vmem [resolvable:$true] %s1051
          %1057 = dma.hbm_to_vmem [thread:$0]  %s23, 9216, %s1052, [#allocation21], 128, 128, 8
        $region56: #{_lambda_.1} parent=11 // pred_fallthru
          _
        // Predicated region
        $region57: #{_lambda_.1} parent=11 // pred_check
          %p1058 = pneg %p378
        $region58: #{_lambda_.1} parent=11 // pred_check_branch
          %1060 = sbr.rel (%p1058) target = $region60
        $region59: #{_lambda_.1} parent=11 // pred_region
          %s1062 = ssub.s32 1024, 1024
          %1063 = vsyncadd [#allocation21], %s1062
          %s1064 = sshll.u32 [#allocation22], 4
          %s1065 = int_to_ptr.vmem [resolvable:$true] %s1064
          %1070 = dma.hbm_to_vmem [thread:$0]  %s25, 1024, %s1065, [#allocation21], 128, 128, 8
        $region60: #{_lambda_.1} parent=11 // pred_fallthru
          _
        // Predicated region
        $region61: #{_lambda_.1} parent=11 // pred_check
          %p1071 = pneg %p399
        $region62: #{_lambda_.1} parent=11 // pred_check_branch
          %1073 = sbr.rel (%p1071) target = $region64
        $region63: #{_lambda_.1} parent=11 // pred_region
          %s1075 = ssub.s32 256, 256
          %1076 = vsyncadd [#allocation24], %s1075
          %s1077 = sshll.u32 [#allocation23], 4
          %s1078 = int_to_ptr.vmem [resolvable:$true] %s1077
          %1083 = dma.hbm_to_vmem [thread:$0]  %s27, 256, %s1078, [#allocation24], 128, 128, 8
        $region64: #{_lambda_.1} parent=11 // pred_fallthru
          _
        // Predicated region
        $region65: #{_lambda_.1} parent=11 // pred_check
          %p1084 = pneg %p420
        $region66: #{_lambda_.1} parent=11 // pred_check_branch
          %1086 = sbr.rel (%p1084) target = $region68
        $region67: #{_lambda_.1} parent=11 // pred_region
          %s1088 = ssub.s32 16, 16
          %1089 = vsyncadd [#allocation24], %s1088
          %s1091 = sshll.u32 [#allocation25], 4
          %s1092 = int_to_ptr.vmem [resolvable:$true] %s1091
          %1094 = dma.hbm_to_vmem [thread:$0]  %s29, 16, %s1092, [#allocation24]
        $region68: #{_lambda_.1} parent=11 // pred_fallthru
          _
        // Predicated region
        $region69: #{_lambda_.1} parent=11 // pred_check
          %p1095 = pneg %p441
        $region70: #{_lambda_.1} parent=11 // pred_check_branch
          %1097 = sbr.rel (%p1095) target = $region72
        $region71: #{_lambda_.1} parent=11 // pred_region
          %s1099 = ssub.s32 9216, 9216
          %1100 = vsyncadd [#allocation27], %s1099
          %s1101 = sshll.u32 [#allocation26], 4
          %s1102 = int_to_ptr.vmem [resolvable:$true] %s1101
          %1107 = dma.hbm_to_vmem [thread:$0]  %s31, 9216, %s1102, [#allocation27], 128, 128, 8
        $region72: #{_lambda_.1} parent=11 // pred_fallthru
          _
        // Predicated region
        $region73: #{_lambda_.1} parent=11 // pred_check
          %p1108 = pneg %p462
        $region74: #{_lambda_.1} parent=11 // pred_check_branch
          %1110 = sbr.rel (%p1108) target = $region76
        $region75: #{_lambda_.1} parent=11 // pred_region
          %s1112 = ssub.s32 1024, 1024
          %1113 = vsyncadd [#allocation27], %s1112
          %s1114 = sshll.u32 [#allocation28], 4
          %s1115 = int_to_ptr.vmem [resolvable:$true] %s1114
          %1120 = dma.hbm_to_vmem [thread:$0]  %s33, 1024, %s1115, [#allocation27], 128, 128, 8
        $region76: #{_lambda_.1} parent=11 // pred_fallthru
          _
        // Predicated region
        $region77: #{_lambda_.1} parent=11 // pred_check
          %p1121 = pneg %p483
        $region78: #{_lambda_.1} parent=11 // pred_check_branch
          %1123 = sbr.rel (%p1121) target = $region80
        $region79: #{_lambda_.1} parent=11 // pred_region
          %s1125 = ssub.s32 1024, 1024
          %1126 = vsyncadd [#allocation30], %s1125
          %s1127 = sshll.u32 [#allocation29], 4
          %s1128 = int_to_ptr.vmem [resolvable:$true] %s1127
          %1133 = dma.hbm_to_vmem [thread:$0]  %s35, 1024, %s1128, [#allocation30], 128, 128, 8
        $region80: #{_lambda_.1} parent=11 // pred_fallthru
          _
        // Predicated region
        $region81: #{_lambda_.1} parent=11 // pred_check
          %p1134 = pneg %p504
        $region82: #{_lambda_.1} parent=11 // pred_check_branch
          %1136 = sbr.rel (%p1134) target = $region84
        $region83: #{_lambda_.1} parent=11 // pred_region
          %s1138 = ssub.s32 16, 16
          %1139 = vsyncadd [#allocation30], %s1138
          %s1141 = sshll.u32 [#allocation31], 4
          %s1142 = int_to_ptr.vmem [resolvable:$true] %s1141
          %1144 = dma.hbm_to_vmem [thread:$0]  %s37, 16, %s1142, [#allocation30]
        $region84: #{_lambda_.1} parent=11 // pred_fallthru
          _
        // Predicated region
        $region85: #{_lambda_.1} parent=11 // pred_check
          %p1145 = pneg %p525
        $region86: #{_lambda_.1} parent=11 // pred_check_branch
          %1147 = sbr.rel (%p1145) target = $region88
        $region87: #{_lambda_.1} parent=11 // pred_region
          %s1149 = ssub.s32 4608, 4608
          %1150 = vsyncadd [#allocation33], %s1149
          %s1151 = sshll.u32 [#allocation32], 4
          %s1152 = int_to_ptr.vmem [resolvable:$true] %s1151
          %1157 = dma.hbm_to_vmem [thread:$0]  %s39, 4608, %s1152, [#allocation33], 128, 128, 8
        $region88: #{_lambda_.1} parent=11 // pred_fallthru
          _
        // Predicated region
        $region89: #{_lambda_.1} parent=11 // pred_check
          %p1158 = pneg %p546
        $region90: #{_lambda_.1} parent=11 // pred_check_branch
          %1160 = sbr.rel (%p1158) target = $region92
        $region91: #{_lambda_.1} parent=11 // pred_region
          %s1162 = ssub.s32 512, 512
          %1163 = vsyncadd [#allocation33], %s1162
          %s1164 = sshll.u32 [#allocation34], 4
          %s1165 = int_to_ptr.vmem [resolvable:$true] %s1164
          %1170 = dma.hbm_to_vmem [thread:$0]  %s41, 512, %s1165, [#allocation33], 128, 128, 8
        $region92: #{_lambda_.1} parent=11 // pred_fallthru
          _
        // Predicated region
        $region93: #{_lambda_.1} parent=11 // pred_check
          %p1171 = pneg %p567
        $region94: #{_lambda_.1} parent=11 // pred_check_branch
          %1173 = sbr.rel (%p1171) target = $region96
        $region95: #{_lambda_.1} parent=11 // pred_region
          %s1175 = ssub.s32 1024, 1024
          %1176 = vsyncadd [#allocation36], %s1175
          %s1177 = sshll.u32 [#allocation35], 4
          %s1178 = int_to_ptr.vmem [resolvable:$true] %s1177
          %1183 = dma.hbm_to_vmem [thread:$0]  %s43, 1024, %s1178, [#allocation36], 128, 128, 8
        $region96: #{_lambda_.1} parent=11 // pred_fallthru
          _
        // Predicated region
        $region97: #{_lambda_.1} parent=11 // pred_check
          %p1184 = pneg %p588
        $region98: #{_lambda_.1} parent=11 // pred_check_branch
          %1186 = sbr.rel (%p1184) target = $region100
        $region99: #{_lambda_.1} parent=11 // pred_region
          %s1188 = ssub.s32 16, 16
          %1189 = vsyncadd [#allocation36], %s1188
          %s1191 = sshll.u32 [#allocation37], 4
          %s1192 = int_to_ptr.vmem [resolvable:$true] %s1191
          %1194 = dma.hbm_to_vmem [thread:$0]  %s45, 16, %s1192, [#allocation36]
        $region100: #{_lambda_.1} parent=11 // pred_fallthru
          _
        // Predicated region
        $region101: #{_lambda_.1} parent=11 // pred_check
          %p1195 = pneg %p609
        $region102: #{_lambda_.1} parent=11 // pred_check_branch
          %1197 = sbr.rel (%p1195) target = $region104
        $region103: #{_lambda_.1} parent=11 // pred_region
          %s1199 = ssub.s32 4608, 4608
          %1200 = vsyncadd [#allocation39], %s1199
          %s1201 = sshll.u32 [#allocation38], 4
          %s1202 = int_to_ptr.vmem [resolvable:$true] %s1201
          %1207 = dma.hbm_to_vmem [thread:$0]  %s47, 4608, %s1202, [#allocation39], 128, 128, 8
        $region104: #{_lambda_.1} parent=11 // pred_fallthru
          _
        // Predicated region
        $region105: #{_lambda_.1} parent=11 // pred_check
          %p1208 = pneg %p630
        $region106: #{_lambda_.1} parent=11 // pred_check_branch
          %1210 = sbr.rel (%p1208) target = $region108
        $region107: #{_lambda_.1} parent=11 // pred_region
          _
        $region108: #{_lambda_.1} parent=11 // pred_fallthru
          _
        // Predicated region
        $region109: #{_lambda_.1} parent=11 // pred_check
          %p1211 = pneg %p651
        $region110: #{_lambda_.1} parent=11 // pred_check_branch
          %1213 = sbr.rel (%p1211) target = $region112
        $region111: #{_lambda_.1} parent=11 // pred_region
          %s1215 = ssub.s32 4096, 4096
          %1216 = vsyncadd [#allocation39], %s1215
          %s1217 = sshll.u32 [#allocation40], 4
          %s1218 = int_to_ptr.vmem [resolvable:$true] %s1217
          %1223 = dma.hbm_to_vmem [thread:$0]  %s51, 4096, %s1218, [#allocation39], 128, 128, 8
        $region112: #{_lambda_.1} parent=11 // pred_fallthru
          _
        // Predicated region
        $region113: #{_lambda_.1} parent=11 // pred_check
          %p1224 = pneg %p672
        $region114: #{_lambda_.1} parent=11 // pred_check_branch
          %1226 = sbr.rel (%p1224) target = $region116
        $region115: #{_lambda_.1} parent=11 // pred_region
          %s1228 = ssub.s32 16, 16
          %1229 = vsyncadd [#allocation42], %s1228
          %s1231 = sshll.u32 [#allocation41], 4
          %s1232 = int_to_ptr.vmem [resolvable:$true] %s1231
          %1234 = dma.hbm_to_vmem [thread:$0]  %s53, 16, %s1232, [#allocation42]
        $region116: #{_lambda_.1} parent=11 // pred_fallthru
          _
        // Predicated region
        $region117: #{_lambda_.1} parent=11 // pred_check
          %p1235 = pneg %p693
        $region118: #{_lambda_.1} parent=11 // pred_check_branch
          %1237 = sbr.rel (%p1235) target = $region120
        $region119: #{_lambda_.1} parent=11 // pred_region
          %s1239 = ssub.s32 2304, 2304
          %1240 = vsyncadd [#allocation42], %s1239
          %s1241 = sshll.u32 [#allocation43], 4
          %s1242 = int_to_ptr.vmem [resolvable:$true] %s1241
          %1247 = dma.hbm_to_vmem [thread:$0]  %s55, 2304, %s1242, [#allocation42], 128, 128, 8
        $region120: #{_lambda_.1} parent=11 // pred_fallthru
          _
        // Predicated region
        $region121: #{_lambda_.1} parent=11 // pred_check
          %p1248 = pneg %p714
        $region122: #{_lambda_.1} parent=11 // pred_check_branch
          %1250 = sbr.rel (%p1248) target = $region124
        $region123: #{_lambda_.1} parent=11 // pred_region
          _
        $region124: #{_lambda_.1} parent=11 // pred_fallthru
          _
        // Predicated region
        $region125: #{_lambda_.1} parent=11 // pred_check
          %p1251 = pneg %p735
        $region126: #{_lambda_.1} parent=11 // pred_check_branch
          %1253 = sbr.rel (%p1251) target = $region128
        $region127: #{_lambda_.1} parent=11 // pred_region
          %s1255 = ssub.s32 4096, 4096
          %1256 = vsyncadd [#allocation45], %s1255
          %s1257 = sshll.u32 [#allocation44], 4
          %s1258 = int_to_ptr.vmem [resolvable:$true] %s1257
          %1263 = dma.hbm_to_vmem [thread:$0]  %s59, 4096, %s1258, [#allocation45], 128, 128, 8
        $region128: #{_lambda_.1} parent=11 // pred_fallthru
          _
        // Predicated region
        $region129: #{_lambda_.1} parent=11 // pred_check
          %p1264 = pneg %p756
        $region130: #{_lambda_.1} parent=11 // pred_check_branch
          %1266 = sbr.rel (%p1264) target = $region132
        $region131: #{_lambda_.1} parent=11 // pred_region
          %s1268 = ssub.s32 16, 16
          %1269 = vsyncadd [#allocation45], %s1268
          %s1271 = sshll.u32 [#allocation46], 4
          %s1272 = int_to_ptr.vmem [resolvable:$true] %s1271
          %1274 = dma.hbm_to_vmem [thread:$0]  %s61, 16, %s1272, [#allocation45]
        $region132: #{_lambda_.1} parent=11 // pred_fallthru
          _
        // Predicated region
        $region133: #{_lambda_.1} parent=11 // pred_check
          %p1275 = pneg %p777
        $region134: #{_lambda_.1} parent=11 // pred_check_branch
          %1277 = sbr.rel (%p1275) target = $region136
        $region135: #{_lambda_.1} parent=11 // pred_region
          %s1279 = ssub.s32 64, 64
          %1280 = vsyncadd [#allocation48], %s1279
          %s1282 = sshll.u32 [#allocation47], 4
          %s1283 = int_to_ptr.vmem [resolvable:$true] %s1282
          %1285 = dma.hbm_to_vmem [thread:$0]  %s63, 64, %s1283, [#allocation48]
        $region136: #{_lambda_.1} parent=11 // pred_fallthru
          _
        // Predicated region
        $region137: #{_lambda_.1} parent=11 // pred_check
          %p1286 = pneg %p798
        $region138: #{_lambda_.1} parent=11 // pred_check_branch
          %1288 = sbr.rel (%p1286) target = $region140
        $region139: #{_lambda_.1} parent=11 // pred_region
          %s1290 = ssub.s32 64, 64
          %1291 = vsyncadd [#allocation48], %s1290
          %s1293 = sshll.u32 [#allocation49], 4
          %s1294 = int_to_ptr.vmem [resolvable:$true] %s1293
          %1296 = dma.hbm_to_vmem [thread:$0]  %s65, 64, %s1294, [#allocation48]
        $region140: #{_lambda_.1} parent=11 // pred_fallthru
          _
        // Predicated region
        $region141: #{_lambda_.1} parent=11 // pred_check
          %p1297 = pneg %p819
        $region142: #{_lambda_.1} parent=11 // pred_check_branch
          %1299 = sbr.rel (%p1297) target = $region144
        $region143: #{_lambda_.1} parent=11 // pred_region
          %s1301 = ssub.s32 64, 64
          %1302 = vsyncadd [#allocation51], %s1301
          %s1304 = sshll.u32 [#allocation50], 4
          %s1305 = int_to_ptr.vmem [resolvable:$true] %s1304
          %1307 = dma.hbm_to_vmem [thread:$0]  %s67, 64, %s1305, [#allocation51]
        $region144: #{_lambda_.1} parent=11 // pred_fallthru
          _
        // Predicated region
        $region145: #{_lambda_.1} parent=11 // pred_check
          %p1308 = pneg %p840
        $region146: #{_lambda_.1} parent=11 // pred_check_branch
          %1310 = sbr.rel (%p1308) target = $region148
        $region147: #{_lambda_.1} parent=11 // pred_region
          _
        $region148: #{_lambda_.1} parent=11 // pred_fallthru
          _
        // Predicated region
        $region149: #{_lambda_.1} parent=11 // pred_check
          %p1311 = pneg %p861
        $region150: #{_lambda_.1} parent=11 // pred_check_branch
          %1313 = sbr.rel (%p1311) target = $region152
        $region151: #{_lambda_.1} parent=11 // pred_region
          _
        $region152: #{_lambda_.1} parent=11 // pred_fallthru
          _
        // Predicated region
        $region153: #{_lambda_.1} parent=11 // pred_check
          %p1314 = pneg %p882
        $region154: #{_lambda_.1} parent=11 // pred_check_branch
          %1316 = sbr.rel (%p1314) target = $region156
        $region155: #{_lambda_.1} parent=11 // pred_region
          _
        $region156: #{_lambda_.1} parent=11 // pred_fallthru
          _
      $region12: #{_lambda_.1} parent=5 // pred_fallthru
        _
      %p1317 = scmp.lt.s32.totalorder %s100, 2
      // Predicated region
      $region157: #{_lambda_.1} parent=5 // pred_check
        %p1318 = pneg %p1317
      $region158: #{_lambda_.1} parent=5 // pred_check_branch
        %1320 = sbr.rel (%p1318) target = $region160
      $region159: #{_lambda_.1} parent=5 // pred_region
        // Predicated region
        $region161: #{_lambda_.1} parent=159 // pred_check
          %p1321 = pneg %p120
        $region162: #{_lambda_.1} parent=159 // pred_check_branch
          %1323 = sbr.rel (%p1321) target = $region164
        $region163: #{_lambda_.1} parent=159 // pred_region
          %s1324 = sand.u32 %s110, 1
          %s1325 = scalar_lea.sflag [#allocation4], %s1324
          %s1326 = sand.u32 %s110, 1
          %s1327 = scalar_lea.vmem [#allocation3], %s1326
          %s1329 = ssub.s32 16, 16
          %1330 = vsyncadd %s1325, %s1329
          %s1331 = smul.addr %s100, 16
          %s1332 = scalar_lea.hbm %s1, %s1331
          %s1334 = sshll.u32 %s1327, 4
          %s1335 = int_to_ptr.vmem [resolvable:$true] %s1334
          %1337 = dma.hbm_to_vmem [thread:$0]  %s1332, 16, %s1335, %s1325
        $region164: #{_lambda_.1} parent=159 // pred_fallthru
          _
      $region160: #{_lambda_.1} parent=5 // pred_fallthru
        _
      %p1338 = scmp.le.s32.totalorder 1, %s100
      %p1339 = scmp.lt.s32.totalorder %s100, 3
      %p1340 = pnand %p1338, %p1339
      %p1341 = pneg %p1340
      // Predicated region
      $region165: #{_lambda_.1} parent=5 // pred_check
        _
      $region166: #{_lambda_.1} parent=5 // pred_check_branch
        %1343 = sbr.rel (%p1340) target = $region168
      $region167: #{_lambda_.1} parent=5 // pred_region
        %s1344 = ssub.s32 %s100, 1
        %s1345 = sand.u32 %s113, 1
        %s1346 = scalar_lea.sflag [#allocation4], %s1345
        %s1347 = sand.u32 %s113, 1
        %s1348 = scalar_lea.vmem [#allocation3], %s1347
        // Predicated region
        $region169: #{_lambda_.1} parent=167 // pred_check
          %p1349 = pneg %p126
        $region170: #{_lambda_.1} parent=167 // pred_check_branch
          %1351 = sbr.rel (%p1349) target = $region172
        $region171: #{_lambda_.1} parent=167 // pred_region
          %1352 = dma.done %s1346, 16
        $region172: #{_lambda_.1} parent=167 // pred_fallthru
          _
        // Predicated region
        $region173: #{_lambda_.1} parent=167 // pred_check
          %p1353 = pneg %p147
        $region174: #{_lambda_.1} parent=167 // pred_check_branch
          %1355 = sbr.rel (%p1353) target = $region176
        $region175: #{_lambda_.1} parent=167 // pred_region
          %1356 = dma.done [#allocation6], 1024
        $region176: #{_lambda_.1} parent=167 // pred_fallthru
          _
        // Predicated region
        $region177: #{_lambda_.1} parent=167 // pred_check
          %p1357 = pneg %p168
        $region178: #{_lambda_.1} parent=167 // pred_check_branch
          %1359 = sbr.rel (%p1357) target = $region180
        $region179: #{_lambda_.1} parent=167 // pred_region
          %1360 = dma.done [#allocation6], 16
        $region180: #{_lambda_.1} parent=167 // pred_fallthru
          _
        // Predicated region
        $region181: #{_lambda_.1} parent=167 // pred_check
          %p1361 = pneg %p189
        $region182: #{_lambda_.1} parent=167 // pred_check_branch
          %1363 = sbr.rel (%p1361) target = $region184
        $region183: #{_lambda_.1} parent=167 // pred_region
          %1364 = dma.done [#allocation9], 1024
        $region184: #{_lambda_.1} parent=167 // pred_fallthru
          _
        // Predicated region
        $region185: #{_lambda_.1} parent=167 // pred_check
          %p1365 = pneg %p210
        $region186: #{_lambda_.1} parent=167 // pred_check_branch
          %1367 = sbr.rel (%p1365) target = $region188
        $region187: #{_lambda_.1} parent=167 // pred_region
          %1368 = dma.done [#allocation9], 16
        $region188: #{_lambda_.1} parent=167 // pred_fallthru
          _
        // Predicated region
        $region189: #{_lambda_.1} parent=167 // pred_check
          %p1369 = pneg %p231
        $region190: #{_lambda_.1} parent=167 // pred_check_branch
          %1371 = sbr.rel (%p1369) target = $region192
        $region191: #{_lambda_.1} parent=167 // pred_region
          %1372 = dma.done [#allocation12], 16
        $region192: #{_lambda_.1} parent=167 // pred_fallthru
          _
        // Predicated region
        $region193: #{_lambda_.1} parent=167 // pred_check
          %p1373 = pneg %p252
        $region194: #{_lambda_.1} parent=167 // pred_check_branch
          %1375 = sbr.rel (%p1373) target = $region196
        $region195: #{_lambda_.1} parent=167 // pred_region
          %1376 = dma.done [#allocation12], 8192
        $region196: #{_lambda_.1} parent=167 // pred_fallthru
          _
        // Predicated region
        $region197: #{_lambda_.1} parent=167 // pred_check
          %p1377 = pneg %p273
        $region198: #{_lambda_.1} parent=167 // pred_check_branch
          %1379 = sbr.rel (%p1377) target = $region200
        $region199: #{_lambda_.1} parent=167 // pred_region
          %1380 = dma.done [#allocation15], 128
        $region200: #{_lambda_.1} parent=167 // pred_fallthru
          _
        // Predicated region
        $region201: #{_lambda_.1} parent=167 // pred_check
          %p1381 = pneg %p294
        $region202: #{_lambda_.1} parent=167 // pred_check_branch
          %1383 = sbr.rel (%p1381) target = $region204
        $region203: #{_lambda_.1} parent=167 // pred_region
          %1384 = dma.done [#allocation15], 256
        $region204: #{_lambda_.1} parent=167 // pred_fallthru
          _
        // Predicated region
        $region205: #{_lambda_.1} parent=167 // pred_check
          %p1385 = pneg %p315
        $region206: #{_lambda_.1} parent=167 // pred_check_branch
          %1387 = sbr.rel (%p1385) target = $region208
        $region207: #{_lambda_.1} parent=167 // pred_region
          %1388 = dma.done [#allocation18], 1024
        $region208: #{_lambda_.1} parent=167 // pred_fallthru
          _
        // Predicated region
        $region209: #{_lambda_.1} parent=167 // pred_check
          %p1389 = pneg %p336
        $region210: #{_lambda_.1} parent=167 // pred_check_branch
          %1391 = sbr.rel (%p1389) target = $region212
        $region211: #{_lambda_.1} parent=167 // pred_region
          %1392 = dma.done [#allocation18], 4096
        $region212: #{_lambda_.1} parent=167 // pred_fallthru
          _
        // Predicated region
        $region213: #{_lambda_.1} parent=167 // pred_check
          %p1393 = pneg %p357
        $region214: #{_lambda_.1} parent=167 // pred_check_branch
          %1395 = sbr.rel (%p1393) target = $region216
        $region215: #{_lambda_.1} parent=167 // pred_region
          %1396 = dma.done [#allocation21], 9216
        $region216: #{_lambda_.1} parent=167 // pred_fallthru
          _
        // Predicated region
        $region217: #{_lambda_.1} parent=167 // pred_check
          %p1397 = pneg %p378
        $region218: #{_lambda_.1} parent=167 // pred_check_branch
          %1399 = sbr.rel (%p1397) target = $region220
        $region219: #{_lambda_.1} parent=167 // pred_region
          %1400 = dma.done [#allocation21], 1024
        $region220: #{_lambda_.1} parent=167 // pred_fallthru
          _
        // Predicated region
        $region221: #{_lambda_.1} parent=167 // pred_check
          %p1401 = pneg %p399
        $region222: #{_lambda_.1} parent=167 // pred_check_branch
          %1403 = sbr.rel (%p1401) target = $region224
        $region223: #{_lambda_.1} parent=167 // pred_region
          %1404 = dma.done [#allocation24], 256
        $region224: #{_lambda_.1} parent=167 // pred_fallthru
          _
        // Predicated region
        $region225: #{_lambda_.1} parent=167 // pred_check
          %p1405 = pneg %p420
        $region226: #{_lambda_.1} parent=167 // pred_check_branch
          %1407 = sbr.rel (%p1405) target = $region228
        $region227: #{_lambda_.1} parent=167 // pred_region
          %1408 = dma.done [#allocation24], 16
        $region228: #{_lambda_.1} parent=167 // pred_fallthru
          _
        // Predicated region
        $region229: #{_lambda_.1} parent=167 // pred_check
          %p1409 = pneg %p441
        $region230: #{_lambda_.1} parent=167 // pred_check_branch
          %1411 = sbr.rel (%p1409) target = $region232
        $region231: #{_lambda_.1} parent=167 // pred_region
          %1412 = dma.done [#allocation27], 9216
        $region232: #{_lambda_.1} parent=167 // pred_fallthru
          _
        // Predicated region
        $region233: #{_lambda_.1} parent=167 // pred_check
          %p1413 = pneg %p462
        $region234: #{_lambda_.1} parent=167 // pred_check_branch
          %1415 = sbr.rel (%p1413) target = $region236
        $region235: #{_lambda_.1} parent=167 // pred_region
          %1416 = dma.done [#allocation27], 1024
        $region236: #{_lambda_.1} parent=167 // pred_fallthru
          _
        // Predicated region
        $region237: #{_lambda_.1} parent=167 // pred_check
          %p1417 = pneg %p483
        $region238: #{_lambda_.1} parent=167 // pred_check_branch
          %1419 = sbr.rel (%p1417) target = $region240
        $region239: #{_lambda_.1} parent=167 // pred_region
          %1420 = dma.done [#allocation30], 1024
        $region240: #{_lambda_.1} parent=167 // pred_fallthru
          _
        // Predicated region
        $region241: #{_lambda_.1} parent=167 // pred_check
          %p1421 = pneg %p504
        $region242: #{_lambda_.1} parent=167 // pred_check_branch
          %1423 = sbr.rel (%p1421) target = $region244
        $region243: #{_lambda_.1} parent=167 // pred_region
          %1424 = dma.done [#allocation30], 16
        $region244: #{_lambda_.1} parent=167 // pred_fallthru
          _
        // Predicated region
        $region245: #{_lambda_.1} parent=167 // pred_check
          %p1425 = pneg %p525
        $region246: #{_lambda_.1} parent=167 // pred_check_branch
          %1427 = sbr.rel (%p1425) target = $region248
        $region247: #{_lambda_.1} parent=167 // pred_region
          %1428 = dma.done [#allocation33], 4608
        $region248: #{_lambda_.1} parent=167 // pred_fallthru
          _
        // Predicated region
        $region249: #{_lambda_.1} parent=167 // pred_check
          %p1429 = pneg %p546
        $region250: #{_lambda_.1} parent=167 // pred_check_branch
          %1431 = sbr.rel (%p1429) target = $region252
        $region251: #{_lambda_.1} parent=167 // pred_region
          %1432 = dma.done [#allocation33], 512
        $region252: #{_lambda_.1} parent=167 // pred_fallthru
          _
        // Predicated region
        $region253: #{_lambda_.1} parent=167 // pred_check
          %p1433 = pneg %p567
        $region254: #{_lambda_.1} parent=167 // pred_check_branch
          %1435 = sbr.rel (%p1433) target = $region256
        $region255: #{_lambda_.1} parent=167 // pred_region
          %1436 = dma.done [#allocation36], 1024
        $region256: #{_lambda_.1} parent=167 // pred_fallthru
          _
        // Predicated region
        $region257: #{_lambda_.1} parent=167 // pred_check
          %p1437 = pneg %p588
        $region258: #{_lambda_.1} parent=167 // pred_check_branch
          %1439 = sbr.rel (%p1437) target = $region260
        $region259: #{_lambda_.1} parent=167 // pred_region
          %1440 = dma.done [#allocation36], 16
        $region260: #{_lambda_.1} parent=167 // pred_fallthru
          _
        // Predicated region
        $region261: #{_lambda_.1} parent=167 // pred_check
          %p1441 = pneg %p609
        $region262: #{_lambda_.1} parent=167 // pred_check_branch
          %1443 = sbr.rel (%p1441) target = $region264
        $region263: #{_lambda_.1} parent=167 // pred_region
          %1444 = dma.done [#allocation39], 4608
        $region264: #{_lambda_.1} parent=167 // pred_fallthru
          _
        // Predicated region
        $region265: #{_lambda_.1} parent=167 // pred_check
          %p1445 = pneg %p651
        $region266: #{_lambda_.1} parent=167 // pred_check_branch
          %1447 = sbr.rel (%p1445) target = $region268
        $region267: #{_lambda_.1} parent=167 // pred_region
          %1448 = dma.done [#allocation39], 4096
        $region268: #{_lambda_.1} parent=167 // pred_fallthru
          _
        // Predicated region
        $region269: #{_lambda_.1} parent=167 // pred_check
          %p1449 = pneg %p672
        $region270: #{_lambda_.1} parent=167 // pred_check_branch
          %1451 = sbr.rel (%p1449) target = $region272
        $region271: #{_lambda_.1} parent=167 // pred_region
          %1452 = dma.done [#allocation42], 16
        $region272: #{_lambda_.1} parent=167 // pred_fallthru
          _
        // Predicated region
        $region273: #{_lambda_.1} parent=167 // pred_check
          %p1453 = pneg %p693
        $region274: #{_lambda_.1} parent=167 // pred_check_branch
          %1455 = sbr.rel (%p1453) target = $region276
        $region275: #{_lambda_.1} parent=167 // pred_region
          %1456 = dma.done [#allocation42], 2304
        $region276: #{_lambda_.1} parent=167 // pred_fallthru
          _
        // Predicated region
        $region277: #{_lambda_.1} parent=167 // pred_check
          %p1457 = pneg %p735
        $region278: #{_lambda_.1} parent=167 // pred_check_branch
          %1459 = sbr.rel (%p1457) target = $region280
        $region279: #{_lambda_.1} parent=167 // pred_region
          %1460 = dma.done [#allocation45], 4096
        $region280: #{_lambda_.1} parent=167 // pred_fallthru
          _
        // Predicated region
        $region281: #{_lambda_.1} parent=167 // pred_check
          %p1461 = pneg %p756
        $region282: #{_lambda_.1} parent=167 // pred_check_branch
          %1463 = sbr.rel (%p1461) target = $region284
        $region283: #{_lambda_.1} parent=167 // pred_region
          %1464 = dma.done [#allocation45], 16
        $region284: #{_lambda_.1} parent=167 // pred_fallthru
          _
        // Predicated region
        $region285: #{_lambda_.1} parent=167 // pred_check
          %p1465 = pneg %p777
        $region286: #{_lambda_.1} parent=167 // pred_check_branch
          %1467 = sbr.rel (%p1465) target = $region288
        $region287: #{_lambda_.1} parent=167 // pred_region
          %1468 = dma.done [#allocation48], 64
        $region288: #{_lambda_.1} parent=167 // pred_fallthru
          _
        // Predicated region
        $region289: #{_lambda_.1} parent=167 // pred_check
          %p1469 = pneg %p798
        $region290: #{_lambda_.1} parent=167 // pred_check_branch
          %1471 = sbr.rel (%p1469) target = $region292
        $region291: #{_lambda_.1} parent=167 // pred_region
          %1472 = dma.done [#allocation48], 64
        $region292: #{_lambda_.1} parent=167 // pred_fallthru
          _
        // Predicated region
        $region293: #{_lambda_.1} parent=167 // pred_check
          %p1473 = pneg %p819
        $region294: #{_lambda_.1} parent=167 // pred_check_branch
          %1475 = sbr.rel (%p1473) target = $region296
        $region295: #{_lambda_.1} parent=167 // pred_region
          %1476 = dma.done [#allocation51], 64
        $region296: #{_lambda_.1} parent=167 // pred_fallthru
          _
        %s1477 = sand.u32 %s113, 1
        %s1478 = scalar_lea.sflag [#allocation4], %s1477
        %s1479 = sand.u32 %s113, 1
        %s1480 = scalar_lea.vmem [#allocation3], %s1479
        %p1481 = pneg %p126
        %p1482 = pneg %p123
        %p1483 = pneg %p147
        %p1484 = pneg %p144
        %p1485 = pneg %p168
        %p1486 = pneg %p165
        %p1487 = pneg %p189
        %p1488 = pneg %p186
        %p1489 = pneg %p210
        %p1490 = pneg %p207
        %p1491 = pneg %p231
        %p1492 = pneg %p228
        %p1493 = pneg %p252
        %p1494 = pneg %p249
        %p1495 = pneg %p273
        %p1496 = pneg %p270
        %p1497 = pneg %p294
        %p1498 = pneg %p291
        %p1499 = pneg %p315
        %p1500 = pneg %p312
        %p1501 = pneg %p336
        %p1502 = pneg %p333
        %p1503 = pneg %p357
        %p1504 = pneg %p354
        %p1505 = pneg %p378
        %p1506 = pneg %p375
        %p1507 = pneg %p399
        %p1508 = pneg %p396
        %p1509 = pneg %p420
        %p1510 = pneg %p417
        %p1511 = pneg %p441
        %p1512 = pneg %p438
        %p1513 = pneg %p462
        %p1514 = pneg %p459
        %p1515 = pneg %p483
        %p1516 = pneg %p480
        %p1517 = pneg %p504
        %p1518 = pneg %p501
        %p1519 = pneg %p525
        %p1520 = pneg %p522
        %p1521 = pneg %p546
        %p1522 = pneg %p543
        %p1523 = pneg %p567
        %p1524 = pneg %p564
        %p1525 = pneg %p588
        %p1526 = pneg %p585
        %p1527 = pneg %p609
        %p1528 = pneg %p606
        %p1529 = pneg %p630
        %p1530 = pneg %p627
        %p1531 = pneg %p651
        %p1532 = pneg %p648
        %p1533 = pneg %p672
        %p1534 = pneg %p669
        %p1535 = pneg %p693
        %p1536 = pneg %p690
        %p1537 = pneg %p714
        %p1538 = pneg %p711
        %p1539 = pneg %p735
        %p1540 = pneg %p732
        %p1541 = pneg %p756
        %p1542 = pneg %p753
        %p1543 = pneg %p777
        %p1544 = pneg %p774
        %p1545 = pneg %p798
        %p1546 = pneg %p795
        %p1547 = pneg %p819
        %p1548 = pneg %p816
        %p1549 = pneg %p840
        %p1550 = pneg %p837
        %p1551 = pneg %p861
        %p1552 = pneg %p858
        %p1553 = pneg %p882
        %p1554 = pneg %p879
        %p1555 = pneg %p908
        %p1556 = pneg %p905
        %p1557 = scmp.lt.s32.totalorder %s105, 1
        %s1558 = scalar_select %p1557, %s105, 1
        %s1559 = smul.addr %s1558, 2
        %s1560 = smul.addr %s1559, 4
        %s1561 = scalar_lea.vmem %s75, %s1560
        %p1562 = scmp.lt.s32.totalorder %s105, 1
        %s1563 = scalar_select %p1562, %s105, 1
        %s1564 = smul.addr %s1563, 2
        %s1565 = smul.addr %s1564, 4
        %s1566 = scalar_lea.vmem %s75, %s1565
        %vm1568 = vcmask 523264
        %1569 = vst.msk [vmem:[#allocation2] sm:$0xff] %vm1568, 0.0
        %1570 = vst.msk [vmem:[#allocation2 + $0x8] sm:$0xff] %vm1568, 0.0
        %vm1571 = vcmask 517120
        %1572 = vst.msk [vmem:[#allocation2 + $0x10] sm:$0x3] %vm1571, 0.0
        %1573 = vst.msk [vmem:[#allocation2 + $0x18] sm:$0xff] %vm1568, 0.0
        %1574 = vst.msk [vmem:[#allocation2 + $0x20] sm:$0xff] %vm1568, 0.0
        %1575 = vst.msk [vmem:[#allocation2 + $0x28] sm:$0x3] %vm1571, 0.0
        %1576 = vst.msk [vmem:[#allocation2 + $0x30] sm:$0xff] %vm1568, 0.0
        %1577 = vst.msk [vmem:[#allocation2 + $0x38] sm:$0xff] %vm1568, 0.0
        %1578 = vst.msk [vmem:[#allocation2 + $0x40] sm:$0x3] %vm1571, 0.0
        %1579 = vst.msk [vmem:[#allocation2 + $0x48] sm:$0xff] %vm1568, 0.0
        %1580 = vst.msk [vmem:[#allocation2 + $0x50] sm:$0xff] %vm1568, 0.0
        %1581 = vst.msk [vmem:[#allocation2 + $0x58] sm:$0x3] %vm1571, 0.0
        %1582 = vst.msk [vmem:[#allocation2 + $0x60] sm:$0xff] %vm1568, 0.0
        %1583 = vst.msk [vmem:[#allocation2 + $0x68] sm:$0xff] %vm1568, 0.0
        %1584 = vst.msk [vmem:[#allocation2 + $0x70] sm:$0x3] %vm1571, 0.0
        %1585 = vst.msk [vmem:[#allocation2 + $0x78] sm:$0xff] %vm1568, 0.0
        %1586 = vst.msk [vmem:[#allocation2 + $0x80] sm:$0xff] %vm1568, 0.0
        %1587 = vst.msk [vmem:[#allocation2 + $0x88] sm:$0x3] %vm1571, 0.0
        %1588 = vst.msk [vmem:[#allocation2 + $0x90] sm:$0xff] %vm1568, 0.0
        %1589 = vst.msk [vmem:[#allocation2 + $0x98] sm:$0xff] %vm1568, 0.0
        %1590 = vst.msk [vmem:[#allocation2 + $0xa0] sm:$0x3] %vm1571, 0.0
        %1591 = vst.msk [vmem:[#allocation2 + $0xa8] sm:$0xff] %vm1568, 0.0
        %1592 = vst.msk [vmem:[#allocation2 + $0xb0] sm:$0xff] %vm1568, 0.0
        %1593 = vst.msk [vmem:[#allocation2 + $0xb8] sm:$0x3] %vm1571, 0.0
        %1594 = vst.msk [vmem:[#allocation2 + $0xc0] sm:$0xff] %vm1568, 0.0
        %1595 = vst.msk [vmem:[#allocation2 + $0xc8] sm:$0xff] %vm1568, 0.0
        %1596 = vst.msk [vmem:[#allocation2 + $0xd0] sm:$0x3] %vm1571, 0.0
        %1597 = vst.msk [vmem:[#allocation2 + $0xd8] sm:$0xff] %vm1568, 0.0
        %1598 = vst.msk [vmem:[#allocation2 + $0xe0] sm:$0xff] %vm1568, 0.0
        %1599 = vst.msk [vmem:[#allocation2 + $0xe8] sm:$0x3] %vm1571, 0.0
        %1600 = vst.msk [vmem:[#allocation2 + $0xf0] sm:$0xff] %vm1568, 0.0
        %1601 = vst.msk [vmem:[#allocation2 + $0xf8] sm:$0xff] %vm1568, 0.0
        %1602 = vst.msk [vmem:[#allocation2 + $0x100] sm:$0x3] %vm1571, 0.0
        %1603 = vst.msk [vmem:[#allocation2 + $0x108] sm:$0xff] %vm1568, 0.0
        %1604 = vst.msk [vmem:[#allocation2 + $0x110] sm:$0xff] %vm1568, 0.0
        %1605 = vst.msk [vmem:[#allocation2 + $0x118] sm:$0x3] %vm1571, 0.0
        %1606 = vst.msk [vmem:[#allocation2 + $0x120] sm:$0xff] %vm1568, 0.0
        %1607 = vst.msk [vmem:[#allocation2 + $0x128] sm:$0xff] %vm1568, 0.0
        %1608 = vst.msk [vmem:[#allocation2 + $0x130] sm:$0x3] %vm1571, 0.0
        %1609 = vst.msk [vmem:[#allocation2 + $0x138] sm:$0xff] %vm1568, 0.0
        %1610 = vst.msk [vmem:[#allocation2 + $0x140] sm:$0xff] %vm1568, 0.0
        %1611 = vst.msk [vmem:[#allocation2 + $0x148] sm:$0x3] %vm1571, 0.0
        %1612 = vst.msk [vmem:[#allocation2 + $0x150] sm:$0xff] %vm1568, 0.0
        %1613 = vst.msk [vmem:[#allocation2 + $0x158] sm:$0xff] %vm1568, 0.0
        %1614 = vst.msk [vmem:[#allocation2 + $0x160] sm:$0x3] %vm1571, 0.0
        %1615 = vst.msk [vmem:[#allocation2 + $0x168] sm:$0xff] %vm1568, 0.0
        %1616 = vst.msk [vmem:[#allocation2 + $0x170] sm:$0xff] %vm1568, 0.0
        %1617 = vst.msk [vmem:[#allocation2 + $0x178] sm:$0x3] %vm1571, 0.0
        %1618 = vst.msk [vmem:[#allocation2 + $0x180] sm:$0xff] %vm1568, 0.0
        %1619 = vst.msk [vmem:[#allocation2 + $0x188] sm:$0xff] %vm1568, 0.0
        %1620 = vst.msk [vmem:[#allocation2 + $0x190] sm:$0x3] %vm1571, 0.0
        %1621 = vst.msk [vmem:[#allocation2 + $0x198] sm:$0xff] %vm1568, 0.0
        %1622 = vst.msk [vmem:[#allocation2 + $0x1a0] sm:$0xff] %vm1568, 0.0
        %1623 = vst.msk [vmem:[#allocation2 + $0x1a8] sm:$0x3] %vm1571, 0.0
        %v1624 = vld [vmem:[%s1348] sm:$0x1]
        %v1625 = vmul.f32 %v1624, %v1624
        %vm1626 = vcmask 516096
        %v1627 = vsel %vm1626, %v1625, 0.0
        %1628 = vadd.xlane.f32.xlu0 %v1627
        %v1629 = vpop.xlane.xlu0 %1628
        %v1630 = vrcp.pop 64.0
        %v1631 = vmul.f32 %v1629, %v1630
        %v1632 = vadd.f32 %v1631, 1e-08
        %v1633 = vrsqrt.pop %v1632
        %v1634 = vmul.f32 %v1624, %v1633
        %v1635 = vld [vmem:[#allocation5] sm:$0xff]
        %v1636 = vld [vmem:[#allocation5 + $0x8] sm:$0xff]
        %v1637 = vld [vmem:[#allocation5 + $0x10] sm:$0xff]
        %v1638 = vld [vmem:[#allocation5 + $0x18] sm:$0xff]
        %v1639 = vld [vmem:[#allocation5 + $0x20] sm:$0xff]
        %v1640 = vld [vmem:[#allocation5 + $0x28] sm:$0xff]
        %v1641 = vld [vmem:[#allocation5 + $0x30] sm:$0xff]
        %v1642 = vld [vmem:[#allocation5 + $0x38] sm:$0xff]
        %v1643 = vpack.c.bf16 %v1634, %v1634
        %v1644 = vpack.c.bf16 %v1636, %v1635
        %v1645 = vpack.c.bf16 %v1638, %v1637
        %v1646 = vpack.c.bf16 %v1640, %v1639
        %v1647 = vpack.c.bf16 %v1642, %v1641
        %v1648 = vld [vmem:[#allocation7] sm:$0x1]
        %v1650 = vsel %vm1568, %v1643, 0
        %1652 = vmatprep.subr.bf16.mxu0 0
        %1653 = vmatpush1.bf16.msra.mxu0 0
        %1654 = vmatprep.subr.bf16.mxu0 0
        %1655 = vmatpush1.bf16.msra.mxu0 0
        %1656 = vmatprep.subr.bf16.mxu0 0
        %1657 = vmatpush1.bf16.msra.mxu0 0
        %1658 = vmatprep.subr.bf16.mxu0 0
        %1659 = vmatpush1.bf16.msra.mxu0 0
        %1660 = vmatprep.subr.bf16.mxu0 0
        %1661 = vmatpush1.bf16.msra.mxu0 %v1647
        %1662 = vmatprep.subr.bf16.mxu0 0
        %1663 = vmatpush1.bf16.msra.mxu0 %v1646
        %1664 = vmatprep.subr.bf16.mxu0 0
        %1665 = vmatpush1.bf16.msra.mxu0 %v1645
        %1666 = vmatprep.subr.bf16.mxu0 0
        %1667 = vmatpush1.bf16.msra.mxu0 %v1644
        %1668 = vmatprep.subr.bf16.mxu0 0
        %1669 = vmatpush2.bf16.msra.mxu0 0
        %1670 = vmatprep.subr.bf16.mxu0 0
        %1671 = vmatpush2.bf16.msra.mxu0 0
        %1672 = vmatprep.subr.bf16.mxu0 0
        %1673 = vmatpush2.bf16.msra.mxu0 0
        %1674 = vmatprep.subr.bf16.mxu0 0
        %1675 = vmatpush2.bf16.msra.mxu0 0
        %1676 = vmatprep.subr.bf16.mxu0 0
        %1677 = vmatpush2.bf16.msra.mxu0 0
        %1678 = vmatprep.subr.bf16.mxu0 0
        %1679 = vmatpush2.bf16.msra.mxu0 0
        %1680 = vmatprep.subr.bf16.mxu0 0
        %1681 = vmatpush2.bf16.msra.mxu0 0
        %1682 = vmatprep.subr.bf16.mxu0 0
        %1683 = vmatpush2.bf16.msra.mxu0 0
        %1684 = vmatprep.mubr.bf16.mxu0 0
        %1685 = vmatmul.mubr.bf16.gmra.mxu0 %v1650
        %v1686 = vpop.f32.mrf.mxu0
        %v1687 = vadd.f32 %v1648, %v1686
        %v1688 = vpop.f32.mrf.mxu0
        %v1689 = vpop.f32.mrf.mxu0
        %v1690 = vpop.f32.mrf.mxu0
        %1691 = vdwg.mxu0
        %vm1692 = vcmp.ge.f32.partialorder %v1687, 0.0
        %v1693 = vmul.f32 %v1687, 0.2
        %v1694 = vsel %vm1692, %v1687, %v1693
        %v1695 = vmul.f32 %v1694, 1.4142135
        %v1696 = vld [vmem:[#allocation8] sm:$0xff]
        %v1697 = vld [vmem:[#allocation8 + $0x8] sm:$0xff]
        %v1698 = vld [vmem:[#allocation8 + $0x10] sm:$0xff]
        %v1699 = vld [vmem:[#allocation8 + $0x18] sm:$0xff]
        %v1700 = vld [vmem:[#allocation8 + $0x20] sm:$0xff]
        %v1701 = vld [vmem:[#allocation8 + $0x28] sm:$0xff]
        %v1702 = vld [vmem:[#allocation8 + $0x30] sm:$0xff]
        %v1703 = vld [vmem:[#allocation8 + $0x38] sm:$0xff]
        %v1704 = vpack.c.bf16 %v1695, %v1695
        %v1705 = vpack.c.bf16 %v1697, %v1696
        %v1706 = vpack.c.bf16 %v1699, %v1698
        %v1707 = vpack.c.bf16 %v1701, %v1700
        %v1708 = vpack.c.bf16 %v1703, %v1702
        %v1709 = vld [vmem:[#allocation10] sm:$0x1]
        %v1711 = vsel %vm1568, %v1704, 0
        %1713 = vmatprep.subr.bf16.mxu0 0
        %1714 = vmatpush1.bf16.msra.mxu0 0
        %1715 = vmatprep.subr.bf16.mxu0 0
        %1716 = vmatpush1.bf16.msra.mxu0 0
        %1717 = vmatprep.subr.bf16.mxu0 0
        %1718 = vmatpush1.bf16.msra.mxu0 0
        %1719 = vmatprep.subr.bf16.mxu0 0
        %1720 = vmatpush1.bf16.msra.mxu0 0
        %1721 = vmatprep.subr.bf16.mxu0 0
        %1722 = vmatpush1.bf16.msra.mxu0 %v1708
        %1723 = vmatprep.subr.bf16.mxu0 0
        %1724 = vmatpush1.bf16.msra.mxu0 %v1707
        %1725 = vmatprep.subr.bf16.mxu0 0
        %1726 = vmatpush1.bf16.msra.mxu0 %v1706
        %1727 = vmatprep.subr.bf16.mxu0 0
        %1728 = vmatpush1.bf16.msra.mxu0 %v1705
        %1729 = vmatprep.subr.bf16.mxu0 0
        %1730 = vmatpush2.bf16.msra.mxu0 0
        %1731 = vmatprep.subr.bf16.mxu0 0
        %1732 = vmatpush2.bf16.msra.mxu0 0
        %1733 = vmatprep.subr.bf16.mxu0 0
        %1734 = vmatpush2.bf16.msra.mxu0 0
        %1735 = vmatprep.subr.bf16.mxu0 0
        %1736 = vmatpush2.bf16.msra.mxu0 0
        %1737 = vmatprep.subr.bf16.mxu0 0
        %1738 = vmatpush2.bf16.msra.mxu0 0
        %1739 = vmatprep.subr.bf16.mxu0 0
        %1740 = vmatpush2.bf16.msra.mxu0 0
        %1741 = vmatprep.subr.bf16.mxu0 0
        %1742 = vmatpush2.bf16.msra.mxu0 0
        %1743 = vmatprep.subr.bf16.mxu0 0
        %1744 = vmatpush2.bf16.msra.mxu0 0
        %1745 = vmatprep.mubr.bf16.mxu0 0
        %1746 = vmatmul.mubr.bf16.gmra.mxu0 %v1711
        %v1747 = vpop.f32.mrf.mxu0
        %v1748 = vadd.f32 %v1709, %v1747
        %v1749 = vpop.f32.mrf.mxu0
        %v1750 = vpop.f32.mrf.mxu0
        %v1751 = vpop.f32.mrf.mxu0
        %1752 = vdwg.mxu0
        %vm1753 = vcmp.ge.f32.partialorder %v1748, 0.0
        %v1754 = vmul.f32 %v1748, 0.2
        %v1755 = vsel %vm1753, %v1748, %v1754
        %v1756 = vmul.f32 %v1755, 1.4142135
        %v1757 = vld [vmem:[#allocation11] sm:$0x1]
        %v1758 = vsub.f32 %v1756, %v1757
        %v1759 = vmul.f32 %v1758, 0.7
        %v1760 = vadd.f32 %v1757, %v1759
        %v1761 = vld [vmem:[#allocation13] sm:$0xff]
        %v1762 = vld [vmem:[#allocation13 + $0x8] sm:$0xff]
        %v1763 = vld [vmem:[#allocation13 + $0x10] sm:$0xff]
        %v1764 = vld [vmem:[#allocation13 + $0x18] sm:$0xff]
        %v1765 = vld [vmem:[#allocation13 + $0x20] sm:$0xff]
        %v1766 = vld [vmem:[#allocation13 + $0x28] sm:$0xff]
        %v1767 = vld [vmem:[#allocation13 + $0x30] sm:$0xff]
        %v1768 = vld [vmem:[#allocation13 + $0x38] sm:$0xff]
        %v1769 = vld [vmem:[#allocation13 + $0x40] sm:$0xff]
        %v1770 = vld [vmem:[#allocation13 + $0x48] sm:$0xff]
        %v1771 = vld [vmem:[#allocation13 + $0x50] sm:$0xff]
        %v1772 = vld [vmem:[#allocation13 + $0x58] sm:$0xff]
        %v1773 = vld [vmem:[#allocation13 + $0x60] sm:$0xff]
        %v1774 = vld [vmem:[#allocation13 + $0x68] sm:$0xff]
        %v1775 = vld [vmem:[#allocation13 + $0x70] sm:$0xff]
        %v1776 = vld [vmem:[#allocation13 + $0x78] sm:$0xff]
        %v1777 = vld [vmem:[#allocation13 + $0x80] sm:$0xff]
        %v1778 = vld [vmem:[#allocation13 + $0x88] sm:$0xff]
        %v1779 = vld [vmem:[#allocation13 + $0x90] sm:$0xff]
        %v1780 = vld [vmem:[#allocation13 + $0x98] sm:$0xff]
        %v1781 = vld [vmem:[#allocation13 + $0xa0] sm:$0xff]
        %v1782 = vld [vmem:[#allocation13 + $0xa8] sm:$0xff]
        %v1783 = vld [vmem:[#allocation13 + $0xb0] sm:$0xff]
        %v1784 = vld [vmem:[#allocation13 + $0xb8] sm:$0xff]
        %v1785 = vld [vmem:[#allocation13 + $0xc0] sm:$0xff]
        %v1786 = vld [vmem:[#allocation13 + $0xc8] sm:$0xff]
        %v1787 = vld [vmem:[#allocation13 + $0xd0] sm:$0xff]
        %v1788 = vld [vmem:[#allocation13 + $0xd8] sm:$0xff]
        %v1789 = vld [vmem:[#allocation13 + $0xe0] sm:$0xff]
        %v1790 = vld [vmem:[#allocation13 + $0xe8] sm:$0xff]
        %v1791 = vld [vmem:[#allocation13 + $0xf0] sm:$0xff]
        %v1792 = vld [vmem:[#allocation13 + $0xf8] sm:$0xff]
        %v1793 = vld [vmem:[#allocation13 + $0x100] sm:$0xff]
        %v1794 = vld [vmem:[#allocation13 + $0x108] sm:$0xff]
        %v1795 = vld [vmem:[#allocation13 + $0x110] sm:$0xff]
        %v1796 = vld [vmem:[#allocation13 + $0x118] sm:$0xff]
        %v1797 = vld [vmem:[#allocation13 + $0x120] sm:$0xff]
        %v1798 = vld [vmem:[#allocation13 + $0x128] sm:$0xff]
        %v1799 = vld [vmem:[#allocation13 + $0x130] sm:$0xff]
        %v1800 = vld [vmem:[#allocation13 + $0x138] sm:$0xff]
        %v1801 = vld [vmem:[#allocation13 + $0x140] sm:$0xff]
        %v1802 = vld [vmem:[#allocation13 + $0x148] sm:$0xff]
        %v1803 = vld [vmem:[#allocation13 + $0x150] sm:$0xff]
        %v1804 = vld [vmem:[#allocation13 + $0x158] sm:$0xff]
        %v1805 = vld [vmem:[#allocation13 + $0x160] sm:$0xff]
        %v1806 = vld [vmem:[#allocation13 + $0x168] sm:$0xff]
        %v1807 = vld [vmem:[#allocation13 + $0x170] sm:$0xff]
        %v1808 = vld [vmem:[#allocation13 + $0x178] sm:$0xff]
        %v1809 = vld [vmem:[#allocation13 + $0x180] sm:$0xff]
        %v1810 = vld [vmem:[#allocation13 + $0x188] sm:$0xff]
        %v1811 = vld [vmem:[#allocation13 + $0x190] sm:$0xff]
        %v1812 = vld [vmem:[#allocation13 + $0x198] sm:$0xff]
        %v1813 = vld [vmem:[#allocation13 + $0x1a0] sm:$0xff]
        %v1814 = vld [vmem:[#allocation13 + $0x1a8] sm:$0xff]
        %v1815 = vld [vmem:[#allocation13 + $0x1b0] sm:$0xff]
        %v1816 = vld [vmem:[#allocation13 + $0x1b8] sm:$0xff]
        %v1817 = vld [vmem:[#allocation13 + $0x1c0] sm:$0xff]
        %v1818 = vld [vmem:[#allocation13 + $0x1c8] sm:$0xff]
        %v1819 = vld [vmem:[#allocation13 + $0x1d0] sm:$0xff]
        %v1820 = vld [vmem:[#allocation13 + $0x1d8] sm:$0xff]
        %v1821 = vld [vmem:[#allocation13 + $0x1e0] sm:$0xff]
        %v1822 = vld [vmem:[#allocation13 + $0x1e8] sm:$0xff]
        %v1823 = vld [vmem:[#allocation13 + $0x1f0] sm:$0xff]
        %v1824 = vld [vmem:[#allocation13 + $0x1f8] sm:$0xff]
        %v1825 = vpack.c.bf16 %v1760, %v1760
        %v1826 = vpack.c.bf16 %v1769, %v1761
        %v1827 = vpack.c.bf16 %v1770, %v1762
        %v1828 = vpack.c.bf16 %v1771, %v1763
        %v1829 = vpack.c.bf16 %v1772, %v1764
        %v1830 = vpack.c.bf16 %v1773, %v1765
        %v1831 = vpack.c.bf16 %v1774, %v1766
        %v1832 = vpack.c.bf16 %v1775, %v1767
        %v1833 = vpack.c.bf16 %v1776, %v1768
        %v1834 = vpack.c.bf16 %v1785, %v1777
        %v1835 = vpack.c.bf16 %v1786, %v1778
        %v1836 = vpack.c.bf16 %v1787, %v1779
        %v1837 = vpack.c.bf16 %v1788, %v1780
        %v1838 = vpack.c.bf16 %v1789, %v1781
        %v1839 = vpack.c.bf16 %v1790, %v1782
        %v1840 = vpack.c.bf16 %v1791, %v1783
        %v1841 = vpack.c.bf16 %v1792, %v1784
        %v1842 = vpack.c.bf16 %v1801, %v1793
        %v1843 = vpack.c.bf16 %v1802, %v1794
        %v1844 = vpack.c.bf16 %v1803, %v1795
        %v1845 = vpack.c.bf16 %v1804, %v1796
        %v1846 = vpack.c.bf16 %v1805, %v1797
        %v1847 = vpack.c.bf16 %v1806, %v1798
        %v1848 = vpack.c.bf16 %v1807, %v1799
        %v1849 = vpack.c.bf16 %v1808, %v1800
        %v1850 = vpack.c.bf16 %v1817, %v1809
        %v1851 = vpack.c.bf16 %v1818, %v1810
        %v1852 = vpack.c.bf16 %v1819, %v1811
        %v1853 = vpack.c.bf16 %v1820, %v1812
        %v1854 = vpack.c.bf16 %v1821, %v1813
        %v1855 = vpack.c.bf16 %v1822, %v1814
        %v1856 = vpack.c.bf16 %v1823, %v1815
        %v1857 = vpack.c.bf16 %v1824, %v1816
        %v1858 = vld [vmem:[#allocation14] sm:$0xff]
        %v1860 = vlaneseq
        %v1861 = vshrl.u32 %v1860, 7
        %v1862 = vsub.s32 0, %v1861
        %v1863 = vrot.slane %v1858, %v1862
        %v1864 = vlaneseq
        %v1865 = vshrl.u32 %v1864, 7
        %v1866 = vsub.s32 1, %v1865
        %v1867 = vrot.slane %v1858, %v1866
        %v1868 = vlaneseq
        %v1869 = vshrl.u32 %v1868, 7
        %v1870 = vsub.s32 2, %v1869
        %v1871 = vrot.slane %v1858, %v1870
        %v1872 = vlaneseq
        %v1873 = vshrl.u32 %v1872, 7
        %v1874 = vsub.s32 3, %v1873
        %v1875 = vrot.slane %v1858, %v1874
        %v1876 = vlaneseq
        %v1877 = vshrl.u32 %v1876, 7
        %v1878 = vsub.s32 4, %v1877
        %v1879 = vrot.slane %v1858, %v1878
        %v1880 = vlaneseq
        %v1881 = vshrl.u32 %v1880, 7
        %v1882 = vsub.s32 5, %v1881
        %v1883 = vrot.slane %v1858, %v1882
        %v1884 = vlaneseq
        %v1885 = vshrl.u32 %v1884, 7
        %v1886 = vsub.s32 6, %v1885
        %v1887 = vrot.slane %v1858, %v1886
        %v1888 = vlaneseq
        %v1889 = vshrl.u32 %v1888, 7
        %v1890 = vsub.s32 7, %v1889
        %v1891 = vrot.slane %v1858, %v1890
        %v1901 = vsel %vm1568, %v1825, 0
        %1903 = vmatprep.subr.bf16.mxu0 0
        %1904 = vmatpush1.bf16.msra.mxu0 0
        %1905 = vmatprep.subr.bf16.mxu0 0
        %1906 = vmatpush1.bf16.msra.mxu0 0
        %1907 = vmatprep.subr.bf16.mxu0 0
        %1908 = vmatpush1.bf16.msra.mxu0 0
        %1909 = vmatprep.subr.bf16.mxu0 0
        %1910 = vmatpush1.bf16.msra.mxu0 0
        %1911 = vmatprep.subr.bf16.mxu0 %v1851
        %1912 = vmatpush1.bf16.msra.mxu0 %v1850
        %1913 = vmatprep.subr.bf16.mxu0 %v1843
        %1914 = vmatpush1.bf16.msra.mxu0 %v1842
        %1915 = vmatprep.subr.bf16.mxu0 %v1835
        %1916 = vmatpush1.bf16.msra.mxu0 %v1834
        %1917 = vmatprep.subr.bf16.mxu0 %v1827
        %1918 = vmatpush1.bf16.msra.mxu0 %v1826
        %1919 = vmatprep.subr.bf16.mxu0 0
        %1920 = vmatpush2.bf16.msra.mxu0 0
        %1921 = vmatprep.subr.bf16.mxu0 0
        %1922 = vmatpush2.bf16.msra.mxu0 0
        %1923 = vmatprep.subr.bf16.mxu0 0
        %1924 = vmatpush2.bf16.msra.mxu0 0
        %1925 = vmatprep.subr.bf16.mxu0 0
        %1926 = vmatpush2.bf16.msra.mxu0 0
        %1927 = vmatprep.subr.bf16.mxu0 0
        %1928 = vmatpush2.bf16.msra.mxu0 0
        %1929 = vmatprep.subr.bf16.mxu0 0
        %1930 = vmatpush2.bf16.msra.mxu0 0
        %1931 = vmatprep.subr.bf16.mxu0 0
        %1932 = vmatpush2.bf16.msra.mxu0 0
        %1933 = vmatprep.subr.bf16.mxu0 0
        %1934 = vmatpush2.bf16.msra.mxu0 0
        %1935 = vmatprep.mubr.bf16.mxu0 0
        %1936 = vmatmul.mubr.bf16.gmra.mxu0 %v1901
        %v1937 = vpop.f32.mrf.mxu0
        %v1938 = vadd.f32 %v1863, %v1937
        %v1939 = vpop.f32.mrf.mxu0
        %v1940 = vadd.f32 %v1867, %v1939
        %v1941 = vpop.f32.mrf.mxu0
        %v1942 = vpop.f32.mrf.mxu0
        %1943 = vdwg.mxu0
        %1944 = vmatprep.subr.bf16.mxu0 0
        %1945 = vmatpush1.bf16.msra.mxu0 0
        %1946 = vmatprep.subr.bf16.mxu0 0
        %1947 = vmatpush1.bf16.msra.mxu0 0
        %1948 = vmatprep.subr.bf16.mxu0 0
        %1949 = vmatpush1.bf16.msra.mxu0 0
        %1950 = vmatprep.subr.bf16.mxu0 0
        %1951 = vmatpush1.bf16.msra.mxu0 0
        %1952 = vmatprep.subr.bf16.mxu0 %v1853
        %1953 = vmatpush1.bf16.msra.mxu0 %v1852
        %1954 = vmatprep.subr.bf16.mxu0 %v1845
        %1955 = vmatpush1.bf16.msra.mxu0 %v1844
        %1956 = vmatprep.subr.bf16.mxu0 %v1837
        %1957 = vmatpush1.bf16.msra.mxu0 %v1836
        %1958 = vmatprep.subr.bf16.mxu0 %v1829
        %1959 = vmatpush1.bf16.msra.mxu0 %v1828
        %1960 = vmatprep.subr.bf16.mxu0 0
        %1961 = vmatpush2.bf16.msra.mxu0 0
        %1962 = vmatprep.subr.bf16.mxu0 0
        %1963 = vmatpush2.bf16.msra.mxu0 0
        %1964 = vmatprep.subr.bf16.mxu0 0
        %1965 = vmatpush2.bf16.msra.mxu0 0
        %1966 = vmatprep.subr.bf16.mxu0 0
        %1967 = vmatpush2.bf16.msra.mxu0 0
        %1968 = vmatprep.subr.bf16.mxu0 0
        %1969 = vmatpush2.bf16.msra.mxu0 0
        %1970 = vmatprep.subr.bf16.mxu0 0
        %1971 = vmatpush2.bf16.msra.mxu0 0
        %1972 = vmatprep.subr.bf16.mxu0 0
        %1973 = vmatpush2.bf16.msra.mxu0 0
        %1974 = vmatprep.subr.bf16.mxu0 0
        %1975 = vmatpush2.bf16.msra.mxu0 0
        %1976 = vmatprep.mubr.bf16.mxu0 0
        %1977 = vmatmul.mubr.bf16.gmra.mxu0 %v1901
        %v1978 = vpop.f32.mrf.mxu0
        %v1979 = vadd.f32 %v1871, %v1978
        %v1980 = vpop.f32.mrf.mxu0
        %v1981 = vadd.f32 %v1875, %v1980
        %v1982 = vpop.f32.mrf.mxu0
        %v1983 = vpop.f32.mrf.mxu0
        %1984 = vdwg.mxu0
        %1985 = vmatprep.subr.bf16.mxu0 0
        %1986 = vmatpush1.bf16.msra.mxu0 0
        %1987 = vmatprep.subr.bf16.mxu0 0
        %1988 = vmatpush1.bf16.msra.mxu0 0
        %1989 = vmatprep.subr.bf16.mxu0 0
        %1990 = vmatpush1.bf16.msra.mxu0 0
        %1991 = vmatprep.subr.bf16.mxu0 0
        %1992 = vmatpush1.bf16.msra.mxu0 0
        %1993 = vmatprep.subr.bf16.mxu0 %v1855
        %1994 = vmatpush1.bf16.msra.mxu0 %v1854
        %1995 = vmatprep.subr.bf16.mxu0 %v1847
        %1996 = vmatpush1.bf16.msra.mxu0 %v1846
        %1997 = vmatprep.subr.bf16.mxu0 %v1839
        %1998 = vmatpush1.bf16.msra.mxu0 %v1838
        %1999 = vmatprep.subr.bf16.mxu0 %v1831
        %2000 = vmatpush1.bf16.msra.mxu0 %v1830
        %2001 = vmatprep.subr.bf16.mxu0 0
        %2002 = vmatpush2.bf16.msra.mxu0 0
        %2003 = vmatprep.subr.bf16.mxu0 0
        %2004 = vmatpush2.bf16.msra.mxu0 0
        %2005 = vmatprep.subr.bf16.mxu0 0
        %2006 = vmatpush2.bf16.msra.mxu0 0
        %2007 = vmatprep.subr.bf16.mxu0 0
        %2008 = vmatpush2.bf16.msra.mxu0 0
        %2009 = vmatprep.subr.bf16.mxu0 0
        %2010 = vmatpush2.bf16.msra.mxu0 0
        %2011 = vmatprep.subr.bf16.mxu0 0
        %2012 = vmatpush2.bf16.msra.mxu0 0
        %2013 = vmatprep.subr.bf16.mxu0 0
        %2014 = vmatpush2.bf16.msra.mxu0 0
        %2015 = vmatprep.subr.bf16.mxu0 0
        %2016 = vmatpush2.bf16.msra.mxu0 0
        %2017 = vmatprep.mubr.bf16.mxu0 0
        %2018 = vmatmul.mubr.bf16.gmra.mxu0 %v1901
        %v2019 = vpop.f32.mrf.mxu0
        %v2020 = vadd.f32 %v1879, %v2019
        %v2021 = vpop.f32.mrf.mxu0
        %v2022 = vadd.f32 %v1883, %v2021
        %v2023 = vpop.f32.mrf.mxu0
        %v2024 = vpop.f32.mrf.mxu0
        %2025 = vdwg.mxu0
        %2026 = vmatprep.subr.bf16.mxu0 0
        %2027 = vmatpush1.bf16.msra.mxu0 0
        %2028 = vmatprep.subr.bf16.mxu0 0
        %2029 = vmatpush1.bf16.msra.mxu0 0
        %2030 = vmatprep.subr.bf16.mxu0 0
        %2031 = vmatpush1.bf16.msra.mxu0 0
        %2032 = vmatprep.subr.bf16.mxu0 0
        %2033 = vmatpush1.bf16.msra.mxu0 0
        %2034 = vmatprep.subr.bf16.mxu0 %v1857
        %2035 = vmatpush1.bf16.msra.mxu0 %v1856
        %2036 = vmatprep.subr.bf16.mxu0 %v1849
        %2037 = vmatpush1.bf16.msra.mxu0 %v1848
        %2038 = vmatprep.subr.bf16.mxu0 %v1841
        %2039 = vmatpush1.bf16.msra.mxu0 %v1840
        %2040 = vmatprep.subr.bf16.mxu0 %v1833
        %2041 = vmatpush1.bf16.msra.mxu0 %v1832
        %2042 = vmatprep.subr.bf16.mxu0 0
        %2043 = vmatpush2.bf16.msra.mxu0 0
        %2044 = vmatprep.subr.bf16.mxu0 0
        %2045 = vmatpush2.bf16.msra.mxu0 0
        %2046 = vmatprep.subr.bf16.mxu0 0
        %2047 = vmatpush2.bf16.msra.mxu0 0
        %2048 = vmatprep.subr.bf16.mxu0 0
        %2049 = vmatpush2.bf16.msra.mxu0 0
        %2050 = vmatprep.subr.bf16.mxu0 0
        %2051 = vmatpush2.bf16.msra.mxu0 0
        %2052 = vmatprep.subr.bf16.mxu0 0
        %2053 = vmatpush2.bf16.msra.mxu0 0
        %2054 = vmatprep.subr.bf16.mxu0 0
        %2055 = vmatpush2.bf16.msra.mxu0 0
        %2056 = vmatprep.subr.bf16.mxu0 0
        %2057 = vmatpush2.bf16.msra.mxu0 0
        %2058 = vmatprep.mubr.bf16.mxu0 0
        %2059 = vmatmul.mubr.bf16.gmra.mxu0 %v1901
        %v2060 = vpop.f32.mrf.mxu0
        %v2061 = vadd.f32 %v1887, %v2060
        %v2062 = vpop.f32.mrf.mxu0
        %v2063 = vadd.f32 %v1891, %v2062
        %v2064 = vpop.f32.mrf.mxu0
        %v2065 = vpop.f32.mrf.mxu0
        %2066 = vdwg.mxu0
        %v2067 = vld [vmem:[#allocation16] sm:$0xff]
        %v2068 = vld [vmem:[#allocation16 + $0x8] sm:$0xff]
        %v2069 = vlaneseq
        %v2070 = vshrl.u32 %v2069, 7
        %v2071 = vsub.s32 0, %v2070
        %v2072 = vrot.slane %v1938, %v2071
        %v2073 = vmul.f32 %v2067, %v2072
        %v2074 = vmul.f32 %v2068, %v2072
        %v2077 = vcombine.high %v2073, %v2073
        %v2078 = vcombine.high %v2074, %v2074
        %s2081 = scalar_lea.vmem [#allocation2], 24
        %vm2082 = vcmask 519168
        %2083 = vst.msk [vmem:[%s2081 + $0x1] sm:$0xf] %vm2082, %v2073
        %2084 = vst.msk [vmem:[%s2081 + $0x19] sm:$0xf] %vm2082, %v2077
        %2085 = vst.msk [vmem:[%s2081 + $0x31] sm:$0xf] %vm2082, %v2074
        %2086 = vst.msk [vmem:[%s2081 + $0x49] sm:$0xf] %vm2082, %v2078
        %v2087 = vld [vmem:[#allocation2] sm:$0xf]
        %v2088 = vld [vmem:[#allocation2 + $0x18] sm:$0xf]
        %v2089 = vld [vmem:[#allocation2 + $0x30] sm:$0xf]
        %v2090 = vld [vmem:[#allocation2 + $0x48] sm:$0xf]
        %v2091 = vld [vmem:[#allocation2 + $0x1] sm:$0xf]
        %v2092 = vld [vmem:[#allocation2 + $0x19] sm:$0xf]
        %v2093 = vld [vmem:[#allocation2 + $0x31] sm:$0xf]
        %v2094 = vld [vmem:[#allocation2 + $0x49] sm:$0xf]
        %v2095 = vld [vmem:[#allocation2 + $0x2] sm:$0xf]
        %v2096 = vld [vmem:[#allocation2 + $0x1a] sm:$0xf]
        %v2097 = vld [vmem:[#allocation2 + $0x32] sm:$0xf]
        %v2098 = vld [vmem:[#allocation2 + $0x4a] sm:$0xf]
        %v2099 = vld [vmem:[%s2081] sm:$0xf]
        %v2100 = vld [vmem:[%s2081 + $0x18] sm:$0xf]
        %v2101 = vld [vmem:[%s2081 + $0x30] sm:$0xf]
        %v2102 = vld [vmem:[%s2081 + $0x48] sm:$0xf]
        %v2103 = vld [vmem:[%s2081 + $0x1] sm:$0xf]
        %v2104 = vld [vmem:[%s2081 + $0x19] sm:$0xf]
        %v2105 = vld [vmem:[%s2081 + $0x31] sm:$0xf]
        %v2106 = vld [vmem:[%s2081 + $0x49] sm:$0xf]
        %v2107 = vld [vmem:[%s2081 + $0x2] sm:$0xf]
        %v2108 = vld [vmem:[%s2081 + $0x1a] sm:$0xf]
        %v2109 = vld [vmem:[%s2081 + $0x32] sm:$0xf]
        %v2110 = vld [vmem:[%s2081 + $0x4a] sm:$0xf]
        %s2111 = scalar_lea.vmem [#allocation2], 48
        %v2112 = vld [vmem:[%s2111] sm:$0xf]
        %v2113 = vld [vmem:[%s2111 + $0x18] sm:$0xf]
        %v2114 = vld [vmem:[%s2111 + $0x30] sm:$0xf]
        %v2115 = vld [vmem:[%s2111 + $0x48] sm:$0xf]
        %v2116 = vld [vmem:[%s2111 + $0x1] sm:$0xf]
        %v2117 = vld [vmem:[%s2111 + $0x19] sm:$0xf]
        %v2118 = vld [vmem:[%s2111 + $0x31] sm:$0xf]
        %v2119 = vld [vmem:[%s2111 + $0x49] sm:$0xf]
        %v2120 = vld [vmem:[%s2111 + $0x2] sm:$0xf]
        %v2121 = vld [vmem:[%s2111 + $0x1a] sm:$0xf]
        %v2122 = vld [vmem:[%s2111 + $0x32] sm:$0xf]
        %v2123 = vld [vmem:[%s2111 + $0x4a] sm:$0xf]
        %2128 = vrot.lane.b32.xlu0 %v2091, 64
        %v2129 = vpop.permute.xlu0 %2128
        %2130 = vrot.lane.b32.xlu0 %v2092, 64
        %v2131 = vpop.permute.xlu0 %2130
        %2132 = vrot.lane.b32.xlu0 %v2093, 64
        %v2133 = vpop.permute.xlu0 %2132
        %2134 = vrot.lane.b32.xlu0 %v2094, 64
        %v2135 = vpop.permute.xlu0 %2134
        %2144 = vrot.lane.b32.xlu0 %v2099, 64
        %v2145 = vpop.permute.xlu0 %2144
        %2146 = vrot.lane.b32.xlu0 %v2100, 64
        %v2147 = vpop.permute.xlu0 %2146
        %2148 = vrot.lane.b32.xlu0 %v2101, 64
        %v2149 = vpop.permute.xlu0 %2148
        %2150 = vrot.lane.b32.xlu0 %v2102, 64
        %v2151 = vpop.permute.xlu0 %2150
        %2160 = vrot.lane.b32.xlu0 %v2107, 64
        %v2161 = vpop.permute.xlu0 %2160
        %2162 = vrot.lane.b32.xlu0 %v2108, 64
        %v2163 = vpop.permute.xlu0 %2162
        %2164 = vrot.lane.b32.xlu0 %v2109, 64
        %v2165 = vpop.permute.xlu0 %2164
        %2166 = vrot.lane.b32.xlu0 %v2110, 64
        %v2167 = vpop.permute.xlu0 %2166
        %2176 = vrot.lane.b32.xlu0 %v2116, 64
        %v2177 = vpop.permute.xlu0 %2176
        %2178 = vrot.lane.b32.xlu0 %v2117, 64
        %v2179 = vpop.permute.xlu0 %2178
        %2180 = vrot.lane.b32.xlu0 %v2118, 64
        %v2181 = vpop.permute.xlu0 %2180
        %2182 = vrot.lane.b32.xlu0 %v2119, 64
        %v2183 = vpop.permute.xlu0 %2182
        %v2188 = vsel %vm1568, %v2087, %v2129
        %v2189 = vsel %vm1568, %v2088, %v2131
        %v2190 = vsel %vm1568, %v2089, %v2133
        %v2191 = vsel %vm1568, %v2090, %v2135
        %v2192 = vsel %vm1568, %v2095, %v2145
        %v2193 = vsel %vm1568, %v2096, %v2147
        %v2194 = vsel %vm1568, %v2097, %v2149
        %v2195 = vsel %vm1568, %v2098, %v2151
        %v2196 = vsel %vm1568, %v2103, %v2161
        %v2197 = vsel %vm1568, %v2104, %v2163
        %v2198 = vsel %vm1568, %v2105, %v2165
        %v2199 = vsel %vm1568, %v2106, %v2167
        %v2200 = vsel %vm1568, %v2112, %v2177
        %v2201 = vsel %vm1568, %v2113, %v2179
        %v2202 = vsel %vm1568, %v2114, %v2181
        %v2203 = vsel %vm1568, %v2115, %v2183
        %v2224 = vcombine.low %v2188, %v2192
        %v2225 = vcombine.low %v2196, %v2200
        %v2226 = vcombine.low %v2189, %v2193
        %v2227 = vcombine.low %v2197, %v2201
        %v2228 = vcombine.low %v2190, %v2194
        %v2229 = vcombine.low %v2198, %v2202
        %v2230 = vcombine.low %v2191, %v2195
        %v2231 = vcombine.low %v2199, %v2203
        %v2232 = vld [vmem:[#allocation20] sm:$0xff]
        %v2233 = vld [vmem:[#allocation20 + $0x8] sm:$0xff]
        %v2234 = vld [vmem:[#allocation20 + $0x10] sm:$0xff]
        %v2235 = vld [vmem:[#allocation20 + $0x18] sm:$0xff]
        %v2236 = vld [vmem:[#allocation20 + $0x20] sm:$0xff]
        %v2237 = vld [vmem:[#allocation20 + $0x28] sm:$0xff]
        %v2238 = vld [vmem:[#allocation20 + $0x30] sm:$0xff]
        %v2239 = vld [vmem:[#allocation20 + $0x38] sm:$0xff]
        %v2240 = vld [vmem:[#allocation20 + $0x40] sm:$0xff]
        %v2241 = vld [vmem:[#allocation20 + $0x48] sm:$0xff]
        %v2242 = vld [vmem:[#allocation20 + $0x50] sm:$0xff]
        %v2243 = vld [vmem:[#allocation20 + $0x58] sm:$0xff]
        %v2244 = vld [vmem:[#allocation20 + $0x60] sm:$0xff]
        %v2245 = vld [vmem:[#allocation20 + $0x68] sm:$0xff]
        %v2246 = vld [vmem:[#allocation20 + $0x70] sm:$0xff]
        %v2247 = vld [vmem:[#allocation20 + $0x78] sm:$0xff]
        %v2248 = vld [vmem:[#allocation20 + $0x80] sm:$0xff]
        %v2249 = vld [vmem:[#allocation20 + $0x88] sm:$0xff]
        %v2250 = vld [vmem:[#allocation20 + $0x90] sm:$0xff]
        %v2251 = vld [vmem:[#allocation20 + $0x98] sm:$0xff]
        %v2252 = vld [vmem:[#allocation20 + $0xa0] sm:$0xff]
        %v2253 = vld [vmem:[#allocation20 + $0xa8] sm:$0xff]
        %v2254 = vld [vmem:[#allocation20 + $0xb0] sm:$0xff]
        %v2255 = vld [vmem:[#allocation20 + $0xb8] sm:$0xff]
        %v2256 = vld [vmem:[#allocation20 + $0xc0] sm:$0xff]
        %v2257 = vld [vmem:[#allocation20 + $0xc8] sm:$0xff]
        %v2258 = vld [vmem:[#allocation20 + $0xd0] sm:$0xff]
        %v2259 = vld [vmem:[#allocation20 + $0xd8] sm:$0xff]
        %v2260 = vld [vmem:[#allocation20 + $0xe0] sm:$0xff]
        %v2261 = vld [vmem:[#allocation20 + $0xe8] sm:$0xff]
        %v2262 = vld [vmem:[#allocation20 + $0xf0] sm:$0xff]
        %v2263 = vld [vmem:[#allocation20 + $0xf8] sm:$0xff]
        %v2264 = vld [vmem:[#allocation20 + $0x100] sm:$0xff]
        %v2265 = vld [vmem:[#allocation20 + $0x108] sm:$0xff]
        %v2266 = vld [vmem:[#allocation20 + $0x110] sm:$0xff]
        %v2267 = vld [vmem:[#allocation20 + $0x118] sm:$0xff]
        %v2268 = vld [vmem:[#allocation20 + $0x120] sm:$0xff]
        %v2269 = vld [vmem:[#allocation20 + $0x128] sm:$0xff]
        %v2270 = vld [vmem:[#allocation20 + $0x130] sm:$0xff]
        %v2271 = vld [vmem:[#allocation20 + $0x138] sm:$0xff]
        %v2272 = vld [vmem:[#allocation20 + $0x140] sm:$0xff]
        %v2273 = vld [vmem:[#allocation20 + $0x148] sm:$0xff]
        %v2274 = vld [vmem:[#allocation20 + $0x150] sm:$0xff]
        %v2275 = vld [vmem:[#allocation20 + $0x158] sm:$0xff]
        %v2276 = vld [vmem:[#allocation20 + $0x160] sm:$0xff]
        %v2277 = vld [vmem:[#allocation20 + $0x168] sm:$0xff]
        %v2278 = vld [vmem:[#allocation20 + $0x170] sm:$0xff]
        %v2279 = vld [vmem:[#allocation20 + $0x178] sm:$0xff]
        %v2280 = vld [vmem:[#allocation20 + $0x180] sm:$0xff]
        %v2281 = vld [vmem:[#allocation20 + $0x188] sm:$0xff]
        %v2282 = vld [vmem:[#allocation20 + $0x190] sm:$0xff]
        %v2283 = vld [vmem:[#allocation20 + $0x198] sm:$0xff]
        %v2284 = vld [vmem:[#allocation20 + $0x1a0] sm:$0xff]
        %v2285 = vld [vmem:[#allocation20 + $0x1a8] sm:$0xff]
        %v2286 = vld [vmem:[#allocation20 + $0x1b0] sm:$0xff]
        %v2287 = vld [vmem:[#allocation20 + $0x1b8] sm:$0xff]
        %v2288 = vld [vmem:[#allocation20 + $0x1c0] sm:$0xff]
        %v2289 = vld [vmem:[#allocation20 + $0x1c8] sm:$0xff]
        %v2290 = vld [vmem:[#allocation20 + $0x1d0] sm:$0xff]
        %v2291 = vld [vmem:[#allocation20 + $0x1d8] sm:$0xff]
        %v2292 = vld [vmem:[#allocation20 + $0x1e0] sm:$0xff]
        %v2293 = vld [vmem:[#allocation20 + $0x1e8] sm:$0xff]
        %v2294 = vld [vmem:[#allocation20 + $0x1f0] sm:$0xff]
        %v2295 = vld [vmem:[#allocation20 + $0x1f8] sm:$0xff]
        %v2296 = vld [vmem:[#allocation20 + $0x200] sm:$0xff]
        %v2297 = vld [vmem:[#allocation20 + $0x208] sm:$0xff]
        %v2298 = vld [vmem:[#allocation20 + $0x210] sm:$0xff]
        %v2299 = vld [vmem:[#allocation20 + $0x218] sm:$0xff]
        %v2300 = vld [vmem:[#allocation20 + $0x220] sm:$0xff]
        %v2301 = vld [vmem:[#allocation20 + $0x228] sm:$0xff]
        %v2302 = vld [vmem:[#allocation20 + $0x230] sm:$0xff]
        %v2303 = vld [vmem:[#allocation20 + $0x238] sm:$0xff]
        %v2304 = vcombine.low %v2224, %v2226
        %v2305 = vcombine.high %v2224, %v2226
        %v2306 = vcombine.low %v2225, %v2227
        %v2307 = vcombine.high %v2225, %v2227
        %v2308 = vcombine.low %v2120, %v2121
        %v2309 = vcombine.low %v2228, %v2230
        %v2310 = vcombine.high %v2228, %v2230
        %v2311 = vcombine.low %v2229, %v2231
        %v2312 = vcombine.high %v2229, %v2231
        %v2313 = vcombine.low %v2122, %v2123
        %v2324 = vpack.c.bf16 %v2309, %v2304
        %v2325 = vpack.c.bf16 %v2310, %v2305
        %v2326 = vpack.c.bf16 %v2311, %v2306
        %v2327 = vpack.c.bf16 %v2312, %v2307
        %v2328 = vpack.c.bf16 %v2313, %v2308
        %v2329 = vpack.c.bf16 %v2233, %v2232
        %v2330 = vpack.c.bf16 %v2235, %v2234
        %v2331 = vpack.c.bf16 %v2237, %v2236
        %v2332 = vpack.c.bf16 %v2239, %v2238
        %v2333 = vpack.c.bf16 %v2241, %v2240
        %v2334 = vpack.c.bf16 %v2243, %v2242
        %v2335 = vpack.c.bf16 %v2245, %v2244
        %v2336 = vpack.c.bf16 %v2247, %v2246
        %v2337 = vpack.c.bf16 %v2249, %v2248
        %v2338 = vpack.c.bf16 %v2251, %v2250
        %v2339 = vpack.c.bf16 %v2253, %v2252
        %v2340 = vpack.c.bf16 %v2255, %v2254
        %v2341 = vpack.c.bf16 %v2257, %v2256
        %v2342 = vpack.c.bf16 %v2259, %v2258
        %v2343 = vpack.c.bf16 %v2261, %v2260
        %v2344 = vpack.c.bf16 %v2263, %v2262
        %v2345 = vpack.c.bf16 %v2265, %v2264
        %v2346 = vpack.c.bf16 %v2267, %v2266
        %v2347 = vpack.c.bf16 %v2269, %v2268
        %v2348 = vpack.c.bf16 %v2271, %v2270
        %v2349 = vpack.c.bf16 %v2273, %v2272
        %v2350 = vpack.c.bf16 %v2275, %v2274
        %v2351 = vpack.c.bf16 %v2277, %v2276
        %v2352 = vpack.c.bf16 %v2279, %v2278
        %v2353 = vpack.c.bf16 %v2281, %v2280
        %v2354 = vpack.c.bf16 %v2283, %v2282
        %v2355 = vpack.c.bf16 %v2285, %v2284
        %v2356 = vpack.c.bf16 %v2287, %v2286
        %v2357 = vpack.c.bf16 %v2289, %v2288
        %v2358 = vpack.c.bf16 %v2291, %v2290
        %v2359 = vpack.c.bf16 %v2293, %v2292
        %v2360 = vpack.c.bf16 %v2295, %v2294
        %v2361 = vpack.c.bf16 %v2297, %v2296
        %v2362 = vpack.c.bf16 %v2299, %v2298
        %v2363 = vpack.c.bf16 %v2301, %v2300
        %v2364 = vpack.c.bf16 %v2303, %v2302
        %v2366 = vsel %vm1568, %v2328, 0
        %2368 = vmatprep.subr.bf16.mxu0 0
        %2369 = vmatpush1.bf16.msra.mxu0 %v2336
        %2370 = vmatprep.subr.bf16.mxu0 0
        %2371 = vmatpush1.bf16.msra.mxu0 %v2335
        %2372 = vmatprep.subr.bf16.mxu0 0
        %2373 = vmatpush1.bf16.msra.mxu0 %v2334
        %2374 = vmatprep.subr.bf16.mxu0 0
        %2375 = vmatpush1.bf16.msra.mxu0 %v2333
        %2376 = vmatprep.subr.bf16.mxu0 0
        %2377 = vmatpush1.bf16.msra.mxu0 %v2332
        %2378 = vmatprep.subr.bf16.mxu0 0
        %2379 = vmatpush1.bf16.msra.mxu0 %v2331
        %2380 = vmatprep.subr.bf16.mxu0 0
        %2381 = vmatpush1.bf16.msra.mxu0 %v2330
        %2382 = vmatprep.subr.bf16.mxu0 0
        %2383 = vmatpush1.bf16.msra.mxu0 %v2329
        %2384 = vmatprep.subr.bf16.mxu0 0
        %2385 = vmatpush2.bf16.msra.mxu0 %v2344
        %2386 = vmatprep.subr.bf16.mxu0 0
        %2387 = vmatpush2.bf16.msra.mxu0 %v2343
        %2388 = vmatprep.subr.bf16.mxu0 0
        %2389 = vmatpush2.bf16.msra.mxu0 %v2342
        %2390 = vmatprep.subr.bf16.mxu0 0
        %2391 = vmatpush2.bf16.msra.mxu0 %v2341
        %2392 = vmatprep.subr.bf16.mxu0 0
        %2393 = vmatpush2.bf16.msra.mxu0 %v2340
        %2394 = vmatprep.subr.bf16.mxu0 0
        %2395 = vmatpush2.bf16.msra.mxu0 %v2339
        %2396 = vmatprep.subr.bf16.mxu0 0
        %2397 = vmatpush2.bf16.msra.mxu0 %v2338
        %2398 = vmatprep.subr.bf16.mxu0 0
        %2399 = vmatpush2.bf16.msra.mxu0 %v2337
        %2400 = vmatprep.mubr.bf16.mxu0 %v2325
        %2401 = vmatmul.mubr.bf16.gmra.mxu0 %v2324
        %v2402 = vpop.f32.mrf.mxu0
        %v2403 = vadd.f32 0.0, %v2402
        %v2404 = vpop.f32.mrf.mxu0
        %v2405 = vpop.f32.mrf.mxu0
        %v2406 = vadd.f32 0.0, %v2405
        %v2407 = vpop.f32.mrf.mxu0
        %2408 = vdwg.mxu0
        %2409 = vmatprep.subr.bf16.mxu0 0
        %2410 = vmatpush1.bf16.msra.mxu0 %v2352
        %2411 = vmatprep.subr.bf16.mxu0 0
        %2412 = vmatpush1.bf16.msra.mxu0 %v2351
        %2413 = vmatprep.subr.bf16.mxu0 0
        %2414 = vmatpush1.bf16.msra.mxu0 %v2350
        %2415 = vmatprep.subr.bf16.mxu0 0
        %2416 = vmatpush1.bf16.msra.mxu0 %v2349
        %2417 = vmatprep.subr.bf16.mxu0 0
        %2418 = vmatpush1.bf16.msra.mxu0 %v2348
        %2419 = vmatprep.subr.bf16.mxu0 0
        %2420 = vmatpush1.bf16.msra.mxu0 %v2347
        %2421 = vmatprep.subr.bf16.mxu0 0
        %2422 = vmatpush1.bf16.msra.mxu0 %v2346
        %2423 = vmatprep.subr.bf16.mxu0 0
        %2424 = vmatpush1.bf16.msra.mxu0 %v2345
        %2425 = vmatprep.subr.bf16.mxu0 0
        %2426 = vmatpush2.bf16.msra.mxu0 %v2360
        %2427 = vmatprep.subr.bf16.mxu0 0
        %2428 = vmatpush2.bf16.msra.mxu0 %v2359
        %2429 = vmatprep.subr.bf16.mxu0 0
        %2430 = vmatpush2.bf16.msra.mxu0 %v2358
        %2431 = vmatprep.subr.bf16.mxu0 0
        %2432 = vmatpush2.bf16.msra.mxu0 %v2357
        %2433 = vmatprep.subr.bf16.mxu0 0
        %2434 = vmatpush2.bf16.msra.mxu0 %v2356
        %2435 = vmatprep.subr.bf16.mxu0 0
        %2436 = vmatpush2.bf16.msra.mxu0 %v2355
        %2437 = vmatprep.subr.bf16.mxu0 0
        %2438 = vmatpush2.bf16.msra.mxu0 %v2354
        %2439 = vmatprep.subr.bf16.mxu0 0
        %2440 = vmatpush2.bf16.msra.mxu0 %v2353
        %2441 = vmatprep.mubr.bf16.mxu0 %v2327
        %2442 = vmatmul.mubr.bf16.gmra.mxu0 %v2326
        %v2443 = vpop.f32.mrf.mxu0
        %v2444 = vadd.f32 %v2403, %v2443
        %v2445 = vpop.f32.mrf.mxu0
        %v2446 = vpop.f32.mrf.mxu0
        %v2447 = vadd.f32 %v2406, %v2446
        %v2448 = vpop.f32.mrf.mxu0
        %2449 = vdwg.mxu0
        %2450 = vmatprep.subr.bf16.mxu0 0
        %2451 = vmatpush1.bf16.msra.mxu0 0
        %2452 = vmatprep.subr.bf16.mxu0 0
        %2453 = vmatpush1.bf16.msra.mxu0 0
        %2454 = vmatprep.subr.bf16.mxu0 0
        %2455 = vmatpush1.bf16.msra.mxu0 0
        %2456 = vmatprep.subr.bf16.mxu0 0
        %2457 = vmatpush1.bf16.msra.mxu0 0
        %2458 = vmatprep.subr.bf16.mxu0 0
        %2459 = vmatpush1.bf16.msra.mxu0 %v2364
        %2460 = vmatprep.subr.bf16.mxu0 0
        %2461 = vmatpush1.bf16.msra.mxu0 %v2363
        %2462 = vmatprep.subr.bf16.mxu0 0
        %2463 = vmatpush1.bf16.msra.mxu0 %v2362
        %2464 = vmatprep.subr.bf16.mxu0 0
        %2465 = vmatpush1.bf16.msra.mxu0 %v2361
        %2466 = vmatprep.subr.bf16.mxu0 0
        %2467 = vmatpush2.bf16.msra.mxu0 0
        %2468 = vmatprep.subr.bf16.mxu0 0
        %2469 = vmatpush2.bf16.msra.mxu0 0
        %2470 = vmatprep.subr.bf16.mxu0 0
        %2471 = vmatpush2.bf16.msra.mxu0 0
        %2472 = vmatprep.subr.bf16.mxu0 0
        %2473 = vmatpush2.bf16.msra.mxu0 0
        %2474 = vmatprep.subr.bf16.mxu0 0
        %2475 = vmatpush2.bf16.msra.mxu0 0
        %2476 = vmatprep.subr.bf16.mxu0 0
        %2477 = vmatpush2.bf16.msra.mxu0 0
        %2478 = vmatprep.subr.bf16.mxu0 0
        %2479 = vmatpush2.bf16.msra.mxu0 0
        %2480 = vmatprep.subr.bf16.mxu0 0
        %2481 = vmatpush2.bf16.msra.mxu0 0
        %2482 = vmatprep.mubr.bf16.mxu0 0
        %2483 = vmatmul.mubr.bf16.gmra.mxu0 %v2366
        %v2484 = vpop.f32.mrf.mxu0
        %v2485 = vadd.f32 %v2444, %v2484
        %v2486 = vpop.f32.mrf.mxu0
        %v2487 = vpop.f32.mrf.mxu0
        %v2488 = vadd.f32 %v2447, %v2487
        %v2489 = vpop.f32.mrf.mxu0
        %2490 = vdwg.mxu0
        %v2491 = vmul.f32 %v1938, %v1938
        %v2492 = vld [vmem:[#allocation22] sm:$0xff]
        %v2493 = vld [vmem:[#allocation22 + $0x8] sm:$0xff]
        %v2494 = vld [vmem:[#allocation22 + $0x10] sm:$0xff]
        %v2495 = vld [vmem:[#allocation22 + $0x18] sm:$0xff]
        %v2496 = vld [vmem:[#allocation22 + $0x20] sm:$0xff]
        %v2497 = vld [vmem:[#allocation22 + $0x28] sm:$0xff]
        %v2498 = vld [vmem:[#allocation22 + $0x30] sm:$0xff]
        %v2499 = vld [vmem:[#allocation22 + $0x38] sm:$0xff]
        %v2501 = vsel %vm1568, %v2491, 0
        %2503 = vmatprep.subr.mxu0 0.0
        %2504 = vmatpush1.msra.mxu0 0.0
        %2505 = vmatprep.subr.mxu0 0.0
        %2506 = vmatpush1.msra.mxu0 0.0
        %2507 = vmatprep.subr.mxu0 0.0
        %2508 = vmatpush1.msra.mxu0 0.0
        %2509 = vmatprep.subr.mxu0 0.0
        %2510 = vmatpush1.msra.mxu0 0.0
        %2511 = vmatprep.subr.mxu0 0.0
        %2512 = vmatpush1.msra.mxu0 0.0
        %2513 = vmatprep.subr.mxu0 0.0
        %2514 = vmatpush1.msra.mxu0 0.0
        %2515 = vmatprep.subr.mxu0 0.0
        %2516 = vmatpush1.msra.mxu0 0.0
        %2517 = vmatprep.subr.mxu0 0.0
        %2518 = vmatpush1.msra.mxu0 0.0
        %2519 = vmatprep.subr.mxu0 0.0
        %2520 = vmatpush1.msra.mxu0 %v2499
        %2521 = vmatprep.subr.mxu0 0.0
        %2522 = vmatpush1.msra.mxu0 %v2498
        %2523 = vmatprep.subr.mxu0 0.0
        %2524 = vmatpush1.msra.mxu0 %v2497
        %2525 = vmatprep.subr.mxu0 0.0
        %2526 = vmatpush1.msra.mxu0 %v2496
        %2527 = vmatprep.subr.mxu0 0.0
        %2528 = vmatpush1.msra.mxu0 %v2495
        %2529 = vmatprep.subr.mxu0 0.0
        %2530 = vmatpush1.msra.mxu0 %v2494
        %2531 = vmatprep.subr.mxu0 0.0
        %2532 = vmatpush1.msra.mxu0 %v2493
        %2533 = vmatprep.subr.mxu0 0.0
        %2534 = vmatpush1.msra.mxu0 %v2492
        %2535 = vmatprep.subr.mxu0 0.0
        %2536 = vmatpush2.msra.mxu0 0.0
        %2537 = vmatprep.subr.mxu0 0.0
        %2538 = vmatpush2.msra.mxu0 0.0
        %2539 = vmatprep.subr.mxu0 0.0
        %2540 = vmatpush2.msra.mxu0 0.0
        %2541 = vmatprep.subr.mxu0 0.0
        %2542 = vmatpush2.msra.mxu0 0.0
        %2543 = vmatprep.subr.mxu0 0.0
        %2544 = vmatpush2.msra.mxu0 0.0
        %2545 = vmatprep.subr.mxu0 0.0
        %2546 = vmatpush2.msra.mxu0 0.0
        %2547 = vmatprep.subr.mxu0 0.0
        %2548 = vmatpush2.msra.mxu0 0.0
        %2549 = vmatprep.subr.mxu0 0.0
        %2550 = vmatpush2.msra.mxu0 0.0
        %2551 = vmatprep.subr.mxu0 0.0
        %2552 = vmatpush2.msra.mxu0 0.0
        %2553 = vmatprep.subr.mxu0 0.0
        %2554 = vmatpush2.msra.mxu0 0.0
        %2555 = vmatprep.subr.mxu0 0.0
        %2556 = vmatpush2.msra.mxu0 0.0
        %2557 = vmatprep.subr.mxu0 0.0
        %2558 = vmatpush2.msra.mxu0 0.0
        %2559 = vmatprep.subr.mxu0 0.0
        %2560 = vmatpush2.msra.mxu0 0.0
        %2561 = vmatprep.subr.mxu0 0.0
        %2562 = vmatpush2.msra.mxu0 0.0
        %2563 = vmatprep.subr.mxu0 0.0
        %2564 = vmatpush2.msra.mxu0 0.0
        %2565 = vmatprep.subr.mxu0 0.0
        %2566 = vmatpush2.msra.mxu0 0.0
        %2567 = vmatprep.mubr.f32.mxu0 0.0
        %2568 = vmatmul.mubr.f32.gmra.mxu0 %v2501
        %v2569 = vpop.f32.mrf.mxu0
        %v2570 = vadd.f32 1e-08, %v2569
        %v2571 = vpop.f32.mrf.mxu0
        %2572 = vdwg.mxu0
        %v2573 = vrsqrt.pop %v2570
        %v2574 = vlaneseq
        %v2575 = vshrl.u32 %v2574, 7
        %v2576 = vsub.s32 0, %v2575
        %v2577 = vrot.slane %v2573, %v2576
        %v2578 = vmul.f32 %v2485, %v2577
        %v2579 = vmul.f32 %v2488, %v2577
        %v2580 = vld [vmem:[#allocation23] sm:$0xff]
        %v2581 = vld [vmem:[#allocation23 + $0x8] sm:$0xff]
        %2583 = vset.pattern.permute.xlu0 0
        %2584 = vperm.xlu0 %2583, %v2580
        %v2585 = vpop.permute.xlu0 %2584
        %2588 = vset.pattern.permute.xlu0 0
        %2589 = vperm.xlu0 %2588, %v2581
        %v2590 = vpop.permute.xlu0 %2589
        %v2592 = vadd.f32 %v2578, %v2585
        %v2593 = vadd.f32 %v2579, %v2590
        %v2594 = vld [vmem:[#allocation25] sm:$0x1]
        %v2596 = vlaneseq
        %v2597 = vshrl.u32 %v2596, 7
        %v2598 = vsub.s32 0, %v2597
        %v2599 = vrot.slane %v2594, %v2598
        %v2601 = vadd.f32 %v2592, %v2599
        %v2602 = vadd.f32 %v2593, %v2599
        %vm2603 = vcmp.ge.f32.partialorder %v2601, 0.0
        %vm2604 = vcmp.ge.f32.partialorder %v2602, 0.0
        %v2605 = vmul.f32 %v2601, 0.2
        %v2606 = vmul.f32 %v2602, 0.2
        %v2607 = vsel %vm2603, %v2601, %v2605
        %v2608 = vsel %vm2604, %v2602, %v2606
        %v2609 = vmul.f32 %v2607, 1.4142135
        %v2610 = vmul.f32 %v2608, 1.4142135
        %v2611 = vmax.f32 %v2609, -256.0
        %v2612 = vmax.f32 %v2610, -256.0
        %v2613 = vmin.f32 %v2611, 256.0
        %v2614 = vmin.f32 %v2612, 256.0
        %v2615 = vlaneseq
        %v2616 = vshrl.u32 %v2615, 7
        %v2617 = vsub.s32 0, %v2616
        %v2618 = vrot.slane %v2022, %v2617
        %v2619 = vmul.f32 %v2613, %v2618
        %v2620 = vmul.f32 %v2614, %v2618
        %v2621 = vpack.c.bf16 %v2620, %v2619
        %v2622 = vld [vmem:[#allocation47] sm:$0x7]
        %v2623 = vpack.c.bf16 %v2622, %v2622
        %v2624 = vld [vmem:[#allocation49] sm:$0x7]
        %2626 = vset.pattern.permute.xlu0 0
        %2627 = vperm.xlu0 %2626, %v2624
        %v2628 = vpop.permute.xlu0 %2627
        %v2631 = vsel %vm1568, %v2623, 0
        %v2634 = vsel %vm1568, %v2621, 0
        %2636 = vmatprep.subr.bf16.mxu0 0
        %2637 = vmatpush1.bf16.xpose.msra.mxu0 0
        %2638 = vmatprep.subr.bf16.mxu0 0
        %2639 = vmatpush1.bf16.xpose.msra.mxu0 0
        %2640 = vmatprep.subr.bf16.mxu0 0
        %2641 = vmatpush1.bf16.xpose.msra.mxu0 0
        %2642 = vmatprep.subr.bf16.mxu0 0
        %2643 = vmatpush1.bf16.xpose.msra.mxu0 0
        %2644 = vmatprep.subr.bf16.mxu0 0
        %2645 = vmatpush1.bf16.xpose.msra.mxu0 0
        %2646 = vmatprep.subr.bf16.mxu0 0
        %2647 = vmatpush1.bf16.xpose.msra.mxu0 0
        %2648 = vmatprep.subr.bf16.mxu0 0
        %2649 = vmatpush1.bf16.xpose.msra.mxu0 0
        %2650 = vmatprep.subr.bf16.mxu0 0
        %2651 = vmatpush1.bf16.xpose.msra.mxu0 %v2634
        %2652 = vmatprep.subr.bf16.mxu0 0
        %2653 = vmatpush2.bf16.xpose.msra.mxu0 0
        %2654 = vmatprep.subr.bf16.mxu0 0
        %2655 = vmatpush2.bf16.xpose.msra.mxu0 0
        %2656 = vmatprep.subr.bf16.mxu0 0
        %2657 = vmatpush2.bf16.xpose.msra.mxu0 0
        %2658 = vmatprep.subr.bf16.mxu0 0
        %2659 = vmatpush2.bf16.xpose.msra.mxu0 0
        %2660 = vmatprep.subr.bf16.mxu0 0
        %2661 = vmatpush2.bf16.xpose.msra.mxu0 0
        %2662 = vmatprep.subr.bf16.mxu0 0
        %2663 = vmatpush2.bf16.xpose.msra.mxu0 0
        %2664 = vmatprep.subr.bf16.mxu0 0
        %2665 = vmatpush2.bf16.xpose.msra.mxu0 0
        %2666 = vmatprep.subr.bf16.mxu0 0
        %2667 = vmatpush2.bf16.xpose.msra.mxu0 0
        %2668 = vmatprep.mubr.bf16.mxu0 0
        %2669 = vmatmul.mubr.bf16.gmra.mxu0 %v2631
        %v2670 = vpop.f32.mrf.mxu0
        %v2671 = vadd.f32 %v2628, %v2670
        %v2672 = vpop.f32.mrf.mxu0
        %v2673 = vpop.f32.mrf.mxu0
        %v2674 = vpop.f32.mrf.mxu0
        %2675 = vdwg.mxu0
        %v2676 = vmax.f32 %v2671, -256.0
        %v2677 = vmin.f32 %v2676, 256.0
        %v2678 = vld [vmem:[#allocation17] sm:$0xff]
        %v2679 = vld [vmem:[#allocation17 + $0x8] sm:$0xff]
        %v2680 = vld [vmem:[#allocation17 + $0x10] sm:$0xff]
        %v2681 = vld [vmem:[#allocation17 + $0x18] sm:$0xff]
        %v2682 = vld [vmem:[#allocation17 + $0x20] sm:$0xff]
        %v2683 = vld [vmem:[#allocation17 + $0x28] sm:$0xff]
        %v2684 = vld [vmem:[#allocation17 + $0x30] sm:$0xff]
        %v2685 = vld [vmem:[#allocation17 + $0x38] sm:$0xff]
        %vm2686 = vcmask 130048
        %v2688 = vsel %vm2686, %v2678, 0
        %v2691 = vsel %vm2686, %v2679, 0
        %v2694 = vsel %vm2686, %v2680, 0
        %v2697 = vsel %vm2686, %v2681, 0
        %v2700 = vsel %vm2686, %v2682, 0
        %v2703 = vsel %vm2686, %v2683, 0
        %v2706 = vsel %vm2686, %v2684, 0
        %v2709 = vsel %vm2686, %v2685, 0
        %2711 = vmatprep.subr.mxu0 0.0
        %2712 = vmatpush1.msra.mxu0 0.0
        %2713 = vmatprep.subr.mxu0 0.0
        %2714 = vmatpush1.msra.mxu0 0.0
        %2715 = vmatprep.subr.mxu0 0.0
        %2716 = vmatpush1.msra.mxu0 0.0
        %2717 = vmatprep.subr.mxu0 0.0
        %2718 = vmatpush1.msra.mxu0 0.0
        %2719 = vmatprep.subr.mxu0 0.0
        %2720 = vmatpush1.msra.mxu0 0.0
        %2721 = vmatprep.subr.mxu0 0.0
        %2722 = vmatpush1.msra.mxu0 0.0
        %2723 = vmatprep.subr.mxu0 0.0
        %2724 = vmatpush1.msra.mxu0 0.0
        %2725 = vmatprep.subr.mxu0 0.0
        %2726 = vmatpush1.msra.mxu0 0.0
        %2727 = vmatprep.subr.mxu0 0.0
        %2728 = vmatpush1.msra.mxu0 0.0
        %2729 = vmatprep.subr.mxu0 0.0
        %2730 = vmatpush1.msra.mxu0 0.0
        %2731 = vmatprep.subr.mxu0 0.0
        %2732 = vmatpush1.msra.mxu0 0.0
        %2733 = vmatprep.subr.mxu0 0.0
        %2734 = vmatpush1.msra.mxu0 0.0
        %2735 = vmatprep.subr.mxu0 0.0
        %2736 = vmatpush1.msra.mxu0 0.0
        %2737 = vmatprep.subr.mxu0 0.0
        %2738 = vmatpush1.msra.mxu0 0.0
        %2739 = vmatprep.subr.mxu0 0.0
        %2740 = vmatpush1.msra.mxu0 %v2614
        %2741 = vmatprep.subr.mxu0 0.0
        %2742 = vmatpush1.msra.mxu0 %v2613
        %2743 = vmatprep.subr.mxu0 0.0
        %2744 = vmatpush2.msra.mxu0 0.0
        %2745 = vmatprep.subr.mxu0 0.0
        %2746 = vmatpush2.msra.mxu0 0.0
        %2747 = vmatprep.subr.mxu0 0.0
        %2748 = vmatpush2.msra.mxu0 0.0
        %2749 = vmatprep.subr.mxu0 0.0
        %2750 = vmatpush2.msra.mxu0 0.0
        %2751 = vmatprep.subr.mxu0 0.0
        %2752 = vmatpush2.msra.mxu0 0.0
        %2753 = vmatprep.subr.mxu0 0.0
        %2754 = vmatpush2.msra.mxu0 0.0
        %2755 = vmatprep.subr.mxu0 0.0
        %2756 = vmatpush2.msra.mxu0 0.0
        %2757 = vmatprep.subr.mxu0 0.0
        %2758 = vmatpush2.msra.mxu0 0.0
        %2759 = vmatprep.subr.mxu0 0.0
        %2760 = vmatpush2.msra.mxu0 0.0
        %2761 = vmatprep.subr.mxu0 0.0
        %2762 = vmatpush2.msra.mxu0 0.0
        %2763 = vmatprep.subr.mxu0 0.0
        %2764 = vmatpush2.msra.mxu0 0.0
        %2765 = vmatprep.subr.mxu0 0.0
        %2766 = vmatpush2.msra.mxu0 0.0
        %2767 = vmatprep.subr.mxu0 0.0
        %2768 = vmatpush2.msra.mxu0 0.0
        %2769 = vmatprep.subr.mxu0 0.0
        %2770 = vmatpush2.msra.mxu0 0.0
        %2771 = vmatprep.subr.mxu0 0.0
        %2772 = vmatpush2.msra.mxu0 0.0
        %2773 = vmatprep.subr.mxu0 0.0
        %2774 = vmatpush2.msra.mxu0 0.0
        %2775 = vmatprep.mubr.f32.mxu0 0.0
        %2776 = vmatmul.mubr.f32.gmra.mxu0 %v2688
        %v2777 = vpop.f32.mrf.mxu0
        %v2778 = vadd.f32 0.0, %v2777
        %v2779 = vpop.f32.mrf.mxu0
        %2780 = vmatprep.mubr.f32.mxu0 0.0
        %2781 = vmatmul.mubr.f32.gmra.mxu0 %v2691
        %v2782 = vpop.f32.mrf.mxu0
        %v2783 = vadd.f32 0.0, %v2782
        %v2784 = vpop.f32.mrf.mxu0
        %2785 = vmatprep.mubr.f32.mxu0 0.0
        %2786 = vmatmul.mubr.f32.gmra.mxu0 %v2694
        %v2787 = vpop.f32.mrf.mxu0
        %v2788 = vadd.f32 0.0, %v2787
        %v2789 = vpop.f32.mrf.mxu0
        %2790 = vmatprep.mubr.f32.mxu0 0.0
        %2791 = vmatmul.mubr.f32.gmra.mxu0 %v2697
        %v2792 = vpop.f32.mrf.mxu0
        %v2793 = vadd.f32 0.0, %v2792
        %v2794 = vpop.f32.mrf.mxu0
        %2795 = vmatprep.mubr.f32.mxu0 0.0
        %2796 = vmatmul.mubr.f32.gmra.mxu0 %v2700
        %v2797 = vpop.f32.mrf.mxu0
        %v2798 = vadd.f32 0.0, %v2797
        %v2799 = vpop.f32.mrf.mxu0
        %2800 = vmatprep.mubr.f32.mxu0 0.0
        %2801 = vmatmul.mubr.f32.gmra.mxu0 %v2703
        %v2802 = vpop.f32.mrf.mxu0
        %v2803 = vadd.f32 0.0, %v2802
        %v2804 = vpop.f32.mrf.mxu0
        %2805 = vmatprep.mubr.f32.mxu0 0.0
        %2806 = vmatmul.mubr.f32.gmra.mxu0 %v2706
        %v2807 = vpop.f32.mrf.mxu0
        %v2808 = vadd.f32 0.0, %v2807
        %v2809 = vpop.f32.mrf.mxu0
        %2810 = vmatprep.mubr.f32.mxu0 0.0
        %2811 = vmatmul.mubr.f32.gmra.mxu0 %v2709
        %v2812 = vpop.f32.mrf.mxu0
        %v2813 = vadd.f32 0.0, %v2812
        %v2814 = vpop.f32.mrf.mxu0
        %2815 = vdwg.mxu0
        %v2816 = vlaneseq
        %v2817 = vshrl.u32 %v2816, 7
        %v2818 = vsub.s32 0, %v2817
        %v2819 = vrot.slane %v1940, %v2818
        %v2820 = vmul.f32 %v2778, %v2819
        %v2821 = vmul.f32 %v2783, %v2819
        %v2822 = vmul.f32 %v2788, %v2819
        %v2823 = vmul.f32 %v2793, %v2819
        %v2824 = vmul.f32 %v2798, %v2819
        %v2825 = vmul.f32 %v2803, %v2819
        %v2826 = vmul.f32 %v2808, %v2819
        %v2827 = vmul.f32 %v2813, %v2819
        %2828 = vst.msk [vmem:[%s2081 + $0x1] sm:$0xff] %vm1568, %v2820
        %2829 = vst.msk [vmem:[%s2081 + $0x19] sm:$0xff] %vm1568, %v2821
        %2830 = vst.msk [vmem:[%s2081 + $0x31] sm:$0xff] %vm1568, %v2822
        %2831 = vst.msk [vmem:[%s2081 + $0x49] sm:$0xff] %vm1568, %v2823
        %2832 = vst.msk [vmem:[%s2081 + $0x61] sm:$0xff] %vm1568, %v2824
        %2833 = vst.msk [vmem:[%s2081 + $0x79] sm:$0xff] %vm1568, %v2825
        %2834 = vst.msk [vmem:[%s2081 + $0x91] sm:$0xff] %vm1568, %v2826
        %2835 = vst.msk [vmem:[%s2081 + $0xa9] sm:$0xff] %vm1568, %v2827
        %v2836 = vld [vmem:[#allocation2] sm:$0xff]
        %v2837 = vld [vmem:[#allocation2 + $0x18] sm:$0xff]
        %v2838 = vld [vmem:[#allocation2 + $0x30] sm:$0xff]
        %v2839 = vld [vmem:[#allocation2 + $0x48] sm:$0xff]
        %v2840 = vld [vmem:[#allocation2 + $0x60] sm:$0xff]
        %v2841 = vld [vmem:[#allocation2 + $0x78] sm:$0xff]
        %v2842 = vld [vmem:[#allocation2 + $0x90] sm:$0xff]
        %v2843 = vld [vmem:[#allocation2 + $0xa8] sm:$0xff]
        %v2844 = vld [vmem:[#allocation2 + $0x1] sm:$0xff]
        %v2845 = vld [vmem:[#allocation2 + $0x19] sm:$0xff]
        %v2846 = vld [vmem:[#allocation2 + $0x31] sm:$0xff]
        %v2847 = vld [vmem:[#allocation2 + $0x49] sm:$0xff]
        %v2848 = vld [vmem:[#allocation2 + $0x61] sm:$0xff]
        %v2849 = vld [vmem:[#allocation2 + $0x79] sm:$0xff]
        %v2850 = vld [vmem:[#allocation2 + $0x91] sm:$0xff]
        %v2851 = vld [vmem:[#allocation2 + $0xa9] sm:$0xff]
        %v2852 = vld [vmem:[#allocation2 + $0x2] sm:$0xff]
        %v2853 = vld [vmem:[#allocation2 + $0x1a] sm:$0xff]
        %v2854 = vld [vmem:[#allocation2 + $0x32] sm:$0xff]
        %v2855 = vld [vmem:[#allocation2 + $0x4a] sm:$0xff]
        %v2856 = vld [vmem:[#allocation2 + $0x62] sm:$0xff]
        %v2857 = vld [vmem:[#allocation2 + $0x7a] sm:$0xff]
        %v2858 = vld [vmem:[#allocation2 + $0x92] sm:$0xff]
        %v2859 = vld [vmem:[#allocation2 + $0xaa] sm:$0xff]
        %v2860 = vld [vmem:[%s2081] sm:$0xff]
        %v2861 = vld [vmem:[%s2081 + $0x18] sm:$0xff]
        %v2862 = vld [vmem:[%s2081 + $0x30] sm:$0xff]
        %v2863 = vld [vmem:[%s2081 + $0x48] sm:$0xff]
        %v2864 = vld [vmem:[%s2081 + $0x60] sm:$0xff]
        %v2865 = vld [vmem:[%s2081 + $0x78] sm:$0xff]
        %v2866 = vld [vmem:[%s2081 + $0x90] sm:$0xff]
        %v2867 = vld [vmem:[%s2081 + $0xa8] sm:$0xff]
        %v2868 = vld [vmem:[%s2081 + $0x1] sm:$0xff]
        %v2869 = vld [vmem:[%s2081 + $0x19] sm:$0xff]
        %v2870 = vld [vmem:[%s2081 + $0x31] sm:$0xff]
        %v2871 = vld [vmem:[%s2081 + $0x49] sm:$0xff]
        %v2872 = vld [vmem:[%s2081 + $0x61] sm:$0xff]
        %v2873 = vld [vmem:[%s2081 + $0x79] sm:$0xff]
        %v2874 = vld [vmem:[%s2081 + $0x91] sm:$0xff]
        %v2875 = vld [vmem:[%s2081 + $0xa9] sm:$0xff]
        %v2876 = vld [vmem:[%s2081 + $0x2] sm:$0xff]
        %v2877 = vld [vmem:[%s2081 + $0x1a] sm:$0xff]
        %v2878 = vld [vmem:[%s2081 + $0x32] sm:$0xff]
        %v2879 = vld [vmem:[%s2081 + $0x4a] sm:$0xff]
        %v2880 = vld [vmem:[%s2081 + $0x62] sm:$0xff]
        %v2881 = vld [vmem:[%s2081 + $0x7a] sm:$0xff]
        %v2882 = vld [vmem:[%s2081 + $0x92] sm:$0xff]
        %v2883 = vld [vmem:[%s2081 + $0xaa] sm:$0xff]
        %v2884 = vld [vmem:[%s2111] sm:$0xff]
        %v2885 = vld [vmem:[%s2111 + $0x18] sm:$0xff]
        %v2886 = vld [vmem:[%s2111 + $0x30] sm:$0xff]
        %v2887 = vld [vmem:[%s2111 + $0x48] sm:$0xff]
        %v2888 = vld [vmem:[%s2111 + $0x60] sm:$0xff]
        %v2889 = vld [vmem:[%s2111 + $0x78] sm:$0xff]
        %v2890 = vld [vmem:[%s2111 + $0x90] sm:$0xff]
        %v2891 = vld [vmem:[%s2111 + $0xa8] sm:$0xff]
        %v2892 = vld [vmem:[%s2111 + $0x1] sm:$0xff]
        %v2893 = vld [vmem:[%s2111 + $0x19] sm:$0xff]
        %v2894 = vld [vmem:[%s2111 + $0x31] sm:$0xff]
        %v2895 = vld [vmem:[%s2111 + $0x49] sm:$0xff]
        %v2896 = vld [vmem:[%s2111 + $0x61] sm:$0xff]
        %v2897 = vld [vmem:[%s2111 + $0x79] sm:$0xff]
        %v2898 = vld [vmem:[%s2111 + $0x91] sm:$0xff]
        %v2899 = vld [vmem:[%s2111 + $0xa9] sm:$0xff]
        %v2900 = vld [vmem:[%s2111 + $0x2] sm:$0xff]
        %v2901 = vld [vmem:[%s2111 + $0x1a] sm:$0xff]
        %v2902 = vld [vmem:[%s2111 + $0x32] sm:$0xff]
        %v2903 = vld [vmem:[%s2111 + $0x4a] sm:$0xff]
        %v2904 = vld [vmem:[%s2111 + $0x62] sm:$0xff]
        %v2905 = vld [vmem:[%s2111 + $0x7a] sm:$0xff]
        %v2906 = vld [vmem:[%s2111 + $0x92] sm:$0xff]
        %v2907 = vld [vmem:[%s2111 + $0xaa] sm:$0xff]
        %2916 = vrot.lane.b32.xlu0 %v2844, 64
        %v2917 = vpop.permute.xlu0 %2916
        %2918 = vrot.lane.b32.xlu0 %v2845, 64
        %v2919 = vpop.permute.xlu0 %2918
        %2920 = vrot.lane.b32.xlu0 %v2846, 64
        %v2921 = vpop.permute.xlu0 %2920
        %2922 = vrot.lane.b32.xlu0 %v2847, 64
        %v2923 = vpop.permute.xlu0 %2922
        %2924 = vrot.lane.b32.xlu0 %v2848, 64
        %v2925 = vpop.permute.xlu0 %2924
        %2926 = vrot.lane.b32.xlu0 %v2849, 64
        %v2927 = vpop.permute.xlu0 %2926
        %2928 = vrot.lane.b32.xlu0 %v2850, 64
        %v2929 = vpop.permute.xlu0 %2928
        %2930 = vrot.lane.b32.xlu0 %v2851, 64
        %v2931 = vpop.permute.xlu0 %2930
        %2948 = vrot.lane.b32.xlu0 %v2860, 64
        %v2949 = vpop.permute.xlu0 %2948
        %2950 = vrot.lane.b32.xlu0 %v2861, 64
        %v2951 = vpop.permute.xlu0 %2950
        %2952 = vrot.lane.b32.xlu0 %v2862, 64
        %v2953 = vpop.permute.xlu0 %2952
        %2954 = vrot.lane.b32.xlu0 %v2863, 64
        %v2955 = vpop.permute.xlu0 %2954
        %2956 = vrot.lane.b32.xlu0 %v2864, 64
        %v2957 = vpop.permute.xlu0 %2956
        %2958 = vrot.lane.b32.xlu0 %v2865, 64
        %v2959 = vpop.permute.xlu0 %2958
        %2960 = vrot.lane.b32.xlu0 %v2866, 64
        %v2961 = vpop.permute.xlu0 %2960
        %2962 = vrot.lane.b32.xlu0 %v2867, 64
        %v2963 = vpop.permute.xlu0 %2962
        %2980 = vrot.lane.b32.xlu0 %v2876, 64
        %v2981 = vpop.permute.xlu0 %2980
        %2982 = vrot.lane.b32.xlu0 %v2877, 64
        %v2983 = vpop.permute.xlu0 %2982
        %2984 = vrot.lane.b32.xlu0 %v2878, 64
        %v2985 = vpop.permute.xlu0 %2984
        %2986 = vrot.lane.b32.xlu0 %v2879, 64
        %v2987 = vpop.permute.xlu0 %2986
        %2988 = vrot.lane.b32.xlu0 %v2880, 64
        %v2989 = vpop.permute.xlu0 %2988
        %2990 = vrot.lane.b32.xlu0 %v2881, 64
        %v2991 = vpop.permute.xlu0 %2990
        %2992 = vrot.lane.b32.xlu0 %v2882, 64
        %v2993 = vpop.permute.xlu0 %2992
        %2994 = vrot.lane.b32.xlu0 %v2883, 64
        %v2995 = vpop.permute.xlu0 %2994
        %3012 = vrot.lane.b32.xlu0 %v2892, 64
        %v3013 = vpop.permute.xlu0 %3012
        %3014 = vrot.lane.b32.xlu0 %v2893, 64
        %v3015 = vpop.permute.xlu0 %3014
        %3016 = vrot.lane.b32.xlu0 %v2894, 64
        %v3017 = vpop.permute.xlu0 %3016
        %3018 = vrot.lane.b32.xlu0 %v2895, 64
        %v3019 = vpop.permute.xlu0 %3018
        %3020 = vrot.lane.b32.xlu0 %v2896, 64
        %v3021 = vpop.permute.xlu0 %3020
        %3022 = vrot.lane.b32.xlu0 %v2897, 64
        %v3023 = vpop.permute.xlu0 %3022
        %3024 = vrot.lane.b32.xlu0 %v2898, 64
        %v3025 = vpop.permute.xlu0 %3024
        %3026 = vrot.lane.b32.xlu0 %v2899, 64
        %v3027 = vpop.permute.xlu0 %3026
        %v3036 = vsel %vm1568, %v2836, %v2917
        %v3037 = vsel %vm1568, %v2837, %v2919
        %v3038 = vsel %vm1568, %v2838, %v2921
        %v3039 = vsel %vm1568, %v2839, %v2923
        %v3040 = vsel %vm1568, %v2840, %v2925
        %v3041 = vsel %vm1568, %v2841, %v2927
        %v3042 = vsel %vm1568, %v2842, %v2929
        %v3043 = vsel %vm1568, %v2843, %v2931
        %v3044 = vsel %vm1568, %v2852, %v2949
        %v3045 = vsel %vm1568, %v2853, %v2951
        %v3046 = vsel %vm1568, %v2854, %v2953
        %v3047 = vsel %vm1568, %v2855, %v2955
        %v3048 = vsel %vm1568, %v2856, %v2957
        %v3049 = vsel %vm1568, %v2857, %v2959
        %v3050 = vsel %vm1568, %v2858, %v2961
        %v3051 = vsel %vm1568, %v2859, %v2963
        %v3052 = vsel %vm1568, %v2868, %v2981
        %v3053 = vsel %vm1568, %v2869, %v2983
        %v3054 = vsel %vm1568, %v2870, %v2985
        %v3055 = vsel %vm1568, %v2871, %v2987
        %v3056 = vsel %vm1568, %v2872, %v2989
        %v3057 = vsel %vm1568, %v2873, %v2991
        %v3058 = vsel %vm1568, %v2874, %v2993
        %v3059 = vsel %vm1568, %v2875, %v2995
        %v3060 = vsel %vm1568, %v2884, %v3013
        %v3061 = vsel %vm1568, %v2885, %v3015
        %v3062 = vsel %vm1568, %v2886, %v3017
        %v3063 = vsel %vm1568, %v2887, %v3019
        %v3064 = vsel %vm1568, %v2888, %v3021
        %v3065 = vsel %vm1568, %v2889, %v3023
        %v3066 = vsel %vm1568, %v2890, %v3025
        %v3067 = vsel %vm1568, %v2891, %v3027
        %v3068 = vld [vmem:[#allocation26] sm:$0xff]
        %v3069 = vld [vmem:[#allocation26 + $0x8] sm:$0xff]
        %v3070 = vld [vmem:[#allocation26 + $0x10] sm:$0xff]
        %v3071 = vld [vmem:[#allocation26 + $0x18] sm:$0xff]
        %v3072 = vld [vmem:[#allocation26 + $0x20] sm:$0xff]
        %v3073 = vld [vmem:[#allocation26 + $0x28] sm:$0xff]
        %v3074 = vld [vmem:[#allocation26 + $0x30] sm:$0xff]
        %v3075 = vld [vmem:[#allocation26 + $0x38] sm:$0xff]
        %v3076 = vld [vmem:[#allocation26 + $0x40] sm:$0xff]
        %v3077 = vld [vmem:[#allocation26 + $0x48] sm:$0xff]
        %v3078 = vld [vmem:[#allocation26 + $0x50] sm:$0xff]
        %v3079 = vld [vmem:[#allocation26 + $0x58] sm:$0xff]
        %v3080 = vld [vmem:[#allocation26 + $0x60] sm:$0xff]
        %v3081 = vld [vmem:[#allocation26 + $0x68] sm:$0xff]
        %v3082 = vld [vmem:[#allocation26 + $0x70] sm:$0xff]
        %v3083 = vld [vmem:[#allocation26 + $0x78] sm:$0xff]
        %v3084 = vld [vmem:[#allocation26 + $0x80] sm:$0xff]
        %v3085 = vld [vmem:[#allocation26 + $0x88] sm:$0xff]
        %v3086 = vld [vmem:[#allocation26 + $0x90] sm:$0xff]
        %v3087 = vld [vmem:[#allocation26 + $0x98] sm:$0xff]
        %v3088 = vld [vmem:[#allocation26 + $0xa0] sm:$0xff]
        %v3089 = vld [vmem:[#allocation26 + $0xa8] sm:$0xff]
        %v3090 = vld [vmem:[#allocation26 + $0xb0] sm:$0xff]
        %v3091 = vld [vmem:[#allocation26 + $0xb8] sm:$0xff]
        %v3092 = vld [vmem:[#allocation26 + $0xc0] sm:$0xff]
        %v3093 = vld [vmem:[#allocation26 + $0xc8] sm:$0xff]
        %v3094 = vld [vmem:[#allocation26 + $0xd0] sm:$0xff]
        %v3095 = vld [vmem:[#allocation26 + $0xd8] sm:$0xff]
        %v3096 = vld [vmem:[#allocation26 + $0xe0] sm:$0xff]
        %v3097 = vld [vmem:[#allocation26 + $0xe8] sm:$0xff]
        %v3098 = vld [vmem:[#allocation26 + $0xf0] sm:$0xff]
        %v3099 = vld [vmem:[#allocation26 + $0xf8] sm:$0xff]
        %v3100 = vld [vmem:[#allocation26 + $0x100] sm:$0xff]
        %v3101 = vld [vmem:[#allocation26 + $0x108] sm:$0xff]
        %v3102 = vld [vmem:[#allocation26 + $0x110] sm:$0xff]
        %v3103 = vld [vmem:[#allocation26 + $0x118] sm:$0xff]
        %v3104 = vld [vmem:[#allocation26 + $0x120] sm:$0xff]
        %v3105 = vld [vmem:[#allocation26 + $0x128] sm:$0xff]
        %v3106 = vld [vmem:[#allocation26 + $0x130] sm:$0xff]
        %v3107 = vld [vmem:[#allocation26 + $0x138] sm:$0xff]
        %v3108 = vld [vmem:[#allocation26 + $0x140] sm:$0xff]
        %v3109 = vld [vmem:[#allocation26 + $0x148] sm:$0xff]
        %v3110 = vld [vmem:[#allocation26 + $0x150] sm:$0xff]
        %v3111 = vld [vmem:[#allocation26 + $0x158] sm:$0xff]
        %v3112 = vld [vmem:[#allocation26 + $0x160] sm:$0xff]
        %v3113 = vld [vmem:[#allocation26 + $0x168] sm:$0xff]
        %v3114 = vld [vmem:[#allocation26 + $0x170] sm:$0xff]
        %v3115 = vld [vmem:[#allocation26 + $0x178] sm:$0xff]
        %v3116 = vld [vmem:[#allocation26 + $0x180] sm:$0xff]
        %v3117 = vld [vmem:[#allocation26 + $0x188] sm:$0xff]
        %v3118 = vld [vmem:[#allocation26 + $0x190] sm:$0xff]
        %v3119 = vld [vmem:[#allocation26 + $0x198] sm:$0xff]
        %v3120 = vld [vmem:[#allocation26 + $0x1a0] sm:$0xff]
        %v3121 = vld [vmem:[#allocation26 + $0x1a8] sm:$0xff]
        %v3122 = vld [vmem:[#allocation26 + $0x1b0] sm:$0xff]
        %v3123 = vld [vmem:[#allocation26 + $0x1b8] sm:$0xff]
        %v3124 = vld [vmem:[#allocation26 + $0x1c0] sm:$0xff]
        %v3125 = vld [vmem:[#allocation26 + $0x1c8] sm:$0xff]
        %v3126 = vld [vmem:[#allocation26 + $0x1d0] sm:$0xff]
        %v3127 = vld [vmem:[#allocation26 + $0x1d8] sm:$0xff]
        %v3128 = vld [vmem:[#allocation26 + $0x1e0] sm:$0xff]
        %v3129 = vld [vmem:[#allocation26 + $0x1e8] sm:$0xff]
        %v3130 = vld [vmem:[#allocation26 + $0x1f0] sm:$0xff]
        %v3131 = vld [vmem:[#allocation26 + $0x1f8] sm:$0xff]
        %v3132 = vld [vmem:[#allocation26 + $0x200] sm:$0xff]
        %v3133 = vld [vmem:[#allocation26 + $0x208] sm:$0xff]
        %v3134 = vld [vmem:[#allocation26 + $0x210] sm:$0xff]
        %v3135 = vld [vmem:[#allocation26 + $0x218] sm:$0xff]
        %v3136 = vld [vmem:[#allocation26 + $0x220] sm:$0xff]
        %v3137 = vld [vmem:[#allocation26 + $0x228] sm:$0xff]
        %v3138 = vld [vmem:[#allocation26 + $0x230] sm:$0xff]
        %v3139 = vld [vmem:[#allocation26 + $0x238] sm:$0xff]
        %v3140 = vpack.c.bf16 %v3037, %v3036
        %v3141 = vpack.c.bf16 %v3045, %v3044
        %v3142 = vpack.c.bf16 %v3053, %v3052
        %v3143 = vpack.c.bf16 %v3061, %v3060
        %v3144 = vpack.c.bf16 %v2901, %v2900
        %v3145 = vpack.c.bf16 %v3039, %v3038
        %v3146 = vpack.c.bf16 %v3047, %v3046
        %v3147 = vpack.c.bf16 %v3055, %v3054
        %v3148 = vpack.c.bf16 %v3063, %v3062
        %v3149 = vpack.c.bf16 %v2903, %v2902
        %v3150 = vpack.c.bf16 %v3041, %v3040
        %v3151 = vpack.c.bf16 %v3049, %v3048
        %v3152 = vpack.c.bf16 %v3057, %v3056
        %v3153 = vpack.c.bf16 %v3065, %v3064
        %v3154 = vpack.c.bf16 %v2905, %v2904
        %v3155 = vpack.c.bf16 %v3043, %v3042
        %v3156 = vpack.c.bf16 %v3051, %v3050
        %v3157 = vpack.c.bf16 %v3059, %v3058
        %v3158 = vpack.c.bf16 %v3067, %v3066
        %v3159 = vpack.c.bf16 %v2907, %v2906
        %v3160 = vpack.c.bf16 %v3069, %v3068
        %v3161 = vpack.c.bf16 %v3071, %v3070
        %v3162 = vpack.c.bf16 %v3073, %v3072
        %v3163 = vpack.c.bf16 %v3075, %v3074
        %v3164 = vpack.c.bf16 %v3077, %v3076
        %v3165 = vpack.c.bf16 %v3079, %v3078
        %v3166 = vpack.c.bf16 %v3081, %v3080
        %v3167 = vpack.c.bf16 %v3083, %v3082
        %v3168 = vpack.c.bf16 %v3085, %v3084
        %v3169 = vpack.c.bf16 %v3087, %v3086
        %v3170 = vpack.c.bf16 %v3089, %v3088
        %v3171 = vpack.c.bf16 %v3091, %v3090
        %v3172 = vpack.c.bf16 %v3093, %v3092
        %v3173 = vpack.c.bf16 %v3095, %v3094
        %v3174 = vpack.c.bf16 %v3097, %v3096
        %v3175 = vpack.c.bf16 %v3099, %v3098
        %v3176 = vpack.c.bf16 %v3101, %v3100
        %v3177 = vpack.c.bf16 %v3103, %v3102
        %v3178 = vpack.c.bf16 %v3105, %v3104
        %v3179 = vpack.c.bf16 %v3107, %v3106
        %v3180 = vpack.c.bf16 %v3109, %v3108
        %v3181 = vpack.c.bf16 %v3111, %v3110
        %v3182 = vpack.c.bf16 %v3113, %v3112
        %v3183 = vpack.c.bf16 %v3115, %v3114
        %v3184 = vpack.c.bf16 %v3117, %v3116
        %v3185 = vpack.c.bf16 %v3119, %v3118
        %v3186 = vpack.c.bf16 %v3121, %v3120
        %v3187 = vpack.c.bf16 %v3123, %v3122
        %v3188 = vpack.c.bf16 %v3125, %v3124
        %v3189 = vpack.c.bf16 %v3127, %v3126
        %v3190 = vpack.c.bf16 %v3129, %v3128
        %v3191 = vpack.c.bf16 %v3131, %v3130
        %v3192 = vpack.c.bf16 %v3133, %v3132
        %v3193 = vpack.c.bf16 %v3135, %v3134
        %v3194 = vpack.c.bf16 %v3137, %v3136
        %v3195 = vpack.c.bf16 %v3139, %v3138
        %v3197 = vsel %vm1568, %v3144, 0
        %v3200 = vsel %vm1568, %v3149, 0
        %v3203 = vsel %vm1568, %v3154, 0
        %v3206 = vsel %vm1568, %v3159, 0
        %3208 = vmatprep.subr.bf16.mxu0 0
        %3209 = vmatpush1.bf16.msra.mxu0 %v3167
        %3210 = vmatprep.subr.bf16.mxu0 0
        %3211 = vmatpush1.bf16.msra.mxu0 %v3166
        %3212 = vmatprep.subr.bf16.mxu0 0
        %3213 = vmatpush1.bf16.msra.mxu0 %v3165
        %3214 = vmatprep.subr.bf16.mxu0 0
        %3215 = vmatpush1.bf16.msra.mxu0 %v3164
        %3216 = vmatprep.subr.bf16.mxu0 0
        %3217 = vmatpush1.bf16.msra.mxu0 %v3163
        %3218 = vmatprep.subr.bf16.mxu0 0
        %3219 = vmatpush1.bf16.msra.mxu0 %v3162
        %3220 = vmatprep.subr.bf16.mxu0 0
        %3221 = vmatpush1.bf16.msra.mxu0 %v3161
        %3222 = vmatprep.subr.bf16.mxu0 0
        %3223 = vmatpush1.bf16.msra.mxu0 %v3160
        %3224 = vmatprep.subr.bf16.mxu0 0
        %3225 = vmatpush2.bf16.msra.mxu0 %v3175
        %3226 = vmatprep.subr.bf16.mxu0 0
        %3227 = vmatpush2.bf16.msra.mxu0 %v3174
        %3228 = vmatprep.subr.bf16.mxu0 0
        %3229 = vmatpush2.bf16.msra.mxu0 %v3173
        %3230 = vmatprep.subr.bf16.mxu0 0
        %3231 = vmatpush2.bf16.msra.mxu0 %v3172
        %3232 = vmatprep.subr.bf16.mxu0 0
        %3233 = vmatpush2.bf16.msra.mxu0 %v3171
        %3234 = vmatprep.subr.bf16.mxu0 0
        %3235 = vmatpush2.bf16.msra.mxu0 %v3170
        %3236 = vmatprep.subr.bf16.mxu0 0
        %3237 = vmatpush2.bf16.msra.mxu0 %v3169
        %3238 = vmatprep.subr.bf16.mxu0 0
        %3239 = vmatpush2.bf16.msra.mxu0 %v3168
        %3240 = vmatprep.mubr.bf16.mxu0 %v3141
        %3241 = vmatmul.mubr.bf16.gmra.mxu0 %v3140
        %v3242 = vpop.f32.mrf.mxu0
        %v3243 = vadd.f32 0.0, %v3242
        %v3244 = vpop.f32.mrf.mxu0
        %v3245 = vpop.f32.mrf.mxu0
        %v3246 = vadd.f32 0.0, %v3245
        %v3247 = vpop.f32.mrf.mxu0
        %3248 = vmatprep.mubr.bf16.mxu0 %v3146
        %3249 = vmatmul.mubr.bf16.gmra.mxu0 %v3145
        %v3250 = vpop.f32.mrf.mxu0
        %v3251 = vadd.f32 0.0, %v3250
        %v3252 = vpop.f32.mrf.mxu0
        %v3253 = vpop.f32.mrf.mxu0
        %v3254 = vadd.f32 0.0, %v3253
        %v3255 = vpop.f32.mrf.mxu0
        %3256 = vmatprep.mubr.bf16.mxu0 %v3151
        %3257 = vmatmul.mubr.bf16.gmra.mxu0 %v3150
        %v3258 = vpop.f32.mrf.mxu0
        %v3259 = vadd.f32 0.0, %v3258
        %v3260 = vpop.f32.mrf.mxu0
        %v3261 = vpop.f32.mrf.mxu0
        %v3262 = vadd.f32 0.0, %v3261
        %v3263 = vpop.f32.mrf.mxu0
        %3264 = vmatprep.mubr.bf16.mxu0 %v3156
        %3265 = vmatmul.mubr.bf16.gmra.mxu0 %v3155
        %v3266 = vpop.f32.mrf.mxu0
        %v3267 = vadd.f32 0.0, %v3266
        %v3268 = vpop.f32.mrf.mxu0
        %v3269 = vpop.f32.mrf.mxu0
        %v3270 = vadd.f32 0.0, %v3269
        %v3271 = vpop.f32.mrf.mxu0
        %3272 = vdwg.mxu0
        %3273 = vmatprep.subr.bf16.mxu0 0
        %3274 = vmatpush1.bf16.msra.mxu0 %v3183
        %3275 = vmatprep.subr.bf16.mxu0 0
        %3276 = vmatpush1.bf16.msra.mxu0 %v3182
        %3277 = vmatprep.subr.bf16.mxu0 0
        %3278 = vmatpush1.bf16.msra.mxu0 %v3181
        %3279 = vmatprep.subr.bf16.mxu0 0
        %3280 = vmatpush1.bf16.msra.mxu0 %v3180
        %3281 = vmatprep.subr.bf16.mxu0 0
        %3282 = vmatpush1.bf16.msra.mxu0 %v3179
        %3283 = vmatprep.subr.bf16.mxu0 0
        %3284 = vmatpush1.bf16.msra.mxu0 %v3178
        %3285 = vmatprep.subr.bf16.mxu0 0
        %3286 = vmatpush1.bf16.msra.mxu0 %v3177
        %3287 = vmatprep.subr.bf16.mxu0 0
        %3288 = vmatpush1.bf16.msra.mxu0 %v3176
        %3289 = vmatprep.subr.bf16.mxu0 0
        %3290 = vmatpush2.bf16.msra.mxu0 %v3191
        %3291 = vmatprep.subr.bf16.mxu0 0
        %3292 = vmatpush2.bf16.msra.mxu0 %v3190
        %3293 = vmatprep.subr.bf16.mxu0 0
        %3294 = vmatpush2.bf16.msra.mxu0 %v3189
        %3295 = vmatprep.subr.bf16.mxu0 0
        %3296 = vmatpush2.bf16.msra.mxu0 %v3188
        %3297 = vmatprep.subr.bf16.mxu0 0
        %3298 = vmatpush2.bf16.msra.mxu0 %v3187
        %3299 = vmatprep.subr.bf16.mxu0 0
        %3300 = vmatpush2.bf16.msra.mxu0 %v3186
        %3301 = vmatprep.subr.bf16.mxu0 0
        %3302 = vmatpush2.bf16.msra.mxu0 %v3185
        %3303 = vmatprep.subr.bf16.mxu0 0
        %3304 = vmatpush2.bf16.msra.mxu0 %v3184
        %3305 = vmatprep.mubr.bf16.mxu0 %v3143
        %3306 = vmatmul.mubr.bf16.gmra.mxu0 %v3142
        %v3307 = vpop.f32.mrf.mxu0
        %v3308 = vadd.f32 %v3243, %v3307
        %v3309 = vpop.f32.mrf.mxu0
        %v3310 = vpop.f32.mrf.mxu0
        %v3311 = vadd.f32 %v3246, %v3310
        %v3312 = vpop.f32.mrf.mxu0
        %3313 = vmatprep.mubr.bf16.mxu0 %v3148
        %3314 = vmatmul.mubr.bf16.gmra.mxu0 %v3147
        %v3315 = vpop.f32.mrf.mxu0
        %v3316 = vadd.f32 %v3251, %v3315
        %v3317 = vpop.f32.mrf.mxu0
        %v3318 = vpop.f32.mrf.mxu0
        %v3319 = vadd.f32 %v3254, %v3318
        %v3320 = vpop.f32.mrf.mxu0
        %3321 = vmatprep.mubr.bf16.mxu0 %v3153
        %3322 = vmatmul.mubr.bf16.gmra.mxu0 %v3152
        %v3323 = vpop.f32.mrf.mxu0
        %v3324 = vadd.f32 %v3259, %v3323
        %v3325 = vpop.f32.mrf.mxu0
        %v3326 = vpop.f32.mrf.mxu0
        %v3327 = vadd.f32 %v3262, %v3326
        %v3328 = vpop.f32.mrf.mxu0
        %3329 = vmatprep.mubr.bf16.mxu0 %v3158
        %3330 = vmatmul.mubr.bf16.gmra.mxu0 %v3157
        %v3331 = vpop.f32.mrf.mxu0
        %v3332 = vadd.f32 %v3267, %v3331
        %v3333 = vpop.f32.mrf.mxu0
        %v3334 = vpop.f32.mrf.mxu0
        %v3335 = vadd.f32 %v3270, %v3334
        %v3336 = vpop.f32.mrf.mxu0
        %3337 = vdwg.mxu0
        %3338 = vmatprep.subr.bf16.mxu0 0
        %3339 = vmatpush1.bf16.msra.mxu0 0
        %3340 = vmatprep.subr.bf16.mxu0 0
        %3341 = vmatpush1.bf16.msra.mxu0 0
        %3342 = vmatprep.subr.bf16.mxu0 0
        %3343 = vmatpush1.bf16.msra.mxu0 0
        %3344 = vmatprep.subr.bf16.mxu0 0
        %3345 = vmatpush1.bf16.msra.mxu0 0
        %3346 = vmatprep.subr.bf16.mxu0 0
        %3347 = vmatpush1.bf16.msra.mxu0 %v3195
        %3348 = vmatprep.subr.bf16.mxu0 0
        %3349 = vmatpush1.bf16.msra.mxu0 %v3194
        %3350 = vmatprep.subr.bf16.mxu0 0
        %3351 = vmatpush1.bf16.msra.mxu0 %v3193
        %3352 = vmatprep.subr.bf16.mxu0 0
        %3353 = vmatpush1.bf16.msra.mxu0 %v3192
        %3354 = vmatprep.subr.bf16.mxu0 0
        %3355 = vmatpush2.bf16.msra.mxu0 0
        %3356 = vmatprep.subr.bf16.mxu0 0
        %3357 = vmatpush2.bf16.msra.mxu0 0
        %3358 = vmatprep.subr.bf16.mxu0 0
        %3359 = vmatpush2.bf16.msra.mxu0 0
        %3360 = vmatprep.subr.bf16.mxu0 0
        %3361 = vmatpush2.bf16.msra.mxu0 0
        %3362 = vmatprep.subr.bf16.mxu0 0
        %3363 = vmatpush2.bf16.msra.mxu0 0
        %3364 = vmatprep.subr.bf16.mxu0 0
        %3365 = vmatpush2.bf16.msra.mxu0 0
        %3366 = vmatprep.subr.bf16.mxu0 0
        %3367 = vmatpush2.bf16.msra.mxu0 0
        %3368 = vmatprep.subr.bf16.mxu0 0
        %3369 = vmatpush2.bf16.msra.mxu0 0
        %3370 = vmatprep.mubr.bf16.mxu0 0
        %3371 = vmatmul.mubr.bf16.gmra.mxu0 %v3197
        %v3372 = vpop.f32.mrf.mxu0
        %v3373 = vadd.f32 %v3308, %v3372
        %v3374 = vpop.f32.mrf.mxu0
        %v3375 = vpop.f32.mrf.mxu0
        %v3376 = vadd.f32 %v3311, %v3375
        %v3377 = vpop.f32.mrf.mxu0
        %3378 = vmatprep.mubr.bf16.mxu0 0
        %3379 = vmatmul.mubr.bf16.gmra.mxu0 %v3200
        %v3380 = vpop.f32.mrf.mxu0
        %v3381 = vadd.f32 %v3316, %v3380
        %v3382 = vpop.f32.mrf.mxu0
        %v3383 = vpop.f32.mrf.mxu0
        %v3384 = vadd.f32 %v3319, %v3383
        %v3385 = vpop.f32.mrf.mxu0
        %3386 = vmatprep.mubr.bf16.mxu0 0
        %3387 = vmatmul.mubr.bf16.gmra.mxu0 %v3203
        %v3388 = vpop.f32.mrf.mxu0
        %v3389 = vadd.f32 %v3324, %v3388
        %v3390 = vpop.f32.mrf.mxu0
        %v3391 = vpop.f32.mrf.mxu0
        %v3392 = vadd.f32 %v3327, %v3391
        %v3393 = vpop.f32.mrf.mxu0
        %3394 = vmatprep.mubr.bf16.mxu0 0
        %3395 = vmatmul.mubr.bf16.gmra.mxu0 %v3206
        %v3396 = vpop.f32.mrf.mxu0
        %v3397 = vadd.f32 %v3332, %v3396
        %v3398 = vpop.f32.mrf.mxu0
        %v3399 = vpop.f32.mrf.mxu0
        %v3400 = vadd.f32 %v3335, %v3399
        %v3401 = vpop.f32.mrf.mxu0
        %3402 = vdwg.mxu0
        %v3403 = vmul.f32 %v1940, %v1940
        %v3404 = vld [vmem:[#allocation28] sm:$0xff]
        %v3405 = vld [vmem:[#allocation28 + $0x8] sm:$0xff]
        %v3406 = vld [vmem:[#allocation28 + $0x10] sm:$0xff]
        %v3407 = vld [vmem:[#allocation28 + $0x18] sm:$0xff]
        %v3408 = vld [vmem:[#allocation28 + $0x20] sm:$0xff]
        %v3409 = vld [vmem:[#allocation28 + $0x28] sm:$0xff]
        %v3410 = vld [vmem:[#allocation28 + $0x30] sm:$0xff]
        %v3411 = vld [vmem:[#allocation28 + $0x38] sm:$0xff]
        %v3413 = vsel %vm1568, %v3403, 0
        %3415 = vmatprep.subr.mxu0 0.0
        %3416 = vmatpush1.msra.mxu0 0.0
        %3417 = vmatprep.subr.mxu0 0.0
        %3418 = vmatpush1.msra.mxu0 0.0
        %3419 = vmatprep.subr.mxu0 0.0
        %3420 = vmatpush1.msra.mxu0 0.0
        %3421 = vmatprep.subr.mxu0 0.0
        %3422 = vmatpush1.msra.mxu0 0.0
        %3423 = vmatprep.subr.mxu0 0.0
        %3424 = vmatpush1.msra.mxu0 0.0
        %3425 = vmatprep.subr.mxu0 0.0
        %3426 = vmatpush1.msra.mxu0 0.0
        %3427 = vmatprep.subr.mxu0 0.0
        %3428 = vmatpush1.msra.mxu0 0.0
        %3429 = vmatprep.subr.mxu0 0.0
        %3430 = vmatpush1.msra.mxu0 0.0
        %3431 = vmatprep.subr.mxu0 0.0
        %3432 = vmatpush1.msra.mxu0 %v3411
        %3433 = vmatprep.subr.mxu0 0.0
        %3434 = vmatpush1.msra.mxu0 %v3410
        %3435 = vmatprep.subr.mxu0 0.0
        %3436 = vmatpush1.msra.mxu0 %v3409
        %3437 = vmatprep.subr.mxu0 0.0
        %3438 = vmatpush1.msra.mxu0 %v3408
        %3439 = vmatprep.subr.mxu0 0.0
        %3440 = vmatpush1.msra.mxu0 %v3407
        %3441 = vmatprep.subr.mxu0 0.0
        %3442 = vmatpush1.msra.mxu0 %v3406
        %3443 = vmatprep.subr.mxu0 0.0
        %3444 = vmatpush1.msra.mxu0 %v3405
        %3445 = vmatprep.subr.mxu0 0.0
        %3446 = vmatpush1.msra.mxu0 %v3404
        %3447 = vmatprep.subr.mxu0 0.0
        %3448 = vmatpush2.msra.mxu0 0.0
        %3449 = vmatprep.subr.mxu0 0.0
        %3450 = vmatpush2.msra.mxu0 0.0
        %3451 = vmatprep.subr.mxu0 0.0
        %3452 = vmatpush2.msra.mxu0 0.0
        %3453 = vmatprep.subr.mxu0 0.0
        %3454 = vmatpush2.msra.mxu0 0.0
        %3455 = vmatprep.subr.mxu0 0.0
        %3456 = vmatpush2.msra.mxu0 0.0
        %3457 = vmatprep.subr.mxu0 0.0
        %3458 = vmatpush2.msra.mxu0 0.0
        %3459 = vmatprep.subr.mxu0 0.0
        %3460 = vmatpush2.msra.mxu0 0.0
        %3461 = vmatprep.subr.mxu0 0.0
        %3462 = vmatpush2.msra.mxu0 0.0
        %3463 = vmatprep.subr.mxu0 0.0
        %3464 = vmatpush2.msra.mxu0 0.0
        %3465 = vmatprep.subr.mxu0 0.0
        %3466 = vmatpush2.msra.mxu0 0.0
        %3467 = vmatprep.subr.mxu0 0.0
        %3468 = vmatpush2.msra.mxu0 0.0
        %3469 = vmatprep.subr.mxu0 0.0
        %3470 = vmatpush2.msra.mxu0 0.0
        %3471 = vmatprep.subr.mxu0 0.0
        %3472 = vmatpush2.msra.mxu0 0.0
        %3473 = vmatprep.subr.mxu0 0.0
        %3474 = vmatpush2.msra.mxu0 0.0
        %3475 = vmatprep.subr.mxu0 0.0
        %3476 = vmatpush2.msra.mxu0 0.0
        %3477 = vmatprep.subr.mxu0 0.0
        %3478 = vmatpush2.msra.mxu0 0.0
        %3479 = vmatprep.mubr.f32.mxu0 0.0
        %3480 = vmatmul.mubr.f32.gmra.mxu0 %v3413
        %v3481 = vpop.f32.mrf.mxu0
        %v3482 = vadd.f32 1e-08, %v3481
        %v3483 = vpop.f32.mrf.mxu0
        %3484 = vdwg.mxu0
        %v3485 = vrsqrt.pop %v3482
        %v3486 = vlaneseq
        %v3487 = vshrl.u32 %v3486, 7
        %v3488 = vsub.s32 0, %v3487
        %v3489 = vrot.slane %v3485, %v3488
        %v3490 = vmul.f32 %v3373, %v3489
        %v3491 = vmul.f32 %v3376, %v3489
        %v3492 = vmul.f32 %v3381, %v3489
        %v3493 = vmul.f32 %v3384, %v3489
        %v3494 = vmul.f32 %v3389, %v3489
        %v3495 = vmul.f32 %v3392, %v3489
        %v3496 = vmul.f32 %v3397, %v3489
        %v3497 = vmul.f32 %v3400, %v3489
        %v3498 = vld [vmem:[#allocation29] sm:$0xff]
        %v3499 = vld [vmem:[#allocation29 + $0x8] sm:$0xff]
        %v3500 = vld [vmem:[#allocation29 + $0x10] sm:$0xff]
        %v3501 = vld [vmem:[#allocation29 + $0x18] sm:$0xff]
        %v3502 = vld [vmem:[#allocation29 + $0x20] sm:$0xff]
        %v3503 = vld [vmem:[#allocation29 + $0x28] sm:$0xff]
        %v3504 = vld [vmem:[#allocation29 + $0x30] sm:$0xff]
        %v3505 = vld [vmem:[#allocation29 + $0x38] sm:$0xff]
        %3507 = vset.pattern.permute.xlu0 0
        %3508 = vperm.xlu0 %3507, %v3498
        %v3509 = vpop.permute.xlu0 %3508
        %3512 = vset.pattern.permute.xlu0 0
        %3513 = vperm.xlu0 %3512, %v3499
        %v3514 = vpop.permute.xlu0 %3513
        %3517 = vset.pattern.permute.xlu0 0
        %3518 = vperm.xlu0 %3517, %v3500
        %v3519 = vpop.permute.xlu0 %3518
        %3522 = vset.pattern.permute.xlu0 0
        %3523 = vperm.xlu0 %3522, %v3501
        %v3524 = vpop.permute.xlu0 %3523
        %3527 = vset.pattern.permute.xlu0 0
        %3528 = vperm.xlu0 %3527, %v3502
        %v3529 = vpop.permute.xlu0 %3528
        %3532 = vset.pattern.permute.xlu0 0
        %3533 = vperm.xlu0 %3532, %v3503
        %v3534 = vpop.permute.xlu0 %3533
        %3537 = vset.pattern.permute.xlu0 0
        %3538 = vperm.xlu0 %3537, %v3504
        %v3539 = vpop.permute.xlu0 %3538
        %3542 = vset.pattern.permute.xlu0 0
        %3543 = vperm.xlu0 %3542, %v3505
        %v3544 = vpop.permute.xlu0 %3543
        %v3546 = vadd.f32 %v3490, %v3509
        %v3547 = vadd.f32 %v3491, %v3514
        %v3548 = vadd.f32 %v3492, %v3519
        %v3549 = vadd.f32 %v3493, %v3524
        %v3550 = vadd.f32 %v3494, %v3529
        %v3551 = vadd.f32 %v3495, %v3534
        %v3552 = vadd.f32 %v3496, %v3539
        %v3553 = vadd.f32 %v3497, %v3544
        %v3554 = vld [vmem:[#allocation31] sm:$0x1]
        %v3556 = vlaneseq
        %v3557 = vshrl.u32 %v3556, 7
        %v3558 = vsub.s32 0, %v3557
        %v3559 = vrot.slane %v3554, %v3558
        %v3561 = vadd.f32 %v3546, %v3559
        %v3562 = vadd.f32 %v3547, %v3559
        %v3563 = vadd.f32 %v3548, %v3559
        %v3564 = vadd.f32 %v3549, %v3559
        %v3565 = vadd.f32 %v3550, %v3559
        %v3566 = vadd.f32 %v3551, %v3559
        %v3567 = vadd.f32 %v3552, %v3559
        %v3568 = vadd.f32 %v3553, %v3559
        %vm3569 = vcmp.ge.f32.partialorder %v3561, 0.0
        %vm3570 = vcmp.ge.f32.partialorder %v3562, 0.0
        %vm3571 = vcmp.ge.f32.partialorder %v3563, 0.0
        %vm3572 = vcmp.ge.f32.partialorder %v3564, 0.0
        %vm3573 = vcmp.ge.f32.partialorder %v3565, 0.0
        %vm3574 = vcmp.ge.f32.partialorder %v3566, 0.0
        %vm3575 = vcmp.ge.f32.partialorder %v3567, 0.0
        %vm3576 = vcmp.ge.f32.partialorder %v3568, 0.0
        %v3577 = vmul.f32 %v3561, 0.2
        %v3578 = vmul.f32 %v3562, 0.2
        %v3579 = vmul.f32 %v3563, 0.2
        %v3580 = vmul.f32 %v3564, 0.2
        %v3581 = vmul.f32 %v3565, 0.2
        %v3582 = vmul.f32 %v3566, 0.2
        %v3583 = vmul.f32 %v3567, 0.2
        %v3584 = vmul.f32 %v3568, 0.2
        %v3585 = vsel %vm3569, %v3561, %v3577
        %v3586 = vsel %vm3570, %v3562, %v3578
        %v3587 = vsel %vm3571, %v3563, %v3579
        %v3588 = vsel %vm3572, %v3564, %v3580
        %v3589 = vsel %vm3573, %v3565, %v3581
        %v3590 = vsel %vm3574, %v3566, %v3582
        %v3591 = vsel %vm3575, %v3567, %v3583
        %v3592 = vsel %vm3576, %v3568, %v3584
        %v3593 = vmul.f32 %v3585, 1.4142135
        %v3594 = vmul.f32 %v3586, 1.4142135
        %v3595 = vmul.f32 %v3587, 1.4142135
        %v3596 = vmul.f32 %v3588, 1.4142135
        %v3597 = vmul.f32 %v3589, 1.4142135
        %v3598 = vmul.f32 %v3590, 1.4142135
        %v3599 = vmul.f32 %v3591, 1.4142135
        %v3600 = vmul.f32 %v3592, 1.4142135
        %v3601 = vmax.f32 %v3593, -256.0
        %v3602 = vmax.f32 %v3594, -256.0
        %v3603 = vmax.f32 %v3595, -256.0
        %v3604 = vmax.f32 %v3596, -256.0
        %v3605 = vmax.f32 %v3597, -256.0
        %v3606 = vmax.f32 %v3598, -256.0
        %v3607 = vmax.f32 %v3599, -256.0
        %v3608 = vmax.f32 %v3600, -256.0
        %v3609 = vmin.f32 %v3601, 256.0
        %v3610 = vmin.f32 %v3602, 256.0
        %v3611 = vmin.f32 %v3603, 256.0
        %v3612 = vmin.f32 %v3604, 256.0
        %v3613 = vmin.f32 %v3605, 256.0
        %v3614 = vmin.f32 %v3606, 256.0
        %v3615 = vmin.f32 %v3607, 256.0
        %v3616 = vmin.f32 %v3608, 256.0
        %v3617 = vlaneseq
        %v3618 = vshrl.u32 %v3617, 7
        %v3619 = vsub.s32 0, %v3618
        %v3620 = vrot.slane %v1979, %v3619
        %v3621 = vmul.f32 %v3609, %v3620
        %v3622 = vmul.f32 %v3610, %v3620
        %v3623 = vmul.f32 %v3611, %v3620
        %v3624 = vmul.f32 %v3612, %v3620
        %v3625 = vmul.f32 %v3613, %v3620
        %v3626 = vmul.f32 %v3614, %v3620
        %v3627 = vmul.f32 %v3615, %v3620
        %v3628 = vmul.f32 %v3616, %v3620
        %vm3629 = vcmask 261120
        %3630 = vst.msk [vmem:[%s2081 + $0x1] sm:$0xff] %vm3629, %v3621
        %3631 = vst.msk [vmem:[%s2081 + $0x19] sm:$0xff] %vm3629, %v3622
        %3632 = vst.msk [vmem:[%s2081 + $0x31] sm:$0xff] %vm3629, %v3623
        %3633 = vst.msk [vmem:[%s2081 + $0x49] sm:$0xff] %vm3629, %v3624
        %3634 = vst.msk [vmem:[%s2081 + $0x61] sm:$0xff] %vm3629, %v3625
        %3635 = vst.msk [vmem:[%s2081 + $0x79] sm:$0xff] %vm3629, %v3626
        %3636 = vst.msk [vmem:[%s2081 + $0x91] sm:$0xff] %vm3629, %v3627
        %3637 = vst.msk [vmem:[%s2081 + $0xa9] sm:$0xff] %vm3629, %v3628
        %v3638 = vld [vmem:[#allocation2] sm:$0xff]
        %v3639 = vld [vmem:[#allocation2 + $0x18] sm:$0xff]
        %v3640 = vld [vmem:[#allocation2 + $0x30] sm:$0xff]
        %v3641 = vld [vmem:[#allocation2 + $0x48] sm:$0xff]
        %v3642 = vld [vmem:[#allocation2 + $0x60] sm:$0xff]
        %v3643 = vld [vmem:[#allocation2 + $0x78] sm:$0xff]
        %v3644 = vld [vmem:[#allocation2 + $0x90] sm:$0xff]
        %v3645 = vld [vmem:[#allocation2 + $0xa8] sm:$0xff]
        %v3646 = vld [vmem:[#allocation2 + $0x1] sm:$0xff]
        %v3647 = vld [vmem:[#allocation2 + $0x19] sm:$0xff]
        %v3648 = vld [vmem:[#allocation2 + $0x31] sm:$0xff]
        %v3649 = vld [vmem:[#allocation2 + $0x49] sm:$0xff]
        %v3650 = vld [vmem:[#allocation2 + $0x61] sm:$0xff]
        %v3651 = vld [vmem:[#allocation2 + $0x79] sm:$0xff]
        %v3652 = vld [vmem:[#allocation2 + $0x91] sm:$0xff]
        %v3653 = vld [vmem:[#allocation2 + $0xa9] sm:$0xff]
        %v3654 = vld [vmem:[#allocation2 + $0x2] sm:$0xff]
        %v3655 = vld [vmem:[#allocation2 + $0x1a] sm:$0xff]
        %v3656 = vld [vmem:[#allocation2 + $0x32] sm:$0xff]
        %v3657 = vld [vmem:[#allocation2 + $0x4a] sm:$0xff]
        %v3658 = vld [vmem:[#allocation2 + $0x62] sm:$0xff]
        %v3659 = vld [vmem:[#allocation2 + $0x7a] sm:$0xff]
        %v3660 = vld [vmem:[#allocation2 + $0x92] sm:$0xff]
        %v3661 = vld [vmem:[#allocation2 + $0xaa] sm:$0xff]
        %v3662 = vld [vmem:[%s2081] sm:$0xff]
        %v3663 = vld [vmem:[%s2081 + $0x18] sm:$0xff]
        %v3664 = vld [vmem:[%s2081 + $0x30] sm:$0xff]
        %v3665 = vld [vmem:[%s2081 + $0x48] sm:$0xff]
        %v3666 = vld [vmem:[%s2081 + $0x60] sm:$0xff]
        %v3667 = vld [vmem:[%s2081 + $0x78] sm:$0xff]
        %v3668 = vld [vmem:[%s2081 + $0x90] sm:$0xff]
        %v3669 = vld [vmem:[%s2081 + $0xa8] sm:$0xff]
        %v3670 = vld [vmem:[%s2081 + $0x1] sm:$0xff]
        %v3671 = vld [vmem:[%s2081 + $0x19] sm:$0xff]
        %v3672 = vld [vmem:[%s2081 + $0x31] sm:$0xff]
        %v3673 = vld [vmem:[%s2081 + $0x49] sm:$0xff]
        %v3674 = vld [vmem:[%s2081 + $0x61] sm:$0xff]
        %v3675 = vld [vmem:[%s2081 + $0x79] sm:$0xff]
        %v3676 = vld [vmem:[%s2081 + $0x91] sm:$0xff]
        %v3677 = vld [vmem:[%s2081 + $0xa9] sm:$0xff]
        %v3678 = vld [vmem:[%s2081 + $0x2] sm:$0xff]
        %v3679 = vld [vmem:[%s2081 + $0x1a] sm:$0xff]
        %v3680 = vld [vmem:[%s2081 + $0x32] sm:$0xff]
        %v3681 = vld [vmem:[%s2081 + $0x4a] sm:$0xff]
        %v3682 = vld [vmem:[%s2081 + $0x62] sm:$0xff]
        %v3683 = vld [vmem:[%s2081 + $0x7a] sm:$0xff]
        %v3684 = vld [vmem:[%s2081 + $0x92] sm:$0xff]
        %v3685 = vld [vmem:[%s2081 + $0xaa] sm:$0xff]
        %v3686 = vld [vmem:[%s2111] sm:$0xff]
        %v3687 = vld [vmem:[%s2111 + $0x18] sm:$0xff]
        %v3688 = vld [vmem:[%s2111 + $0x30] sm:$0xff]
        %v3689 = vld [vmem:[%s2111 + $0x48] sm:$0xff]
        %v3690 = vld [vmem:[%s2111 + $0x60] sm:$0xff]
        %v3691 = vld [vmem:[%s2111 + $0x78] sm:$0xff]
        %v3692 = vld [vmem:[%s2111 + $0x90] sm:$0xff]
        %v3693 = vld [vmem:[%s2111 + $0xa8] sm:$0xff]
        %v3694 = vld [vmem:[%s2111 + $0x1] sm:$0xff]
        %v3695 = vld [vmem:[%s2111 + $0x19] sm:$0xff]
        %v3696 = vld [vmem:[%s2111 + $0x31] sm:$0xff]
        %v3697 = vld [vmem:[%s2111 + $0x49] sm:$0xff]
        %v3698 = vld [vmem:[%s2111 + $0x61] sm:$0xff]
        %v3699 = vld [vmem:[%s2111 + $0x79] sm:$0xff]
        %v3700 = vld [vmem:[%s2111 + $0x91] sm:$0xff]
        %v3701 = vld [vmem:[%s2111 + $0xa9] sm:$0xff]
        %v3702 = vld [vmem:[%s2111 + $0x2] sm:$0xff]
        %v3703 = vld [vmem:[%s2111 + $0x1a] sm:$0xff]
        %v3704 = vld [vmem:[%s2111 + $0x32] sm:$0xff]
        %v3705 = vld [vmem:[%s2111 + $0x4a] sm:$0xff]
        %v3706 = vld [vmem:[%s2111 + $0x62] sm:$0xff]
        %v3707 = vld [vmem:[%s2111 + $0x7a] sm:$0xff]
        %v3708 = vld [vmem:[%s2111 + $0x92] sm:$0xff]
        %v3709 = vld [vmem:[%s2111 + $0xaa] sm:$0xff]
        %3718 = vrot.lane.b32.xlu0 %v3646, 32
        %v3719 = vpop.permute.xlu0 %3718
        %3720 = vrot.lane.b32.xlu0 %v3647, 32
        %v3721 = vpop.permute.xlu0 %3720
        %3722 = vrot.lane.b32.xlu0 %v3648, 32
        %v3723 = vpop.permute.xlu0 %3722
        %3724 = vrot.lane.b32.xlu0 %v3649, 32
        %v3725 = vpop.permute.xlu0 %3724
        %3726 = vrot.lane.b32.xlu0 %v3650, 32
        %v3727 = vpop.permute.xlu0 %3726
        %3728 = vrot.lane.b32.xlu0 %v3651, 32
        %v3729 = vpop.permute.xlu0 %3728
        %3730 = vrot.lane.b32.xlu0 %v3652, 32
        %v3731 = vpop.permute.xlu0 %3730
        %3732 = vrot.lane.b32.xlu0 %v3653, 32
        %v3733 = vpop.permute.xlu0 %3732
        %3750 = vrot.lane.b32.xlu0 %v3654, 64
        %v3751 = vpop.permute.xlu0 %3750
        %3752 = vrot.lane.b32.xlu0 %v3655, 64
        %v3753 = vpop.permute.xlu0 %3752
        %3754 = vrot.lane.b32.xlu0 %v3656, 64
        %v3755 = vpop.permute.xlu0 %3754
        %3756 = vrot.lane.b32.xlu0 %v3657, 64
        %v3757 = vpop.permute.xlu0 %3756
        %3758 = vrot.lane.b32.xlu0 %v3658, 64
        %v3759 = vpop.permute.xlu0 %3758
        %3760 = vrot.lane.b32.xlu0 %v3659, 64
        %v3761 = vpop.permute.xlu0 %3760
        %3762 = vrot.lane.b32.xlu0 %v3660, 64
        %v3763 = vpop.permute.xlu0 %3762
        %3764 = vrot.lane.b32.xlu0 %v3661, 64
        %v3765 = vpop.permute.xlu0 %3764
        %3782 = vrot.lane.b32.xlu0 %v3662, 96
        %v3783 = vpop.permute.xlu0 %3782
        %3784 = vrot.lane.b32.xlu0 %v3663, 96
        %v3785 = vpop.permute.xlu0 %3784
        %3786 = vrot.lane.b32.xlu0 %v3664, 96
        %v3787 = vpop.permute.xlu0 %3786
        %3788 = vrot.lane.b32.xlu0 %v3665, 96
        %v3789 = vpop.permute.xlu0 %3788
        %3790 = vrot.lane.b32.xlu0 %v3666, 96
        %v3791 = vpop.permute.xlu0 %3790
        %3792 = vrot.lane.b32.xlu0 %v3667, 96
        %v3793 = vpop.permute.xlu0 %3792
        %3794 = vrot.lane.b32.xlu0 %v3668, 96
        %v3795 = vpop.permute.xlu0 %3794
        %3796 = vrot.lane.b32.xlu0 %v3669, 96
        %v3797 = vpop.permute.xlu0 %3796
        %3814 = vrot.lane.b32.xlu0 %v3678, 32
        %v3815 = vpop.permute.xlu0 %3814
        %3816 = vrot.lane.b32.xlu0 %v3679, 32
        %v3817 = vpop.permute.xlu0 %3816
        %3818 = vrot.lane.b32.xlu0 %v3680, 32
        %v3819 = vpop.permute.xlu0 %3818
        %3820 = vrot.lane.b32.xlu0 %v3681, 32
        %v3821 = vpop.permute.xlu0 %3820
        %3822 = vrot.lane.b32.xlu0 %v3682, 32
        %v3823 = vpop.permute.xlu0 %3822
        %3824 = vrot.lane.b32.xlu0 %v3683, 32
        %v3825 = vpop.permute.xlu0 %3824
        %3826 = vrot.lane.b32.xlu0 %v3684, 32
        %v3827 = vpop.permute.xlu0 %3826
        %3828 = vrot.lane.b32.xlu0 %v3685, 32
        %v3829 = vpop.permute.xlu0 %3828
        %3846 = vrot.lane.b32.xlu0 %v3686, 64
        %v3847 = vpop.permute.xlu0 %3846
        %3848 = vrot.lane.b32.xlu0 %v3687, 64
        %v3849 = vpop.permute.xlu0 %3848
        %3850 = vrot.lane.b32.xlu0 %v3688, 64
        %v3851 = vpop.permute.xlu0 %3850
        %3852 = vrot.lane.b32.xlu0 %v3689, 64
        %v3853 = vpop.permute.xlu0 %3852
        %3854 = vrot.lane.b32.xlu0 %v3690, 64
        %v3855 = vpop.permute.xlu0 %3854
        %3856 = vrot.lane.b32.xlu0 %v3691, 64
        %v3857 = vpop.permute.xlu0 %3856
        %3858 = vrot.lane.b32.xlu0 %v3692, 64
        %v3859 = vpop.permute.xlu0 %3858
        %3860 = vrot.lane.b32.xlu0 %v3693, 64
        %v3861 = vpop.permute.xlu0 %3860
        %3878 = vrot.lane.b32.xlu0 %v3694, 96
        %v3879 = vpop.permute.xlu0 %3878
        %3880 = vrot.lane.b32.xlu0 %v3695, 96
        %v3881 = vpop.permute.xlu0 %3880
        %3882 = vrot.lane.b32.xlu0 %v3696, 96
        %v3883 = vpop.permute.xlu0 %3882
        %3884 = vrot.lane.b32.xlu0 %v3697, 96
        %v3885 = vpop.permute.xlu0 %3884
        %3886 = vrot.lane.b32.xlu0 %v3698, 96
        %v3887 = vpop.permute.xlu0 %3886
        %3888 = vrot.lane.b32.xlu0 %v3699, 96
        %v3889 = vpop.permute.xlu0 %3888
        %3890 = vrot.lane.b32.xlu0 %v3700, 96
        %v3891 = vpop.permute.xlu0 %3890
        %3892 = vrot.lane.b32.xlu0 %v3701, 96
        %v3893 = vpop.permute.xlu0 %3892
        %v3902 = vsel %vm3629, %v3638, %v3719
        %v3903 = vsel %vm3629, %v3639, %v3721
        %v3904 = vsel %vm3629, %v3640, %v3723
        %v3905 = vsel %vm3629, %v3641, %v3725
        %v3906 = vsel %vm3629, %v3642, %v3727
        %v3907 = vsel %vm3629, %v3643, %v3729
        %v3908 = vsel %vm3629, %v3644, %v3731
        %v3909 = vsel %vm3629, %v3645, %v3733
        %v3910 = vsel %vm1568, %v3902, %v3751
        %v3911 = vsel %vm1568, %v3903, %v3753
        %v3912 = vsel %vm1568, %v3904, %v3755
        %v3913 = vsel %vm1568, %v3905, %v3757
        %v3914 = vsel %vm1568, %v3906, %v3759
        %v3915 = vsel %vm1568, %v3907, %v3761
        %v3916 = vsel %vm1568, %v3908, %v3763
        %v3917 = vsel %vm1568, %v3909, %v3765
        %vm3918 = vcmask 785408
        %v3919 = vsel %vm3918, %v3910, %v3783
        %v3920 = vsel %vm3918, %v3911, %v3785
        %v3921 = vsel %vm3918, %v3912, %v3787
        %v3922 = vsel %vm3918, %v3913, %v3789
        %v3923 = vsel %vm3918, %v3914, %v3791
        %v3924 = vsel %vm3918, %v3915, %v3793
        %v3925 = vsel %vm3918, %v3916, %v3795
        %v3926 = vsel %vm3918, %v3917, %v3797
        %v3927 = vsel %vm3629, %v3670, %v3815
        %v3928 = vsel %vm3629, %v3671, %v3817
        %v3929 = vsel %vm3629, %v3672, %v3819
        %v3930 = vsel %vm3629, %v3673, %v3821
        %v3931 = vsel %vm3629, %v3674, %v3823
        %v3932 = vsel %vm3629, %v3675, %v3825
        %v3933 = vsel %vm3629, %v3676, %v3827
        %v3934 = vsel %vm3629, %v3677, %v3829
        %v3935 = vsel %vm1568, %v3927, %v3847
        %v3936 = vsel %vm1568, %v3928, %v3849
        %v3937 = vsel %vm1568, %v3929, %v3851
        %v3938 = vsel %vm1568, %v3930, %v3853
        %v3939 = vsel %vm1568, %v3931, %v3855
        %v3940 = vsel %vm1568, %v3932, %v3857
        %v3941 = vsel %vm1568, %v3933, %v3859
        %v3942 = vsel %vm1568, %v3934, %v3861
        %v3943 = vsel %vm3918, %v3935, %v3879
        %v3944 = vsel %vm3918, %v3936, %v3881
        %v3945 = vsel %vm3918, %v3937, %v3883
        %v3946 = vsel %vm3918, %v3938, %v3885
        %v3947 = vsel %vm3918, %v3939, %v3887
        %v3948 = vsel %vm3918, %v3940, %v3889
        %v3949 = vsel %vm3918, %v3941, %v3891
        %v3950 = vsel %vm3918, %v3942, %v3893
        %v3951 = vld [vmem:[#allocation32] sm:$0xff]
        %v3952 = vld [vmem:[#allocation32 + $0x8] sm:$0xff]
        %v3953 = vld [vmem:[#allocation32 + $0x10] sm:$0xff]
        %v3954 = vld [vmem:[#allocation32 + $0x18] sm:$0xff]
        %v3955 = vld [vmem:[#allocation32 + $0x20] sm:$0xff]
        %v3956 = vld [vmem:[#allocation32 + $0x28] sm:$0xff]
        %v3957 = vld [vmem:[#allocation32 + $0x30] sm:$0xff]
        %v3958 = vld [vmem:[#allocation32 + $0x38] sm:$0xff]
        %v3959 = vld [vmem:[#allocation32 + $0x40] sm:$0xff]
        %v3960 = vld [vmem:[#allocation32 + $0x48] sm:$0xff]
        %v3961 = vld [vmem:[#allocation32 + $0x50] sm:$0xff]
        %v3962 = vld [vmem:[#allocation32 + $0x58] sm:$0xff]
        %v3963 = vld [vmem:[#allocation32 + $0x60] sm:$0xff]
        %v3964 = vld [vmem:[#allocation32 + $0x68] sm:$0xff]
        %v3965 = vld [vmem:[#allocation32 + $0x70] sm:$0xff]
        %v3966 = vld [vmem:[#allocation32 + $0x78] sm:$0xff]
        %v3967 = vld [vmem:[#allocation32 + $0x80] sm:$0xff]
        %v3968 = vld [vmem:[#allocation32 + $0x88] sm:$0xff]
        %v3969 = vld [vmem:[#allocation32 + $0x90] sm:$0xff]
        %v3970 = vld [vmem:[#allocation32 + $0x98] sm:$0xff]
        %v3971 = vld [vmem:[#allocation32 + $0xa0] sm:$0xff]
        %v3972 = vld [vmem:[#allocation32 + $0xa8] sm:$0xff]
        %v3973 = vld [vmem:[#allocation32 + $0xb0] sm:$0xff]
        %v3974 = vld [vmem:[#allocation32 + $0xb8] sm:$0xff]
        %v3975 = vld [vmem:[#allocation32 + $0xc0] sm:$0xff]
        %v3976 = vld [vmem:[#allocation32 + $0xc8] sm:$0xff]
        %v3977 = vld [vmem:[#allocation32 + $0xd0] sm:$0xff]
        %v3978 = vld [vmem:[#allocation32 + $0xd8] sm:$0xff]
        %v3979 = vld [vmem:[#allocation32 + $0xe0] sm:$0xff]
        %v3980 = vld [vmem:[#allocation32 + $0xe8] sm:$0xff]
        %v3981 = vld [vmem:[#allocation32 + $0xf0] sm:$0xff]
        %v3982 = vld [vmem:[#allocation32 + $0xf8] sm:$0xff]
        %v3983 = vld [vmem:[#allocation32 + $0x100] sm:$0xff]
        %v3984 = vld [vmem:[#allocation32 + $0x108] sm:$0xff]
        %v3985 = vld [vmem:[#allocation32 + $0x110] sm:$0xff]
        %v3986 = vld [vmem:[#allocation32 + $0x118] sm:$0xff]
        %v3987 = vpack.c.bf16 %v3920, %v3919
        %v3988 = vpack.c.bf16 %v3944, %v3943
        %v3989 = vpack.c.bf16 %v3703, %v3702
        %v3990 = vpack.c.bf16 %v3922, %v3921
        %v3991 = vpack.c.bf16 %v3946, %v3945
        %v3992 = vpack.c.bf16 %v3705, %v3704
        %v3993 = vpack.c.bf16 %v3924, %v3923
        %v3994 = vpack.c.bf16 %v3948, %v3947
        %v3995 = vpack.c.bf16 %v3707, %v3706
        %v3996 = vpack.c.bf16 %v3926, %v3925
        %v3997 = vpack.c.bf16 %v3950, %v3949
        %v3998 = vpack.c.bf16 %v3709, %v3708
        %v3999 = vpack.c.bf16 %v3952, %v3951
        %v4000 = vpack.c.bf16 %v3954, %v3953
        %v4001 = vpack.c.bf16 %v3956, %v3955
        %v4002 = vpack.c.bf16 %v3958, %v3957
        %v4003 = vpack.c.bf16 %v3960, %v3959
        %v4004 = vpack.c.bf16 %v3962, %v3961
        %v4005 = vpack.c.bf16 %v3964, %v3963
        %v4006 = vpack.c.bf16 %v3966, %v3965
        %v4007 = vpack.c.bf16 %v3968, %v3967
        %v4008 = vpack.c.bf16 %v3970, %v3969
        %v4009 = vpack.c.bf16 %v3972, %v3971
        %v4010 = vpack.c.bf16 %v3974, %v3973
        %v4011 = vpack.c.bf16 %v3976, %v3975
        %v4012 = vpack.c.bf16 %v3978, %v3977
        %v4013 = vpack.c.bf16 %v3980, %v3979
        %v4014 = vpack.c.bf16 %v3982, %v3981
        %v4015 = vpack.c.bf16 %v3984, %v3983
        %v4016 = vpack.c.bf16 %v3986, %v3985
        %v4018 = vsel %vm3629, %v3989, 0
        %v4021 = vsel %vm3629, %v3992, 0
        %v4024 = vsel %vm3629, %v3995, 0
        %v4027 = vsel %vm3629, %v3998, 0
        %4029 = vmatprep.subr.bf16.mxu0 0
        %4030 = vmatpush1.bf16.msra.mxu0 %v4006
        %4031 = vmatprep.subr.bf16.mxu0 0
        %4032 = vmatpush1.bf16.msra.mxu0 %v4005
        %4033 = vmatprep.subr.bf16.mxu0 0
        %4034 = vmatpush1.bf16.msra.mxu0 %v4004
        %4035 = vmatprep.subr.bf16.mxu0 0
        %4036 = vmatpush1.bf16.msra.mxu0 %v4003
        %4037 = vmatprep.subr.bf16.mxu0 0
        %4038 = vmatpush1.bf16.msra.mxu0 %v4002
        %4039 = vmatprep.subr.bf16.mxu0 0
        %4040 = vmatpush1.bf16.msra.mxu0 %v4001
        %4041 = vmatprep.subr.bf16.mxu0 0
        %4042 = vmatpush1.bf16.msra.mxu0 %v4000
        %4043 = vmatprep.subr.bf16.mxu0 0
        %4044 = vmatpush1.bf16.msra.mxu0 %v3999
        %4045 = vmatprep.subr.bf16.mxu0 0
        %4046 = vmatpush2.bf16.msra.mxu0 %v4014
        %4047 = vmatprep.subr.bf16.mxu0 0
        %4048 = vmatpush2.bf16.msra.mxu0 %v4013
        %4049 = vmatprep.subr.bf16.mxu0 0
        %4050 = vmatpush2.bf16.msra.mxu0 %v4012
        %4051 = vmatprep.subr.bf16.mxu0 0
        %4052 = vmatpush2.bf16.msra.mxu0 %v4011
        %4053 = vmatprep.subr.bf16.mxu0 0
        %4054 = vmatpush2.bf16.msra.mxu0 %v4010
        %4055 = vmatprep.subr.bf16.mxu0 0
        %4056 = vmatpush2.bf16.msra.mxu0 %v4009
        %4057 = vmatprep.subr.bf16.mxu0 0
        %4058 = vmatpush2.bf16.msra.mxu0 %v4008
        %4059 = vmatprep.subr.bf16.mxu0 0
        %4060 = vmatpush2.bf16.msra.mxu0 %v4007
        %4061 = vmatprep.mubr.bf16.mxu0 %v3988
        %4062 = vmatmul.mubr.bf16.gmra.mxu0 %v3987
        %v4063 = vpop.f32.mrf.mxu0
        %v4064 = vadd.f32 0.0, %v4063
        %v4065 = vpop.f32.mrf.mxu0
        %v4066 = vpop.f32.mrf.mxu0
        %v4067 = vadd.f32 0.0, %v4066
        %v4068 = vpop.f32.mrf.mxu0
        %4069 = vmatprep.mubr.bf16.mxu0 %v3991
        %4070 = vmatmul.mubr.bf16.gmra.mxu0 %v3990
        %v4071 = vpop.f32.mrf.mxu0
        %v4072 = vadd.f32 0.0, %v4071
        %v4073 = vpop.f32.mrf.mxu0
        %v4074 = vpop.f32.mrf.mxu0
        %v4075 = vadd.f32 0.0, %v4074
        %v4076 = vpop.f32.mrf.mxu0
        %4077 = vmatprep.mubr.bf16.mxu0 %v3994
        %4078 = vmatmul.mubr.bf16.gmra.mxu0 %v3993
        %v4079 = vpop.f32.mrf.mxu0
        %v4080 = vadd.f32 0.0, %v4079
        %v4081 = vpop.f32.mrf.mxu0
        %v4082 = vpop.f32.mrf.mxu0
        %v4083 = vadd.f32 0.0, %v4082
        %v4084 = vpop.f32.mrf.mxu0
        %4085 = vmatprep.mubr.bf16.mxu0 %v3997
        %4086 = vmatmul.mubr.bf16.gmra.mxu0 %v3996
        %v4087 = vpop.f32.mrf.mxu0
        %v4088 = vadd.f32 0.0, %v4087
        %v4089 = vpop.f32.mrf.mxu0
        %v4090 = vpop.f32.mrf.mxu0
        %v4091 = vadd.f32 0.0, %v4090
        %v4092 = vpop.f32.mrf.mxu0
        %4093 = vdwg.mxu0
        %4094 = vmatprep.subr.bf16.mxu0 0
        %4095 = vmatpush1.bf16.msra.mxu0 0
        %4096 = vmatprep.subr.bf16.mxu0 0
        %4097 = vmatpush1.bf16.msra.mxu0 0
        %4098 = vmatprep.subr.bf16.mxu0 0
        %4099 = vmatpush1.bf16.msra.mxu0 0
        %4100 = vmatprep.subr.bf16.mxu0 0
        %4101 = vmatpush1.bf16.msra.mxu0 0
        %4102 = vmatprep.subr.bf16.mxu0 0
        %4103 = vmatpush1.bf16.msra.mxu0 0
        %4104 = vmatprep.subr.bf16.mxu0 0
        %4105 = vmatpush1.bf16.msra.mxu0 0
        %4106 = vmatprep.subr.bf16.mxu0 0
        %4107 = vmatpush1.bf16.msra.mxu0 %v4016
        %4108 = vmatprep.subr.bf16.mxu0 0
        %4109 = vmatpush1.bf16.msra.mxu0 %v4015
        %4110 = vmatprep.subr.bf16.mxu0 0
        %4111 = vmatpush2.bf16.msra.mxu0 0
        %4112 = vmatprep.subr.bf16.mxu0 0
        %4113 = vmatpush2.bf16.msra.mxu0 0
        %4114 = vmatprep.subr.bf16.mxu0 0
        %4115 = vmatpush2.bf16.msra.mxu0 0
        %4116 = vmatprep.subr.bf16.mxu0 0
        %4117 = vmatpush2.bf16.msra.mxu0 0
        %4118 = vmatprep.subr.bf16.mxu0 0
        %4119 = vmatpush2.bf16.msra.mxu0 0
        %4120 = vmatprep.subr.bf16.mxu0 0
        %4121 = vmatpush2.bf16.msra.mxu0 0
        %4122 = vmatprep.subr.bf16.mxu0 0
        %4123 = vmatpush2.bf16.msra.mxu0 0
        %4124 = vmatprep.subr.bf16.mxu0 0
        %4125 = vmatpush2.bf16.msra.mxu0 0
        %4126 = vmatprep.mubr.bf16.mxu0 0
        %4127 = vmatmul.mubr.bf16.gmra.mxu0 %v4018
        %v4128 = vpop.f32.mrf.mxu0
        %v4129 = vadd.f32 %v4064, %v4128
        %v4130 = vpop.f32.mrf.mxu0
        %v4131 = vpop.f32.mrf.mxu0
        %v4132 = vadd.f32 %v4067, %v4131
        %v4133 = vpop.f32.mrf.mxu0
        %4134 = vmatprep.mubr.bf16.mxu0 0
        %4135 = vmatmul.mubr.bf16.gmra.mxu0 %v4021
        %v4136 = vpop.f32.mrf.mxu0
        %v4137 = vadd.f32 %v4072, %v4136
        %v4138 = vpop.f32.mrf.mxu0
        %v4139 = vpop.f32.mrf.mxu0
        %v4140 = vadd.f32 %v4075, %v4139
        %v4141 = vpop.f32.mrf.mxu0
        %4142 = vmatprep.mubr.bf16.mxu0 0
        %4143 = vmatmul.mubr.bf16.gmra.mxu0 %v4024
        %v4144 = vpop.f32.mrf.mxu0
        %v4145 = vadd.f32 %v4080, %v4144
        %v4146 = vpop.f32.mrf.mxu0
        %v4147 = vpop.f32.mrf.mxu0
        %v4148 = vadd.f32 %v4083, %v4147
        %v4149 = vpop.f32.mrf.mxu0
        %4150 = vmatprep.mubr.bf16.mxu0 0
        %4151 = vmatmul.mubr.bf16.gmra.mxu0 %v4027
        %v4152 = vpop.f32.mrf.mxu0
        %v4153 = vadd.f32 %v4088, %v4152
        %v4154 = vpop.f32.mrf.mxu0
        %v4155 = vpop.f32.mrf.mxu0
        %v4156 = vadd.f32 %v4091, %v4155
        %v4157 = vpop.f32.mrf.mxu0
        %4158 = vdwg.mxu0
        %v4159 = vmul.f32 %v1979, %v1979
        %v4160 = vld [vmem:[#allocation34] sm:$0xff]
        %v4161 = vld [vmem:[#allocation34 + $0x8] sm:$0xff]
        %v4162 = vld [vmem:[#allocation34 + $0x10] sm:$0xff]
        %v4163 = vld [vmem:[#allocation34 + $0x18] sm:$0xff]
        %v4165 = vsel %vm3629, %v4159, 0
        %4167 = vmatprep.subr.mxu0 0.0
        %4168 = vmatpush1.msra.mxu0 0.0
        %4169 = vmatprep.subr.mxu0 0.0
        %4170 = vmatpush1.msra.mxu0 0.0
        %4171 = vmatprep.subr.mxu0 0.0
        %4172 = vmatpush1.msra.mxu0 0.0
        %4173 = vmatprep.subr.mxu0 0.0
        %4174 = vmatpush1.msra.mxu0 0.0
        %4175 = vmatprep.subr.mxu0 0.0
        %4176 = vmatpush1.msra.mxu0 0.0
        %4177 = vmatprep.subr.mxu0 0.0
        %4178 = vmatpush1.msra.mxu0 0.0
        %4179 = vmatprep.subr.mxu0 0.0
        %4180 = vmatpush1.msra.mxu0 0.0
        %4181 = vmatprep.subr.mxu0 0.0
        %4182 = vmatpush1.msra.mxu0 0.0
        %4183 = vmatprep.subr.mxu0 0.0
        %4184 = vmatpush1.msra.mxu0 0.0
        %4185 = vmatprep.subr.mxu0 0.0
        %4186 = vmatpush1.msra.mxu0 0.0
        %4187 = vmatprep.subr.mxu0 0.0
        %4188 = vmatpush1.msra.mxu0 0.0
        %4189 = vmatprep.subr.mxu0 0.0
        %4190 = vmatpush1.msra.mxu0 0.0
        %4191 = vmatprep.subr.mxu0 0.0
        %4192 = vmatpush1.msra.mxu0 %v4163
        %4193 = vmatprep.subr.mxu0 0.0
        %4194 = vmatpush1.msra.mxu0 %v4162
        %4195 = vmatprep.subr.mxu0 0.0
        %4196 = vmatpush1.msra.mxu0 %v4161
        %4197 = vmatprep.subr.mxu0 0.0
        %4198 = vmatpush1.msra.mxu0 %v4160
        %4199 = vmatprep.subr.mxu0 0.0
        %4200 = vmatpush2.msra.mxu0 0.0
        %4201 = vmatprep.subr.mxu0 0.0
        %4202 = vmatpush2.msra.mxu0 0.0
        %4203 = vmatprep.subr.mxu0 0.0
        %4204 = vmatpush2.msra.mxu0 0.0
        %4205 = vmatprep.subr.mxu0 0.0
        %4206 = vmatpush2.msra.mxu0 0.0
        %4207 = vmatprep.subr.mxu0 0.0
        %4208 = vmatpush2.msra.mxu0 0.0
        %4209 = vmatprep.subr.mxu0 0.0
        %4210 = vmatpush2.msra.mxu0 0.0
        %4211 = vmatprep.subr.mxu0 0.0
        %4212 = vmatpush2.msra.mxu0 0.0
        %4213 = vmatprep.subr.mxu0 0.0
        %4214 = vmatpush2.msra.mxu0 0.0
        %4215 = vmatprep.subr.mxu0 0.0
        %4216 = vmatpush2.msra.mxu0 0.0
        %4217 = vmatprep.subr.mxu0 0.0
        %4218 = vmatpush2.msra.mxu0 0.0
        %4219 = vmatprep.subr.mxu0 0.0
        %4220 = vmatpush2.msra.mxu0 0.0
        %4221 = vmatprep.subr.mxu0 0.0
        %4222 = vmatpush2.msra.mxu0 0.0
        %4223 = vmatprep.subr.mxu0 0.0
        %4224 = vmatpush2.msra.mxu0 0.0
        %4225 = vmatprep.subr.mxu0 0.0
        %4226 = vmatpush2.msra.mxu0 0.0
        %4227 = vmatprep.subr.mxu0 0.0
        %4228 = vmatpush2.msra.mxu0 0.0
        %4229 = vmatprep.subr.mxu0 0.0
        %4230 = vmatpush2.msra.mxu0 0.0
        %4231 = vmatprep.mubr.f32.mxu0 0.0
        %4232 = vmatmul.mubr.f32.gmra.mxu0 %v4165
        %v4233 = vpop.f32.mrf.mxu0
        %v4234 = vadd.f32 1e-08, %v4233
        %v4235 = vpop.f32.mrf.mxu0
        %4236 = vdwg.mxu0
        %v4237 = vrsqrt.pop %v4234
        %v4238 = vlaneseq
        %v4239 = vshrl.u32 %v4238, 7
        %v4240 = vsub.s32 0, %v4239
        %v4241 = vrot.slane %v4237, %v4240
        %v4242 = vmul.f32 %v4129, %v4241
        %v4243 = vmul.f32 %v4132, %v4241
        %v4244 = vmul.f32 %v4137, %v4241
        %v4245 = vmul.f32 %v4140, %v4241
        %v4246 = vmul.f32 %v4145, %v4241
        %v4247 = vmul.f32 %v4148, %v4241
        %v4248 = vmul.f32 %v4153, %v4241
        %v4249 = vmul.f32 %v4156, %v4241
        %v4250 = vld [vmem:[#allocation35] sm:$0xff]
        %v4251 = vld [vmem:[#allocation35 + $0x8] sm:$0xff]
        %v4252 = vld [vmem:[#allocation35 + $0x10] sm:$0xff]
        %v4253 = vld [vmem:[#allocation35 + $0x18] sm:$0xff]
        %v4254 = vld [vmem:[#allocation35 + $0x20] sm:$0xff]
        %v4255 = vld [vmem:[#allocation35 + $0x28] sm:$0xff]
        %v4256 = vld [vmem:[#allocation35 + $0x30] sm:$0xff]
        %v4257 = vld [vmem:[#allocation35 + $0x38] sm:$0xff]
        %4259 = vset.pattern.permute.xlu0 0
        %4260 = vperm.xlu0 %4259, %v4250
        %v4261 = vpop.permute.xlu0 %4260
        %4264 = vset.pattern.permute.xlu0 0
        %4265 = vperm.xlu0 %4264, %v4251
        %v4266 = vpop.permute.xlu0 %4265
        %4269 = vset.pattern.permute.xlu0 0
        %4270 = vperm.xlu0 %4269, %v4252
        %v4271 = vpop.permute.xlu0 %4270
        %4274 = vset.pattern.permute.xlu0 0
        %4275 = vperm.xlu0 %4274, %v4253
        %v4276 = vpop.permute.xlu0 %4275
        %4279 = vset.pattern.permute.xlu0 0
        %4280 = vperm.xlu0 %4279, %v4254
        %v4281 = vpop.permute.xlu0 %4280
        %4284 = vset.pattern.permute.xlu0 0
        %4285 = vperm.xlu0 %4284, %v4255
        %v4286 = vpop.permute.xlu0 %4285
        %4289 = vset.pattern.permute.xlu0 0
        %4290 = vperm.xlu0 %4289, %v4256
        %v4291 = vpop.permute.xlu0 %4290
        %4294 = vset.pattern.permute.xlu0 0
        %4295 = vperm.xlu0 %4294, %v4257
        %v4296 = vpop.permute.xlu0 %4295
        %v4298 = vadd.f32 %v4242, %v4261
        %v4299 = vadd.f32 %v4243, %v4266
        %v4300 = vadd.f32 %v4244, %v4271
        %v4301 = vadd.f32 %v4245, %v4276
        %v4302 = vadd.f32 %v4246, %v4281
        %v4303 = vadd.f32 %v4247, %v4286
        %v4304 = vadd.f32 %v4248, %v4291
        %v4305 = vadd.f32 %v4249, %v4296
        %v4306 = vld [vmem:[#allocation37] sm:$0x1]
        %v4308 = vlaneseq
        %v4309 = vshrl.u32 %v4308, 7
        %v4310 = vsub.s32 0, %v4309
        %v4311 = vrot.slane %v4306, %v4310
        %v4313 = vadd.f32 %v4298, %v4311
        %v4314 = vadd.f32 %v4299, %v4311
        %v4315 = vadd.f32 %v4300, %v4311
        %v4316 = vadd.f32 %v4301, %v4311
        %v4317 = vadd.f32 %v4302, %v4311
        %v4318 = vadd.f32 %v4303, %v4311
        %v4319 = vadd.f32 %v4304, %v4311
        %v4320 = vadd.f32 %v4305, %v4311
        %vm4321 = vcmp.ge.f32.partialorder %v4313, 0.0
        %vm4322 = vcmp.ge.f32.partialorder %v4314, 0.0
        %vm4323 = vcmp.ge.f32.partialorder %v4315, 0.0
        %vm4324 = vcmp.ge.f32.partialorder %v4316, 0.0
        %vm4325 = vcmp.ge.f32.partialorder %v4317, 0.0
        %vm4326 = vcmp.ge.f32.partialorder %v4318, 0.0
        %vm4327 = vcmp.ge.f32.partialorder %v4319, 0.0
        %vm4328 = vcmp.ge.f32.partialorder %v4320, 0.0
        %v4329 = vmul.f32 %v4313, 0.2
        %v4330 = vmul.f32 %v4314, 0.2
        %v4331 = vmul.f32 %v4315, 0.2
        %v4332 = vmul.f32 %v4316, 0.2
        %v4333 = vmul.f32 %v4317, 0.2
        %v4334 = vmul.f32 %v4318, 0.2
        %v4335 = vmul.f32 %v4319, 0.2
        %v4336 = vmul.f32 %v4320, 0.2
        %v4337 = vsel %vm4321, %v4313, %v4329
        %v4338 = vsel %vm4322, %v4314, %v4330
        %v4339 = vsel %vm4323, %v4315, %v4331
        %v4340 = vsel %vm4324, %v4316, %v4332
        %v4341 = vsel %vm4325, %v4317, %v4333
        %v4342 = vsel %vm4326, %v4318, %v4334
        %v4343 = vsel %vm4327, %v4319, %v4335
        %v4344 = vsel %vm4328, %v4320, %v4336
        %v4345 = vmul.f32 %v4337, 1.4142135
        %v4346 = vmul.f32 %v4338, 1.4142135
        %v4347 = vmul.f32 %v4339, 1.4142135
        %v4348 = vmul.f32 %v4340, 1.4142135
        %v4349 = vmul.f32 %v4341, 1.4142135
        %v4350 = vmul.f32 %v4342, 1.4142135
        %v4351 = vmul.f32 %v4343, 1.4142135
        %v4352 = vmul.f32 %v4344, 1.4142135
        %v4353 = vmax.f32 %v4345, -256.0
        %v4354 = vmax.f32 %v4346, -256.0
        %v4355 = vmax.f32 %v4347, -256.0
        %v4356 = vmax.f32 %v4348, -256.0
        %v4357 = vmax.f32 %v4349, -256.0
        %v4358 = vmax.f32 %v4350, -256.0
        %v4359 = vmax.f32 %v4351, -256.0
        %v4360 = vmax.f32 %v4352, -256.0
        %v4361 = vmin.f32 %v4353, 256.0
        %v4362 = vmin.f32 %v4354, 256.0
        %v4363 = vmin.f32 %v4355, 256.0
        %v4364 = vmin.f32 %v4356, 256.0
        %v4365 = vmin.f32 %v4357, 256.0
        %v4366 = vmin.f32 %v4358, 256.0
        %v4367 = vmin.f32 %v4359, 256.0
        %v4368 = vmin.f32 %v4360, 256.0
        %v4369 = vlaneseq
        %v4370 = vshrl.u32 %v4369, 7
        %v4371 = vsub.s32 0, %v4370
        %v4372 = vrot.slane %v2061, %v4371
        %v4373 = vmul.f32 %v4361, %v4372
        %v4374 = vmul.f32 %v4362, %v4372
        %v4375 = vmul.f32 %v4363, %v4372
        %v4376 = vmul.f32 %v4364, %v4372
        %v4377 = vmul.f32 %v4365, %v4372
        %v4378 = vmul.f32 %v4366, %v4372
        %v4379 = vmul.f32 %v4367, %v4372
        %v4380 = vmul.f32 %v4368, %v4372
        %v4381 = vpack.c.bf16 %v4374, %v4373
        %v4382 = vpack.c.bf16 %v4376, %v4375
        %v4383 = vpack.c.bf16 %v4378, %v4377
        %v4384 = vpack.c.bf16 %v4380, %v4379
        %v4385 = vld [vmem:[#allocation50] sm:$0x7]
        %v4386 = vpack.c.bf16 %v4385, %v4385
        %v4387 = vld [vmem:[%s69] sm:$0x7]
        %4389 = vset.pattern.permute.xlu0 0
        %4390 = vperm.xlu0 %4389, %v4387
        %v4391 = vpop.permute.xlu0 %4390
        %v4394 = vsel %vm3629, %v4386, 0
        %v4397 = vsel %vm3629, %v4381, 0
        %v4400 = vsel %vm3629, %v4382, 0
        %v4403 = vsel %vm3629, %v4383, 0
        %v4406 = vsel %vm3629, %v4384, 0
        %4408 = vmatprep.subr.bf16.mxu0 0
        %4409 = vmatpush1.bf16.xpose.msra.mxu0 0
        %4410 = vmatprep.subr.bf16.mxu0 0
        %4411 = vmatpush1.bf16.xpose.msra.mxu0 0
        %4412 = vmatprep.subr.bf16.mxu0 0
        %4413 = vmatpush1.bf16.xpose.msra.mxu0 0
        %4414 = vmatprep.subr.bf16.mxu0 0
        %4415 = vmatpush1.bf16.xpose.msra.mxu0 0
        %4416 = vmatprep.subr.bf16.mxu0 0
        %4417 = vmatpush1.bf16.xpose.msra.mxu0 %v4406
        %4418 = vmatprep.subr.bf16.mxu0 0
        %4419 = vmatpush1.bf16.xpose.msra.mxu0 %v4403
        %4420 = vmatprep.subr.bf16.mxu0 0
        %4421 = vmatpush1.bf16.xpose.msra.mxu0 %v4400
        %4422 = vmatprep.subr.bf16.mxu0 0
        %4423 = vmatpush1.bf16.xpose.msra.mxu0 %v4397
        %4424 = vmatprep.subr.bf16.mxu0 0
        %4425 = vmatpush2.bf16.xpose.msra.mxu0 0
        %4426 = vmatprep.subr.bf16.mxu0 0
        %4427 = vmatpush2.bf16.xpose.msra.mxu0 0
        %4428 = vmatprep.subr.bf16.mxu0 0
        %4429 = vmatpush2.bf16.xpose.msra.mxu0 0
        %4430 = vmatprep.subr.bf16.mxu0 0
        %4431 = vmatpush2.bf16.xpose.msra.mxu0 0
        %4432 = vmatprep.subr.bf16.mxu0 0
        %4433 = vmatpush2.bf16.xpose.msra.mxu0 0
        %4434 = vmatprep.subr.bf16.mxu0 0
        %4435 = vmatpush2.bf16.xpose.msra.mxu0 0
        %4436 = vmatprep.subr.bf16.mxu0 0
        %4437 = vmatpush2.bf16.xpose.msra.mxu0 0
        %4438 = vmatprep.subr.bf16.mxu0 0
        %4439 = vmatpush2.bf16.xpose.msra.mxu0 0
        %4440 = vmatprep.mubr.bf16.mxu0 0
        %4441 = vmatmul.mubr.bf16.gmra.mxu0 %v4394
        %v4442 = vpop.f32.mrf.mxu0
        %v4443 = vadd.f32 %v4391, %v4442
        %v4444 = vpop.f32.mrf.mxu0
        %v4445 = vpop.f32.mrf.mxu0
        %v4446 = vpop.f32.mrf.mxu0
        %4447 = vdwg.mxu0
        %v4448 = vmax.f32 %v4443, -256.0
        %v4449 = vmin.f32 %v4448, 256.0
        %v4451 = vsel %vm2686, %v2677, 0
        %4453 = vmatprep.subr.mxu0 0.0
        %4454 = vmatpush1.xpose.msra.mxu0 0.0
        %4455 = vmatprep.subr.mxu0 0.0
        %4456 = vmatpush1.xpose.msra.mxu0 0.0
        %4457 = vmatprep.subr.mxu0 0.0
        %4458 = vmatpush1.xpose.msra.mxu0 0.0
        %4459 = vmatprep.subr.mxu0 0.0
        %4460 = vmatpush1.xpose.msra.mxu0 0.0
        %4461 = vmatprep.subr.mxu0 0.0
        %4462 = vmatpush1.xpose.msra.mxu0 0.0
        %4463 = vmatprep.subr.mxu0 0.0
        %4464 = vmatpush1.xpose.msra.mxu0 0.0
        %4465 = vmatprep.subr.mxu0 0.0
        %4466 = vmatpush1.xpose.msra.mxu0 0.0
        %4467 = vmatprep.subr.mxu0 0.0
        %4468 = vmatpush1.xpose.msra.mxu0 0.0
        %4469 = vmatprep.subr.mxu0 0.0
        %4470 = vmatpush1.xpose.msra.mxu0 %v2709
        %4471 = vmatprep.subr.mxu0 0.0
        %4472 = vmatpush1.xpose.msra.mxu0 %v2706
        %4473 = vmatprep.subr.mxu0 0.0
        %4474 = vmatpush1.xpose.msra.mxu0 %v2703
        %4475 = vmatprep.subr.mxu0 0.0
        %4476 = vmatpush1.xpose.msra.mxu0 %v2700
        %4477 = vmatprep.subr.mxu0 0.0
        %4478 = vmatpush1.xpose.msra.mxu0 %v2697
        %4479 = vmatprep.subr.mxu0 0.0
        %4480 = vmatpush1.xpose.msra.mxu0 %v2694
        %4481 = vmatprep.subr.mxu0 0.0
        %4482 = vmatpush1.xpose.msra.mxu0 %v2691
        %4483 = vmatprep.subr.mxu0 0.0
        %4484 = vmatpush1.xpose.msra.mxu0 %v2688
        %4485 = vmatprep.subr.mxu0 0.0
        %4486 = vmatpush2.xpose.msra.mxu0 0.0
        %4487 = vmatprep.subr.mxu0 0.0
        %4488 = vmatpush2.xpose.msra.mxu0 0.0
        %4489 = vmatprep.subr.mxu0 0.0
        %4490 = vmatpush2.xpose.msra.mxu0 0.0
        %4491 = vmatprep.subr.mxu0 0.0
        %4492 = vmatpush2.xpose.msra.mxu0 0.0
        %4493 = vmatprep.subr.mxu0 0.0
        %4494 = vmatpush2.xpose.msra.mxu0 0.0
        %4495 = vmatprep.subr.mxu0 0.0
        %4496 = vmatpush2.xpose.msra.mxu0 0.0
        %4497 = vmatprep.subr.mxu0 0.0
        %4498 = vmatpush2.xpose.msra.mxu0 0.0
        %4499 = vmatprep.subr.mxu0 0.0
        %4500 = vmatpush2.xpose.msra.mxu0 0.0
        %4501 = vmatprep.subr.mxu0 0.0
        %4502 = vmatpush2.xpose.msra.mxu0 0.0
        %4503 = vmatprep.subr.mxu0 0.0
        %4504 = vmatpush2.xpose.msra.mxu0 0.0
        %4505 = vmatprep.subr.mxu0 0.0
        %4506 = vmatpush2.xpose.msra.mxu0 0.0
        %4507 = vmatprep.subr.mxu0 0.0
        %4508 = vmatpush2.xpose.msra.mxu0 0.0
        %4509 = vmatprep.subr.mxu0 0.0
        %4510 = vmatpush2.xpose.msra.mxu0 0.0
        %4511 = vmatprep.subr.mxu0 0.0
        %4512 = vmatpush2.xpose.msra.mxu0 0.0
        %4513 = vmatprep.subr.mxu0 0.0
        %4514 = vmatpush2.xpose.msra.mxu0 0.0
        %4515 = vmatprep.subr.mxu0 0.0
        %4516 = vmatpush2.xpose.msra.mxu0 0.0
        %4517 = vmatprep.mubr.f32.mxu0 0.0
        %4518 = vmatmul.mubr.f32.gmra.mxu0 %v4451
        %v4519 = vpop.f32.mrf.mxu0
        %v4520 = vadd.f32 %v4449, %v4519
        %v4521 = vpop.f32.mrf.mxu0
        %4522 = vdwg.mxu0
        %v4523 = vld [vmem:[#allocation19] sm:$0xff]
        %v4524 = vld [vmem:[#allocation19 + $0x8] sm:$0xff]
        %v4525 = vld [vmem:[#allocation19 + $0x10] sm:$0xff]
        %v4526 = vld [vmem:[#allocation19 + $0x18] sm:$0xff]
        %v4527 = vld [vmem:[#allocation19 + $0x20] sm:$0xff]
        %v4528 = vld [vmem:[#allocation19 + $0x28] sm:$0xff]
        %v4529 = vld [vmem:[#allocation19 + $0x30] sm:$0xff]
        %v4530 = vld [vmem:[#allocation19 + $0x38] sm:$0xff]
        %v4531 = vld [vmem:[#allocation19 + $0x40] sm:$0xff]
        %v4532 = vld [vmem:[#allocation19 + $0x48] sm:$0xff]
        %v4533 = vld [vmem:[#allocation19 + $0x50] sm:$0xff]
        %v4534 = vld [vmem:[#allocation19 + $0x58] sm:$0xff]
        %v4535 = vld [vmem:[#allocation19 + $0x60] sm:$0xff]
        %v4536 = vld [vmem:[#allocation19 + $0x68] sm:$0xff]
        %v4537 = vld [vmem:[#allocation19 + $0x70] sm:$0xff]
        %v4538 = vld [vmem:[#allocation19 + $0x78] sm:$0xff]
        %v4539 = vld [vmem:[#allocation19 + $0x80] sm:$0xff]
        %v4540 = vld [vmem:[#allocation19 + $0x88] sm:$0xff]
        %v4541 = vld [vmem:[#allocation19 + $0x90] sm:$0xff]
        %v4542 = vld [vmem:[#allocation19 + $0x98] sm:$0xff]
        %v4543 = vld [vmem:[#allocation19 + $0xa0] sm:$0xff]
        %v4544 = vld [vmem:[#allocation19 + $0xa8] sm:$0xff]
        %v4545 = vld [vmem:[#allocation19 + $0xb0] sm:$0xff]
        %v4546 = vld [vmem:[#allocation19 + $0xb8] sm:$0xff]
        %v4547 = vld [vmem:[#allocation19 + $0xc0] sm:$0xff]
        %v4548 = vld [vmem:[#allocation19 + $0xc8] sm:$0xff]
        %v4549 = vld [vmem:[#allocation19 + $0xd0] sm:$0xff]
        %v4550 = vld [vmem:[#allocation19 + $0xd8] sm:$0xff]
        %v4551 = vld [vmem:[#allocation19 + $0xe0] sm:$0xff]
        %v4552 = vld [vmem:[#allocation19 + $0xe8] sm:$0xff]
        %v4553 = vld [vmem:[#allocation19 + $0xf0] sm:$0xff]
        %v4554 = vld [vmem:[#allocation19 + $0xf8] sm:$0xff]
        %v4556 = vsel %vm1568, %v4523, 0
        %v4559 = vsel %vm1568, %v4524, 0
        %v4562 = vsel %vm1568, %v4525, 0
        %v4565 = vsel %vm1568, %v4526, 0
        %v4568 = vsel %vm1568, %v4527, 0
        %v4571 = vsel %vm1568, %v4528, 0
        %v4574 = vsel %vm1568, %v4529, 0
        %v4577 = vsel %vm1568, %v4530, 0
        %v4580 = vsel %vm1568, %v4531, 0
        %v4583 = vsel %vm1568, %v4532, 0
        %v4586 = vsel %vm1568, %v4533, 0
        %v4589 = vsel %vm1568, %v4534, 0
        %v4592 = vsel %vm1568, %v4535, 0
        %v4595 = vsel %vm1568, %v4536, 0
        %v4598 = vsel %vm1568, %v4537, 0
        %v4601 = vsel %vm1568, %v4538, 0
        %v4604 = vsel %vm1568, %v4539, 0
        %v4607 = vsel %vm1568, %v4540, 0
        %v4610 = vsel %vm1568, %v4541, 0
        %v4613 = vsel %vm1568, %v4542, 0
        %v4616 = vsel %vm1568, %v4543, 0
        %v4619 = vsel %vm1568, %v4544, 0
        %v4622 = vsel %vm1568, %v4545, 0
        %v4625 = vsel %vm1568, %v4546, 0
        %v4628 = vsel %vm1568, %v4547, 0
        %v4631 = vsel %vm1568, %v4548, 0
        %v4634 = vsel %vm1568, %v4549, 0
        %v4637 = vsel %vm1568, %v4550, 0
        %v4640 = vsel %vm1568, %v4551, 0
        %v4643 = vsel %vm1568, %v4552, 0
        %v4646 = vsel %vm1568, %v4553, 0
        %v4649 = vsel %vm1568, %v4554, 0
        %4651 = vmatprep.subr.mxu0 0.0
        %4652 = vmatpush1.msra.mxu0 0.0
        %4653 = vmatprep.subr.mxu0 0.0
        %4654 = vmatpush1.msra.mxu0 0.0
        %4655 = vmatprep.subr.mxu0 0.0
        %4656 = vmatpush1.msra.mxu0 0.0
        %4657 = vmatprep.subr.mxu0 0.0
        %4658 = vmatpush1.msra.mxu0 0.0
        %4659 = vmatprep.subr.mxu0 0.0
        %4660 = vmatpush1.msra.mxu0 0.0
        %4661 = vmatprep.subr.mxu0 0.0
        %4662 = vmatpush1.msra.mxu0 0.0
        %4663 = vmatprep.subr.mxu0 0.0
        %4664 = vmatpush1.msra.mxu0 0.0
        %4665 = vmatprep.subr.mxu0 0.0
        %4666 = vmatpush1.msra.mxu0 0.0
        %4667 = vmatprep.subr.mxu0 0.0
        %4668 = vmatpush1.msra.mxu0 %v4368
        %4669 = vmatprep.subr.mxu0 0.0
        %4670 = vmatpush1.msra.mxu0 %v4367
        %4671 = vmatprep.subr.mxu0 0.0
        %4672 = vmatpush1.msra.mxu0 %v4366
        %4673 = vmatprep.subr.mxu0 0.0
        %4674 = vmatpush1.msra.mxu0 %v4365
        %4675 = vmatprep.subr.mxu0 0.0
        %4676 = vmatpush1.msra.mxu0 %v4364
        %4677 = vmatprep.subr.mxu0 0.0
        %4678 = vmatpush1.msra.mxu0 %v4363
        %4679 = vmatprep.subr.mxu0 0.0
        %4680 = vmatpush1.msra.mxu0 %v4362
        %4681 = vmatprep.subr.mxu0 0.0
        %4682 = vmatpush1.msra.mxu0 %v4361
        %4683 = vmatprep.subr.mxu0 0.0
        %4684 = vmatpush2.msra.mxu0 0.0
        %4685 = vmatprep.subr.mxu0 0.0
        %4686 = vmatpush2.msra.mxu0 0.0
        %4687 = vmatprep.subr.mxu0 0.0
        %4688 = vmatpush2.msra.mxu0 0.0
        %4689 = vmatprep.subr.mxu0 0.0
        %4690 = vmatpush2.msra.mxu0 0.0
        %4691 = vmatprep.subr.mxu0 0.0
        %4692 = vmatpush2.msra.mxu0 0.0
        %4693 = vmatprep.subr.mxu0 0.0
        %4694 = vmatpush2.msra.mxu0 0.0
        %4695 = vmatprep.subr.mxu0 0.0
        %4696 = vmatpush2.msra.mxu0 0.0
        %4697 = vmatprep.subr.mxu0 0.0
        %4698 = vmatpush2.msra.mxu0 0.0
        %4699 = vmatprep.subr.mxu0 0.0
        %4700 = vmatpush2.msra.mxu0 0.0
        %4701 = vmatprep.subr.mxu0 0.0
        %4702 = vmatpush2.msra.mxu0 0.0
        %4703 = vmatprep.subr.mxu0 0.0
        %4704 = vmatpush2.msra.mxu0 0.0
        %4705 = vmatprep.subr.mxu0 0.0
        %4706 = vmatpush2.msra.mxu0 0.0
        %4707 = vmatprep.subr.mxu0 0.0
        %4708 = vmatpush2.msra.mxu0 0.0
        %4709 = vmatprep.subr.mxu0 0.0
        %4710 = vmatpush2.msra.mxu0 0.0
        %4711 = vmatprep.subr.mxu0 0.0
        %4712 = vmatpush2.msra.mxu0 0.0
        %4713 = vmatprep.subr.mxu0 0.0
        %4714 = vmatpush2.msra.mxu0 0.0
        %4715 = vmatprep.mubr.f32.mxu0 0.0
        %4716 = vmatmul.mubr.f32.gmra.mxu0 %v4556
        %v4717 = vpop.f32.mrf.mxu0
        %v4718 = vadd.f32 0.0, %v4717
        %v4719 = vpop.f32.mrf.mxu0
        %4720 = vmatprep.mubr.f32.mxu0 0.0
        %4721 = vmatmul.mubr.f32.gmra.mxu0 %v4559
        %v4722 = vpop.f32.mrf.mxu0
        %v4723 = vadd.f32 0.0, %v4722
        %v4724 = vpop.f32.mrf.mxu0
        %4725 = vmatprep.mubr.f32.mxu0 0.0
        %4726 = vmatmul.mubr.f32.gmra.mxu0 %v4562
        %v4727 = vpop.f32.mrf.mxu0
        %v4728 = vadd.f32 0.0, %v4727
        %v4729 = vpop.f32.mrf.mxu0
        %4730 = vmatprep.mubr.f32.mxu0 0.0
        %4731 = vmatmul.mubr.f32.gmra.mxu0 %v4565
        %v4732 = vpop.f32.mrf.mxu0
        %v4733 = vadd.f32 0.0, %v4732
        %v4734 = vpop.f32.mrf.mxu0
        %4735 = vmatprep.mubr.f32.mxu0 0.0
        %4736 = vmatmul.mubr.f32.gmra.mxu0 %v4568
        %v4737 = vpop.f32.mrf.mxu0
        %v4738 = vadd.f32 0.0, %v4737
        %v4739 = vpop.f32.mrf.mxu0
        %4740 = vmatprep.mubr.f32.mxu0 0.0
        %4741 = vmatmul.mubr.f32.gmra.mxu0 %v4571
        %v4742 = vpop.f32.mrf.mxu0
        %v4743 = vadd.f32 0.0, %v4742
        %v4744 = vpop.f32.mrf.mxu0
        %4745 = vmatprep.mubr.f32.mxu0 0.0
        %4746 = vmatmul.mubr.f32.gmra.mxu0 %v4574
        %v4747 = vpop.f32.mrf.mxu0
        %v4748 = vadd.f32 0.0, %v4747
        %v4749 = vpop.f32.mrf.mxu0
        %4750 = vmatprep.mubr.f32.mxu0 0.0
        %4751 = vmatmul.mubr.f32.gmra.mxu0 %v4577
        %v4752 = vpop.f32.mrf.mxu0
        %v4753 = vadd.f32 0.0, %v4752
        %v4754 = vpop.f32.mrf.mxu0
        %4755 = vmatprep.mubr.f32.mxu0 0.0
        %4756 = vmatmul.mubr.f32.gmra.mxu0 %v4580
        %v4757 = vpop.f32.mrf.mxu0
        %v4758 = vadd.f32 0.0, %v4757
        %v4759 = vpop.f32.mrf.mxu0
        %4760 = vmatprep.mubr.f32.mxu0 0.0
        %4761 = vmatmul.mubr.f32.gmra.mxu0 %v4583
        %v4762 = vpop.f32.mrf.mxu0
        %v4763 = vadd.f32 0.0, %v4762
        %v4764 = vpop.f32.mrf.mxu0
        %4765 = vmatprep.mubr.f32.mxu0 0.0
        %4766 = vmatmul.mubr.f32.gmra.mxu0 %v4586
        %v4767 = vpop.f32.mrf.mxu0
        %v4768 = vadd.f32 0.0, %v4767
        %v4769 = vpop.f32.mrf.mxu0
        %4770 = vmatprep.mubr.f32.mxu0 0.0
        %4771 = vmatmul.mubr.f32.gmra.mxu0 %v4589
        %v4772 = vpop.f32.mrf.mxu0
        %v4773 = vadd.f32 0.0, %v4772
        %v4774 = vpop.f32.mrf.mxu0
        %4775 = vmatprep.mubr.f32.mxu0 0.0
        %4776 = vmatmul.mubr.f32.gmra.mxu0 %v4592
        %v4777 = vpop.f32.mrf.mxu0
        %v4778 = vadd.f32 0.0, %v4777
        %v4779 = vpop.f32.mrf.mxu0
        %4780 = vmatprep.mubr.f32.mxu0 0.0
        %4781 = vmatmul.mubr.f32.gmra.mxu0 %v4595
        %v4782 = vpop.f32.mrf.mxu0
        %v4783 = vadd.f32 0.0, %v4782
        %v4784 = vpop.f32.mrf.mxu0
        %4785 = vmatprep.mubr.f32.mxu0 0.0
        %4786 = vmatmul.mubr.f32.gmra.mxu0 %v4598
        %v4787 = vpop.f32.mrf.mxu0
        %v4788 = vadd.f32 0.0, %v4787
        %v4789 = vpop.f32.mrf.mxu0
        %4790 = vmatprep.mubr.f32.mxu0 0.0
        %4791 = vmatmul.mubr.f32.gmra.mxu0 %v4601
        %v4792 = vpop.f32.mrf.mxu0
        %v4793 = vadd.f32 0.0, %v4792
        %v4794 = vpop.f32.mrf.mxu0
        %4795 = vmatprep.mubr.f32.mxu0 0.0
        %4796 = vmatmul.mubr.f32.gmra.mxu0 %v4604
        %v4797 = vpop.f32.mrf.mxu0
        %v4798 = vadd.f32 0.0, %v4797
        %v4799 = vpop.f32.mrf.mxu0
        %4800 = vmatprep.mubr.f32.mxu0 0.0
        %4801 = vmatmul.mubr.f32.gmra.mxu0 %v4607
        %v4802 = vpop.f32.mrf.mxu0
        %v4803 = vadd.f32 0.0, %v4802
        %v4804 = vpop.f32.mrf.mxu0
        %4805 = vmatprep.mubr.f32.mxu0 0.0
        %4806 = vmatmul.mubr.f32.gmra.mxu0 %v4610
        %v4807 = vpop.f32.mrf.mxu0
        %v4808 = vadd.f32 0.0, %v4807
        %v4809 = vpop.f32.mrf.mxu0
        %4810 = vmatprep.mubr.f32.mxu0 0.0
        %4811 = vmatmul.mubr.f32.gmra.mxu0 %v4613
        %v4812 = vpop.f32.mrf.mxu0
        %v4813 = vadd.f32 0.0, %v4812
        %v4814 = vpop.f32.mrf.mxu0
        %4815 = vmatprep.mubr.f32.mxu0 0.0
        %4816 = vmatmul.mubr.f32.gmra.mxu0 %v4616
        %v4817 = vpop.f32.mrf.mxu0
        %v4818 = vadd.f32 0.0, %v4817
        %v4819 = vpop.f32.mrf.mxu0
        %4820 = vmatprep.mubr.f32.mxu0 0.0
        %4821 = vmatmul.mubr.f32.gmra.mxu0 %v4619
        %v4822 = vpop.f32.mrf.mxu0
        %v4823 = vadd.f32 0.0, %v4822
        %v4824 = vpop.f32.mrf.mxu0
        %4825 = vmatprep.mubr.f32.mxu0 0.0
        %4826 = vmatmul.mubr.f32.gmra.mxu0 %v4622
        %v4827 = vpop.f32.mrf.mxu0
        %v4828 = vadd.f32 0.0, %v4827
        %v4829 = vpop.f32.mrf.mxu0
        %4830 = vmatprep.mubr.f32.mxu0 0.0
        %4831 = vmatmul.mubr.f32.gmra.mxu0 %v4625
        %v4832 = vpop.f32.mrf.mxu0
        %v4833 = vadd.f32 0.0, %v4832
        %v4834 = vpop.f32.mrf.mxu0
        %4835 = vmatprep.mubr.f32.mxu0 0.0
        %4836 = vmatmul.mubr.f32.gmra.mxu0 %v4628
        %v4837 = vpop.f32.mrf.mxu0
        %v4838 = vadd.f32 0.0, %v4837
        %v4839 = vpop.f32.mrf.mxu0
        %4840 = vmatprep.mubr.f32.mxu0 0.0
        %4841 = vmatmul.mubr.f32.gmra.mxu0 %v4631
        %v4842 = vpop.f32.mrf.mxu0
        %v4843 = vadd.f32 0.0, %v4842
        %v4844 = vpop.f32.mrf.mxu0
        %4845 = vmatprep.mubr.f32.mxu0 0.0
        %4846 = vmatmul.mubr.f32.gmra.mxu0 %v4634
        %v4847 = vpop.f32.mrf.mxu0
        %v4848 = vadd.f32 0.0, %v4847
        %v4849 = vpop.f32.mrf.mxu0
        %4850 = vmatprep.mubr.f32.mxu0 0.0
        %4851 = vmatmul.mubr.f32.gmra.mxu0 %v4637
        %v4852 = vpop.f32.mrf.mxu0
        %v4853 = vadd.f32 0.0, %v4852
        %v4854 = vpop.f32.mrf.mxu0
        %4855 = vmatprep.mubr.f32.mxu0 0.0
        %4856 = vmatmul.mubr.f32.gmra.mxu0 %v4640
        %v4857 = vpop.f32.mrf.mxu0
        %v4858 = vadd.f32 0.0, %v4857
        %v4859 = vpop.f32.mrf.mxu0
        %4860 = vmatprep.mubr.f32.mxu0 0.0
        %4861 = vmatmul.mubr.f32.gmra.mxu0 %v4643
        %v4862 = vpop.f32.mrf.mxu0
        %v4863 = vadd.f32 0.0, %v4862
        %v4864 = vpop.f32.mrf.mxu0
        %4865 = vmatprep.mubr.f32.mxu0 0.0
        %4866 = vmatmul.mubr.f32.gmra.mxu0 %v4646
        %v4867 = vpop.f32.mrf.mxu0
        %v4868 = vadd.f32 0.0, %v4867
        %v4869 = vpop.f32.mrf.mxu0
        %4870 = vmatprep.mubr.f32.mxu0 0.0
        %4871 = vmatmul.mubr.f32.gmra.mxu0 %v4649
        %v4872 = vpop.f32.mrf.mxu0
        %v4873 = vadd.f32 0.0, %v4872
        %v4874 = vpop.f32.mrf.mxu0
        %4875 = vdwg.mxu0
        %v4876 = vlaneseq
        %v4877 = vshrl.u32 %v4876, 7
        %v4878 = vsub.s32 0, %v4877
        %v4879 = vrot.slane %v1981, %v4878
        %v4880 = vmul.f32 %v4718, %v4879
        %v4881 = vmul.f32 %v4723, %v4879
        %v4882 = vmul.f32 %v4728, %v4879
        %v4883 = vmul.f32 %v4733, %v4879
        %v4884 = vmul.f32 %v4738, %v4879
        %v4885 = vmul.f32 %v4743, %v4879
        %v4886 = vmul.f32 %v4748, %v4879
        %v4887 = vmul.f32 %v4753, %v4879
        %v4888 = vmul.f32 %v4758, %v4879
        %v4889 = vmul.f32 %v4763, %v4879
        %v4890 = vmul.f32 %v4768, %v4879
        %v4891 = vmul.f32 %v4773, %v4879
        %v4892 = vmul.f32 %v4778, %v4879
        %v4893 = vmul.f32 %v4783, %v4879
        %v4894 = vmul.f32 %v4788, %v4879
        %v4895 = vmul.f32 %v4793, %v4879
        %v4896 = vmul.f32 %v4798, %v4879
        %v4897 = vmul.f32 %v4803, %v4879
        %v4898 = vmul.f32 %v4808, %v4879
        %v4899 = vmul.f32 %v4813, %v4879
        %v4900 = vmul.f32 %v4818, %v4879
        %v4901 = vmul.f32 %v4823, %v4879
        %v4902 = vmul.f32 %v4828, %v4879
        %v4903 = vmul.f32 %v4833, %v4879
        %v4904 = vmul.f32 %v4838, %v4879
        %v4905 = vmul.f32 %v4843, %v4879
        %v4906 = vmul.f32 %v4848, %v4879
        %v4907 = vmul.f32 %v4853, %v4879
        %v4908 = vmul.f32 %v4858, %v4879
        %v4909 = vmul.f32 %v4863, %v4879
        %v4910 = vmul.f32 %v4868, %v4879
        %v4911 = vmul.f32 %v4873, %v4879
        %4912 = vst.msk [vmem:[%s2081 + $0x1] sm:$0xff] %vm3629, %v4880
        %4913 = vst.msk [vmem:[%s2081 + $0x9] sm:$0xff] %vm3629, %v4881
        %4914 = vst.msk [vmem:[%s2081 + $0x19] sm:$0xff] %vm3629, %v4882
        %4915 = vst.msk [vmem:[%s2081 + $0x21] sm:$0xff] %vm3629, %v4883
        %4916 = vst.msk [vmem:[%s2081 + $0x31] sm:$0xff] %vm3629, %v4884
        %4917 = vst.msk [vmem:[%s2081 + $0x39] sm:$0xff] %vm3629, %v4885
        %4918 = vst.msk [vmem:[%s2081 + $0x49] sm:$0xff] %vm3629, %v4886
        %4919 = vst.msk [vmem:[%s2081 + $0x51] sm:$0xff] %vm3629, %v4887
        %4920 = vst.msk [vmem:[%s2081 + $0x61] sm:$0xff] %vm3629, %v4888
        %4921 = vst.msk [vmem:[%s2081 + $0x69] sm:$0xff] %vm3629, %v4889
        %4922 = vst.msk [vmem:[%s2081 + $0x79] sm:$0xff] %vm3629, %v4890
        %4923 = vst.msk [vmem:[%s2081 + $0x81] sm:$0xff] %vm3629, %v4891
        %4924 = vst.msk [vmem:[%s2081 + $0x91] sm:$0xff] %vm3629, %v4892
        %4925 = vst.msk [vmem:[%s2081 + $0x99] sm:$0xff] %vm3629, %v4893
        %4926 = vst.msk [vmem:[%s2081 + $0xa9] sm:$0xff] %vm3629, %v4894
        %4927 = vst.msk [vmem:[%s2081 + $0xb1] sm:$0xff] %vm3629, %v4895
        %4928 = vst.msk [vmem:[%s2081 + $0xc1] sm:$0xff] %vm3629, %v4896
        %4929 = vst.msk [vmem:[%s2081 + $0xc9] sm:$0xff] %vm3629, %v4897
        %4930 = vst.msk [vmem:[%s2081 + $0xd9] sm:$0xff] %vm3629, %v4898
        %4931 = vst.msk [vmem:[%s2081 + $0xe1] sm:$0xff] %vm3629, %v4899
        %4932 = vst.msk [vmem:[%s2081 + $0xf1] sm:$0xff] %vm3629, %v4900
        %4933 = vst.msk [vmem:[%s2081 + $0xf9] sm:$0xff] %vm3629, %v4901
        %4934 = vst.msk [vmem:[%s2081 + $0x109] sm:$0xff] %vm3629, %v4902
        %4935 = vst.msk [vmem:[%s2081 + $0x111] sm:$0xff] %vm3629, %v4903
        %4936 = vst.msk [vmem:[%s2081 + $0x121] sm:$0xff] %vm3629, %v4904
        %4937 = vst.msk [vmem:[%s2081 + $0x129] sm:$0xff] %vm3629, %v4905
        %4938 = vst.msk [vmem:[%s2081 + $0x139] sm:$0xff] %vm3629, %v4906
        %4939 = vst.msk [vmem:[%s2081 + $0x141] sm:$0xff] %vm3629, %v4907
        %4940 = vst.msk [vmem:[%s2081 + $0x151] sm:$0xff] %vm3629, %v4908
        %4941 = vst.msk [vmem:[%s2081 + $0x159] sm:$0xff] %vm3629, %v4909
        %4942 = vst.msk [vmem:[%s2081 + $0x169] sm:$0xff] %vm3629, %v4910
        %4943 = vst.msk [vmem:[%s2081 + $0x171] sm:$0xff] %vm3629, %v4911
        %v4944 = vld [vmem:[#allocation2] sm:$0xff]
        %v4945 = vld [vmem:[#allocation2 + $0x8] sm:$0xff]
        %v4946 = vld [vmem:[#allocation2 + $0x18] sm:$0xff]
        %v4947 = vld [vmem:[#allocation2 + $0x20] sm:$0xff]
        %v4948 = vld [vmem:[#allocation2 + $0x30] sm:$0xff]
        %v4949 = vld [vmem:[#allocation2 + $0x38] sm:$0xff]
        %v4950 = vld [vmem:[#allocation2 + $0x48] sm:$0xff]
        %v4951 = vld [vmem:[#allocation2 + $0x50] sm:$0xff]
        %v4952 = vld [vmem:[#allocation2 + $0x60] sm:$0xff]
        %v4953 = vld [vmem:[#allocation2 + $0x68] sm:$0xff]
        %v4954 = vld [vmem:[#allocation2 + $0x78] sm:$0xff]
        %v4955 = vld [vmem:[#allocation2 + $0x80] sm:$0xff]
        %v4956 = vld [vmem:[#allocation2 + $0x90] sm:$0xff]
        %v4957 = vld [vmem:[#allocation2 + $0x98] sm:$0xff]
        %v4958 = vld [vmem:[#allocation2 + $0xa8] sm:$0xff]
        %v4959 = vld [vmem:[#allocation2 + $0xb0] sm:$0xff]
        %v4960 = vld [vmem:[#allocation2 + $0xc0] sm:$0xff]
        %v4961 = vld [vmem:[#allocation2 + $0xc8] sm:$0xff]
        %v4962 = vld [vmem:[#allocation2 + $0xd8] sm:$0xff]
        %v4963 = vld [vmem:[#allocation2 + $0xe0] sm:$0xff]
        %v4964 = vld [vmem:[#allocation2 + $0xf0] sm:$0xff]
        %v4965 = vld [vmem:[#allocation2 + $0xf8] sm:$0xff]
        %v4966 = vld [vmem:[#allocation2 + $0x108] sm:$0xff]
        %v4967 = vld [vmem:[#allocation2 + $0x110] sm:$0xff]
        %v4968 = vld [vmem:[#allocation2 + $0x120] sm:$0xff]
        %v4969 = vld [vmem:[#allocation2 + $0x128] sm:$0xff]
        %v4970 = vld [vmem:[#allocation2 + $0x138] sm:$0xff]
        %v4971 = vld [vmem:[#allocation2 + $0x140] sm:$0xff]
        %v4972 = vld [vmem:[#allocation2 + $0x150] sm:$0xff]
        %v4973 = vld [vmem:[#allocation2 + $0x158] sm:$0xff]
        %v4974 = vld [vmem:[#allocation2 + $0x168] sm:$0xff]
        %v4975 = vld [vmem:[#allocation2 + $0x170] sm:$0xff]
        %v4976 = vld [vmem:[#allocation2 + $0x1] sm:$0xff]
        %v4977 = vld [vmem:[#allocation2 + $0x9] sm:$0xff]
        %v4978 = vld [vmem:[#allocation2 + $0x19] sm:$0xff]
        %v4979 = vld [vmem:[#allocation2 + $0x21] sm:$0xff]
        %v4980 = vld [vmem:[#allocation2 + $0x31] sm:$0xff]
        %v4981 = vld [vmem:[#allocation2 + $0x39] sm:$0xff]
        %v4982 = vld [vmem:[#allocation2 + $0x49] sm:$0xff]
        %v4983 = vld [vmem:[#allocation2 + $0x51] sm:$0xff]
        %v4984 = vld [vmem:[#allocation2 + $0x61] sm:$0xff]
        %v4985 = vld [vmem:[#allocation2 + $0x69] sm:$0xff]
        %v4986 = vld [vmem:[#allocation2 + $0x79] sm:$0xff]
        %v4987 = vld [vmem:[#allocation2 + $0x81] sm:$0xff]
        %v4988 = vld [vmem:[#allocation2 + $0x91] sm:$0xff]
        %v4989 = vld [vmem:[#allocation2 + $0x99] sm:$0xff]
        %v4990 = vld [vmem:[#allocation2 + $0xa9] sm:$0xff]
        %v4991 = vld [vmem:[#allocation2 + $0xb1] sm:$0xff]
        %v4992 = vld [vmem:[#allocation2 + $0xc1] sm:$0xff]
        %v4993 = vld [vmem:[#allocation2 + $0xc9] sm:$0xff]
        %v4994 = vld [vmem:[#allocation2 + $0xd9] sm:$0xff]
        %v4995 = vld [vmem:[#allocation2 + $0xe1] sm:$0xff]
        %v4996 = vld [vmem:[#allocation2 + $0xf1] sm:$0xff]
        %v4997 = vld [vmem:[#allocation2 + $0xf9] sm:$0xff]
        %v4998 = vld [vmem:[#allocation2 + $0x109] sm:$0xff]
        %v4999 = vld [vmem:[#allocation2 + $0x111] sm:$0xff]
        %v5000 = vld [vmem:[#allocation2 + $0x121] sm:$0xff]
        %v5001 = vld [vmem:[#allocation2 + $0x129] sm:$0xff]
        %v5002 = vld [vmem:[#allocation2 + $0x139] sm:$0xff]
        %v5003 = vld [vmem:[#allocation2 + $0x141] sm:$0xff]
        %v5004 = vld [vmem:[#allocation2 + $0x151] sm:$0xff]
        %v5005 = vld [vmem:[#allocation2 + $0x159] sm:$0xff]
        %v5006 = vld [vmem:[#allocation2 + $0x169] sm:$0xff]
        %v5007 = vld [vmem:[#allocation2 + $0x171] sm:$0xff]
        %v5008 = vld [vmem:[#allocation2 + $0x2] sm:$0xff]
        %v5009 = vld [vmem:[#allocation2 + $0xa] sm:$0xff]
        %v5010 = vld [vmem:[#allocation2 + $0x1a] sm:$0xff]
        %v5011 = vld [vmem:[#allocation2 + $0x22] sm:$0xff]
        %v5012 = vld [vmem:[#allocation2 + $0x32] sm:$0xff]
        %v5013 = vld [vmem:[#allocation2 + $0x3a] sm:$0xff]
        %v5014 = vld [vmem:[#allocation2 + $0x4a] sm:$0xff]
        %v5015 = vld [vmem:[#allocation2 + $0x52] sm:$0xff]
        %v5016 = vld [vmem:[#allocation2 + $0x62] sm:$0xff]
        %v5017 = vld [vmem:[#allocation2 + $0x6a] sm:$0xff]
        %v5018 = vld [vmem:[#allocation2 + $0x7a] sm:$0xff]
        %v5019 = vld [vmem:[#allocation2 + $0x82] sm:$0xff]
        %v5020 = vld [vmem:[#allocation2 + $0x92] sm:$0xff]
        %v5021 = vld [vmem:[#allocation2 + $0x9a] sm:$0xff]
        %v5022 = vld [vmem:[#allocation2 + $0xaa] sm:$0xff]
        %v5023 = vld [vmem:[#allocation2 + $0xb2] sm:$0xff]
        %v5024 = vld [vmem:[#allocation2 + $0xc2] sm:$0xff]
        %v5025 = vld [vmem:[#allocation2 + $0xca] sm:$0xff]
        %v5026 = vld [vmem:[#allocation2 + $0xda] sm:$0xff]
        %v5027 = vld [vmem:[#allocation2 + $0xe2] sm:$0xff]
        %v5028 = vld [vmem:[#allocation2 + $0xf2] sm:$0xff]
        %v5029 = vld [vmem:[#allocation2 + $0xfa] sm:$0xff]
        %v5030 = vld [vmem:[#allocation2 + $0x10a] sm:$0xff]
        %v5031 = vld [vmem:[#allocation2 + $0x112] sm:$0xff]
        %v5032 = vld [vmem:[#allocation2 + $0x122] sm:$0xff]
        %v5033 = vld [vmem:[#allocation2 + $0x12a] sm:$0xff]
        %v5034 = vld [vmem:[#allocation2 + $0x13a] sm:$0xff]
        %v5035 = vld [vmem:[#allocation2 + $0x142] sm:$0xff]
        %v5036 = vld [vmem:[#allocation2 + $0x152] sm:$0xff]
        %v5037 = vld [vmem:[#allocation2 + $0x15a] sm:$0xff]
        %v5038 = vld [vmem:[#allocation2 + $0x16a] sm:$0xff]
        %v5039 = vld [vmem:[#allocation2 + $0x172] sm:$0xff]
        %v5040 = vld [vmem:[%s2081] sm:$0xff]
        %v5041 = vld [vmem:[%s2081 + $0x8] sm:$0xff]
        %v5042 = vld [vmem:[%s2081 + $0x18] sm:$0xff]
        %v5043 = vld [vmem:[%s2081 + $0x20] sm:$0xff]
        %v5044 = vld [vmem:[%s2081 + $0x30] sm:$0xff]
        %v5045 = vld [vmem:[%s2081 + $0x38] sm:$0xff]
        %v5046 = vld [vmem:[%s2081 + $0x48] sm:$0xff]
        %v5047 = vld [vmem:[%s2081 + $0x50] sm:$0xff]
        %v5048 = vld [vmem:[%s2081 + $0x60] sm:$0xff]
        %v5049 = vld [vmem:[%s2081 + $0x68] sm:$0xff]
        %v5050 = vld [vmem:[%s2081 + $0x78] sm:$0xff]
        %v5051 = vld [vmem:[%s2081 + $0x80] sm:$0xff]
        %v5052 = vld [vmem:[%s2081 + $0x90] sm:$0xff]
        %v5053 = vld [vmem:[%s2081 + $0x98] sm:$0xff]
        %v5054 = vld [vmem:[%s2081 + $0xa8] sm:$0xff]
        %v5055 = vld [vmem:[%s2081 + $0xb0] sm:$0xff]
        %v5056 = vld [vmem:[%s2081 + $0xc0] sm:$0xff]
        %v5057 = vld [vmem:[%s2081 + $0xc8] sm:$0xff]
        %v5058 = vld [vmem:[%s2081 + $0xd8] sm:$0xff]
        %v5059 = vld [vmem:[%s2081 + $0xe0] sm:$0xff]
        %v5060 = vld [vmem:[%s2081 + $0xf0] sm:$0xff]
        %v5061 = vld [vmem:[%s2081 + $0xf8] sm:$0xff]
        %v5062 = vld [vmem:[%s2081 + $0x108] sm:$0xff]
        %v5063 = vld [vmem:[%s2081 + $0x110] sm:$0xff]
        %v5064 = vld [vmem:[%s2081 + $0x120] sm:$0xff]
        %v5065 = vld [vmem:[%s2081 + $0x128] sm:$0xff]
        %v5066 = vld [vmem:[%s2081 + $0x138] sm:$0xff]
        %v5067 = vld [vmem:[%s2081 + $0x140] sm:$0xff]
        %v5068 = vld [vmem:[%s2081 + $0x150] sm:$0xff]
        %v5069 = vld [vmem:[%s2081 + $0x158] sm:$0xff]
        %v5070 = vld [vmem:[%s2081 + $0x168] sm:$0xff]
        %v5071 = vld [vmem:[%s2081 + $0x170] sm:$0xff]
        %v5072 = vld [vmem:[%s2081 + $0x1] sm:$0xff]
        %v5073 = vld [vmem:[%s2081 + $0x9] sm:$0xff]
        %v5074 = vld [vmem:[%s2081 + $0x19] sm:$0xff]
        %v5075 = vld [vmem:[%s2081 + $0x21] sm:$0xff]
        %v5076 = vld [vmem:[%s2081 + $0x31] sm:$0xff]
        %v5077 = vld [vmem:[%s2081 + $0x39] sm:$0xff]
        %v5078 = vld [vmem:[%s2081 + $0x49] sm:$0xff]
        %v5079 = vld [vmem:[%s2081 + $0x51] sm:$0xff]
        %v5080 = vld [vmem:[%s2081 + $0x61] sm:$0xff]
        %v5081 = vld [vmem:[%s2081 + $0x69] sm:$0xff]
        %v5082 = vld [vmem:[%s2081 + $0x79] sm:$0xff]
        %v5083 = vld [vmem:[%s2081 + $0x81] sm:$0xff]
        %v5084 = vld [vmem:[%s2081 + $0x91] sm:$0xff]
        %v5085 = vld [vmem:[%s2081 + $0x99] sm:$0xff]
        %v5086 = vld [vmem:[%s2081 + $0xa9] sm:$0xff]
        %v5087 = vld [vmem:[%s2081 + $0xb1] sm:$0xff]
        %v5088 = vld [vmem:[%s2081 + $0xc1] sm:$0xff]
        %v5089 = vld [vmem:[%s2081 + $0xc9] sm:$0xff]
        %v5090 = vld [vmem:[%s2081 + $0xd9] sm:$0xff]
        %v5091 = vld [vmem:[%s2081 + $0xe1] sm:$0xff]
        %v5092 = vld [vmem:[%s2081 + $0xf1] sm:$0xff]
        %v5093 = vld [vmem:[%s2081 + $0xf9] sm:$0xff]
        %v5094 = vld [vmem:[%s2081 + $0x109] sm:$0xff]
        %v5095 = vld [vmem:[%s2081 + $0x111] sm:$0xff]
        %v5096 = vld [vmem:[%s2081 + $0x121] sm:$0xff]
        %v5097 = vld [vmem:[%s2081 + $0x129] sm:$0xff]
        %v5098 = vld [vmem:[%s2081 + $0x139] sm:$0xff]
        %v5099 = vld [vmem:[%s2081 + $0x141] sm:$0xff]
        %v5100 = vld [vmem:[%s2081 + $0x151] sm:$0xff]
        %v5101 = vld [vmem:[%s2081 + $0x159] sm:$0xff]
        %v5102 = vld [vmem:[%s2081 + $0x169] sm:$0xff]
        %v5103 = vld [vmem:[%s2081 + $0x171] sm:$0xff]
        %v5104 = vld [vmem:[%s2081 + $0x2] sm:$0xff]
        %v5105 = vld [vmem:[%s2081 + $0xa] sm:$0xff]
        %v5106 = vld [vmem:[%s2081 + $0x1a] sm:$0xff]
        %v5107 = vld [vmem:[%s2081 + $0x22] sm:$0xff]
        %v5108 = vld [vmem:[%s2081 + $0x32] sm:$0xff]
        %v5109 = vld [vmem:[%s2081 + $0x3a] sm:$0xff]
        %v5110 = vld [vmem:[%s2081 + $0x4a] sm:$0xff]
        %v5111 = vld [vmem:[%s2081 + $0x52] sm:$0xff]
        %v5112 = vld [vmem:[%s2081 + $0x62] sm:$0xff]
        %v5113 = vld [vmem:[%s2081 + $0x6a] sm:$0xff]
        %v5114 = vld [vmem:[%s2081 + $0x7a] sm:$0xff]
        %v5115 = vld [vmem:[%s2081 + $0x82] sm:$0xff]
        %v5116 = vld [vmem:[%s2081 + $0x92] sm:$0xff]
        %v5117 = vld [vmem:[%s2081 + $0x9a] sm:$0xff]
        %v5118 = vld [vmem:[%s2081 + $0xaa] sm:$0xff]
        %v5119 = vld [vmem:[%s2081 + $0xb2] sm:$0xff]
        %v5120 = vld [vmem:[%s2081 + $0xc2] sm:$0xff]
        %v5121 = vld [vmem:[%s2081 + $0xca] sm:$0xff]
        %v5122 = vld [vmem:[%s2081 + $0xda] sm:$0xff]
        %v5123 = vld [vmem:[%s2081 + $0xe2] sm:$0xff]
        %v5124 = vld [vmem:[%s2081 + $0xf2] sm:$0xff]
        %v5125 = vld [vmem:[%s2081 + $0xfa] sm:$0xff]
        %v5126 = vld [vmem:[%s2081 + $0x10a] sm:$0xff]
        %v5127 = vld [vmem:[%s2081 + $0x112] sm:$0xff]
        %v5128 = vld [vmem:[%s2081 + $0x122] sm:$0xff]
        %v5129 = vld [vmem:[%s2081 + $0x12a] sm:$0xff]
        %v5130 = vld [vmem:[%s2081 + $0x13a] sm:$0xff]
        %v5131 = vld [vmem:[%s2081 + $0x142] sm:$0xff]
        %v5132 = vld [vmem:[%s2081 + $0x152] sm:$0xff]
        %v5133 = vld [vmem:[%s2081 + $0x15a] sm:$0xff]
        %v5134 = vld [vmem:[%s2081 + $0x16a] sm:$0xff]
        %v5135 = vld [vmem:[%s2081 + $0x172] sm:$0xff]
        %v5136 = vld [vmem:[%s2111] sm:$0xff]
        %v5137 = vld [vmem:[%s2111 + $0x8] sm:$0xff]
        %v5138 = vld [vmem:[%s2111 + $0x18] sm:$0xff]
        %v5139 = vld [vmem:[%s2111 + $0x20] sm:$0xff]
        %v5140 = vld [vmem:[%s2111 + $0x30] sm:$0xff]
        %v5141 = vld [vmem:[%s2111 + $0x38] sm:$0xff]
        %v5142 = vld [vmem:[%s2111 + $0x48] sm:$0xff]
        %v5143 = vld [vmem:[%s2111 + $0x50] sm:$0xff]
        %v5144 = vld [vmem:[%s2111 + $0x60] sm:$0xff]
        %v5145 = vld [vmem:[%s2111 + $0x68] sm:$0xff]
        %v5146 = vld [vmem:[%s2111 + $0x78] sm:$0xff]
        %v5147 = vld [vmem:[%s2111 + $0x80] sm:$0xff]
        %v5148 = vld [vmem:[%s2111 + $0x90] sm:$0xff]
        %v5149 = vld [vmem:[%s2111 + $0x98] sm:$0xff]
        %v5150 = vld [vmem:[%s2111 + $0xa8] sm:$0xff]
        %v5151 = vld [vmem:[%s2111 + $0xb0] sm:$0xff]
        %v5152 = vld [vmem:[%s2111 + $0xc0] sm:$0xff]
        %v5153 = vld [vmem:[%s2111 + $0xc8] sm:$0xff]
        %v5154 = vld [vmem:[%s2111 + $0xd8] sm:$0xff]
        %v5155 = vld [vmem:[%s2111 + $0xe0] sm:$0xff]
        %v5156 = vld [vmem:[%s2111 + $0xf0] sm:$0xff]
        %v5157 = vld [vmem:[%s2111 + $0xf8] sm:$0xff]
        %v5158 = vld [vmem:[%s2111 + $0x108] sm:$0xff]
        %v5159 = vld [vmem:[%s2111 + $0x110] sm:$0xff]
        %v5160 = vld [vmem:[%s2111 + $0x120] sm:$0xff]
        %v5161 = vld [vmem:[%s2111 + $0x128] sm:$0xff]
        %v5162 = vld [vmem:[%s2111 + $0x138] sm:$0xff]
        %v5163 = vld [vmem:[%s2111 + $0x140] sm:$0xff]
        %v5164 = vld [vmem:[%s2111 + $0x150] sm:$0xff]
        %v5165 = vld [vmem:[%s2111 + $0x158] sm:$0xff]
        %v5166 = vld [vmem:[%s2111 + $0x168] sm:$0xff]
        %v5167 = vld [vmem:[%s2111 + $0x170] sm:$0xff]
        %v5168 = vld [vmem:[%s2111 + $0x1] sm:$0xff]
        %v5169 = vld [vmem:[%s2111 + $0x9] sm:$0xff]
        %v5170 = vld [vmem:[%s2111 + $0x19] sm:$0xff]
        %v5171 = vld [vmem:[%s2111 + $0x21] sm:$0xff]
        %v5172 = vld [vmem:[%s2111 + $0x31] sm:$0xff]
        %v5173 = vld [vmem:[%s2111 + $0x39] sm:$0xff]
        %v5174 = vld [vmem:[%s2111 + $0x49] sm:$0xff]
        %v5175 = vld [vmem:[%s2111 + $0x51] sm:$0xff]
        %v5176 = vld [vmem:[%s2111 + $0x61] sm:$0xff]
        %v5177 = vld [vmem:[%s2111 + $0x69] sm:$0xff]
        %v5178 = vld [vmem:[%s2111 + $0x79] sm:$0xff]
        %v5179 = vld [vmem:[%s2111 + $0x81] sm:$0xff]
        %v5180 = vld [vmem:[%s2111 + $0x91] sm:$0xff]
        %v5181 = vld [vmem:[%s2111 + $0x99] sm:$0xff]
        %v5182 = vld [vmem:[%s2111 + $0xa9] sm:$0xff]
        %v5183 = vld [vmem:[%s2111 + $0xb1] sm:$0xff]
        %v5184 = vld [vmem:[%s2111 + $0xc1] sm:$0xff]
        %v5185 = vld [vmem:[%s2111 + $0xc9] sm:$0xff]
        %v5186 = vld [vmem:[%s2111 + $0xd9] sm:$0xff]
        %v5187 = vld [vmem:[%s2111 + $0xe1] sm:$0xff]
        %v5188 = vld [vmem:[%s2111 + $0xf1] sm:$0xff]
        %v5189 = vld [vmem:[%s2111 + $0xf9] sm:$0xff]
        %v5190 = vld [vmem:[%s2111 + $0x109] sm:$0xff]
        %v5191 = vld [vmem:[%s2111 + $0x111] sm:$0xff]
        %v5192 = vld [vmem:[%s2111 + $0x121] sm:$0xff]
        %v5193 = vld [vmem:[%s2111 + $0x129] sm:$0xff]
        %v5194 = vld [vmem:[%s2111 + $0x139] sm:$0xff]
        %v5195 = vld [vmem:[%s2111 + $0x141] sm:$0xff]
        %v5196 = vld [vmem:[%s2111 + $0x151] sm:$0xff]
        %v5197 = vld [vmem:[%s2111 + $0x159] sm:$0xff]
        %v5198 = vld [vmem:[%s2111 + $0x169] sm:$0xff]
        %v5199 = vld [vmem:[%s2111 + $0x171] sm:$0xff]
        %v5200 = vld [vmem:[%s2111 + $0x2] sm:$0xff]
        %v5201 = vld [vmem:[%s2111 + $0xa] sm:$0xff]
        %v5202 = vld [vmem:[%s2111 + $0x1a] sm:$0xff]
        %v5203 = vld [vmem:[%s2111 + $0x22] sm:$0xff]
        %v5204 = vld [vmem:[%s2111 + $0x32] sm:$0xff]
        %v5205 = vld [vmem:[%s2111 + $0x3a] sm:$0xff]
        %v5206 = vld [vmem:[%s2111 + $0x4a] sm:$0xff]
        %v5207 = vld [vmem:[%s2111 + $0x52] sm:$0xff]
        %v5208 = vld [vmem:[%s2111 + $0x62] sm:$0xff]
        %v5209 = vld [vmem:[%s2111 + $0x6a] sm:$0xff]
        %v5210 = vld [vmem:[%s2111 + $0x7a] sm:$0xff]
        %v5211 = vld [vmem:[%s2111 + $0x82] sm:$0xff]
        %v5212 = vld [vmem:[%s2111 + $0x92] sm:$0xff]
        %v5213 = vld [vmem:[%s2111 + $0x9a] sm:$0xff]
        %v5214 = vld [vmem:[%s2111 + $0xaa] sm:$0xff]
        %v5215 = vld [vmem:[%s2111 + $0xb2] sm:$0xff]
        %v5216 = vld [vmem:[%s2111 + $0xc2] sm:$0xff]
        %v5217 = vld [vmem:[%s2111 + $0xca] sm:$0xff]
        %v5218 = vld [vmem:[%s2111 + $0xda] sm:$0xff]
        %v5219 = vld [vmem:[%s2111 + $0xe2] sm:$0xff]
        %v5220 = vld [vmem:[%s2111 + $0xf2] sm:$0xff]
        %v5221 = vld [vmem:[%s2111 + $0xfa] sm:$0xff]
        %v5222 = vld [vmem:[%s2111 + $0x10a] sm:$0xff]
        %v5223 = vld [vmem:[%s2111 + $0x112] sm:$0xff]
        %v5224 = vld [vmem:[%s2111 + $0x122] sm:$0xff]
        %v5225 = vld [vmem:[%s2111 + $0x12a] sm:$0xff]
        %v5226 = vld [vmem:[%s2111 + $0x13a] sm:$0xff]
        %v5227 = vld [vmem:[%s2111 + $0x142] sm:$0xff]
        %v5228 = vld [vmem:[%s2111 + $0x152] sm:$0xff]
        %v5229 = vld [vmem:[%s2111 + $0x15a] sm:$0xff]
        %v5230 = vld [vmem:[%s2111 + $0x16a] sm:$0xff]
        %v5231 = vld [vmem:[%s2111 + $0x172] sm:$0xff]
        %5264 = vrot.lane.b32.xlu0 %v4976, 32
        %v5265 = vpop.permute.xlu0 %5264
        %5266 = vrot.lane.b32.xlu0 %v4977, 32
        %v5267 = vpop.permute.xlu0 %5266
        %5268 = vrot.lane.b32.xlu0 %v4978, 32
        %v5269 = vpop.permute.xlu0 %5268
        %5270 = vrot.lane.b32.xlu0 %v4979, 32
        %v5271 = vpop.permute.xlu0 %5270
        %5272 = vrot.lane.b32.xlu0 %v4980, 32
        %v5273 = vpop.permute.xlu0 %5272
        %5274 = vrot.lane.b32.xlu0 %v4981, 32
        %v5275 = vpop.permute.xlu0 %5274
        %5276 = vrot.lane.b32.xlu0 %v4982, 32
        %v5277 = vpop.permute.xlu0 %5276
        %5278 = vrot.lane.b32.xlu0 %v4983, 32
        %v5279 = vpop.permute.xlu0 %5278
        %5280 = vrot.lane.b32.xlu0 %v4984, 32
        %v5281 = vpop.permute.xlu0 %5280
        %5282 = vrot.lane.b32.xlu0 %v4985, 32
        %v5283 = vpop.permute.xlu0 %5282
        %5284 = vrot.lane.b32.xlu0 %v4986, 32
        %v5285 = vpop.permute.xlu0 %5284
        %5286 = vrot.lane.b32.xlu0 %v4987, 32
        %v5287 = vpop.permute.xlu0 %5286
        %5288 = vrot.lane.b32.xlu0 %v4988, 32
        %v5289 = vpop.permute.xlu0 %5288
        %5290 = vrot.lane.b32.xlu0 %v4989, 32
        %v5291 = vpop.permute.xlu0 %5290
        %5292 = vrot.lane.b32.xlu0 %v4990, 32
        %v5293 = vpop.permute.xlu0 %5292
        %5294 = vrot.lane.b32.xlu0 %v4991, 32
        %v5295 = vpop.permute.xlu0 %5294
        %5296 = vrot.lane.b32.xlu0 %v4992, 32
        %v5297 = vpop.permute.xlu0 %5296
        %5298 = vrot.lane.b32.xlu0 %v4993, 32
        %v5299 = vpop.permute.xlu0 %5298
        %5300 = vrot.lane.b32.xlu0 %v4994, 32
        %v5301 = vpop.permute.xlu0 %5300
        %5302 = vrot.lane.b32.xlu0 %v4995, 32
        %v5303 = vpop.permute.xlu0 %5302
        %5304 = vrot.lane.b32.xlu0 %v4996, 32
        %v5305 = vpop.permute.xlu0 %5304
        %5306 = vrot.lane.b32.xlu0 %v4997, 32
        %v5307 = vpop.permute.xlu0 %5306
        %5308 = vrot.lane.b32.xlu0 %v4998, 32
        %v5309 = vpop.permute.xlu0 %5308
        %5310 = vrot.lane.b32.xlu0 %v4999, 32
        %v5311 = vpop.permute.xlu0 %5310
        %5312 = vrot.lane.b32.xlu0 %v5000, 32
        %v5313 = vpop.permute.xlu0 %5312
        %5314 = vrot.lane.b32.xlu0 %v5001, 32
        %v5315 = vpop.permute.xlu0 %5314
        %5316 = vrot.lane.b32.xlu0 %v5002, 32
        %v5317 = vpop.permute.xlu0 %5316
        %5318 = vrot.lane.b32.xlu0 %v5003, 32
        %v5319 = vpop.permute.xlu0 %5318
        %5320 = vrot.lane.b32.xlu0 %v5004, 32
        %v5321 = vpop.permute.xlu0 %5320
        %5322 = vrot.lane.b32.xlu0 %v5005, 32
        %v5323 = vpop.permute.xlu0 %5322
        %5324 = vrot.lane.b32.xlu0 %v5006, 32
        %v5325 = vpop.permute.xlu0 %5324
        %5326 = vrot.lane.b32.xlu0 %v5007, 32
        %v5327 = vpop.permute.xlu0 %5326
        %5392 = vrot.lane.b32.xlu0 %v5008, 64
        %v5393 = vpop.permute.xlu0 %5392
        %5394 = vrot.lane.b32.xlu0 %v5009, 64
        %v5395 = vpop.permute.xlu0 %5394
        %5396 = vrot.lane.b32.xlu0 %v5010, 64
        %v5397 = vpop.permute.xlu0 %5396
        %5398 = vrot.lane.b32.xlu0 %v5011, 64
        %v5399 = vpop.permute.xlu0 %5398
        %5400 = vrot.lane.b32.xlu0 %v5012, 64
        %v5401 = vpop.permute.xlu0 %5400
        %5402 = vrot.lane.b32.xlu0 %v5013, 64
        %v5403 = vpop.permute.xlu0 %5402
        %5404 = vrot.lane.b32.xlu0 %v5014, 64
        %v5405 = vpop.permute.xlu0 %5404
        %5406 = vrot.lane.b32.xlu0 %v5015, 64
        %v5407 = vpop.permute.xlu0 %5406
        %5408 = vrot.lane.b32.xlu0 %v5016, 64
        %v5409 = vpop.permute.xlu0 %5408
        %5410 = vrot.lane.b32.xlu0 %v5017, 64
        %v5411 = vpop.permute.xlu0 %5410
        %5412 = vrot.lane.b32.xlu0 %v5018, 64
        %v5413 = vpop.permute.xlu0 %5412
        %5414 = vrot.lane.b32.xlu0 %v5019, 64
        %v5415 = vpop.permute.xlu0 %5414
        %5416 = vrot.lane.b32.xlu0 %v5020, 64
        %v5417 = vpop.permute.xlu0 %5416
        %5418 = vrot.lane.b32.xlu0 %v5021, 64
        %v5419 = vpop.permute.xlu0 %5418
        %5420 = vrot.lane.b32.xlu0 %v5022, 64
        %v5421 = vpop.permute.xlu0 %5420
        %5422 = vrot.lane.b32.xlu0 %v5023, 64
        %v5423 = vpop.permute.xlu0 %5422
        %5424 = vrot.lane.b32.xlu0 %v5024, 64
        %v5425 = vpop.permute.xlu0 %5424
        %5426 = vrot.lane.b32.xlu0 %v5025, 64
        %v5427 = vpop.permute.xlu0 %5426
        %5428 = vrot.lane.b32.xlu0 %v5026, 64
        %v5429 = vpop.permute.xlu0 %5428
        %5430 = vrot.lane.b32.xlu0 %v5027, 64
        %v5431 = vpop.permute.xlu0 %5430
        %5432 = vrot.lane.b32.xlu0 %v5028, 64
        %v5433 = vpop.permute.xlu0 %5432
        %5434 = vrot.lane.b32.xlu0 %v5029, 64
        %v5435 = vpop.permute.xlu0 %5434
        %5436 = vrot.lane.b32.xlu0 %v5030, 64
        %v5437 = vpop.permute.xlu0 %5436
        %5438 = vrot.lane.b32.xlu0 %v5031, 64
        %v5439 = vpop.permute.xlu0 %5438
        %5440 = vrot.lane.b32.xlu0 %v5032, 64
        %v5441 = vpop.permute.xlu0 %5440
        %5442 = vrot.lane.b32.xlu0 %v5033, 64
        %v5443 = vpop.permute.xlu0 %5442
        %5444 = vrot.lane.b32.xlu0 %v5034, 64
        %v5445 = vpop.permute.xlu0 %5444
        %5446 = vrot.lane.b32.xlu0 %v5035, 64
        %v5447 = vpop.permute.xlu0 %5446
        %5448 = vrot.lane.b32.xlu0 %v5036, 64
        %v5449 = vpop.permute.xlu0 %5448
        %5450 = vrot.lane.b32.xlu0 %v5037, 64
        %v5451 = vpop.permute.xlu0 %5450
        %5452 = vrot.lane.b32.xlu0 %v5038, 64
        %v5453 = vpop.permute.xlu0 %5452
        %5454 = vrot.lane.b32.xlu0 %v5039, 64
        %v5455 = vpop.permute.xlu0 %5454
        %5520 = vrot.lane.b32.xlu0 %v5040, 96
        %v5521 = vpop.permute.xlu0 %5520
        %5522 = vrot.lane.b32.xlu0 %v5041, 96
        %v5523 = vpop.permute.xlu0 %5522
        %5524 = vrot.lane.b32.xlu0 %v5042, 96
        %v5525 = vpop.permute.xlu0 %5524
        %5526 = vrot.lane.b32.xlu0 %v5043, 96
        %v5527 = vpop.permute.xlu0 %5526
        %5528 = vrot.lane.b32.xlu0 %v5044, 96
        %v5529 = vpop.permute.xlu0 %5528
        %5530 = vrot.lane.b32.xlu0 %v5045, 96
        %v5531 = vpop.permute.xlu0 %5530
        %5532 = vrot.lane.b32.xlu0 %v5046, 96
        %v5533 = vpop.permute.xlu0 %5532
        %5534 = vrot.lane.b32.xlu0 %v5047, 96
        %v5535 = vpop.permute.xlu0 %5534
        %5536 = vrot.lane.b32.xlu0 %v5048, 96
        %v5537 = vpop.permute.xlu0 %5536
        %5538 = vrot.lane.b32.xlu0 %v5049, 96
        %v5539 = vpop.permute.xlu0 %5538
        %5540 = vrot.lane.b32.xlu0 %v5050, 96
        %v5541 = vpop.permute.xlu0 %5540
        %5542 = vrot.lane.b32.xlu0 %v5051, 96
        %v5543 = vpop.permute.xlu0 %5542
        %5544 = vrot.lane.b32.xlu0 %v5052, 96
        %v5545 = vpop.permute.xlu0 %5544
        %5546 = vrot.lane.b32.xlu0 %v5053, 96
        %v5547 = vpop.permute.xlu0 %5546
        %5548 = vrot.lane.b32.xlu0 %v5054, 96
        %v5549 = vpop.permute.xlu0 %5548
        %5550 = vrot.lane.b32.xlu0 %v5055, 96
        %v5551 = vpop.permute.xlu0 %5550
        %5552 = vrot.lane.b32.xlu0 %v5056, 96
        %v5553 = vpop.permute.xlu0 %5552
        %5554 = vrot.lane.b32.xlu0 %v5057, 96
        %v5555 = vpop.permute.xlu0 %5554
        %5556 = vrot.lane.b32.xlu0 %v5058, 96
        %v5557 = vpop.permute.xlu0 %5556
        %5558 = vrot.lane.b32.xlu0 %v5059, 96
        %v5559 = vpop.permute.xlu0 %5558
        %5560 = vrot.lane.b32.xlu0 %v5060, 96
        %v5561 = vpop.permute.xlu0 %5560
        %5562 = vrot.lane.b32.xlu0 %v5061, 96
        %v5563 = vpop.permute.xlu0 %5562
        %5564 = vrot.lane.b32.xlu0 %v5062, 96
        %v5565 = vpop.permute.xlu0 %5564
        %5566 = vrot.lane.b32.xlu0 %v5063, 96
        %v5567 = vpop.permute.xlu0 %5566
        %5568 = vrot.lane.b32.xlu0 %v5064, 96
        %v5569 = vpop.permute.xlu0 %5568
        %5570 = vrot.lane.b32.xlu0 %v5065, 96
        %v5571 = vpop.permute.xlu0 %5570
        %5572 = vrot.lane.b32.xlu0 %v5066, 96
        %v5573 = vpop.permute.xlu0 %5572
        %5574 = vrot.lane.b32.xlu0 %v5067, 96
        %v5575 = vpop.permute.xlu0 %5574
        %5576 = vrot.lane.b32.xlu0 %v5068, 96
        %v5577 = vpop.permute.xlu0 %5576
        %5578 = vrot.lane.b32.xlu0 %v5069, 96
        %v5579 = vpop.permute.xlu0 %5578
        %5580 = vrot.lane.b32.xlu0 %v5070, 96
        %v5581 = vpop.permute.xlu0 %5580
        %5582 = vrot.lane.b32.xlu0 %v5071, 96
        %v5583 = vpop.permute.xlu0 %5582
        %5648 = vrot.lane.b32.xlu0 %v5104, 32
        %v5649 = vpop.permute.xlu0 %5648
        %5650 = vrot.lane.b32.xlu0 %v5105, 32
        %v5651 = vpop.permute.xlu0 %5650
        %5652 = vrot.lane.b32.xlu0 %v5106, 32
        %v5653 = vpop.permute.xlu0 %5652
        %5654 = vrot.lane.b32.xlu0 %v5107, 32
        %v5655 = vpop.permute.xlu0 %5654
        %5656 = vrot.lane.b32.xlu0 %v5108, 32
        %v5657 = vpop.permute.xlu0 %5656
        %5658 = vrot.lane.b32.xlu0 %v5109, 32
        %v5659 = vpop.permute.xlu0 %5658
        %5660 = vrot.lane.b32.xlu0 %v5110, 32
        %v5661 = vpop.permute.xlu0 %5660
        %5662 = vrot.lane.b32.xlu0 %v5111, 32
        %v5663 = vpop.permute.xlu0 %5662
        %5664 = vrot.lane.b32.xlu0 %v5112, 32
        %v5665 = vpop.permute.xlu0 %5664
        %5666 = vrot.lane.b32.xlu0 %v5113, 32
        %v5667 = vpop.permute.xlu0 %5666
        %5668 = vrot.lane.b32.xlu0 %v5114, 32
        %v5669 = vpop.permute.xlu0 %5668
        %5670 = vrot.lane.b32.xlu0 %v5115, 32
        %v5671 = vpop.permute.xlu0 %5670
        %5672 = vrot.lane.b32.xlu0 %v5116, 32
        %v5673 = vpop.permute.xlu0 %5672
        %5674 = vrot.lane.b32.xlu0 %v5117, 32
        %v5675 = vpop.permute.xlu0 %5674
        %5676 = vrot.lane.b32.xlu0 %v5118, 32
        %v5677 = vpop.permute.xlu0 %5676
        %5678 = vrot.lane.b32.xlu0 %v5119, 32
        %v5679 = vpop.permute.xlu0 %5678
        %5680 = vrot.lane.b32.xlu0 %v5120, 32
        %v5681 = vpop.permute.xlu0 %5680
        %5682 = vrot.lane.b32.xlu0 %v5121, 32
        %v5683 = vpop.permute.xlu0 %5682
        %5684 = vrot.lane.b32.xlu0 %v5122, 32
        %v5685 = vpop.permute.xlu0 %5684
        %5686 = vrot.lane.b32.xlu0 %v5123, 32
        %v5687 = vpop.permute.xlu0 %5686
        %5688 = vrot.lane.b32.xlu0 %v5124, 32
        %v5689 = vpop.permute.xlu0 %5688
        %5690 = vrot.lane.b32.xlu0 %v5125, 32
        %v5691 = vpop.permute.xlu0 %5690
        %5692 = vrot.lane.b32.xlu0 %v5126, 32
        %v5693 = vpop.permute.xlu0 %5692
        %5694 = vrot.lane.b32.xlu0 %v5127, 32
        %v5695 = vpop.permute.xlu0 %5694
        %5696 = vrot.lane.b32.xlu0 %v5128, 32
        %v5697 = vpop.permute.xlu0 %5696
        %5698 = vrot.lane.b32.xlu0 %v5129, 32
        %v5699 = vpop.permute.xlu0 %5698
        %5700 = vrot.lane.b32.xlu0 %v5130, 32
        %v5701 = vpop.permute.xlu0 %5700
        %5702 = vrot.lane.b32.xlu0 %v5131, 32
        %v5703 = vpop.permute.xlu0 %5702
        %5704 = vrot.lane.b32.xlu0 %v5132, 32
        %v5705 = vpop.permute.xlu0 %5704
        %5706 = vrot.lane.b32.xlu0 %v5133, 32
        %v5707 = vpop.permute.xlu0 %5706
        %5708 = vrot.lane.b32.xlu0 %v5134, 32
        %v5709 = vpop.permute.xlu0 %5708
        %5710 = vrot.lane.b32.xlu0 %v5135, 32
        %v5711 = vpop.permute.xlu0 %5710
        %5776 = vrot.lane.b32.xlu0 %v5136, 64
        %v5777 = vpop.permute.xlu0 %5776
        %5778 = vrot.lane.b32.xlu0 %v5137, 64
        %v5779 = vpop.permute.xlu0 %5778
        %5780 = vrot.lane.b32.xlu0 %v5138, 64
        %v5781 = vpop.permute.xlu0 %5780
        %5782 = vrot.lane.b32.xlu0 %v5139, 64
        %v5783 = vpop.permute.xlu0 %5782
        %5784 = vrot.lane.b32.xlu0 %v5140, 64
        %v5785 = vpop.permute.xlu0 %5784
        %5786 = vrot.lane.b32.xlu0 %v5141, 64
        %v5787 = vpop.permute.xlu0 %5786
        %5788 = vrot.lane.b32.xlu0 %v5142, 64
        %v5789 = vpop.permute.xlu0 %5788
        %5790 = vrot.lane.b32.xlu0 %v5143, 64
        %v5791 = vpop.permute.xlu0 %5790
        %5792 = vrot.lane.b32.xlu0 %v5144, 64
        %v5793 = vpop.permute.xlu0 %5792
        %5794 = vrot.lane.b32.xlu0 %v5145, 64
        %v5795 = vpop.permute.xlu0 %5794
        %5796 = vrot.lane.b32.xlu0 %v5146, 64
        %v5797 = vpop.permute.xlu0 %5796
        %5798 = vrot.lane.b32.xlu0 %v5147, 64
        %v5799 = vpop.permute.xlu0 %5798
        %5800 = vrot.lane.b32.xlu0 %v5148, 64
        %v5801 = vpop.permute.xlu0 %5800
        %5802 = vrot.lane.b32.xlu0 %v5149, 64
        %v5803 = vpop.permute.xlu0 %5802
        %5804 = vrot.lane.b32.xlu0 %v5150, 64
        %v5805 = vpop.permute.xlu0 %5804
        %5806 = vrot.lane.b32.xlu0 %v5151, 64
        %v5807 = vpop.permute.xlu0 %5806
        %5808 = vrot.lane.b32.xlu0 %v5152, 64
        %v5809 = vpop.permute.xlu0 %5808
        %5810 = vrot.lane.b32.xlu0 %v5153, 64
        %v5811 = vpop.permute.xlu0 %5810
        %5812 = vrot.lane.b32.xlu0 %v5154, 64
        %v5813 = vpop.permute.xlu0 %5812
        %5814 = vrot.lane.b32.xlu0 %v5155, 64
        %v5815 = vpop.permute.xlu0 %5814
        %5816 = vrot.lane.b32.xlu0 %v5156, 64
        %v5817 = vpop.permute.xlu0 %5816
        %5818 = vrot.lane.b32.xlu0 %v5157, 64
        %v5819 = vpop.permute.xlu0 %5818
        %5820 = vrot.lane.b32.xlu0 %v5158, 64
        %v5821 = vpop.permute.xlu0 %5820
        %5822 = vrot.lane.b32.xlu0 %v5159, 64
        %v5823 = vpop.permute.xlu0 %5822
        %5824 = vrot.lane.b32.xlu0 %v5160, 64
        %v5825 = vpop.permute.xlu0 %5824
        %5826 = vrot.lane.b32.xlu0 %v5161, 64
        %v5827 = vpop.permute.xlu0 %5826
        %5828 = vrot.lane.b32.xlu0 %v5162, 64
        %v5829 = vpop.permute.xlu0 %5828
        %5830 = vrot.lane.b32.xlu0 %v5163, 64
        %v5831 = vpop.permute.xlu0 %5830
        %5832 = vrot.lane.b32.xlu0 %v5164, 64
        %v5833 = vpop.permute.xlu0 %5832
        %5834 = vrot.lane.b32.xlu0 %v5165, 64
        %v5835 = vpop.permute.xlu0 %5834
        %5836 = vrot.lane.b32.xlu0 %v5166, 64
        %v5837 = vpop.permute.xlu0 %5836
        %5838 = vrot.lane.b32.xlu0 %v5167, 64
        %v5839 = vpop.permute.xlu0 %5838
        %5904 = vrot.lane.b32.xlu0 %v5168, 96
        %v5905 = vpop.permute.xlu0 %5904
        %5906 = vrot.lane.b32.xlu0 %v5169, 96
        %v5907 = vpop.permute.xlu0 %5906
        %5908 = vrot.lane.b32.xlu0 %v5170, 96
        %v5909 = vpop.permute.xlu0 %5908
        %5910 = vrot.lane.b32.xlu0 %v5171, 96
        %v5911 = vpop.permute.xlu0 %5910
        %5912 = vrot.lane.b32.xlu0 %v5172, 96
        %v5913 = vpop.permute.xlu0 %5912
        %5914 = vrot.lane.b32.xlu0 %v5173, 96
        %v5915 = vpop.permute.xlu0 %5914
        %5916 = vrot.lane.b32.xlu0 %v5174, 96
        %v5917 = vpop.permute.xlu0 %5916
        %5918 = vrot.lane.b32.xlu0 %v5175, 96
        %v5919 = vpop.permute.xlu0 %5918
        %5920 = vrot.lane.b32.xlu0 %v5176, 96
        %v5921 = vpop.permute.xlu0 %5920
        %5922 = vrot.lane.b32.xlu0 %v5177, 96
        %v5923 = vpop.permute.xlu0 %5922
        %5924 = vrot.lane.b32.xlu0 %v5178, 96
        %v5925 = vpop.permute.xlu0 %5924
        %5926 = vrot.lane.b32.xlu0 %v5179, 96
        %v5927 = vpop.permute.xlu0 %5926
        %5928 = vrot.lane.b32.xlu0 %v5180, 96
        %v5929 = vpop.permute.xlu0 %5928
        %5930 = vrot.lane.b32.xlu0 %v5181, 96
        %v5931 = vpop.permute.xlu0 %5930
        %5932 = vrot.lane.b32.xlu0 %v5182, 96
        %v5933 = vpop.permute.xlu0 %5932
        %5934 = vrot.lane.b32.xlu0 %v5183, 96
        %v5935 = vpop.permute.xlu0 %5934
        %5936 = vrot.lane.b32.xlu0 %v5184, 96
        %v5937 = vpop.permute.xlu0 %5936
        %5938 = vrot.lane.b32.xlu0 %v5185, 96
        %v5939 = vpop.permute.xlu0 %5938
        %5940 = vrot.lane.b32.xlu0 %v5186, 96
        %v5941 = vpop.permute.xlu0 %5940
        %5942 = vrot.lane.b32.xlu0 %v5187, 96
        %v5943 = vpop.permute.xlu0 %5942
        %5944 = vrot.lane.b32.xlu0 %v5188, 96
        %v5945 = vpop.permute.xlu0 %5944
        %5946 = vrot.lane.b32.xlu0 %v5189, 96
        %v5947 = vpop.permute.xlu0 %5946
        %5948 = vrot.lane.b32.xlu0 %v5190, 96
        %v5949 = vpop.permute.xlu0 %5948
        %5950 = vrot.lane.b32.xlu0 %v5191, 96
        %v5951 = vpop.permute.xlu0 %5950
        %5952 = vrot.lane.b32.xlu0 %v5192, 96
        %v5953 = vpop.permute.xlu0 %5952
        %5954 = vrot.lane.b32.xlu0 %v5193, 96
        %v5955 = vpop.permute.xlu0 %5954
        %5956 = vrot.lane.b32.xlu0 %v5194, 96
        %v5957 = vpop.permute.xlu0 %5956
        %5958 = vrot.lane.b32.xlu0 %v5195, 96
        %v5959 = vpop.permute.xlu0 %5958
        %5960 = vrot.lane.b32.xlu0 %v5196, 96
        %v5961 = vpop.permute.xlu0 %5960
        %5962 = vrot.lane.b32.xlu0 %v5197, 96
        %v5963 = vpop.permute.xlu0 %5962
        %5964 = vrot.lane.b32.xlu0 %v5198, 96
        %v5965 = vpop.permute.xlu0 %5964
        %5966 = vrot.lane.b32.xlu0 %v5199, 96
        %v5967 = vpop.permute.xlu0 %5966
        %v6000 = vsel %vm3629, %v4944, %v5265
        %v6001 = vsel %vm3629, %v4945, %v5267
        %v6002 = vsel %vm3629, %v4946, %v5269
        %v6003 = vsel %vm3629, %v4947, %v5271
        %v6004 = vsel %vm3629, %v4948, %v5273
        %v6005 = vsel %vm3629, %v4949, %v5275
        %v6006 = vsel %vm3629, %v4950, %v5277
        %v6007 = vsel %vm3629, %v4951, %v5279
        %v6008 = vsel %vm3629, %v4952, %v5281
        %v6009 = vsel %vm3629, %v4953, %v5283
        %v6010 = vsel %vm3629, %v4954, %v5285
        %v6011 = vsel %vm3629, %v4955, %v5287
        %v6012 = vsel %vm3629, %v4956, %v5289
        %v6013 = vsel %vm3629, %v4957, %v5291
        %v6014 = vsel %vm3629, %v4958, %v5293
        %v6015 = vsel %vm3629, %v4959, %v5295
        %v6016 = vsel %vm3629, %v4960, %v5297
        %v6017 = vsel %vm3629, %v4961, %v5299
        %v6018 = vsel %vm3629, %v4962, %v5301
        %v6019 = vsel %vm3629, %v4963, %v5303
        %v6020 = vsel %vm3629, %v4964, %v5305
        %v6021 = vsel %vm3629, %v4965, %v5307
        %v6022 = vsel %vm3629, %v4966, %v5309
        %v6023 = vsel %vm3629, %v4967, %v5311
        %v6024 = vsel %vm3629, %v4968, %v5313
        %v6025 = vsel %vm3629, %v4969, %v5315
        %v6026 = vsel %vm3629, %v4970, %v5317
        %v6027 = vsel %vm3629, %v4971, %v5319
        %v6028 = vsel %vm3629, %v4972, %v5321
        %v6029 = vsel %vm3629, %v4973, %v5323
        %v6030 = vsel %vm3629, %v4974, %v5325
        %v6031 = vsel %vm3629, %v4975, %v5327
        %v6032 = vsel %vm1568, %v6000, %v5393
        %v6033 = vsel %vm1568, %v6001, %v5395
        %v6034 = vsel %vm1568, %v6002, %v5397
        %v6035 = vsel %vm1568, %v6003, %v5399
        %v6036 = vsel %vm1568, %v6004, %v5401
        %v6037 = vsel %vm1568, %v6005, %v5403
        %v6038 = vsel %vm1568, %v6006, %v5405
        %v6039 = vsel %vm1568, %v6007, %v5407
        %v6040 = vsel %vm1568, %v6008, %v5409
        %v6041 = vsel %vm1568, %v6009, %v5411
        %v6042 = vsel %vm1568, %v6010, %v5413
        %v6043 = vsel %vm1568, %v6011, %v5415
        %v6044 = vsel %vm1568, %v6012, %v5417
        %v6045 = vsel %vm1568, %v6013, %v5419
        %v6046 = vsel %vm1568, %v6014, %v5421
        %v6047 = vsel %vm1568, %v6015, %v5423
        %v6048 = vsel %vm1568, %v6016, %v5425
        %v6049 = vsel %vm1568, %v6017, %v5427
        %v6050 = vsel %vm1568, %v6018, %v5429
        %v6051 = vsel %vm1568, %v6019, %v5431
        %v6052 = vsel %vm1568, %v6020, %v5433
        %v6053 = vsel %vm1568, %v6021, %v5435
        %v6054 = vsel %vm1568, %v6022, %v5437
        %v6055 = vsel %vm1568, %v6023, %v5439
        %v6056 = vsel %vm1568, %v6024, %v5441
        %v6057 = vsel %vm1568, %v6025, %v5443
        %v6058 = vsel %vm1568, %v6026, %v5445
        %v6059 = vsel %vm1568, %v6027, %v5447
        %v6060 = vsel %vm1568, %v6028, %v5449
        %v6061 = vsel %vm1568, %v6029, %v5451
        %v6062 = vsel %vm1568, %v6030, %v5453
        %v6063 = vsel %vm1568, %v6031, %v5455
        %v6064 = vsel %vm3918, %v6032, %v5521
        %v6065 = vsel %vm3918, %v6033, %v5523
        %v6066 = vsel %vm3918, %v6034, %v5525
        %v6067 = vsel %vm3918, %v6035, %v5527
        %v6068 = vsel %vm3918, %v6036, %v5529
        %v6069 = vsel %vm3918, %v6037, %v5531
        %v6070 = vsel %vm3918, %v6038, %v5533
        %v6071 = vsel %vm3918, %v6039, %v5535
        %v6072 = vsel %vm3918, %v6040, %v5537
        %v6073 = vsel %vm3918, %v6041, %v5539
        %v6074 = vsel %vm3918, %v6042, %v5541
        %v6075 = vsel %vm3918, %v6043, %v5543
        %v6076 = vsel %vm3918, %v6044, %v5545
        %v6077 = vsel %vm3918, %v6045, %v5547
        %v6078 = vsel %vm3918, %v6046, %v5549
        %v6079 = vsel %vm3918, %v6047, %v5551
        %v6080 = vsel %vm3918, %v6048, %v5553
        %v6081 = vsel %vm3918, %v6049, %v5555
        %v6082 = vsel %vm3918, %v6050, %v5557
        %v6083 = vsel %vm3918, %v6051, %v5559
        %v6084 = vsel %vm3918, %v6052, %v5561
        %v6085 = vsel %vm3918, %v6053, %v5563
        %v6086 = vsel %vm3918, %v6054, %v5565
        %v6087 = vsel %vm3918, %v6055, %v5567
        %v6088 = vsel %vm3918, %v6056, %v5569
        %v6089 = vsel %vm3918, %v6057, %v5571
        %v6090 = vsel %vm3918, %v6058, %v5573
        %v6091 = vsel %vm3918, %v6059, %v5575
        %v6092 = vsel %vm3918, %v6060, %v5577
        %v6093 = vsel %vm3918, %v6061, %v5579
        %v6094 = vsel %vm3918, %v6062, %v5581
        %v6095 = vsel %vm3918, %v6063, %v5583
        %v6096 = vsel %vm3629, %v5072, %v5649
        %v6097 = vsel %vm3629, %v5073, %v5651
        %v6098 = vsel %vm3629, %v5074, %v5653
        %v6099 = vsel %vm3629, %v5075, %v5655
        %v6100 = vsel %vm3629, %v5076, %v5657
        %v6101 = vsel %vm3629, %v5077, %v5659
        %v6102 = vsel %vm3629, %v5078, %v5661
        %v6103 = vsel %vm3629, %v5079, %v5663
        %v6104 = vsel %vm3629, %v5080, %v5665
        %v6105 = vsel %vm3629, %v5081, %v5667
        %v6106 = vsel %vm3629, %v5082, %v5669
        %v6107 = vsel %vm3629, %v5083, %v5671
        %v6108 = vsel %vm3629, %v5084, %v5673
        %v6109 = vsel %vm3629, %v5085, %v5675
        %v6110 = vsel %vm3629, %v5086, %v5677
        %v6111 = vsel %vm3629, %v5087, %v5679
        %v6112 = vsel %vm3629, %v5088, %v5681
        %v6113 = vsel %vm3629, %v5089, %v5683
        %v6114 = vsel %vm3629, %v5090, %v5685
        %v6115 = vsel %vm3629, %v5091, %v5687
        %v6116 = vsel %vm3629, %v5092, %v5689
        %v6117 = vsel %vm3629, %v5093, %v5691
        %v6118 = vsel %vm3629, %v5094, %v5693
        %v6119 = vsel %vm3629, %v5095, %v5695
        %v6120 = vsel %vm3629, %v5096, %v5697
        %v6121 = vsel %vm3629, %v5097, %v5699
        %v6122 = vsel %vm3629, %v5098, %v5701
        %v6123 = vsel %vm3629, %v5099, %v5703
        %v6124 = vsel %vm3629, %v5100, %v5705
        %v6125 = vsel %vm3629, %v5101, %v5707
        %v6126 = vsel %vm3629, %v5102, %v5709
        %v6127 = vsel %vm3629, %v5103, %v5711
        %v6128 = vsel %vm1568, %v6096, %v5777
        %v6129 = vsel %vm1568, %v6097, %v5779
        %v6130 = vsel %vm1568, %v6098, %v5781
        %v6131 = vsel %vm1568, %v6099, %v5783
        %v6132 = vsel %vm1568, %v6100, %v5785
        %v6133 = vsel %vm1568, %v6101, %v5787
        %v6134 = vsel %vm1568, %v6102, %v5789
        %v6135 = vsel %vm1568, %v6103, %v5791
        %v6136 = vsel %vm1568, %v6104, %v5793
        %v6137 = vsel %vm1568, %v6105, %v5795
        %v6138 = vsel %vm1568, %v6106, %v5797
        %v6139 = vsel %vm1568, %v6107, %v5799
        %v6140 = vsel %vm1568, %v6108, %v5801
        %v6141 = vsel %vm1568, %v6109, %v5803
        %v6142 = vsel %vm1568, %v6110, %v5805
        %v6143 = vsel %vm1568, %v6111, %v5807
        %v6144 = vsel %vm1568, %v6112, %v5809
        %v6145 = vsel %vm1568, %v6113, %v5811
        %v6146 = vsel %vm1568, %v6114, %v5813
        %v6147 = vsel %vm1568, %v6115, %v5815
        %v6148 = vsel %vm1568, %v6116, %v5817
        %v6149 = vsel %vm1568, %v6117, %v5819
        %v6150 = vsel %vm1568, %v6118, %v5821
        %v6151 = vsel %vm1568, %v6119, %v5823
        %v6152 = vsel %vm1568, %v6120, %v5825
        %v6153 = vsel %vm1568, %v6121, %v5827
        %v6154 = vsel %vm1568, %v6122, %v5829
        %v6155 = vsel %vm1568, %v6123, %v5831
        %v6156 = vsel %vm1568, %v6124, %v5833
        %v6157 = vsel %vm1568, %v6125, %v5835
        %v6158 = vsel %vm1568, %v6126, %v5837
        %v6159 = vsel %vm1568, %v6127, %v5839
        %v6160 = vsel %vm3918, %v6128, %v5905
        %v6161 = vsel %vm3918, %v6129, %v5907
        %v6162 = vsel %vm3918, %v6130, %v5909
        %v6163 = vsel %vm3918, %v6131, %v5911
        %v6164 = vsel %vm3918, %v6132, %v5913
        %v6165 = vsel %vm3918, %v6133, %v5915
        %v6166 = vsel %vm3918, %v6134, %v5917
        %v6167 = vsel %vm3918, %v6135, %v5919
        %v6168 = vsel %vm3918, %v6136, %v5921
        %v6169 = vsel %vm3918, %v6137, %v5923
        %v6170 = vsel %vm3918, %v6138, %v5925
        %v6171 = vsel %vm3918, %v6139, %v5927
        %v6172 = vsel %vm3918, %v6140, %v5929
        %v6173 = vsel %vm3918, %v6141, %v5931
        %v6174 = vsel %vm3918, %v6142, %v5933
        %v6175 = vsel %vm3918, %v6143, %v5935
        %v6176 = vsel %vm3918, %v6144, %v5937
        %v6177 = vsel %vm3918, %v6145, %v5939
        %v6178 = vsel %vm3918, %v6146, %v5941
        %v6179 = vsel %vm3918, %v6147, %v5943
        %v6180 = vsel %vm3918, %v6148, %v5945
        %v6181 = vsel %vm3918, %v6149, %v5947
        %v6182 = vsel %vm3918, %v6150, %v5949
        %v6183 = vsel %vm3918, %v6151, %v5951
        %v6184 = vsel %vm3918, %v6152, %v5953
        %v6185 = vsel %vm3918, %v6153, %v5955
        %v6186 = vsel %vm3918, %v6154, %v5957
        %v6187 = vsel %vm3918, %v6155, %v5959
        %v6188 = vsel %vm3918, %v6156, %v5961
        %v6189 = vsel %vm3918, %v6157, %v5963
        %v6190 = vsel %vm3918, %v6158, %v5965
        %v6191 = vsel %vm3918, %v6159, %v5967
        %v6192 = vld [vmem:[#allocation38] sm:$0xff]
        %v6193 = vld [vmem:[#allocation38 + $0x8] sm:$0xff]
        %v6194 = vld [vmem:[#allocation38 + $0x10] sm:$0xff]
        %v6195 = vld [vmem:[#allocation38 + $0x18] sm:$0xff]
        %v6196 = vld [vmem:[#allocation38 + $0x20] sm:$0xff]
        %v6197 = vld [vmem:[#allocation38 + $0x28] sm:$0xff]
        %v6198 = vld [vmem:[#allocation38 + $0x30] sm:$0xff]
        %v6199 = vld [vmem:[#allocation38 + $0x38] sm:$0xff]
        %v6200 = vld [vmem:[#allocation38 + $0x40] sm:$0xff]
        %v6201 = vld [vmem:[#allocation38 + $0x48] sm:$0xff]
        %v6202 = vld [vmem:[#allocation38 + $0x50] sm:$0xff]
        %v6203 = vld [vmem:[#allocation38 + $0x58] sm:$0xff]
        %v6204 = vld [vmem:[#allocation38 + $0x60] sm:$0xff]
        %v6205 = vld [vmem:[#allocation38 + $0x68] sm:$0xff]
        %v6206 = vld [vmem:[#allocation38 + $0x70] sm:$0xff]
        %v6207 = vld [vmem:[#allocation38 + $0x78] sm:$0xff]
        %v6208 = vld [vmem:[#allocation38 + $0x80] sm:$0xff]
        %v6209 = vld [vmem:[#allocation38 + $0x88] sm:$0xff]
        %v6210 = vld [vmem:[#allocation38 + $0x90] sm:$0xff]
        %v6211 = vld [vmem:[#allocation38 + $0x98] sm:$0xff]
        %v6212 = vld [vmem:[#allocation38 + $0xa0] sm:$0xff]
        %v6213 = vld [vmem:[#allocation38 + $0xa8] sm:$0xff]
        %v6214 = vld [vmem:[#allocation38 + $0xb0] sm:$0xff]
        %v6215 = vld [vmem:[#allocation38 + $0xb8] sm:$0xff]
        %v6216 = vld [vmem:[#allocation38 + $0xc0] sm:$0xff]
        %v6217 = vld [vmem:[#allocation38 + $0xc8] sm:$0xff]
        %v6218 = vld [vmem:[#allocation38 + $0xd0] sm:$0xff]
        %v6219 = vld [vmem:[#allocation38 + $0xd8] sm:$0xff]
        %v6220 = vld [vmem:[#allocation38 + $0xe0] sm:$0xff]
        %v6221 = vld [vmem:[#allocation38 + $0xe8] sm:$0xff]
        %v6222 = vld [vmem:[#allocation38 + $0xf0] sm:$0xff]
        %v6223 = vld [vmem:[#allocation38 + $0xf8] sm:$0xff]
        %v6224 = vld [vmem:[#allocation38 + $0x100] sm:$0xff]
        %v6225 = vld [vmem:[#allocation38 + $0x108] sm:$0xff]
        %v6226 = vld [vmem:[#allocation38 + $0x110] sm:$0xff]
        %v6227 = vld [vmem:[#allocation38 + $0x118] sm:$0xff]
        %v6228 = vpack.c.bf16 %v6065, %v6064
        %v6229 = vpack.c.bf16 %v6161, %v6160
        %v6230 = vpack.c.bf16 %v5201, %v5200
        %v6231 = vpack.c.bf16 %v6067, %v6066
        %v6232 = vpack.c.bf16 %v6163, %v6162
        %v6233 = vpack.c.bf16 %v5203, %v5202
        %v6234 = vpack.c.bf16 %v6069, %v6068
        %v6235 = vpack.c.bf16 %v6165, %v6164
        %v6236 = vpack.c.bf16 %v5205, %v5204
        %v6237 = vpack.c.bf16 %v6071, %v6070
        %v6238 = vpack.c.bf16 %v6167, %v6166
        %v6239 = vpack.c.bf16 %v5207, %v5206
        %v6240 = vpack.c.bf16 %v6073, %v6072
        %v6241 = vpack.c.bf16 %v6169, %v6168
        %v6242 = vpack.c.bf16 %v5209, %v5208
        %v6243 = vpack.c.bf16 %v6075, %v6074
        %v6244 = vpack.c.bf16 %v6171, %v6170
        %v6245 = vpack.c.bf16 %v5211, %v5210
        %v6246 = vpack.c.bf16 %v6077, %v6076
        %v6247 = vpack.c.bf16 %v6173, %v6172
        %v6248 = vpack.c.bf16 %v5213, %v5212
        %v6249 = vpack.c.bf16 %v6079, %v6078
        %v6250 = vpack.c.bf16 %v6175, %v6174
        %v6251 = vpack.c.bf16 %v5215, %v5214
        %v6252 = vpack.c.bf16 %v6081, %v6080
        %v6253 = vpack.c.bf16 %v6177, %v6176
        %v6254 = vpack.c.bf16 %v5217, %v5216
        %v6255 = vpack.c.bf16 %v6083, %v6082
        %v6256 = vpack.c.bf16 %v6179, %v6178
        %v6257 = vpack.c.bf16 %v5219, %v5218
        %v6258 = vpack.c.bf16 %v6085, %v6084
        %v6259 = vpack.c.bf16 %v6181, %v6180
        %v6260 = vpack.c.bf16 %v5221, %v5220
        %v6261 = vpack.c.bf16 %v6087, %v6086
        %v6262 = vpack.c.bf16 %v6183, %v6182
        %v6263 = vpack.c.bf16 %v5223, %v5222
        %v6264 = vpack.c.bf16 %v6089, %v6088
        %v6265 = vpack.c.bf16 %v6185, %v6184
        %v6266 = vpack.c.bf16 %v5225, %v5224
        %v6267 = vpack.c.bf16 %v6091, %v6090
        %v6268 = vpack.c.bf16 %v6187, %v6186
        %v6269 = vpack.c.bf16 %v5227, %v5226
        %v6270 = vpack.c.bf16 %v6093, %v6092
        %v6271 = vpack.c.bf16 %v6189, %v6188
        %v6272 = vpack.c.bf16 %v5229, %v5228
        %v6273 = vpack.c.bf16 %v6095, %v6094
        %v6274 = vpack.c.bf16 %v6191, %v6190
        %v6275 = vpack.c.bf16 %v5231, %v5230
        %v6276 = vpack.c.bf16 %v6193, %v6192
        %v6277 = vpack.c.bf16 %v6195, %v6194
        %v6278 = vpack.c.bf16 %v6197, %v6196
        %v6279 = vpack.c.bf16 %v6199, %v6198
        %v6280 = vpack.c.bf16 %v6201, %v6200
        %v6281 = vpack.c.bf16 %v6203, %v6202
        %v6282 = vpack.c.bf16 %v6205, %v6204
        %v6283 = vpack.c.bf16 %v6207, %v6206
        %v6284 = vpack.c.bf16 %v6209, %v6208
        %v6285 = vpack.c.bf16 %v6211, %v6210
        %v6286 = vpack.c.bf16 %v6213, %v6212
        %v6287 = vpack.c.bf16 %v6215, %v6214
        %v6288 = vpack.c.bf16 %v6217, %v6216
        %v6289 = vpack.c.bf16 %v6219, %v6218
        %v6290 = vpack.c.bf16 %v6221, %v6220
        %v6291 = vpack.c.bf16 %v6223, %v6222
        %v6292 = vpack.c.bf16 %v6225, %v6224
        %v6293 = vpack.c.bf16 %v6227, %v6226
        %v6295 = vsel %vm3629, %v6230, 0
        %v6298 = vsel %vm3629, %v6233, 0
        %v6301 = vsel %vm3629, %v6236, 0
        %v6304 = vsel %vm3629, %v6239, 0
        %v6307 = vsel %vm3629, %v6242, 0
        %v6310 = vsel %vm3629, %v6245, 0
        %v6313 = vsel %vm3629, %v6248, 0
        %v6316 = vsel %vm3629, %v6251, 0
        %v6319 = vsel %vm3629, %v6254, 0
        %v6322 = vsel %vm3629, %v6257, 0
        %v6325 = vsel %vm3629, %v6260, 0
        %v6328 = vsel %vm3629, %v6263, 0
        %v6331 = vsel %vm3629, %v6266, 0
        %v6334 = vsel %vm3629, %v6269, 0
        %v6337 = vsel %vm3629, %v6272, 0
        %v6340 = vsel %vm3629, %v6275, 0
        %6342 = vmatprep.subr.bf16.mxu0 0
        %6343 = vmatpush1.bf16.msra.mxu0 %v6283
        %6344 = vmatprep.subr.bf16.mxu0 0
        %6345 = vmatpush1.bf16.msra.mxu0 %v6282
        %6346 = vmatprep.subr.bf16.mxu0 0
        %6347 = vmatpush1.bf16.msra.mxu0 %v6281
        %6348 = vmatprep.subr.bf16.mxu0 0
        %6349 = vmatpush1.bf16.msra.mxu0 %v6280
        %6350 = vmatprep.subr.bf16.mxu0 0
        %6351 = vmatpush1.bf16.msra.mxu0 %v6279
        %6352 = vmatprep.subr.bf16.mxu0 0
        %6353 = vmatpush1.bf16.msra.mxu0 %v6278
        %6354 = vmatprep.subr.bf16.mxu0 0
        %6355 = vmatpush1.bf16.msra.mxu0 %v6277
        %6356 = vmatprep.subr.bf16.mxu0 0
        %6357 = vmatpush1.bf16.msra.mxu0 %v6276
        %6358 = vmatprep.subr.bf16.mxu0 0
        %6359 = vmatpush2.bf16.msra.mxu0 %v6291
        %6360 = vmatprep.subr.bf16.mxu0 0
        %6361 = vmatpush2.bf16.msra.mxu0 %v6290
        %6362 = vmatprep.subr.bf16.mxu0 0
        %6363 = vmatpush2.bf16.msra.mxu0 %v6289
        %6364 = vmatprep.subr.bf16.mxu0 0
        %6365 = vmatpush2.bf16.msra.mxu0 %v6288
        %6366 = vmatprep.subr.bf16.mxu0 0
        %6367 = vmatpush2.bf16.msra.mxu0 %v6287
        %6368 = vmatprep.subr.bf16.mxu0 0
        %6369 = vmatpush2.bf16.msra.mxu0 %v6286
        %6370 = vmatprep.subr.bf16.mxu0 0
        %6371 = vmatpush2.bf16.msra.mxu0 %v6285
        %6372 = vmatprep.subr.bf16.mxu0 0
        %6373 = vmatpush2.bf16.msra.mxu0 %v6284
        %6374 = vmatprep.mubr.bf16.mxu0 %v6229
        %6375 = vmatmul.mubr.bf16.gmra.mxu0 %v6228
        %v6376 = vpop.f32.mrf.mxu0
        %v6377 = vadd.f32 0.0, %v6376
        %v6378 = vpop.f32.mrf.mxu0
        %v6379 = vpop.f32.mrf.mxu0
        %v6380 = vadd.f32 0.0, %v6379
        %v6381 = vpop.f32.mrf.mxu0
        %6382 = vmatprep.mubr.bf16.mxu0 %v6232
        %6383 = vmatmul.mubr.bf16.gmra.mxu0 %v6231
        %v6384 = vpop.f32.mrf.mxu0
        %v6385 = vadd.f32 0.0, %v6384
        %v6386 = vpop.f32.mrf.mxu0
        %v6387 = vpop.f32.mrf.mxu0
        %v6388 = vadd.f32 0.0, %v6387
        %v6389 = vpop.f32.mrf.mxu0
        %6390 = vmatprep.mubr.bf16.mxu0 %v6235
        %6391 = vmatmul.mubr.bf16.gmra.mxu0 %v6234
        %v6392 = vpop.f32.mrf.mxu0
        %v6393 = vadd.f32 0.0, %v6392
        %v6394 = vpop.f32.mrf.mxu0
        %v6395 = vpop.f32.mrf.mxu0
        %v6396 = vadd.f32 0.0, %v6395
        %v6397 = vpop.f32.mrf.mxu0
        %6398 = vmatprep.mubr.bf16.mxu0 %v6238
        %6399 = vmatmul.mubr.bf16.gmra.mxu0 %v6237
        %v6400 = vpop.f32.mrf.mxu0
        %v6401 = vadd.f32 0.0, %v6400
        %v6402 = vpop.f32.mrf.mxu0
        %v6403 = vpop.f32.mrf.mxu0
        %v6404 = vadd.f32 0.0, %v6403
        %v6405 = vpop.f32.mrf.mxu0
        %6406 = vmatprep.mubr.bf16.mxu0 %v6241
        %6407 = vmatmul.mubr.bf16.gmra.mxu0 %v6240
        %v6408 = vpop.f32.mrf.mxu0
        %v6409 = vadd.f32 0.0, %v6408
        %v6410 = vpop.f32.mrf.mxu0
        %v6411 = vpop.f32.mrf.mxu0
        %v6412 = vadd.f32 0.0, %v6411
        %v6413 = vpop.f32.mrf.mxu0
        %6414 = vmatprep.mubr.bf16.mxu0 %v6244
        %6415 = vmatmul.mubr.bf16.gmra.mxu0 %v6243
        %v6416 = vpop.f32.mrf.mxu0
        %v6417 = vadd.f32 0.0, %v6416
        %v6418 = vpop.f32.mrf.mxu0
        %v6419 = vpop.f32.mrf.mxu0
        %v6420 = vadd.f32 0.0, %v6419
        %v6421 = vpop.f32.mrf.mxu0
        %6422 = vmatprep.mubr.bf16.mxu0 %v6247
        %6423 = vmatmul.mubr.bf16.gmra.mxu0 %v6246
        %v6424 = vpop.f32.mrf.mxu0
        %v6425 = vadd.f32 0.0, %v6424
        %v6426 = vpop.f32.mrf.mxu0
        %v6427 = vpop.f32.mrf.mxu0
        %v6428 = vadd.f32 0.0, %v6427
        %v6429 = vpop.f32.mrf.mxu0
        %6430 = vmatprep.mubr.bf16.mxu0 %v6250
        %6431 = vmatmul.mubr.bf16.gmra.mxu0 %v6249
        %v6432 = vpop.f32.mrf.mxu0
        %v6433 = vadd.f32 0.0, %v6432
        %v6434 = vpop.f32.mrf.mxu0
        %v6435 = vpop.f32.mrf.mxu0
        %v6436 = vadd.f32 0.0, %v6435
        %v6437 = vpop.f32.mrf.mxu0
        %6438 = vmatprep.mubr.bf16.mxu0 %v6253
        %6439 = vmatmul.mubr.bf16.gmra.mxu0 %v6252
        %v6440 = vpop.f32.mrf.mxu0
        %v6441 = vadd.f32 0.0, %v6440
        %v6442 = vpop.f32.mrf.mxu0
        %v6443 = vpop.f32.mrf.mxu0
        %v6444 = vadd.f32 0.0, %v6443
        %v6445 = vpop.f32.mrf.mxu0
        %6446 = vmatprep.mubr.bf16.mxu0 %v6256
        %6447 = vmatmul.mubr.bf16.gmra.mxu0 %v6255
        %v6448 = vpop.f32.mrf.mxu0
        %v6449 = vadd.f32 0.0, %v6448
        %v6450 = vpop.f32.mrf.mxu0
        %v6451 = vpop.f32.mrf.mxu0
        %v6452 = vadd.f32 0.0, %v6451
        %v6453 = vpop.f32.mrf.mxu0
        %6454 = vmatprep.mubr.bf16.mxu0 %v6259
        %6455 = vmatmul.mubr.bf16.gmra.mxu0 %v6258
        %v6456 = vpop.f32.mrf.mxu0
        %v6457 = vadd.f32 0.0, %v6456
        %v6458 = vpop.f32.mrf.mxu0
        %v6459 = vpop.f32.mrf.mxu0
        %v6460 = vadd.f32 0.0, %v6459
        %v6461 = vpop.f32.mrf.mxu0
        %6462 = vmatprep.mubr.bf16.mxu0 %v6262
        %6463 = vmatmul.mubr.bf16.gmra.mxu0 %v6261
        %v6464 = vpop.f32.mrf.mxu0
        %v6465 = vadd.f32 0.0, %v6464
        %v6466 = vpop.f32.mrf.mxu0
        %v6467 = vpop.f32.mrf.mxu0
        %v6468 = vadd.f32 0.0, %v6467
        %v6469 = vpop.f32.mrf.mxu0
        %6470 = vmatprep.mubr.bf16.mxu0 %v6265
        %6471 = vmatmul.mubr.bf16.gmra.mxu0 %v6264
        %v6472 = vpop.f32.mrf.mxu0
        %v6473 = vadd.f32 0.0, %v6472
        %v6474 = vpop.f32.mrf.mxu0
        %v6475 = vpop.f32.mrf.mxu0
        %v6476 = vadd.f32 0.0, %v6475
        %v6477 = vpop.f32.mrf.mxu0
        %6478 = vmatprep.mubr.bf16.mxu0 %v6268
        %6479 = vmatmul.mubr.bf16.gmra.mxu0 %v6267
        %v6480 = vpop.f32.mrf.mxu0
        %v6481 = vadd.f32 0.0, %v6480
        %v6482 = vpop.f32.mrf.mxu0
        %v6483 = vpop.f32.mrf.mxu0
        %v6484 = vadd.f32 0.0, %v6483
        %v6485 = vpop.f32.mrf.mxu0
        %6486 = vmatprep.mubr.bf16.mxu0 %v6271
        %6487 = vmatmul.mubr.bf16.gmra.mxu0 %v6270
        %v6488 = vpop.f32.mrf.mxu0
        %v6489 = vadd.f32 0.0, %v6488
        %v6490 = vpop.f32.mrf.mxu0
        %v6491 = vpop.f32.mrf.mxu0
        %v6492 = vadd.f32 0.0, %v6491
        %v6493 = vpop.f32.mrf.mxu0
        %6494 = vmatprep.mubr.bf16.mxu0 %v6274
        %6495 = vmatmul.mubr.bf16.gmra.mxu0 %v6273
        %v6496 = vpop.f32.mrf.mxu0
        %v6497 = vadd.f32 0.0, %v6496
        %v6498 = vpop.f32.mrf.mxu0
        %v6499 = vpop.f32.mrf.mxu0
        %v6500 = vadd.f32 0.0, %v6499
        %v6501 = vpop.f32.mrf.mxu0
        %6502 = vdwg.mxu0
        %6503 = vmatprep.subr.bf16.mxu0 0
        %6504 = vmatpush1.bf16.msra.mxu0 0
        %6505 = vmatprep.subr.bf16.mxu0 0
        %6506 = vmatpush1.bf16.msra.mxu0 0
        %6507 = vmatprep.subr.bf16.mxu0 0
        %6508 = vmatpush1.bf16.msra.mxu0 0
        %6509 = vmatprep.subr.bf16.mxu0 0
        %6510 = vmatpush1.bf16.msra.mxu0 0
        %6511 = vmatprep.subr.bf16.mxu0 0
        %6512 = vmatpush1.bf16.msra.mxu0 0
        %6513 = vmatprep.subr.bf16.mxu0 0
        %6514 = vmatpush1.bf16.msra.mxu0 0
        %6515 = vmatprep.subr.bf16.mxu0 0
        %6516 = vmatpush1.bf16.msra.mxu0 %v6293
        %6517 = vmatprep.subr.bf16.mxu0 0
        %6518 = vmatpush1.bf16.msra.mxu0 %v6292
        %6519 = vmatprep.subr.bf16.mxu0 0
        %6520 = vmatpush2.bf16.msra.mxu0 0
        %6521 = vmatprep.subr.bf16.mxu0 0
        %6522 = vmatpush2.bf16.msra.mxu0 0
        %6523 = vmatprep.subr.bf16.mxu0 0
        %6524 = vmatpush2.bf16.msra.mxu0 0
        %6525 = vmatprep.subr.bf16.mxu0 0
        %6526 = vmatpush2.bf16.msra.mxu0 0
        %6527 = vmatprep.subr.bf16.mxu0 0
        %6528 = vmatpush2.bf16.msra.mxu0 0
        %6529 = vmatprep.subr.bf16.mxu0 0
        %6530 = vmatpush2.bf16.msra.mxu0 0
        %6531 = vmatprep.subr.bf16.mxu0 0
        %6532 = vmatpush2.bf16.msra.mxu0 0
        %6533 = vmatprep.subr.bf16.mxu0 0
        %6534 = vmatpush2.bf16.msra.mxu0 0
        %6535 = vmatprep.mubr.bf16.mxu0 0
        %6536 = vmatmul.mubr.bf16.gmra.mxu0 %v6295
        %v6537 = vpop.f32.mrf.mxu0
        %v6538 = vadd.f32 %v6377, %v6537
        %v6539 = vpop.f32.mrf.mxu0
        %v6540 = vpop.f32.mrf.mxu0
        %v6541 = vadd.f32 %v6380, %v6540
        %v6542 = vpop.f32.mrf.mxu0
        %6543 = vmatprep.mubr.bf16.mxu0 0
        %6544 = vmatmul.mubr.bf16.gmra.mxu0 %v6298
        %v6545 = vpop.f32.mrf.mxu0
        %v6546 = vadd.f32 %v6385, %v6545
        %v6547 = vpop.f32.mrf.mxu0
        %v6548 = vpop.f32.mrf.mxu0
        %v6549 = vadd.f32 %v6388, %v6548
        %v6550 = vpop.f32.mrf.mxu0
        %6551 = vmatprep.mubr.bf16.mxu0 0
        %6552 = vmatmul.mubr.bf16.gmra.mxu0 %v6301
        %v6553 = vpop.f32.mrf.mxu0
        %v6554 = vadd.f32 %v6393, %v6553
        %v6555 = vpop.f32.mrf.mxu0
        %v6556 = vpop.f32.mrf.mxu0
        %v6557 = vadd.f32 %v6396, %v6556
        %v6558 = vpop.f32.mrf.mxu0
        %6559 = vmatprep.mubr.bf16.mxu0 0
        %6560 = vmatmul.mubr.bf16.gmra.mxu0 %v6304
        %v6561 = vpop.f32.mrf.mxu0
        %v6562 = vadd.f32 %v6401, %v6561
        %v6563 = vpop.f32.mrf.mxu0
        %v6564 = vpop.f32.mrf.mxu0
        %v6565 = vadd.f32 %v6404, %v6564
        %v6566 = vpop.f32.mrf.mxu0
        %6567 = vmatprep.mubr.bf16.mxu0 0
        %6568 = vmatmul.mubr.bf16.gmra.mxu0 %v6307
        %v6569 = vpop.f32.mrf.mxu0
        %v6570 = vadd.f32 %v6409, %v6569
        %v6571 = vpop.f32.mrf.mxu0
        %v6572 = vpop.f32.mrf.mxu0
        %v6573 = vadd.f32 %v6412, %v6572
        %v6574 = vpop.f32.mrf.mxu0
        %6575 = vmatprep.mubr.bf16.mxu0 0
        %6576 = vmatmul.mubr.bf16.gmra.mxu0 %v6310
        %v6577 = vpop.f32.mrf.mxu0
        %v6578 = vadd.f32 %v6417, %v6577
        %v6579 = vpop.f32.mrf.mxu0
        %v6580 = vpop.f32.mrf.mxu0
        %v6581 = vadd.f32 %v6420, %v6580
        %v6582 = vpop.f32.mrf.mxu0
        %6583 = vmatprep.mubr.bf16.mxu0 0
        %6584 = vmatmul.mubr.bf16.gmra.mxu0 %v6313
        %v6585 = vpop.f32.mrf.mxu0
        %v6586 = vadd.f32 %v6425, %v6585
        %v6587 = vpop.f32.mrf.mxu0
        %v6588 = vpop.f32.mrf.mxu0
        %v6589 = vadd.f32 %v6428, %v6588
        %v6590 = vpop.f32.mrf.mxu0
        %6591 = vmatprep.mubr.bf16.mxu0 0
        %6592 = vmatmul.mubr.bf16.gmra.mxu0 %v6316
        %v6593 = vpop.f32.mrf.mxu0
        %v6594 = vadd.f32 %v6433, %v6593
        %v6595 = vpop.f32.mrf.mxu0
        %v6596 = vpop.f32.mrf.mxu0
        %v6597 = vadd.f32 %v6436, %v6596
        %v6598 = vpop.f32.mrf.mxu0
        %6599 = vmatprep.mubr.bf16.mxu0 0
        %6600 = vmatmul.mubr.bf16.gmra.mxu0 %v6319
        %v6601 = vpop.f32.mrf.mxu0
        %v6602 = vadd.f32 %v6441, %v6601
        %v6603 = vpop.f32.mrf.mxu0
        %v6604 = vpop.f32.mrf.mxu0
        %v6605 = vadd.f32 %v6444, %v6604
        %v6606 = vpop.f32.mrf.mxu0
        %6607 = vmatprep.mubr.bf16.mxu0 0
        %6608 = vmatmul.mubr.bf16.gmra.mxu0 %v6322
        %v6609 = vpop.f32.mrf.mxu0
        %v6610 = vadd.f32 %v6449, %v6609
        %v6611 = vpop.f32.mrf.mxu0
        %v6612 = vpop.f32.mrf.mxu0
        %v6613 = vadd.f32 %v6452, %v6612
        %v6614 = vpop.f32.mrf.mxu0
        %6615 = vmatprep.mubr.bf16.mxu0 0
        %6616 = vmatmul.mubr.bf16.gmra.mxu0 %v6325
        %v6617 = vpop.f32.mrf.mxu0
        %v6618 = vadd.f32 %v6457, %v6617
        %v6619 = vpop.f32.mrf.mxu0
        %v6620 = vpop.f32.mrf.mxu0
        %v6621 = vadd.f32 %v6460, %v6620
        %v6622 = vpop.f32.mrf.mxu0
        %6623 = vmatprep.mubr.bf16.mxu0 0
        %6624 = vmatmul.mubr.bf16.gmra.mxu0 %v6328
        %v6625 = vpop.f32.mrf.mxu0
        %v6626 = vadd.f32 %v6465, %v6625
        %v6627 = vpop.f32.mrf.mxu0
        %v6628 = vpop.f32.mrf.mxu0
        %v6629 = vadd.f32 %v6468, %v6628
        %v6630 = vpop.f32.mrf.mxu0
        %6631 = vmatprep.mubr.bf16.mxu0 0
        %6632 = vmatmul.mubr.bf16.gmra.mxu0 %v6331
        %v6633 = vpop.f32.mrf.mxu0
        %v6634 = vadd.f32 %v6473, %v6633
        %v6635 = vpop.f32.mrf.mxu0
        %v6636 = vpop.f32.mrf.mxu0
        %v6637 = vadd.f32 %v6476, %v6636
        %v6638 = vpop.f32.mrf.mxu0
        %6639 = vmatprep.mubr.bf16.mxu0 0
        %6640 = vmatmul.mubr.bf16.gmra.mxu0 %v6334
        %v6641 = vpop.f32.mrf.mxu0
        %v6642 = vadd.f32 %v6481, %v6641
        %v6643 = vpop.f32.mrf.mxu0
        %v6644 = vpop.f32.mrf.mxu0
        %v6645 = vadd.f32 %v6484, %v6644
        %v6646 = vpop.f32.mrf.mxu0
        %6647 = vmatprep.mubr.bf16.mxu0 0
        %6648 = vmatmul.mubr.bf16.gmra.mxu0 %v6337
        %v6649 = vpop.f32.mrf.mxu0
        %v6650 = vadd.f32 %v6489, %v6649
        %v6651 = vpop.f32.mrf.mxu0
        %v6652 = vpop.f32.mrf.mxu0
        %v6653 = vadd.f32 %v6492, %v6652
        %v6654 = vpop.f32.mrf.mxu0
        %6655 = vmatprep.mubr.bf16.mxu0 0
        %6656 = vmatmul.mubr.bf16.gmra.mxu0 %v6340
        %v6657 = vpop.f32.mrf.mxu0
        %v6658 = vadd.f32 %v6497, %v6657
        %v6659 = vpop.f32.mrf.mxu0
        %v6660 = vpop.f32.mrf.mxu0
        %v6661 = vadd.f32 %v6500, %v6660
        %v6662 = vpop.f32.mrf.mxu0
        %6663 = vdwg.mxu0
        %v6664 = vmul.f32 %v1981, %v1981
        %v6665 = vld [vmem:[%s49] sm:$0xff]
        %v6666 = vld [vmem:[%s49 + $0x8] sm:$0xff]
        %v6667 = vld [vmem:[%s49 + $0x10] sm:$0xff]
        %v6668 = vld [vmem:[%s49 + $0x18] sm:$0xff]
        %v6670 = vsel %vm3629, %v6664, 0
        %6672 = vmatprep.subr.mxu0 0.0
        %6673 = vmatpush1.msra.mxu0 0.0
        %6674 = vmatprep.subr.mxu0 0.0
        %6675 = vmatpush1.msra.mxu0 0.0
        %6676 = vmatprep.subr.mxu0 0.0
        %6677 = vmatpush1.msra.mxu0 0.0
        %6678 = vmatprep.subr.mxu0 0.0
        %6679 = vmatpush1.msra.mxu0 0.0
        %6680 = vmatprep.subr.mxu0 0.0
        %6681 = vmatpush1.msra.mxu0 0.0
        %6682 = vmatprep.subr.mxu0 0.0
        %6683 = vmatpush1.msra.mxu0 0.0
        %6684 = vmatprep.subr.mxu0 0.0
        %6685 = vmatpush1.msra.mxu0 0.0
        %6686 = vmatprep.subr.mxu0 0.0
        %6687 = vmatpush1.msra.mxu0 0.0
        %6688 = vmatprep.subr.mxu0 0.0
        %6689 = vmatpush1.msra.mxu0 0.0
        %6690 = vmatprep.subr.mxu0 0.0
        %6691 = vmatpush1.msra.mxu0 0.0
        %6692 = vmatprep.subr.mxu0 0.0
        %6693 = vmatpush1.msra.mxu0 0.0
        %6694 = vmatprep.subr.mxu0 0.0
        %6695 = vmatpush1.msra.mxu0 0.0
        %6696 = vmatprep.subr.mxu0 0.0
        %6697 = vmatpush1.msra.mxu0 %v6668
        %6698 = vmatprep.subr.mxu0 0.0
        %6699 = vmatpush1.msra.mxu0 %v6667
        %6700 = vmatprep.subr.mxu0 0.0
        %6701 = vmatpush1.msra.mxu0 %v6666
        %6702 = vmatprep.subr.mxu0 0.0
        %6703 = vmatpush1.msra.mxu0 %v6665
        %6704 = vmatprep.subr.mxu0 0.0
        %6705 = vmatpush2.msra.mxu0 0.0
        %6706 = vmatprep.subr.mxu0 0.0
        %6707 = vmatpush2.msra.mxu0 0.0
        %6708 = vmatprep.subr.mxu0 0.0
        %6709 = vmatpush2.msra.mxu0 0.0
        %6710 = vmatprep.subr.mxu0 0.0
        %6711 = vmatpush2.msra.mxu0 0.0
        %6712 = vmatprep.subr.mxu0 0.0
        %6713 = vmatpush2.msra.mxu0 0.0
        %6714 = vmatprep.subr.mxu0 0.0
        %6715 = vmatpush2.msra.mxu0 0.0
        %6716 = vmatprep.subr.mxu0 0.0
        %6717 = vmatpush2.msra.mxu0 0.0
        %6718 = vmatprep.subr.mxu0 0.0
        %6719 = vmatpush2.msra.mxu0 0.0
        %6720 = vmatprep.subr.mxu0 0.0
        %6721 = vmatpush2.msra.mxu0 0.0
        %6722 = vmatprep.subr.mxu0 0.0
        %6723 = vmatpush2.msra.mxu0 0.0
        %6724 = vmatprep.subr.mxu0 0.0
        %6725 = vmatpush2.msra.mxu0 0.0
        %6726 = vmatprep.subr.mxu0 0.0
        %6727 = vmatpush2.msra.mxu0 0.0
        %6728 = vmatprep.subr.mxu0 0.0
        %6729 = vmatpush2.msra.mxu0 0.0
        %6730 = vmatprep.subr.mxu0 0.0
        %6731 = vmatpush2.msra.mxu0 0.0
        %6732 = vmatprep.subr.mxu0 0.0
        %6733 = vmatpush2.msra.mxu0 0.0
        %6734 = vmatprep.subr.mxu0 0.0
        %6735 = vmatpush2.msra.mxu0 0.0
        %6736 = vmatprep.mubr.f32.mxu0 0.0
        %6737 = vmatmul.mubr.f32.gmra.mxu0 %v6670
        %v6738 = vpop.f32.mrf.mxu0
        %v6739 = vadd.f32 1e-08, %v6738
        %v6740 = vpop.f32.mrf.mxu0
        %6741 = vdwg.mxu0
        %v6742 = vrsqrt.pop %v6739
        %v6743 = vlaneseq
        %v6744 = vshrl.u32 %v6743, 7
        %v6745 = vsub.s32 0, %v6744
        %v6746 = vrot.slane %v6742, %v6745
        %v6747 = vmul.f32 %v6538, %v6746
        %v6748 = vmul.f32 %v6541, %v6746
        %v6749 = vmul.f32 %v6546, %v6746
        %v6750 = vmul.f32 %v6549, %v6746
        %v6751 = vmul.f32 %v6554, %v6746
        %v6752 = vmul.f32 %v6557, %v6746
        %v6753 = vmul.f32 %v6562, %v6746
        %v6754 = vmul.f32 %v6565, %v6746
        %v6755 = vmul.f32 %v6570, %v6746
        %v6756 = vmul.f32 %v6573, %v6746
        %v6757 = vmul.f32 %v6578, %v6746
        %v6758 = vmul.f32 %v6581, %v6746
        %v6759 = vmul.f32 %v6586, %v6746
        %v6760 = vmul.f32 %v6589, %v6746
        %v6761 = vmul.f32 %v6594, %v6746
        %v6762 = vmul.f32 %v6597, %v6746
        %v6763 = vmul.f32 %v6602, %v6746
        %v6764 = vmul.f32 %v6605, %v6746
        %v6765 = vmul.f32 %v6610, %v6746
        %v6766 = vmul.f32 %v6613, %v6746
        %v6767 = vmul.f32 %v6618, %v6746
        %v6768 = vmul.f32 %v6621, %v6746
        %v6769 = vmul.f32 %v6626, %v6746
        %v6770 = vmul.f32 %v6629, %v6746
        %v6771 = vmul.f32 %v6634, %v6746
        %v6772 = vmul.f32 %v6637, %v6746
        %v6773 = vmul.f32 %v6642, %v6746
        %v6774 = vmul.f32 %v6645, %v6746
        %v6775 = vmul.f32 %v6650, %v6746
        %v6776 = vmul.f32 %v6653, %v6746
        %v6777 = vmul.f32 %v6658, %v6746
        %v6778 = vmul.f32 %v6661, %v6746
        %v6779 = vld [vmem:[#allocation40] sm:$0xff]
        %v6780 = vld [vmem:[#allocation40 + $0x8] sm:$0xff]
        %v6781 = vld [vmem:[#allocation40 + $0x10] sm:$0xff]
        %v6782 = vld [vmem:[#allocation40 + $0x18] sm:$0xff]
        %v6783 = vld [vmem:[#allocation40 + $0x20] sm:$0xff]
        %v6784 = vld [vmem:[#allocation40 + $0x28] sm:$0xff]
        %v6785 = vld [vmem:[#allocation40 + $0x30] sm:$0xff]
        %v6786 = vld [vmem:[#allocation40 + $0x38] sm:$0xff]
        %v6787 = vld [vmem:[#allocation40 + $0x40] sm:$0xff]
        %v6788 = vld [vmem:[#allocation40 + $0x48] sm:$0xff]
        %v6789 = vld [vmem:[#allocation40 + $0x50] sm:$0xff]
        %v6790 = vld [vmem:[#allocation40 + $0x58] sm:$0xff]
        %v6791 = vld [vmem:[#allocation40 + $0x60] sm:$0xff]
        %v6792 = vld [vmem:[#allocation40 + $0x68] sm:$0xff]
        %v6793 = vld [vmem:[#allocation40 + $0x70] sm:$0xff]
        %v6794 = vld [vmem:[#allocation40 + $0x78] sm:$0xff]
        %v6795 = vld [vmem:[#allocation40 + $0x80] sm:$0xff]
        %v6796 = vld [vmem:[#allocation40 + $0x88] sm:$0xff]
        %v6797 = vld [vmem:[#allocation40 + $0x90] sm:$0xff]
        %v6798 = vld [vmem:[#allocation40 + $0x98] sm:$0xff]
        %v6799 = vld [vmem:[#allocation40 + $0xa0] sm:$0xff]
        %v6800 = vld [vmem:[#allocation40 + $0xa8] sm:$0xff]
        %v6801 = vld [vmem:[#allocation40 + $0xb0] sm:$0xff]
        %v6802 = vld [vmem:[#allocation40 + $0xb8] sm:$0xff]
        %v6803 = vld [vmem:[#allocation40 + $0xc0] sm:$0xff]
        %v6804 = vld [vmem:[#allocation40 + $0xc8] sm:$0xff]
        %v6805 = vld [vmem:[#allocation40 + $0xd0] sm:$0xff]
        %v6806 = vld [vmem:[#allocation40 + $0xd8] sm:$0xff]
        %v6807 = vld [vmem:[#allocation40 + $0xe0] sm:$0xff]
        %v6808 = vld [vmem:[#allocation40 + $0xe8] sm:$0xff]
        %v6809 = vld [vmem:[#allocation40 + $0xf0] sm:$0xff]
        %v6810 = vld [vmem:[#allocation40 + $0xf8] sm:$0xff]
        %6812 = vset.pattern.permute.xlu0 0
        %6813 = vperm.xlu0 %6812, %v6779
        %v6814 = vpop.permute.xlu0 %6813
        %6817 = vset.pattern.permute.xlu0 0
        %6818 = vperm.xlu0 %6817, %v6780
        %v6819 = vpop.permute.xlu0 %6818
        %6822 = vset.pattern.permute.xlu0 0
        %6823 = vperm.xlu0 %6822, %v6781
        %v6824 = vpop.permute.xlu0 %6823
        %6827 = vset.pattern.permute.xlu0 0
        %6828 = vperm.xlu0 %6827, %v6782
        %v6829 = vpop.permute.xlu0 %6828
        %6832 = vset.pattern.permute.xlu0 0
        %6833 = vperm.xlu0 %6832, %v6783
        %v6834 = vpop.permute.xlu0 %6833
        %6837 = vset.pattern.permute.xlu0 0
        %6838 = vperm.xlu0 %6837, %v6784
        %v6839 = vpop.permute.xlu0 %6838
        %6842 = vset.pattern.permute.xlu0 0
        %6843 = vperm.xlu0 %6842, %v6785
        %v6844 = vpop.permute.xlu0 %6843
        %6847 = vset.pattern.permute.xlu0 0
        %6848 = vperm.xlu0 %6847, %v6786
        %v6849 = vpop.permute.xlu0 %6848
        %6852 = vset.pattern.permute.xlu0 0
        %6853 = vperm.xlu0 %6852, %v6787
        %v6854 = vpop.permute.xlu0 %6853
        %6857 = vset.pattern.permute.xlu0 0
        %6858 = vperm.xlu0 %6857, %v6788
        %v6859 = vpop.permute.xlu0 %6858
        %6862 = vset.pattern.permute.xlu0 0
        %6863 = vperm.xlu0 %6862, %v6789
        %v6864 = vpop.permute.xlu0 %6863
        %6867 = vset.pattern.permute.xlu0 0
        %6868 = vperm.xlu0 %6867, %v6790
        %v6869 = vpop.permute.xlu0 %6868
        %6872 = vset.pattern.permute.xlu0 0
        %6873 = vperm.xlu0 %6872, %v6791
        %v6874 = vpop.permute.xlu0 %6873
        %6877 = vset.pattern.permute.xlu0 0
        %6878 = vperm.xlu0 %6877, %v6792
        %v6879 = vpop.permute.xlu0 %6878
        %6882 = vset.pattern.permute.xlu0 0
        %6883 = vperm.xlu0 %6882, %v6793
        %v6884 = vpop.permute.xlu0 %6883
        %6887 = vset.pattern.permute.xlu0 0
        %6888 = vperm.xlu0 %6887, %v6794
        %v6889 = vpop.permute.xlu0 %6888
        %6892 = vset.pattern.permute.xlu0 0
        %6893 = vperm.xlu0 %6892, %v6795
        %v6894 = vpop.permute.xlu0 %6893
        %6897 = vset.pattern.permute.xlu0 0
        %6898 = vperm.xlu0 %6897, %v6796
        %v6899 = vpop.permute.xlu0 %6898
        %6902 = vset.pattern.permute.xlu0 0
        %6903 = vperm.xlu0 %6902, %v6797
        %v6904 = vpop.permute.xlu0 %6903
        %6907 = vset.pattern.permute.xlu0 0
        %6908 = vperm.xlu0 %6907, %v6798
        %v6909 = vpop.permute.xlu0 %6908
        %6912 = vset.pattern.permute.xlu0 0
        %6913 = vperm.xlu0 %6912, %v6799
        %v6914 = vpop.permute.xlu0 %6913
        %6917 = vset.pattern.permute.xlu0 0
        %6918 = vperm.xlu0 %6917, %v6800
        %v6919 = vpop.permute.xlu0 %6918
        %6922 = vset.pattern.permute.xlu0 0
        %6923 = vperm.xlu0 %6922, %v6801
        %v6924 = vpop.permute.xlu0 %6923
        %6927 = vset.pattern.permute.xlu0 0
        %6928 = vperm.xlu0 %6927, %v6802
        %v6929 = vpop.permute.xlu0 %6928
        %6932 = vset.pattern.permute.xlu0 0
        %6933 = vperm.xlu0 %6932, %v6803
        %v6934 = vpop.permute.xlu0 %6933
        %6937 = vset.pattern.permute.xlu0 0
        %6938 = vperm.xlu0 %6937, %v6804
        %v6939 = vpop.permute.xlu0 %6938
        %6942 = vset.pattern.permute.xlu0 0
        %6943 = vperm.xlu0 %6942, %v6805
        %v6944 = vpop.permute.xlu0 %6943
        %6947 = vset.pattern.permute.xlu0 0
        %6948 = vperm.xlu0 %6947, %v6806
        %v6949 = vpop.permute.xlu0 %6948
        %6952 = vset.pattern.permute.xlu0 0
        %6953 = vperm.xlu0 %6952, %v6807
        %v6954 = vpop.permute.xlu0 %6953
        %6957 = vset.pattern.permute.xlu0 0
        %6958 = vperm.xlu0 %6957, %v6808
        %v6959 = vpop.permute.xlu0 %6958
        %6962 = vset.pattern.permute.xlu0 0
        %6963 = vperm.xlu0 %6962, %v6809
        %v6964 = vpop.permute.xlu0 %6963
        %6967 = vset.pattern.permute.xlu0 0
        %6968 = vperm.xlu0 %6967, %v6810
        %v6969 = vpop.permute.xlu0 %6968
        %v6971 = vadd.f32 %v6747, %v6814
        %v6972 = vadd.f32 %v6748, %v6819
        %v6973 = vadd.f32 %v6749, %v6824
        %v6974 = vadd.f32 %v6750, %v6829
        %v6975 = vadd.f32 %v6751, %v6834
        %v6976 = vadd.f32 %v6752, %v6839
        %v6977 = vadd.f32 %v6753, %v6844
        %v6978 = vadd.f32 %v6754, %v6849
        %v6979 = vadd.f32 %v6755, %v6854
        %v6980 = vadd.f32 %v6756, %v6859
        %v6981 = vadd.f32 %v6757, %v6864
        %v6982 = vadd.f32 %v6758, %v6869
        %v6983 = vadd.f32 %v6759, %v6874
        %v6984 = vadd.f32 %v6760, %v6879
        %v6985 = vadd.f32 %v6761, %v6884
        %v6986 = vadd.f32 %v6762, %v6889
        %v6987 = vadd.f32 %v6763, %v6894
        %v6988 = vadd.f32 %v6764, %v6899
        %v6989 = vadd.f32 %v6765, %v6904
        %v6990 = vadd.f32 %v6766, %v6909
        %v6991 = vadd.f32 %v6767, %v6914
        %v6992 = vadd.f32 %v6768, %v6919
        %v6993 = vadd.f32 %v6769, %v6924
        %v6994 = vadd.f32 %v6770, %v6929
        %v6995 = vadd.f32 %v6771, %v6934
        %v6996 = vadd.f32 %v6772, %v6939
        %v6997 = vadd.f32 %v6773, %v6944
        %v6998 = vadd.f32 %v6774, %v6949
        %v6999 = vadd.f32 %v6775, %v6954
        %v7000 = vadd.f32 %v6776, %v6959
        %v7001 = vadd.f32 %v6777, %v6964
        %v7002 = vadd.f32 %v6778, %v6969
        %v7003 = vld [vmem:[#allocation41] sm:$0x1]
        %v7005 = vlaneseq
        %v7006 = vshrl.u32 %v7005, 7
        %v7007 = vsub.s32 0, %v7006
        %v7008 = vrot.slane %v7003, %v7007
        %v7010 = vadd.f32 %v6971, %v7008
        %v7011 = vadd.f32 %v6972, %v7008
        %v7012 = vadd.f32 %v6973, %v7008
        %v7013 = vadd.f32 %v6974, %v7008
        %v7014 = vadd.f32 %v6975, %v7008
        %v7015 = vadd.f32 %v6976, %v7008
        %v7016 = vadd.f32 %v6977, %v7008
        %v7017 = vadd.f32 %v6978, %v7008
        %v7018 = vadd.f32 %v6979, %v7008
        %v7019 = vadd.f32 %v6980, %v7008
        %v7020 = vadd.f32 %v6981, %v7008
        %v7021 = vadd.f32 %v6982, %v7008
        %v7022 = vadd.f32 %v6983, %v7008
        %v7023 = vadd.f32 %v6984, %v7008
        %v7024 = vadd.f32 %v6985, %v7008
        %v7025 = vadd.f32 %v6986, %v7008
        %v7026 = vadd.f32 %v6987, %v7008
        %v7027 = vadd.f32 %v6988, %v7008
        %v7028 = vadd.f32 %v6989, %v7008
        %v7029 = vadd.f32 %v6990, %v7008
        %v7030 = vadd.f32 %v6991, %v7008
        %v7031 = vadd.f32 %v6992, %v7008
        %v7032 = vadd.f32 %v6993, %v7008
        %v7033 = vadd.f32 %v6994, %v7008
        %v7034 = vadd.f32 %v6995, %v7008
        %v7035 = vadd.f32 %v6996, %v7008
        %v7036 = vadd.f32 %v6997, %v7008
        %v7037 = vadd.f32 %v6998, %v7008
        %v7038 = vadd.f32 %v6999, %v7008
        %v7039 = vadd.f32 %v7000, %v7008
        %v7040 = vadd.f32 %v7001, %v7008
        %v7041 = vadd.f32 %v7002, %v7008
        %vm7042 = vcmp.ge.f32.partialorder %v7010, 0.0
        %vm7043 = vcmp.ge.f32.partialorder %v7011, 0.0
        %vm7044 = vcmp.ge.f32.partialorder %v7012, 0.0
        %vm7045 = vcmp.ge.f32.partialorder %v7013, 0.0
        %vm7046 = vcmp.ge.f32.partialorder %v7014, 0.0
        %vm7047 = vcmp.ge.f32.partialorder %v7015, 0.0
        %vm7048 = vcmp.ge.f32.partialorder %v7016, 0.0
        %vm7049 = vcmp.ge.f32.partialorder %v7017, 0.0
        %vm7050 = vcmp.ge.f32.partialorder %v7018, 0.0
        %vm7051 = vcmp.ge.f32.partialorder %v7019, 0.0
        %vm7052 = vcmp.ge.f32.partialorder %v7020, 0.0
        %vm7053 = vcmp.ge.f32.partialorder %v7021, 0.0
        %vm7054 = vcmp.ge.f32.partialorder %v7022, 0.0
        %vm7055 = vcmp.ge.f32.partialorder %v7023, 0.0
        %vm7056 = vcmp.ge.f32.partialorder %v7024, 0.0
        %vm7057 = vcmp.ge.f32.partialorder %v7025, 0.0
        %vm7058 = vcmp.ge.f32.partialorder %v7026, 0.0
        %vm7059 = vcmp.ge.f32.partialorder %v7027, 0.0
        %vm7060 = vcmp.ge.f32.partialorder %v7028, 0.0
        %vm7061 = vcmp.ge.f32.partialorder %v7029, 0.0
        %vm7062 = vcmp.ge.f32.partialorder %v7030, 0.0
        %vm7063 = vcmp.ge.f32.partialorder %v7031, 0.0
        %vm7064 = vcmp.ge.f32.partialorder %v7032, 0.0
        %vm7065 = vcmp.ge.f32.partialorder %v7033, 0.0
        %vm7066 = vcmp.ge.f32.partialorder %v7034, 0.0
        %vm7067 = vcmp.ge.f32.partialorder %v7035, 0.0
        %vm7068 = vcmp.ge.f32.partialorder %v7036, 0.0
        %vm7069 = vcmp.ge.f32.partialorder %v7037, 0.0
        %vm7070 = vcmp.ge.f32.partialorder %v7038, 0.0
        %vm7071 = vcmp.ge.f32.partialorder %v7039, 0.0
        %vm7072 = vcmp.ge.f32.partialorder %v7040, 0.0
        %vm7073 = vcmp.ge.f32.partialorder %v7041, 0.0
        %v7074 = vmul.f32 %v7010, 0.2
        %v7075 = vmul.f32 %v7011, 0.2
        %v7076 = vmul.f32 %v7012, 0.2
        %v7077 = vmul.f32 %v7013, 0.2
        %v7078 = vmul.f32 %v7014, 0.2
        %v7079 = vmul.f32 %v7015, 0.2
        %v7080 = vmul.f32 %v7016, 0.2
        %v7081 = vmul.f32 %v7017, 0.2
        %v7082 = vmul.f32 %v7018, 0.2
        %v7083 = vmul.f32 %v7019, 0.2
        %v7084 = vmul.f32 %v7020, 0.2
        %v7085 = vmul.f32 %v7021, 0.2
        %v7086 = vmul.f32 %v7022, 0.2
        %v7087 = vmul.f32 %v7023, 0.2
        %v7088 = vmul.f32 %v7024, 0.2
        %v7089 = vmul.f32 %v7025, 0.2
        %v7090 = vmul.f32 %v7026, 0.2
        %v7091 = vmul.f32 %v7027, 0.2
        %v7092 = vmul.f32 %v7028, 0.2
        %v7093 = vmul.f32 %v7029, 0.2
        %v7094 = vmul.f32 %v7030, 0.2
        %v7095 = vmul.f32 %v7031, 0.2
        %v7096 = vmul.f32 %v7032, 0.2
        %v7097 = vmul.f32 %v7033, 0.2
        %v7098 = vmul.f32 %v7034, 0.2
        %v7099 = vmul.f32 %v7035, 0.2
        %v7100 = vmul.f32 %v7036, 0.2
        %v7101 = vmul.f32 %v7037, 0.2
        %v7102 = vmul.f32 %v7038, 0.2
        %v7103 = vmul.f32 %v7039, 0.2
        %v7104 = vmul.f32 %v7040, 0.2
        %v7105 = vmul.f32 %v7041, 0.2
        %v7106 = vsel %vm7042, %v7010, %v7074
        %v7107 = vsel %vm7043, %v7011, %v7075
        %v7108 = vsel %vm7044, %v7012, %v7076
        %v7109 = vsel %vm7045, %v7013, %v7077
        %v7110 = vsel %vm7046, %v7014, %v7078
        %v7111 = vsel %vm7047, %v7015, %v7079
        %v7112 = vsel %vm7048, %v7016, %v7080
        %v7113 = vsel %vm7049, %v7017, %v7081
        %v7114 = vsel %vm7050, %v7018, %v7082
        %v7115 = vsel %vm7051, %v7019, %v7083
        %v7116 = vsel %vm7052, %v7020, %v7084
        %v7117 = vsel %vm7053, %v7021, %v7085
        %v7118 = vsel %vm7054, %v7022, %v7086
        %v7119 = vsel %vm7055, %v7023, %v7087
        %v7120 = vsel %vm7056, %v7024, %v7088
        %v7121 = vsel %vm7057, %v7025, %v7089
        %v7122 = vsel %vm7058, %v7026, %v7090
        %v7123 = vsel %vm7059, %v7027, %v7091
        %v7124 = vsel %vm7060, %v7028, %v7092
        %v7125 = vsel %vm7061, %v7029, %v7093
        %v7126 = vsel %vm7062, %v7030, %v7094
        %v7127 = vsel %vm7063, %v7031, %v7095
        %v7128 = vsel %vm7064, %v7032, %v7096
        %v7129 = vsel %vm7065, %v7033, %v7097
        %v7130 = vsel %vm7066, %v7034, %v7098
        %v7131 = vsel %vm7067, %v7035, %v7099
        %v7132 = vsel %vm7068, %v7036, %v7100
        %v7133 = vsel %vm7069, %v7037, %v7101
        %v7134 = vsel %vm7070, %v7038, %v7102
        %v7135 = vsel %vm7071, %v7039, %v7103
        %v7136 = vsel %vm7072, %v7040, %v7104
        %v7137 = vsel %vm7073, %v7041, %v7105
        %v7138 = vmul.f32 %v7106, 1.4142135
        %v7139 = vmul.f32 %v7107, 1.4142135
        %v7140 = vmul.f32 %v7108, 1.4142135
        %v7141 = vmul.f32 %v7109, 1.4142135
        %v7142 = vmul.f32 %v7110, 1.4142135
        %v7143 = vmul.f32 %v7111, 1.4142135
        %v7144 = vmul.f32 %v7112, 1.4142135
        %v7145 = vmul.f32 %v7113, 1.4142135
        %v7146 = vmul.f32 %v7114, 1.4142135
        %v7147 = vmul.f32 %v7115, 1.4142135
        %v7148 = vmul.f32 %v7116, 1.4142135
        %v7149 = vmul.f32 %v7117, 1.4142135
        %v7150 = vmul.f32 %v7118, 1.4142135
        %v7151 = vmul.f32 %v7119, 1.4142135
        %v7152 = vmul.f32 %v7120, 1.4142135
        %v7153 = vmul.f32 %v7121, 1.4142135
        %v7154 = vmul.f32 %v7122, 1.4142135
        %v7155 = vmul.f32 %v7123, 1.4142135
        %v7156 = vmul.f32 %v7124, 1.4142135
        %v7157 = vmul.f32 %v7125, 1.4142135
        %v7158 = vmul.f32 %v7126, 1.4142135
        %v7159 = vmul.f32 %v7127, 1.4142135
        %v7160 = vmul.f32 %v7128, 1.4142135
        %v7161 = vmul.f32 %v7129, 1.4142135
        %v7162 = vmul.f32 %v7130, 1.4142135
        %v7163 = vmul.f32 %v7131, 1.4142135
        %v7164 = vmul.f32 %v7132, 1.4142135
        %v7165 = vmul.f32 %v7133, 1.4142135
        %v7166 = vmul.f32 %v7134, 1.4142135
        %v7167 = vmul.f32 %v7135, 1.4142135
        %v7168 = vmul.f32 %v7136, 1.4142135
        %v7169 = vmul.f32 %v7137, 1.4142135
        %v7170 = vmax.f32 %v7138, -256.0
        %v7171 = vmax.f32 %v7139, -256.0
        %v7172 = vmax.f32 %v7140, -256.0
        %v7173 = vmax.f32 %v7141, -256.0
        %v7174 = vmax.f32 %v7142, -256.0
        %v7175 = vmax.f32 %v7143, -256.0
        %v7176 = vmax.f32 %v7144, -256.0
        %v7177 = vmax.f32 %v7145, -256.0
        %v7178 = vmax.f32 %v7146, -256.0
        %v7179 = vmax.f32 %v7147, -256.0
        %v7180 = vmax.f32 %v7148, -256.0
        %v7181 = vmax.f32 %v7149, -256.0
        %v7182 = vmax.f32 %v7150, -256.0
        %v7183 = vmax.f32 %v7151, -256.0
        %v7184 = vmax.f32 %v7152, -256.0
        %v7185 = vmax.f32 %v7153, -256.0
        %v7186 = vmax.f32 %v7154, -256.0
        %v7187 = vmax.f32 %v7155, -256.0
        %v7188 = vmax.f32 %v7156, -256.0
        %v7189 = vmax.f32 %v7157, -256.0
        %v7190 = vmax.f32 %v7158, -256.0
        %v7191 = vmax.f32 %v7159, -256.0
        %v7192 = vmax.f32 %v7160, -256.0
        %v7193 = vmax.f32 %v7161, -256.0
        %v7194 = vmax.f32 %v7162, -256.0
        %v7195 = vmax.f32 %v7163, -256.0
        %v7196 = vmax.f32 %v7164, -256.0
        %v7197 = vmax.f32 %v7165, -256.0
        %v7198 = vmax.f32 %v7166, -256.0
        %v7199 = vmax.f32 %v7167, -256.0
        %v7200 = vmax.f32 %v7168, -256.0
        %v7201 = vmax.f32 %v7169, -256.0
        %v7202 = vmin.f32 %v7170, 256.0
        %v7203 = vmin.f32 %v7171, 256.0
        %v7204 = vmin.f32 %v7172, 256.0
        %v7205 = vmin.f32 %v7173, 256.0
        %v7206 = vmin.f32 %v7174, 256.0
        %v7207 = vmin.f32 %v7175, 256.0
        %v7208 = vmin.f32 %v7176, 256.0
        %v7209 = vmin.f32 %v7177, 256.0
        %v7210 = vmin.f32 %v7178, 256.0
        %v7211 = vmin.f32 %v7179, 256.0
        %v7212 = vmin.f32 %v7180, 256.0
        %v7213 = vmin.f32 %v7181, 256.0
        %v7214 = vmin.f32 %v7182, 256.0
        %v7215 = vmin.f32 %v7183, 256.0
        %v7216 = vmin.f32 %v7184, 256.0
        %v7217 = vmin.f32 %v7185, 256.0
        %v7218 = vmin.f32 %v7186, 256.0
        %v7219 = vmin.f32 %v7187, 256.0
        %v7220 = vmin.f32 %v7188, 256.0
        %v7221 = vmin.f32 %v7189, 256.0
        %v7222 = vmin.f32 %v7190, 256.0
        %v7223 = vmin.f32 %v7191, 256.0
        %v7224 = vmin.f32 %v7192, 256.0
        %v7225 = vmin.f32 %v7193, 256.0
        %v7226 = vmin.f32 %v7194, 256.0
        %v7227 = vmin.f32 %v7195, 256.0
        %v7228 = vmin.f32 %v7196, 256.0
        %v7229 = vmin.f32 %v7197, 256.0
        %v7230 = vmin.f32 %v7198, 256.0
        %v7231 = vmin.f32 %v7199, 256.0
        %v7232 = vmin.f32 %v7200, 256.0
        %v7233 = vmin.f32 %v7201, 256.0
        %v7234 = vlaneseq
        %v7235 = vshrl.u32 %v7234, 7
        %v7236 = vsub.s32 0, %v7235
        %v7237 = vrot.slane %v2020, %v7236
        %v7238 = vmul.f32 %v7202, %v7237
        %v7239 = vmul.f32 %v7203, %v7237
        %v7240 = vmul.f32 %v7204, %v7237
        %v7241 = vmul.f32 %v7205, %v7237
        %v7242 = vmul.f32 %v7206, %v7237
        %v7243 = vmul.f32 %v7207, %v7237
        %v7244 = vmul.f32 %v7208, %v7237
        %v7245 = vmul.f32 %v7209, %v7237
        %v7246 = vmul.f32 %v7210, %v7237
        %v7247 = vmul.f32 %v7211, %v7237
        %v7248 = vmul.f32 %v7212, %v7237
        %v7249 = vmul.f32 %v7213, %v7237
        %v7250 = vmul.f32 %v7214, %v7237
        %v7251 = vmul.f32 %v7215, %v7237
        %v7252 = vmul.f32 %v7216, %v7237
        %v7253 = vmul.f32 %v7217, %v7237
        %v7254 = vmul.f32 %v7218, %v7237
        %v7255 = vmul.f32 %v7219, %v7237
        %v7256 = vmul.f32 %v7220, %v7237
        %v7257 = vmul.f32 %v7221, %v7237
        %v7258 = vmul.f32 %v7222, %v7237
        %v7259 = vmul.f32 %v7223, %v7237
        %v7260 = vmul.f32 %v7224, %v7237
        %v7261 = vmul.f32 %v7225, %v7237
        %v7262 = vmul.f32 %v7226, %v7237
        %v7263 = vmul.f32 %v7227, %v7237
        %v7264 = vmul.f32 %v7228, %v7237
        %v7265 = vmul.f32 %v7229, %v7237
        %v7266 = vmul.f32 %v7230, %v7237
        %v7267 = vmul.f32 %v7231, %v7237
        %v7268 = vmul.f32 %v7232, %v7237
        %v7269 = vmul.f32 %v7233, %v7237
        %7270 = vst.msk [vmem:[%s2081 + $0x1] sm:$0xff] %vm2686, %v7238
        %7271 = vst.msk [vmem:[%s2081 + $0x9] sm:$0xff] %vm2686, %v7239
        %7272 = vst.msk [vmem:[%s2081 + $0x19] sm:$0xff] %vm2686, %v7240
        %7273 = vst.msk [vmem:[%s2081 + $0x21] sm:$0xff] %vm2686, %v7241
        %7274 = vst.msk [vmem:[%s2081 + $0x31] sm:$0xff] %vm2686, %v7242
        %7275 = vst.msk [vmem:[%s2081 + $0x39] sm:$0xff] %vm2686, %v7243
        %7276 = vst.msk [vmem:[%s2081 + $0x49] sm:$0xff] %vm2686, %v7244
        %7277 = vst.msk [vmem:[%s2081 + $0x51] sm:$0xff] %vm2686, %v7245
        %7278 = vst.msk [vmem:[%s2081 + $0x61] sm:$0xff] %vm2686, %v7246
        %7279 = vst.msk [vmem:[%s2081 + $0x69] sm:$0xff] %vm2686, %v7247
        %7280 = vst.msk [vmem:[%s2081 + $0x79] sm:$0xff] %vm2686, %v7248
        %7281 = vst.msk [vmem:[%s2081 + $0x81] sm:$0xff] %vm2686, %v7249
        %7282 = vst.msk [vmem:[%s2081 + $0x91] sm:$0xff] %vm2686, %v7250
        %7283 = vst.msk [vmem:[%s2081 + $0x99] sm:$0xff] %vm2686, %v7251
        %7284 = vst.msk [vmem:[%s2081 + $0xa9] sm:$0xff] %vm2686, %v7252
        %7285 = vst.msk [vmem:[%s2081 + $0xb1] sm:$0xff] %vm2686, %v7253
        %7286 = vst.msk [vmem:[%s2081 + $0xc1] sm:$0xff] %vm2686, %v7254
        %7287 = vst.msk [vmem:[%s2081 + $0xc9] sm:$0xff] %vm2686, %v7255
        %7288 = vst.msk [vmem:[%s2081 + $0xd9] sm:$0xff] %vm2686, %v7256
        %7289 = vst.msk [vmem:[%s2081 + $0xe1] sm:$0xff] %vm2686, %v7257
        %7290 = vst.msk [vmem:[%s2081 + $0xf1] sm:$0xff] %vm2686, %v7258
        %7291 = vst.msk [vmem:[%s2081 + $0xf9] sm:$0xff] %vm2686, %v7259
        %7292 = vst.msk [vmem:[%s2081 + $0x109] sm:$0xff] %vm2686, %v7260
        %7293 = vst.msk [vmem:[%s2081 + $0x111] sm:$0xff] %vm2686, %v7261
        %7294 = vst.msk [vmem:[%s2081 + $0x121] sm:$0xff] %vm2686, %v7262
        %7295 = vst.msk [vmem:[%s2081 + $0x129] sm:$0xff] %vm2686, %v7263
        %7296 = vst.msk [vmem:[%s2081 + $0x139] sm:$0xff] %vm2686, %v7264
        %7297 = vst.msk [vmem:[%s2081 + $0x141] sm:$0xff] %vm2686, %v7265
        %7298 = vst.msk [vmem:[%s2081 + $0x151] sm:$0xff] %vm2686, %v7266
        %7299 = vst.msk [vmem:[%s2081 + $0x159] sm:$0xff] %vm2686, %v7267
        %7300 = vst.msk [vmem:[%s2081 + $0x169] sm:$0xff] %vm2686, %v7268
        %7301 = vst.msk [vmem:[%s2081 + $0x171] sm:$0xff] %vm2686, %v7269
        %v7302 = vld [vmem:[#allocation2] sm:$0xff]
        %v7303 = vld [vmem:[#allocation2 + $0x8] sm:$0xff]
        %v7304 = vld [vmem:[#allocation2 + $0x18] sm:$0xff]
        %v7305 = vld [vmem:[#allocation2 + $0x20] sm:$0xff]
        %v7306 = vld [vmem:[#allocation2 + $0x30] sm:$0xff]
        %v7307 = vld [vmem:[#allocation2 + $0x38] sm:$0xff]
        %v7308 = vld [vmem:[#allocation2 + $0x48] sm:$0xff]
        %v7309 = vld [vmem:[#allocation2 + $0x50] sm:$0xff]
        %v7310 = vld [vmem:[#allocation2 + $0x60] sm:$0xff]
        %v7311 = vld [vmem:[#allocation2 + $0x68] sm:$0xff]
        %v7312 = vld [vmem:[#allocation2 + $0x78] sm:$0xff]
        %v7313 = vld [vmem:[#allocation2 + $0x80] sm:$0xff]
        %v7314 = vld [vmem:[#allocation2 + $0x90] sm:$0xff]
        %v7315 = vld [vmem:[#allocation2 + $0x98] sm:$0xff]
        %v7316 = vld [vmem:[#allocation2 + $0xa8] sm:$0xff]
        %v7317 = vld [vmem:[#allocation2 + $0xb0] sm:$0xff]
        %v7318 = vld [vmem:[#allocation2 + $0xc0] sm:$0xff]
        %v7319 = vld [vmem:[#allocation2 + $0xc8] sm:$0xff]
        %v7320 = vld [vmem:[#allocation2 + $0xd8] sm:$0xff]
        %v7321 = vld [vmem:[#allocation2 + $0xe0] sm:$0xff]
        %v7322 = vld [vmem:[#allocation2 + $0xf0] sm:$0xff]
        %v7323 = vld [vmem:[#allocation2 + $0xf8] sm:$0xff]
        %v7324 = vld [vmem:[#allocation2 + $0x108] sm:$0xff]
        %v7325 = vld [vmem:[#allocation2 + $0x110] sm:$0xff]
        %v7326 = vld [vmem:[#allocation2 + $0x120] sm:$0xff]
        %v7327 = vld [vmem:[#allocation2 + $0x128] sm:$0xff]
        %v7328 = vld [vmem:[#allocation2 + $0x138] sm:$0xff]
        %v7329 = vld [vmem:[#allocation2 + $0x140] sm:$0xff]
        %v7330 = vld [vmem:[#allocation2 + $0x150] sm:$0xff]
        %v7331 = vld [vmem:[#allocation2 + $0x158] sm:$0xff]
        %v7332 = vld [vmem:[#allocation2 + $0x168] sm:$0xff]
        %v7333 = vld [vmem:[#allocation2 + $0x170] sm:$0xff]
        %v7334 = vld [vmem:[#allocation2 + $0x1] sm:$0xff]
        %v7335 = vld [vmem:[#allocation2 + $0x9] sm:$0xff]
        %v7336 = vld [vmem:[#allocation2 + $0x19] sm:$0xff]
        %v7337 = vld [vmem:[#allocation2 + $0x21] sm:$0xff]
        %v7338 = vld [vmem:[#allocation2 + $0x31] sm:$0xff]
        %v7339 = vld [vmem:[#allocation2 + $0x39] sm:$0xff]
        %v7340 = vld [vmem:[#allocation2 + $0x49] sm:$0xff]
        %v7341 = vld [vmem:[#allocation2 + $0x51] sm:$0xff]
        %v7342 = vld [vmem:[#allocation2 + $0x61] sm:$0xff]
        %v7343 = vld [vmem:[#allocation2 + $0x69] sm:$0xff]
        %v7344 = vld [vmem:[#allocation2 + $0x79] sm:$0xff]
        %v7345 = vld [vmem:[#allocation2 + $0x81] sm:$0xff]
        %v7346 = vld [vmem:[#allocation2 + $0x91] sm:$0xff]
        %v7347 = vld [vmem:[#allocation2 + $0x99] sm:$0xff]
        %v7348 = vld [vmem:[#allocation2 + $0xa9] sm:$0xff]
        %v7349 = vld [vmem:[#allocation2 + $0xb1] sm:$0xff]
        %v7350 = vld [vmem:[#allocation2 + $0xc1] sm:$0xff]
        %v7351 = vld [vmem:[#allocation2 + $0xc9] sm:$0xff]
        %v7352 = vld [vmem:[#allocation2 + $0xd9] sm:$0xff]
        %v7353 = vld [vmem:[#allocation2 + $0xe1] sm:$0xff]
        %v7354 = vld [vmem:[#allocation2 + $0xf1] sm:$0xff]
        %v7355 = vld [vmem:[#allocation2 + $0xf9] sm:$0xff]
        %v7356 = vld [vmem:[#allocation2 + $0x109] sm:$0xff]
        %v7357 = vld [vmem:[#allocation2 + $0x111] sm:$0xff]
        %v7358 = vld [vmem:[#allocation2 + $0x121] sm:$0xff]
        %v7359 = vld [vmem:[#allocation2 + $0x129] sm:$0xff]
        %v7360 = vld [vmem:[#allocation2 + $0x139] sm:$0xff]
        %v7361 = vld [vmem:[#allocation2 + $0x141] sm:$0xff]
        %v7362 = vld [vmem:[#allocation2 + $0x151] sm:$0xff]
        %v7363 = vld [vmem:[#allocation2 + $0x159] sm:$0xff]
        %v7364 = vld [vmem:[#allocation2 + $0x169] sm:$0xff]
        %v7365 = vld [vmem:[#allocation2 + $0x171] sm:$0xff]
        %v7366 = vld [vmem:[#allocation2 + $0x2] sm:$0xff]
        %v7367 = vld [vmem:[#allocation2 + $0xa] sm:$0xff]
        %v7368 = vld [vmem:[#allocation2 + $0x1a] sm:$0xff]
        %v7369 = vld [vmem:[#allocation2 + $0x22] sm:$0xff]
        %v7370 = vld [vmem:[#allocation2 + $0x32] sm:$0xff]
        %v7371 = vld [vmem:[#allocation2 + $0x3a] sm:$0xff]
        %v7372 = vld [vmem:[#allocation2 + $0x4a] sm:$0xff]
        %v7373 = vld [vmem:[#allocation2 + $0x52] sm:$0xff]
        %v7374 = vld [vmem:[#allocation2 + $0x62] sm:$0xff]
        %v7375 = vld [vmem:[#allocation2 + $0x6a] sm:$0xff]
        %v7376 = vld [vmem:[#allocation2 + $0x7a] sm:$0xff]
        %v7377 = vld [vmem:[#allocation2 + $0x82] sm:$0xff]
        %v7378 = vld [vmem:[#allocation2 + $0x92] sm:$0xff]
        %v7379 = vld [vmem:[#allocation2 + $0x9a] sm:$0xff]
        %v7380 = vld [vmem:[#allocation2 + $0xaa] sm:$0xff]
        %v7381 = vld [vmem:[#allocation2 + $0xb2] sm:$0xff]
        %v7382 = vld [vmem:[#allocation2 + $0xc2] sm:$0xff]
        %v7383 = vld [vmem:[#allocation2 + $0xca] sm:$0xff]
        %v7384 = vld [vmem:[#allocation2 + $0xda] sm:$0xff]
        %v7385 = vld [vmem:[#allocation2 + $0xe2] sm:$0xff]
        %v7386 = vld [vmem:[#allocation2 + $0xf2] sm:$0xff]
        %v7387 = vld [vmem:[#allocation2 + $0xfa] sm:$0xff]
        %v7388 = vld [vmem:[#allocation2 + $0x10a] sm:$0xff]
        %v7389 = vld [vmem:[#allocation2 + $0x112] sm:$0xff]
        %v7390 = vld [vmem:[#allocation2 + $0x122] sm:$0xff]
        %v7391 = vld [vmem:[#allocation2 + $0x12a] sm:$0xff]
        %v7392 = vld [vmem:[#allocation2 + $0x13a] sm:$0xff]
        %v7393 = vld [vmem:[#allocation2 + $0x142] sm:$0xff]
        %v7394 = vld [vmem:[#allocation2 + $0x152] sm:$0xff]
        %v7395 = vld [vmem:[#allocation2 + $0x15a] sm:$0xff]
        %v7396 = vld [vmem:[#allocation2 + $0x16a] sm:$0xff]
        %v7397 = vld [vmem:[#allocation2 + $0x172] sm:$0xff]
        %v7398 = vld [vmem:[%s2081] sm:$0xff]
        %v7399 = vld [vmem:[%s2081 + $0x8] sm:$0xff]
        %v7400 = vld [vmem:[%s2081 + $0x18] sm:$0xff]
        %v7401 = vld [vmem:[%s2081 + $0x20] sm:$0xff]
        %v7402 = vld [vmem:[%s2081 + $0x30] sm:$0xff]
        %v7403 = vld [vmem:[%s2081 + $0x38] sm:$0xff]
        %v7404 = vld [vmem:[%s2081 + $0x48] sm:$0xff]
        %v7405 = vld [vmem:[%s2081 + $0x50] sm:$0xff]
        %v7406 = vld [vmem:[%s2081 + $0x60] sm:$0xff]
        %v7407 = vld [vmem:[%s2081 + $0x68] sm:$0xff]
        %v7408 = vld [vmem:[%s2081 + $0x78] sm:$0xff]
        %v7409 = vld [vmem:[%s2081 + $0x80] sm:$0xff]
        %v7410 = vld [vmem:[%s2081 + $0x90] sm:$0xff]
        %v7411 = vld [vmem:[%s2081 + $0x98] sm:$0xff]
        %v7412 = vld [vmem:[%s2081 + $0xa8] sm:$0xff]
        %v7413 = vld [vmem:[%s2081 + $0xb0] sm:$0xff]
        %v7414 = vld [vmem:[%s2081 + $0xc0] sm:$0xff]
        %v7415 = vld [vmem:[%s2081 + $0xc8] sm:$0xff]
        %v7416 = vld [vmem:[%s2081 + $0xd8] sm:$0xff]
        %v7417 = vld [vmem:[%s2081 + $0xe0] sm:$0xff]
        %v7418 = vld [vmem:[%s2081 + $0xf0] sm:$0xff]
        %v7419 = vld [vmem:[%s2081 + $0xf8] sm:$0xff]
        %v7420 = vld [vmem:[%s2081 + $0x108] sm:$0xff]
        %v7421 = vld [vmem:[%s2081 + $0x110] sm:$0xff]
        %v7422 = vld [vmem:[%s2081 + $0x120] sm:$0xff]
        %v7423 = vld [vmem:[%s2081 + $0x128] sm:$0xff]
        %v7424 = vld [vmem:[%s2081 + $0x138] sm:$0xff]
        %v7425 = vld [vmem:[%s2081 + $0x140] sm:$0xff]
        %v7426 = vld [vmem:[%s2081 + $0x150] sm:$0xff]
        %v7427 = vld [vmem:[%s2081 + $0x158] sm:$0xff]
        %v7428 = vld [vmem:[%s2081 + $0x168] sm:$0xff]
        %v7429 = vld [vmem:[%s2081 + $0x170] sm:$0xff]
        %v7430 = vld [vmem:[%s2081 + $0x1] sm:$0xff]
        %v7431 = vld [vmem:[%s2081 + $0x9] sm:$0xff]
        %v7432 = vld [vmem:[%s2081 + $0x19] sm:$0xff]
        %v7433 = vld [vmem:[%s2081 + $0x21] sm:$0xff]
        %v7434 = vld [vmem:[%s2081 + $0x31] sm:$0xff]
        %v7435 = vld [vmem:[%s2081 + $0x39] sm:$0xff]
        %v7436 = vld [vmem:[%s2081 + $0x49] sm:$0xff]
        %v7437 = vld [vmem:[%s2081 + $0x51] sm:$0xff]
        %v7438 = vld [vmem:[%s2081 + $0x61] sm:$0xff]
        %v7439 = vld [vmem:[%s2081 + $0x69] sm:$0xff]
        %v7440 = vld [vmem:[%s2081 + $0x79] sm:$0xff]
        %v7441 = vld [vmem:[%s2081 + $0x81] sm:$0xff]
        %v7442 = vld [vmem:[%s2081 + $0x91] sm:$0xff]
        %v7443 = vld [vmem:[%s2081 + $0x99] sm:$0xff]
        %v7444 = vld [vmem:[%s2081 + $0xa9] sm:$0xff]
        %v7445 = vld [vmem:[%s2081 + $0xb1] sm:$0xff]
        %v7446 = vld [vmem:[%s2081 + $0xc1] sm:$0xff]
        %v7447 = vld [vmem:[%s2081 + $0xc9] sm:$0xff]
        %v7448 = vld [vmem:[%s2081 + $0xd9] sm:$0xff]
        %v7449 = vld [vmem:[%s2081 + $0xe1] sm:$0xff]
        %v7450 = vld [vmem:[%s2081 + $0xf1] sm:$0xff]
        %v7451 = vld [vmem:[%s2081 + $0xf9] sm:$0xff]
        %v7452 = vld [vmem:[%s2081 + $0x109] sm:$0xff]
        %v7453 = vld [vmem:[%s2081 + $0x111] sm:$0xff]
        %v7454 = vld [vmem:[%s2081 + $0x121] sm:$0xff]
        %v7455 = vld [vmem:[%s2081 + $0x129] sm:$0xff]
        %v7456 = vld [vmem:[%s2081 + $0x139] sm:$0xff]
        %v7457 = vld [vmem:[%s2081 + $0x141] sm:$0xff]
        %v7458 = vld [vmem:[%s2081 + $0x151] sm:$0xff]
        %v7459 = vld [vmem:[%s2081 + $0x159] sm:$0xff]
        %v7460 = vld [vmem:[%s2081 + $0x169] sm:$0xff]
        %v7461 = vld [vmem:[%s2081 + $0x171] sm:$0xff]
        %v7462 = vld [vmem:[%s2081 + $0x2] sm:$0xff]
        %v7463 = vld [vmem:[%s2081 + $0xa] sm:$0xff]
        %v7464 = vld [vmem:[%s2081 + $0x1a] sm:$0xff]
        %v7465 = vld [vmem:[%s2081 + $0x22] sm:$0xff]
        %v7466 = vld [vmem:[%s2081 + $0x32] sm:$0xff]
        %v7467 = vld [vmem:[%s2081 + $0x3a] sm:$0xff]
        %v7468 = vld [vmem:[%s2081 + $0x4a] sm:$0xff]
        %v7469 = vld [vmem:[%s2081 + $0x52] sm:$0xff]
        %v7470 = vld [vmem:[%s2081 + $0x62] sm:$0xff]
        %v7471 = vld [vmem:[%s2081 + $0x6a] sm:$0xff]
        %v7472 = vld [vmem:[%s2081 + $0x7a] sm:$0xff]
        %v7473 = vld [vmem:[%s2081 + $0x82] sm:$0xff]
        %v7474 = vld [vmem:[%s2081 + $0x92] sm:$0xff]
        %v7475 = vld [vmem:[%s2081 + $0x9a] sm:$0xff]
        %v7476 = vld [vmem:[%s2081 + $0xaa] sm:$0xff]
        %v7477 = vld [vmem:[%s2081 + $0xb2] sm:$0xff]
        %v7478 = vld [vmem:[%s2081 + $0xc2] sm:$0xff]
        %v7479 = vld [vmem:[%s2081 + $0xca] sm:$0xff]
        %v7480 = vld [vmem:[%s2081 + $0xda] sm:$0xff]
        %v7481 = vld [vmem:[%s2081 + $0xe2] sm:$0xff]
        %v7482 = vld [vmem:[%s2081 + $0xf2] sm:$0xff]
        %v7483 = vld [vmem:[%s2081 + $0xfa] sm:$0xff]
        %v7484 = vld [vmem:[%s2081 + $0x10a] sm:$0xff]
        %v7485 = vld [vmem:[%s2081 + $0x112] sm:$0xff]
        %v7486 = vld [vmem:[%s2081 + $0x122] sm:$0xff]
        %v7487 = vld [vmem:[%s2081 + $0x12a] sm:$0xff]
        %v7488 = vld [vmem:[%s2081 + $0x13a] sm:$0xff]
        %v7489 = vld [vmem:[%s2081 + $0x142] sm:$0xff]
        %v7490 = vld [vmem:[%s2081 + $0x152] sm:$0xff]
        %v7491 = vld [vmem:[%s2081 + $0x15a] sm:$0xff]
        %v7492 = vld [vmem:[%s2081 + $0x16a] sm:$0xff]
        %v7493 = vld [vmem:[%s2081 + $0x172] sm:$0xff]
        %v7494 = vld [vmem:[%s2111] sm:$0xff]
        %v7495 = vld [vmem:[%s2111 + $0x8] sm:$0xff]
        %v7496 = vld [vmem:[%s2111 + $0x18] sm:$0xff]
        %v7497 = vld [vmem:[%s2111 + $0x20] sm:$0xff]
        %v7498 = vld [vmem:[%s2111 + $0x30] sm:$0xff]
        %v7499 = vld [vmem:[%s2111 + $0x38] sm:$0xff]
        %v7500 = vld [vmem:[%s2111 + $0x48] sm:$0xff]
        %v7501 = vld [vmem:[%s2111 + $0x50] sm:$0xff]
        %v7502 = vld [vmem:[%s2111 + $0x60] sm:$0xff]
        %v7503 = vld [vmem:[%s2111 + $0x68] sm:$0xff]
        %v7504 = vld [vmem:[%s2111 + $0x78] sm:$0xff]
        %v7505 = vld [vmem:[%s2111 + $0x80] sm:$0xff]
        %v7506 = vld [vmem:[%s2111 + $0x90] sm:$0xff]
        %v7507 = vld [vmem:[%s2111 + $0x98] sm:$0xff]
        %v7508 = vld [vmem:[%s2111 + $0xa8] sm:$0xff]
        %v7509 = vld [vmem:[%s2111 + $0xb0] sm:$0xff]
        %v7510 = vld [vmem:[%s2111 + $0xc0] sm:$0xff]
        %v7511 = vld [vmem:[%s2111 + $0xc8] sm:$0xff]
        %v7512 = vld [vmem:[%s2111 + $0xd8] sm:$0xff]
        %v7513 = vld [vmem:[%s2111 + $0xe0] sm:$0xff]
        %v7514 = vld [vmem:[%s2111 + $0xf0] sm:$0xff]
        %v7515 = vld [vmem:[%s2111 + $0xf8] sm:$0xff]
        %v7516 = vld [vmem:[%s2111 + $0x108] sm:$0xff]
        %v7517 = vld [vmem:[%s2111 + $0x110] sm:$0xff]
        %v7518 = vld [vmem:[%s2111 + $0x120] sm:$0xff]
        %v7519 = vld [vmem:[%s2111 + $0x128] sm:$0xff]
        %v7520 = vld [vmem:[%s2111 + $0x138] sm:$0xff]
        %v7521 = vld [vmem:[%s2111 + $0x140] sm:$0xff]
        %v7522 = vld [vmem:[%s2111 + $0x150] sm:$0xff]
        %v7523 = vld [vmem:[%s2111 + $0x158] sm:$0xff]
        %v7524 = vld [vmem:[%s2111 + $0x168] sm:$0xff]
        %v7525 = vld [vmem:[%s2111 + $0x170] sm:$0xff]
        %v7526 = vld [vmem:[%s2111 + $0x1] sm:$0xff]
        %v7527 = vld [vmem:[%s2111 + $0x9] sm:$0xff]
        %v7528 = vld [vmem:[%s2111 + $0x19] sm:$0xff]
        %v7529 = vld [vmem:[%s2111 + $0x21] sm:$0xff]
        %v7530 = vld [vmem:[%s2111 + $0x31] sm:$0xff]
        %v7531 = vld [vmem:[%s2111 + $0x39] sm:$0xff]
        %v7532 = vld [vmem:[%s2111 + $0x49] sm:$0xff]
        %v7533 = vld [vmem:[%s2111 + $0x51] sm:$0xff]
        %v7534 = vld [vmem:[%s2111 + $0x61] sm:$0xff]
        %v7535 = vld [vmem:[%s2111 + $0x69] sm:$0xff]
        %v7536 = vld [vmem:[%s2111 + $0x79] sm:$0xff]
        %v7537 = vld [vmem:[%s2111 + $0x81] sm:$0xff]
        %v7538 = vld [vmem:[%s2111 + $0x91] sm:$0xff]
        %v7539 = vld [vmem:[%s2111 + $0x99] sm:$0xff]
        %v7540 = vld [vmem:[%s2111 + $0xa9] sm:$0xff]
        %v7541 = vld [vmem:[%s2111 + $0xb1] sm:$0xff]
        %v7542 = vld [vmem:[%s2111 + $0xc1] sm:$0xff]
        %v7543 = vld [vmem:[%s2111 + $0xc9] sm:$0xff]
        %v7544 = vld [vmem:[%s2111 + $0xd9] sm:$0xff]
        %v7545 = vld [vmem:[%s2111 + $0xe1] sm:$0xff]
        %v7546 = vld [vmem:[%s2111 + $0xf1] sm:$0xff]
        %v7547 = vld [vmem:[%s2111 + $0xf9] sm:$0xff]
        %v7548 = vld [vmem:[%s2111 + $0x109] sm:$0xff]
        %v7549 = vld [vmem:[%s2111 + $0x111] sm:$0xff]
        %v7550 = vld [vmem:[%s2111 + $0x121] sm:$0xff]
        %v7551 = vld [vmem:[%s2111 + $0x129] sm:$0xff]
        %v7552 = vld [vmem:[%s2111 + $0x139] sm:$0xff]
        %v7553 = vld [vmem:[%s2111 + $0x141] sm:$0xff]
        %v7554 = vld [vmem:[%s2111 + $0x151] sm:$0xff]
        %v7555 = vld [vmem:[%s2111 + $0x159] sm:$0xff]
        %v7556 = vld [vmem:[%s2111 + $0x169] sm:$0xff]
        %v7557 = vld [vmem:[%s2111 + $0x171] sm:$0xff]
        %v7558 = vld [vmem:[%s2111 + $0x2] sm:$0xff]
        %v7559 = vld [vmem:[%s2111 + $0xa] sm:$0xff]
        %v7560 = vld [vmem:[%s2111 + $0x1a] sm:$0xff]
        %v7561 = vld [vmem:[%s2111 + $0x22] sm:$0xff]
        %v7562 = vld [vmem:[%s2111 + $0x32] sm:$0xff]
        %v7563 = vld [vmem:[%s2111 + $0x3a] sm:$0xff]
        %v7564 = vld [vmem:[%s2111 + $0x4a] sm:$0xff]
        %v7565 = vld [vmem:[%s2111 + $0x52] sm:$0xff]
        %v7566 = vld [vmem:[%s2111 + $0x62] sm:$0xff]
        %v7567 = vld [vmem:[%s2111 + $0x6a] sm:$0xff]
        %v7568 = vld [vmem:[%s2111 + $0x7a] sm:$0xff]
        %v7569 = vld [vmem:[%s2111 + $0x82] sm:$0xff]
        %v7570 = vld [vmem:[%s2111 + $0x92] sm:$0xff]
        %v7571 = vld [vmem:[%s2111 + $0x9a] sm:$0xff]
        %v7572 = vld [vmem:[%s2111 + $0xaa] sm:$0xff]
        %v7573 = vld [vmem:[%s2111 + $0xb2] sm:$0xff]
        %v7574 = vld [vmem:[%s2111 + $0xc2] sm:$0xff]
        %v7575 = vld [vmem:[%s2111 + $0xca] sm:$0xff]
        %v7576 = vld [vmem:[%s2111 + $0xda] sm:$0xff]
        %v7577 = vld [vmem:[%s2111 + $0xe2] sm:$0xff]
        %v7578 = vld [vmem:[%s2111 + $0xf2] sm:$0xff]
        %v7579 = vld [vmem:[%s2111 + $0xfa] sm:$0xff]
        %v7580 = vld [vmem:[%s2111 + $0x10a] sm:$0xff]
        %v7581 = vld [vmem:[%s2111 + $0x112] sm:$0xff]
        %v7582 = vld [vmem:[%s2111 + $0x122] sm:$0xff]
        %v7583 = vld [vmem:[%s2111 + $0x12a] sm:$0xff]
        %v7584 = vld [vmem:[%s2111 + $0x13a] sm:$0xff]
        %v7585 = vld [vmem:[%s2111 + $0x142] sm:$0xff]
        %v7586 = vld [vmem:[%s2111 + $0x152] sm:$0xff]
        %v7587 = vld [vmem:[%s2111 + $0x15a] sm:$0xff]
        %v7588 = vld [vmem:[%s2111 + $0x16a] sm:$0xff]
        %v7589 = vld [vmem:[%s2111 + $0x172] sm:$0xff]
        %7622 = vrot.lane.b32.xlu0 %v7334, 16
        %v7623 = vpop.permute.xlu0 %7622
        %7624 = vrot.lane.b32.xlu0 %v7335, 16
        %v7625 = vpop.permute.xlu0 %7624
        %7626 = vrot.lane.b32.xlu0 %v7336, 16
        %v7627 = vpop.permute.xlu0 %7626
        %7628 = vrot.lane.b32.xlu0 %v7337, 16
        %v7629 = vpop.permute.xlu0 %7628
        %7630 = vrot.lane.b32.xlu0 %v7338, 16
        %v7631 = vpop.permute.xlu0 %7630
        %7632 = vrot.lane.b32.xlu0 %v7339, 16
        %v7633 = vpop.permute.xlu0 %7632
        %7634 = vrot.lane.b32.xlu0 %v7340, 16
        %v7635 = vpop.permute.xlu0 %7634
        %7636 = vrot.lane.b32.xlu0 %v7341, 16
        %v7637 = vpop.permute.xlu0 %7636
        %7638 = vrot.lane.b32.xlu0 %v7342, 16
        %v7639 = vpop.permute.xlu0 %7638
        %7640 = vrot.lane.b32.xlu0 %v7343, 16
        %v7641 = vpop.permute.xlu0 %7640
        %7642 = vrot.lane.b32.xlu0 %v7344, 16
        %v7643 = vpop.permute.xlu0 %7642
        %7644 = vrot.lane.b32.xlu0 %v7345, 16
        %v7645 = vpop.permute.xlu0 %7644
        %7646 = vrot.lane.b32.xlu0 %v7346, 16
        %v7647 = vpop.permute.xlu0 %7646
        %7648 = vrot.lane.b32.xlu0 %v7347, 16
        %v7649 = vpop.permute.xlu0 %7648
        %7650 = vrot.lane.b32.xlu0 %v7348, 16
        %v7651 = vpop.permute.xlu0 %7650
        %7652 = vrot.lane.b32.xlu0 %v7349, 16
        %v7653 = vpop.permute.xlu0 %7652
        %7654 = vrot.lane.b32.xlu0 %v7350, 16
        %v7655 = vpop.permute.xlu0 %7654
        %7656 = vrot.lane.b32.xlu0 %v7351, 16
        %v7657 = vpop.permute.xlu0 %7656
        %7658 = vrot.lane.b32.xlu0 %v7352, 16
        %v7659 = vpop.permute.xlu0 %7658
        %7660 = vrot.lane.b32.xlu0 %v7353, 16
        %v7661 = vpop.permute.xlu0 %7660
        %7662 = vrot.lane.b32.xlu0 %v7354, 16
        %v7663 = vpop.permute.xlu0 %7662
        %7664 = vrot.lane.b32.xlu0 %v7355, 16
        %v7665 = vpop.permute.xlu0 %7664
        %7666 = vrot.lane.b32.xlu0 %v7356, 16
        %v7667 = vpop.permute.xlu0 %7666
        %7668 = vrot.lane.b32.xlu0 %v7357, 16
        %v7669 = vpop.permute.xlu0 %7668
        %7670 = vrot.lane.b32.xlu0 %v7358, 16
        %v7671 = vpop.permute.xlu0 %7670
        %7672 = vrot.lane.b32.xlu0 %v7359, 16
        %v7673 = vpop.permute.xlu0 %7672
        %7674 = vrot.lane.b32.xlu0 %v7360, 16
        %v7675 = vpop.permute.xlu0 %7674
        %7676 = vrot.lane.b32.xlu0 %v7361, 16
        %v7677 = vpop.permute.xlu0 %7676
        %7678 = vrot.lane.b32.xlu0 %v7362, 16
        %v7679 = vpop.permute.xlu0 %7678
        %7680 = vrot.lane.b32.xlu0 %v7363, 16
        %v7681 = vpop.permute.xlu0 %7680
        %7682 = vrot.lane.b32.xlu0 %v7364, 16
        %v7683 = vpop.permute.xlu0 %7682
        %7684 = vrot.lane.b32.xlu0 %v7365, 16
        %v7685 = vpop.permute.xlu0 %7684
        %7750 = vrot.lane.b32.xlu0 %v7366, 32
        %v7751 = vpop.permute.xlu0 %7750
        %7752 = vrot.lane.b32.xlu0 %v7367, 32
        %v7753 = vpop.permute.xlu0 %7752
        %7754 = vrot.lane.b32.xlu0 %v7368, 32
        %v7755 = vpop.permute.xlu0 %7754
        %7756 = vrot.lane.b32.xlu0 %v7369, 32
        %v7757 = vpop.permute.xlu0 %7756
        %7758 = vrot.lane.b32.xlu0 %v7370, 32
        %v7759 = vpop.permute.xlu0 %7758
        %7760 = vrot.lane.b32.xlu0 %v7371, 32
        %v7761 = vpop.permute.xlu0 %7760
        %7762 = vrot.lane.b32.xlu0 %v7372, 32
        %v7763 = vpop.permute.xlu0 %7762
        %7764 = vrot.lane.b32.xlu0 %v7373, 32
        %v7765 = vpop.permute.xlu0 %7764
        %7766 = vrot.lane.b32.xlu0 %v7374, 32
        %v7767 = vpop.permute.xlu0 %7766
        %7768 = vrot.lane.b32.xlu0 %v7375, 32
        %v7769 = vpop.permute.xlu0 %7768
        %7770 = vrot.lane.b32.xlu0 %v7376, 32
        %v7771 = vpop.permute.xlu0 %7770
        %7772 = vrot.lane.b32.xlu0 %v7377, 32
        %v7773 = vpop.permute.xlu0 %7772
        %7774 = vrot.lane.b32.xlu0 %v7378, 32
        %v7775 = vpop.permute.xlu0 %7774
        %7776 = vrot.lane.b32.xlu0 %v7379, 32
        %v7777 = vpop.permute.xlu0 %7776
        %7778 = vrot.lane.b32.xlu0 %v7380, 32
        %v7779 = vpop.permute.xlu0 %7778
        %7780 = vrot.lane.b32.xlu0 %v7381, 32
        %v7781 = vpop.permute.xlu0 %7780
        %7782 = vrot.lane.b32.xlu0 %v7382, 32
        %v7783 = vpop.permute.xlu0 %7782
        %7784 = vrot.lane.b32.xlu0 %v7383, 32
        %v7785 = vpop.permute.xlu0 %7784
        %7786 = vrot.lane.b32.xlu0 %v7384, 32
        %v7787 = vpop.permute.xlu0 %7786
        %7788 = vrot.lane.b32.xlu0 %v7385, 32
        %v7789 = vpop.permute.xlu0 %7788
        %7790 = vrot.lane.b32.xlu0 %v7386, 32
        %v7791 = vpop.permute.xlu0 %7790
        %7792 = vrot.lane.b32.xlu0 %v7387, 32
        %v7793 = vpop.permute.xlu0 %7792
        %7794 = vrot.lane.b32.xlu0 %v7388, 32
        %v7795 = vpop.permute.xlu0 %7794
        %7796 = vrot.lane.b32.xlu0 %v7389, 32
        %v7797 = vpop.permute.xlu0 %7796
        %7798 = vrot.lane.b32.xlu0 %v7390, 32
        %v7799 = vpop.permute.xlu0 %7798
        %7800 = vrot.lane.b32.xlu0 %v7391, 32
        %v7801 = vpop.permute.xlu0 %7800
        %7802 = vrot.lane.b32.xlu0 %v7392, 32
        %v7803 = vpop.permute.xlu0 %7802
        %7804 = vrot.lane.b32.xlu0 %v7393, 32
        %v7805 = vpop.permute.xlu0 %7804
        %7806 = vrot.lane.b32.xlu0 %v7394, 32
        %v7807 = vpop.permute.xlu0 %7806
        %7808 = vrot.lane.b32.xlu0 %v7395, 32
        %v7809 = vpop.permute.xlu0 %7808
        %7810 = vrot.lane.b32.xlu0 %v7396, 32
        %v7811 = vpop.permute.xlu0 %7810
        %7812 = vrot.lane.b32.xlu0 %v7397, 32
        %v7813 = vpop.permute.xlu0 %7812
        %7878 = vrot.lane.b32.xlu0 %v7398, 48
        %v7879 = vpop.permute.xlu0 %7878
        %7880 = vrot.lane.b32.xlu0 %v7399, 48
        %v7881 = vpop.permute.xlu0 %7880
        %7882 = vrot.lane.b32.xlu0 %v7400, 48
        %v7883 = vpop.permute.xlu0 %7882
        %7884 = vrot.lane.b32.xlu0 %v7401, 48
        %v7885 = vpop.permute.xlu0 %7884
        %7886 = vrot.lane.b32.xlu0 %v7402, 48
        %v7887 = vpop.permute.xlu0 %7886
        %7888 = vrot.lane.b32.xlu0 %v7403, 48
        %v7889 = vpop.permute.xlu0 %7888
        %7890 = vrot.lane.b32.xlu0 %v7404, 48
        %v7891 = vpop.permute.xlu0 %7890
        %7892 = vrot.lane.b32.xlu0 %v7405, 48
        %v7893 = vpop.permute.xlu0 %7892
        %7894 = vrot.lane.b32.xlu0 %v7406, 48
        %v7895 = vpop.permute.xlu0 %7894
        %7896 = vrot.lane.b32.xlu0 %v7407, 48
        %v7897 = vpop.permute.xlu0 %7896
        %7898 = vrot.lane.b32.xlu0 %v7408, 48
        %v7899 = vpop.permute.xlu0 %7898
        %7900 = vrot.lane.b32.xlu0 %v7409, 48
        %v7901 = vpop.permute.xlu0 %7900
        %7902 = vrot.lane.b32.xlu0 %v7410, 48
        %v7903 = vpop.permute.xlu0 %7902
        %7904 = vrot.lane.b32.xlu0 %v7411, 48
        %v7905 = vpop.permute.xlu0 %7904
        %7906 = vrot.lane.b32.xlu0 %v7412, 48
        %v7907 = vpop.permute.xlu0 %7906
        %7908 = vrot.lane.b32.xlu0 %v7413, 48
        %v7909 = vpop.permute.xlu0 %7908
        %7910 = vrot.lane.b32.xlu0 %v7414, 48
        %v7911 = vpop.permute.xlu0 %7910
        %7912 = vrot.lane.b32.xlu0 %v7415, 48
        %v7913 = vpop.permute.xlu0 %7912
        %7914 = vrot.lane.b32.xlu0 %v7416, 48
        %v7915 = vpop.permute.xlu0 %7914
        %7916 = vrot.lane.b32.xlu0 %v7417, 48
        %v7917 = vpop.permute.xlu0 %7916
        %7918 = vrot.lane.b32.xlu0 %v7418, 48
        %v7919 = vpop.permute.xlu0 %7918
        %7920 = vrot.lane.b32.xlu0 %v7419, 48
        %v7921 = vpop.permute.xlu0 %7920
        %7922 = vrot.lane.b32.xlu0 %v7420, 48
        %v7923 = vpop.permute.xlu0 %7922
        %7924 = vrot.lane.b32.xlu0 %v7421, 48
        %v7925 = vpop.permute.xlu0 %7924
        %7926 = vrot.lane.b32.xlu0 %v7422, 48
        %v7927 = vpop.permute.xlu0 %7926
        %7928 = vrot.lane.b32.xlu0 %v7423, 48
        %v7929 = vpop.permute.xlu0 %7928
        %7930 = vrot.lane.b32.xlu0 %v7424, 48
        %v7931 = vpop.permute.xlu0 %7930
        %7932 = vrot.lane.b32.xlu0 %v7425, 48
        %v7933 = vpop.permute.xlu0 %7932
        %7934 = vrot.lane.b32.xlu0 %v7426, 48
        %v7935 = vpop.permute.xlu0 %7934
        %7936 = vrot.lane.b32.xlu0 %v7427, 48
        %v7937 = vpop.permute.xlu0 %7936
        %7938 = vrot.lane.b32.xlu0 %v7428, 48
        %v7939 = vpop.permute.xlu0 %7938
        %7940 = vrot.lane.b32.xlu0 %v7429, 48
        %v7941 = vpop.permute.xlu0 %7940
        %8006 = vrot.lane.b32.xlu0 %v7430, 64
        %v8007 = vpop.permute.xlu0 %8006
        %8008 = vrot.lane.b32.xlu0 %v7431, 64
        %v8009 = vpop.permute.xlu0 %8008
        %8010 = vrot.lane.b32.xlu0 %v7432, 64
        %v8011 = vpop.permute.xlu0 %8010
        %8012 = vrot.lane.b32.xlu0 %v7433, 64
        %v8013 = vpop.permute.xlu0 %8012
        %8014 = vrot.lane.b32.xlu0 %v7434, 64
        %v8015 = vpop.permute.xlu0 %8014
        %8016 = vrot.lane.b32.xlu0 %v7435, 64
        %v8017 = vpop.permute.xlu0 %8016
        %8018 = vrot.lane.b32.xlu0 %v7436, 64
        %v8019 = vpop.permute.xlu0 %8018
        %8020 = vrot.lane.b32.xlu0 %v7437, 64
        %v8021 = vpop.permute.xlu0 %8020
        %8022 = vrot.lane.b32.xlu0 %v7438, 64
        %v8023 = vpop.permute.xlu0 %8022
        %8024 = vrot.lane.b32.xlu0 %v7439, 64
        %v8025 = vpop.permute.xlu0 %8024
        %8026 = vrot.lane.b32.xlu0 %v7440, 64
        %v8027 = vpop.permute.xlu0 %8026
        %8028 = vrot.lane.b32.xlu0 %v7441, 64
        %v8029 = vpop.permute.xlu0 %8028
        %8030 = vrot.lane.b32.xlu0 %v7442, 64
        %v8031 = vpop.permute.xlu0 %8030
        %8032 = vrot.lane.b32.xlu0 %v7443, 64
        %v8033 = vpop.permute.xlu0 %8032
        %8034 = vrot.lane.b32.xlu0 %v7444, 64
        %v8035 = vpop.permute.xlu0 %8034
        %8036 = vrot.lane.b32.xlu0 %v7445, 64
        %v8037 = vpop.permute.xlu0 %8036
        %8038 = vrot.lane.b32.xlu0 %v7446, 64
        %v8039 = vpop.permute.xlu0 %8038
        %8040 = vrot.lane.b32.xlu0 %v7447, 64
        %v8041 = vpop.permute.xlu0 %8040
        %8042 = vrot.lane.b32.xlu0 %v7448, 64
        %v8043 = vpop.permute.xlu0 %8042
        %8044 = vrot.lane.b32.xlu0 %v7449, 64
        %v8045 = vpop.permute.xlu0 %8044
        %8046 = vrot.lane.b32.xlu0 %v7450, 64
        %v8047 = vpop.permute.xlu0 %8046
        %8048 = vrot.lane.b32.xlu0 %v7451, 64
        %v8049 = vpop.permute.xlu0 %8048
        %8050 = vrot.lane.b32.xlu0 %v7452, 64
        %v8051 = vpop.permute.xlu0 %8050
        %8052 = vrot.lane.b32.xlu0 %v7453, 64
        %v8053 = vpop.permute.xlu0 %8052
        %8054 = vrot.lane.b32.xlu0 %v7454, 64
        %v8055 = vpop.permute.xlu0 %8054
        %8056 = vrot.lane.b32.xlu0 %v7455, 64
        %v8057 = vpop.permute.xlu0 %8056
        %8058 = vrot.lane.b32.xlu0 %v7456, 64
        %v8059 = vpop.permute.xlu0 %8058
        %8060 = vrot.lane.b32.xlu0 %v7457, 64
        %v8061 = vpop.permute.xlu0 %8060
        %8062 = vrot.lane.b32.xlu0 %v7458, 64
        %v8063 = vpop.permute.xlu0 %8062
        %8064 = vrot.lane.b32.xlu0 %v7459, 64
        %v8065 = vpop.permute.xlu0 %8064
        %8066 = vrot.lane.b32.xlu0 %v7460, 64
        %v8067 = vpop.permute.xlu0 %8066
        %8068 = vrot.lane.b32.xlu0 %v7461, 64
        %v8069 = vpop.permute.xlu0 %8068
        %8134 = vrot.lane.b32.xlu0 %v7462, 80
        %v8135 = vpop.permute.xlu0 %8134
        %8136 = vrot.lane.b32.xlu0 %v7463, 80
        %v8137 = vpop.permute.xlu0 %8136
        %8138 = vrot.lane.b32.xlu0 %v7464, 80
        %v8139 = vpop.permute.xlu0 %8138
        %8140 = vrot.lane.b32.xlu0 %v7465, 80
        %v8141 = vpop.permute.xlu0 %8140
        %8142 = vrot.lane.b32.xlu0 %v7466, 80
        %v8143 = vpop.permute.xlu0 %8142
        %8144 = vrot.lane.b32.xlu0 %v7467, 80
        %v8145 = vpop.permute.xlu0 %8144
        %8146 = vrot.lane.b32.xlu0 %v7468, 80
        %v8147 = vpop.permute.xlu0 %8146
        %8148 = vrot.lane.b32.xlu0 %v7469, 80
        %v8149 = vpop.permute.xlu0 %8148
        %8150 = vrot.lane.b32.xlu0 %v7470, 80
        %v8151 = vpop.permute.xlu0 %8150
        %8152 = vrot.lane.b32.xlu0 %v7471, 80
        %v8153 = vpop.permute.xlu0 %8152
        %8154 = vrot.lane.b32.xlu0 %v7472, 80
        %v8155 = vpop.permute.xlu0 %8154
        %8156 = vrot.lane.b32.xlu0 %v7473, 80
        %v8157 = vpop.permute.xlu0 %8156
        %8158 = vrot.lane.b32.xlu0 %v7474, 80
        %v8159 = vpop.permute.xlu0 %8158
        %8160 = vrot.lane.b32.xlu0 %v7475, 80
        %v8161 = vpop.permute.xlu0 %8160
        %8162 = vrot.lane.b32.xlu0 %v7476, 80
        %v8163 = vpop.permute.xlu0 %8162
        %8164 = vrot.lane.b32.xlu0 %v7477, 80
        %v8165 = vpop.permute.xlu0 %8164
        %8166 = vrot.lane.b32.xlu0 %v7478, 80
        %v8167 = vpop.permute.xlu0 %8166
        %8168 = vrot.lane.b32.xlu0 %v7479, 80
        %v8169 = vpop.permute.xlu0 %8168
        %8170 = vrot.lane.b32.xlu0 %v7480, 80
        %v8171 = vpop.permute.xlu0 %8170
        %8172 = vrot.lane.b32.xlu0 %v7481, 80
        %v8173 = vpop.permute.xlu0 %8172
        %8174 = vrot.lane.b32.xlu0 %v7482, 80
        %v8175 = vpop.permute.xlu0 %8174
        %8176 = vrot.lane.b32.xlu0 %v7483, 80
        %v8177 = vpop.permute.xlu0 %8176
        %8178 = vrot.lane.b32.xlu0 %v7484, 80
        %v8179 = vpop.permute.xlu0 %8178
        %8180 = vrot.lane.b32.xlu0 %v7485, 80
        %v8181 = vpop.permute.xlu0 %8180
        %8182 = vrot.lane.b32.xlu0 %v7486, 80
        %v8183 = vpop.permute.xlu0 %8182
        %8184 = vrot.lane.b32.xlu0 %v7487, 80
        %v8185 = vpop.permute.xlu0 %8184
        %8186 = vrot.lane.b32.xlu0 %v7488, 80
        %v8187 = vpop.permute.xlu0 %8186
        %8188 = vrot.lane.b32.xlu0 %v7489, 80
        %v8189 = vpop.permute.xlu0 %8188
        %8190 = vrot.lane.b32.xlu0 %v7490, 80
        %v8191 = vpop.permute.xlu0 %8190
        %8192 = vrot.lane.b32.xlu0 %v7491, 80
        %v8193 = vpop.permute.xlu0 %8192
        %8194 = vrot.lane.b32.xlu0 %v7492, 80
        %v8195 = vpop.permute.xlu0 %8194
        %8196 = vrot.lane.b32.xlu0 %v7493, 80
        %v8197 = vpop.permute.xlu0 %8196
        %8262 = vrot.lane.b32.xlu0 %v7494, 96
        %v8263 = vpop.permute.xlu0 %8262
        %8264 = vrot.lane.b32.xlu0 %v7495, 96
        %v8265 = vpop.permute.xlu0 %8264
        %8266 = vrot.lane.b32.xlu0 %v7496, 96
        %v8267 = vpop.permute.xlu0 %8266
        %8268 = vrot.lane.b32.xlu0 %v7497, 96
        %v8269 = vpop.permute.xlu0 %8268
        %8270 = vrot.lane.b32.xlu0 %v7498, 96
        %v8271 = vpop.permute.xlu0 %8270
        %8272 = vrot.lane.b32.xlu0 %v7499, 96
        %v8273 = vpop.permute.xlu0 %8272
        %8274 = vrot.lane.b32.xlu0 %v7500, 96
        %v8275 = vpop.permute.xlu0 %8274
        %8276 = vrot.lane.b32.xlu0 %v7501, 96
        %v8277 = vpop.permute.xlu0 %8276
        %8278 = vrot.lane.b32.xlu0 %v7502, 96
        %v8279 = vpop.permute.xlu0 %8278
        %8280 = vrot.lane.b32.xlu0 %v7503, 96
        %v8281 = vpop.permute.xlu0 %8280
        %8282 = vrot.lane.b32.xlu0 %v7504, 96
        %v8283 = vpop.permute.xlu0 %8282
        %8284 = vrot.lane.b32.xlu0 %v7505, 96
        %v8285 = vpop.permute.xlu0 %8284
        %8286 = vrot.lane.b32.xlu0 %v7506, 96
        %v8287 = vpop.permute.xlu0 %8286
        %8288 = vrot.lane.b32.xlu0 %v7507, 96
        %v8289 = vpop.permute.xlu0 %8288
        %8290 = vrot.lane.b32.xlu0 %v7508, 96
        %v8291 = vpop.permute.xlu0 %8290
        %8292 = vrot.lane.b32.xlu0 %v7509, 96
        %v8293 = vpop.permute.xlu0 %8292
        %8294 = vrot.lane.b32.xlu0 %v7510, 96
        %v8295 = vpop.permute.xlu0 %8294
        %8296 = vrot.lane.b32.xlu0 %v7511, 96
        %v8297 = vpop.permute.xlu0 %8296
        %8298 = vrot.lane.b32.xlu0 %v7512, 96
        %v8299 = vpop.permute.xlu0 %8298
        %8300 = vrot.lane.b32.xlu0 %v7513, 96
        %v8301 = vpop.permute.xlu0 %8300
        %8302 = vrot.lane.b32.xlu0 %v7514, 96
        %v8303 = vpop.permute.xlu0 %8302
        %8304 = vrot.lane.b32.xlu0 %v7515, 96
        %v8305 = vpop.permute.xlu0 %8304
        %8306 = vrot.lane.b32.xlu0 %v7516, 96
        %v8307 = vpop.permute.xlu0 %8306
        %8308 = vrot.lane.b32.xlu0 %v7517, 96
        %v8309 = vpop.permute.xlu0 %8308
        %8310 = vrot.lane.b32.xlu0 %v7518, 96
        %v8311 = vpop.permute.xlu0 %8310
        %8312 = vrot.lane.b32.xlu0 %v7519, 96
        %v8313 = vpop.permute.xlu0 %8312
        %8314 = vrot.lane.b32.xlu0 %v7520, 96
        %v8315 = vpop.permute.xlu0 %8314
        %8316 = vrot.lane.b32.xlu0 %v7521, 96
        %v8317 = vpop.permute.xlu0 %8316
        %8318 = vrot.lane.b32.xlu0 %v7522, 96
        %v8319 = vpop.permute.xlu0 %8318
        %8320 = vrot.lane.b32.xlu0 %v7523, 96
        %v8321 = vpop.permute.xlu0 %8320
        %8322 = vrot.lane.b32.xlu0 %v7524, 96
        %v8323 = vpop.permute.xlu0 %8322
        %8324 = vrot.lane.b32.xlu0 %v7525, 96
        %v8325 = vpop.permute.xlu0 %8324
        %8390 = vrot.lane.b32.xlu0 %v7526, 112
        %v8391 = vpop.permute.xlu0 %8390
        %8392 = vrot.lane.b32.xlu0 %v7527, 112
        %v8393 = vpop.permute.xlu0 %8392
        %8394 = vrot.lane.b32.xlu0 %v7528, 112
        %v8395 = vpop.permute.xlu0 %8394
        %8396 = vrot.lane.b32.xlu0 %v7529, 112
        %v8397 = vpop.permute.xlu0 %8396
        %8398 = vrot.lane.b32.xlu0 %v7530, 112
        %v8399 = vpop.permute.xlu0 %8398
        %8400 = vrot.lane.b32.xlu0 %v7531, 112
        %v8401 = vpop.permute.xlu0 %8400
        %8402 = vrot.lane.b32.xlu0 %v7532, 112
        %v8403 = vpop.permute.xlu0 %8402
        %8404 = vrot.lane.b32.xlu0 %v7533, 112
        %v8405 = vpop.permute.xlu0 %8404
        %8406 = vrot.lane.b32.xlu0 %v7534, 112
        %v8407 = vpop.permute.xlu0 %8406
        %8408 = vrot.lane.b32.xlu0 %v7535, 112
        %v8409 = vpop.permute.xlu0 %8408
        %8410 = vrot.lane.b32.xlu0 %v7536, 112
        %v8411 = vpop.permute.xlu0 %8410
        %8412 = vrot.lane.b32.xlu0 %v7537, 112
        %v8413 = vpop.permute.xlu0 %8412
        %8414 = vrot.lane.b32.xlu0 %v7538, 112
        %v8415 = vpop.permute.xlu0 %8414
        %8416 = vrot.lane.b32.xlu0 %v7539, 112
        %v8417 = vpop.permute.xlu0 %8416
        %8418 = vrot.lane.b32.xlu0 %v7540, 112
        %v8419 = vpop.permute.xlu0 %8418
        %8420 = vrot.lane.b32.xlu0 %v7541, 112
        %v8421 = vpop.permute.xlu0 %8420
        %8422 = vrot.lane.b32.xlu0 %v7542, 112
        %v8423 = vpop.permute.xlu0 %8422
        %8424 = vrot.lane.b32.xlu0 %v7543, 112
        %v8425 = vpop.permute.xlu0 %8424
        %8426 = vrot.lane.b32.xlu0 %v7544, 112
        %v8427 = vpop.permute.xlu0 %8426
        %8428 = vrot.lane.b32.xlu0 %v7545, 112
        %v8429 = vpop.permute.xlu0 %8428
        %8430 = vrot.lane.b32.xlu0 %v7546, 112
        %v8431 = vpop.permute.xlu0 %8430
        %8432 = vrot.lane.b32.xlu0 %v7547, 112
        %v8433 = vpop.permute.xlu0 %8432
        %8434 = vrot.lane.b32.xlu0 %v7548, 112
        %v8435 = vpop.permute.xlu0 %8434
        %8436 = vrot.lane.b32.xlu0 %v7549, 112
        %v8437 = vpop.permute.xlu0 %8436
        %8438 = vrot.lane.b32.xlu0 %v7550, 112
        %v8439 = vpop.permute.xlu0 %8438
        %8440 = vrot.lane.b32.xlu0 %v7551, 112
        %v8441 = vpop.permute.xlu0 %8440
        %8442 = vrot.lane.b32.xlu0 %v7552, 112
        %v8443 = vpop.permute.xlu0 %8442
        %8444 = vrot.lane.b32.xlu0 %v7553, 112
        %v8445 = vpop.permute.xlu0 %8444
        %8446 = vrot.lane.b32.xlu0 %v7554, 112
        %v8447 = vpop.permute.xlu0 %8446
        %8448 = vrot.lane.b32.xlu0 %v7555, 112
        %v8449 = vpop.permute.xlu0 %8448
        %8450 = vrot.lane.b32.xlu0 %v7556, 112
        %v8451 = vpop.permute.xlu0 %8450
        %8452 = vrot.lane.b32.xlu0 %v7557, 112
        %v8453 = vpop.permute.xlu0 %8452
        %v8486 = vsel %vm2686, %v7302, %v7623
        %v8487 = vsel %vm2686, %v7303, %v7625
        %v8488 = vsel %vm2686, %v7304, %v7627
        %v8489 = vsel %vm2686, %v7305, %v7629
        %v8490 = vsel %vm2686, %v7306, %v7631
        %v8491 = vsel %vm2686, %v7307, %v7633
        %v8492 = vsel %vm2686, %v7308, %v7635
        %v8493 = vsel %vm2686, %v7309, %v7637
        %v8494 = vsel %vm2686, %v7310, %v7639
        %v8495 = vsel %vm2686, %v7311, %v7641
        %v8496 = vsel %vm2686, %v7312, %v7643
        %v8497 = vsel %vm2686, %v7313, %v7645
        %v8498 = vsel %vm2686, %v7314, %v7647
        %v8499 = vsel %vm2686, %v7315, %v7649
        %v8500 = vsel %vm2686, %v7316, %v7651
        %v8501 = vsel %vm2686, %v7317, %v7653
        %v8502 = vsel %vm2686, %v7318, %v7655
        %v8503 = vsel %vm2686, %v7319, %v7657
        %v8504 = vsel %vm2686, %v7320, %v7659
        %v8505 = vsel %vm2686, %v7321, %v7661
        %v8506 = vsel %vm2686, %v7322, %v7663
        %v8507 = vsel %vm2686, %v7323, %v7665
        %v8508 = vsel %vm2686, %v7324, %v7667
        %v8509 = vsel %vm2686, %v7325, %v7669
        %v8510 = vsel %vm2686, %v7326, %v7671
        %v8511 = vsel %vm2686, %v7327, %v7673
        %v8512 = vsel %vm2686, %v7328, %v7675
        %v8513 = vsel %vm2686, %v7329, %v7677
        %v8514 = vsel %vm2686, %v7330, %v7679
        %v8515 = vsel %vm2686, %v7331, %v7681
        %v8516 = vsel %vm2686, %v7332, %v7683
        %v8517 = vsel %vm2686, %v7333, %v7685
        %v8518 = vsel %vm3629, %v8486, %v7751
        %v8519 = vsel %vm3629, %v8487, %v7753
        %v8520 = vsel %vm3629, %v8488, %v7755
        %v8521 = vsel %vm3629, %v8489, %v7757
        %v8522 = vsel %vm3629, %v8490, %v7759
        %v8523 = vsel %vm3629, %v8491, %v7761
        %v8524 = vsel %vm3629, %v8492, %v7763
        %v8525 = vsel %vm3629, %v8493, %v7765
        %v8526 = vsel %vm3629, %v8494, %v7767
        %v8527 = vsel %vm3629, %v8495, %v7769
        %v8528 = vsel %vm3629, %v8496, %v7771
        %v8529 = vsel %vm3629, %v8497, %v7773
        %v8530 = vsel %vm3629, %v8498, %v7775
        %v8531 = vsel %vm3629, %v8499, %v7777
        %v8532 = vsel %vm3629, %v8500, %v7779
        %v8533 = vsel %vm3629, %v8501, %v7781
        %v8534 = vsel %vm3629, %v8502, %v7783
        %v8535 = vsel %vm3629, %v8503, %v7785
        %v8536 = vsel %vm3629, %v8504, %v7787
        %v8537 = vsel %vm3629, %v8505, %v7789
        %v8538 = vsel %vm3629, %v8506, %v7791
        %v8539 = vsel %vm3629, %v8507, %v7793
        %v8540 = vsel %vm3629, %v8508, %v7795
        %v8541 = vsel %vm3629, %v8509, %v7797
        %v8542 = vsel %vm3629, %v8510, %v7799
        %v8543 = vsel %vm3629, %v8511, %v7801
        %v8544 = vsel %vm3629, %v8512, %v7803
        %v8545 = vsel %vm3629, %v8513, %v7805
        %v8546 = vsel %vm3629, %v8514, %v7807
        %v8547 = vsel %vm3629, %v8515, %v7809
        %v8548 = vsel %vm3629, %v8516, %v7811
        %v8549 = vsel %vm3629, %v8517, %v7813
        %vm8550 = vcmask 392192
        %v8551 = vsel %vm8550, %v8518, %v7879
        %v8552 = vsel %vm8550, %v8519, %v7881
        %v8553 = vsel %vm8550, %v8520, %v7883
        %v8554 = vsel %vm8550, %v8521, %v7885
        %v8555 = vsel %vm8550, %v8522, %v7887
        %v8556 = vsel %vm8550, %v8523, %v7889
        %v8557 = vsel %vm8550, %v8524, %v7891
        %v8558 = vsel %vm8550, %v8525, %v7893
        %v8559 = vsel %vm8550, %v8526, %v7895
        %v8560 = vsel %vm8550, %v8527, %v7897
        %v8561 = vsel %vm8550, %v8528, %v7899
        %v8562 = vsel %vm8550, %v8529, %v7901
        %v8563 = vsel %vm8550, %v8530, %v7903
        %v8564 = vsel %vm8550, %v8531, %v7905
        %v8565 = vsel %vm8550, %v8532, %v7907
        %v8566 = vsel %vm8550, %v8533, %v7909
        %v8567 = vsel %vm8550, %v8534, %v7911
        %v8568 = vsel %vm8550, %v8535, %v7913
        %v8569 = vsel %vm8550, %v8536, %v7915
        %v8570 = vsel %vm8550, %v8537, %v7917
        %v8571 = vsel %vm8550, %v8538, %v7919
        %v8572 = vsel %vm8550, %v8539, %v7921
        %v8573 = vsel %vm8550, %v8540, %v7923
        %v8574 = vsel %vm8550, %v8541, %v7925
        %v8575 = vsel %vm8550, %v8542, %v7927
        %v8576 = vsel %vm8550, %v8543, %v7929
        %v8577 = vsel %vm8550, %v8544, %v7931
        %v8578 = vsel %vm8550, %v8545, %v7933
        %v8579 = vsel %vm8550, %v8546, %v7935
        %v8580 = vsel %vm8550, %v8547, %v7937
        %v8581 = vsel %vm8550, %v8548, %v7939
        %v8582 = vsel %vm8550, %v8549, %v7941
        %v8583 = vsel %vm1568, %v8551, %v8007
        %v8584 = vsel %vm1568, %v8552, %v8009
        %v8585 = vsel %vm1568, %v8553, %v8011
        %v8586 = vsel %vm1568, %v8554, %v8013
        %v8587 = vsel %vm1568, %v8555, %v8015
        %v8588 = vsel %vm1568, %v8556, %v8017
        %v8589 = vsel %vm1568, %v8557, %v8019
        %v8590 = vsel %vm1568, %v8558, %v8021
        %v8591 = vsel %vm1568, %v8559, %v8023
        %v8592 = vsel %vm1568, %v8560, %v8025
        %v8593 = vsel %vm1568, %v8561, %v8027
        %v8594 = vsel %vm1568, %v8562, %v8029
        %v8595 = vsel %vm1568, %v8563, %v8031
        %v8596 = vsel %vm1568, %v8564, %v8033
        %v8597 = vsel %vm1568, %v8565, %v8035
        %v8598 = vsel %vm1568, %v8566, %v8037
        %v8599 = vsel %vm1568, %v8567, %v8039
        %v8600 = vsel %vm1568, %v8568, %v8041
        %v8601 = vsel %vm1568, %v8569, %v8043
        %v8602 = vsel %vm1568, %v8570, %v8045
        %v8603 = vsel %vm1568, %v8571, %v8047
        %v8604 = vsel %vm1568, %v8572, %v8049
        %v8605 = vsel %vm1568, %v8573, %v8051
        %v8606 = vsel %vm1568, %v8574, %v8053
        %v8607 = vsel %vm1568, %v8575, %v8055
        %v8608 = vsel %vm1568, %v8576, %v8057
        %v8609 = vsel %vm1568, %v8577, %v8059
        %v8610 = vsel %vm1568, %v8578, %v8061
        %v8611 = vsel %vm1568, %v8579, %v8063
        %v8612 = vsel %vm1568, %v8580, %v8065
        %v8613 = vsel %vm1568, %v8581, %v8067
        %v8614 = vsel %vm1568, %v8582, %v8069
        %vm8615 = vcmask 654336
        %v8616 = vsel %vm8615, %v8583, %v8135
        %v8617 = vsel %vm8615, %v8584, %v8137
        %v8618 = vsel %vm8615, %v8585, %v8139
        %v8619 = vsel %vm8615, %v8586, %v8141
        %v8620 = vsel %vm8615, %v8587, %v8143
        %v8621 = vsel %vm8615, %v8588, %v8145
        %v8622 = vsel %vm8615, %v8589, %v8147
        %v8623 = vsel %vm8615, %v8590, %v8149
        %v8624 = vsel %vm8615, %v8591, %v8151
        %v8625 = vsel %vm8615, %v8592, %v8153
        %v8626 = vsel %vm8615, %v8593, %v8155
        %v8627 = vsel %vm8615, %v8594, %v8157
        %v8628 = vsel %vm8615, %v8595, %v8159
        %v8629 = vsel %vm8615, %v8596, %v8161
        %v8630 = vsel %vm8615, %v8597, %v8163
        %v8631 = vsel %vm8615, %v8598, %v8165
        %v8632 = vsel %vm8615, %v8599, %v8167
        %v8633 = vsel %vm8615, %v8600, %v8169
        %v8634 = vsel %vm8615, %v8601, %v8171
        %v8635 = vsel %vm8615, %v8602, %v8173
        %v8636 = vsel %vm8615, %v8603, %v8175
        %v8637 = vsel %vm8615, %v8604, %v8177
        %v8638 = vsel %vm8615, %v8605, %v8179
        %v8639 = vsel %vm8615, %v8606, %v8181
        %v8640 = vsel %vm8615, %v8607, %v8183
        %v8641 = vsel %vm8615, %v8608, %v8185
        %v8642 = vsel %vm8615, %v8609, %v8187
        %v8643 = vsel %vm8615, %v8610, %v8189
        %v8644 = vsel %vm8615, %v8611, %v8191
        %v8645 = vsel %vm8615, %v8612, %v8193
        %v8646 = vsel %vm8615, %v8613, %v8195
        %v8647 = vsel %vm8615, %v8614, %v8197
        %v8648 = vsel %vm3918, %v8616, %v8263
        %v8649 = vsel %vm3918, %v8617, %v8265
        %v8650 = vsel %vm3918, %v8618, %v8267
        %v8651 = vsel %vm3918, %v8619, %v8269
        %v8652 = vsel %vm3918, %v8620, %v8271
        %v8653 = vsel %vm3918, %v8621, %v8273
        %v8654 = vsel %vm3918, %v8622, %v8275
        %v8655 = vsel %vm3918, %v8623, %v8277
        %v8656 = vsel %vm3918, %v8624, %v8279
        %v8657 = vsel %vm3918, %v8625, %v8281
        %v8658 = vsel %vm3918, %v8626, %v8283
        %v8659 = vsel %vm3918, %v8627, %v8285
        %v8660 = vsel %vm3918, %v8628, %v8287
        %v8661 = vsel %vm3918, %v8629, %v8289
        %v8662 = vsel %vm3918, %v8630, %v8291
        %v8663 = vsel %vm3918, %v8631, %v8293
        %v8664 = vsel %vm3918, %v8632, %v8295
        %v8665 = vsel %vm3918, %v8633, %v8297
        %v8666 = vsel %vm3918, %v8634, %v8299
        %v8667 = vsel %vm3918, %v8635, %v8301
        %v8668 = vsel %vm3918, %v8636, %v8303
        %v8669 = vsel %vm3918, %v8637, %v8305
        %v8670 = vsel %vm3918, %v8638, %v8307
        %v8671 = vsel %vm3918, %v8639, %v8309
        %v8672 = vsel %vm3918, %v8640, %v8311
        %v8673 = vsel %vm3918, %v8641, %v8313
        %v8674 = vsel %vm3918, %v8642, %v8315
        %v8675 = vsel %vm3918, %v8643, %v8317
        %v8676 = vsel %vm3918, %v8644, %v8319
        %v8677 = vsel %vm3918, %v8645, %v8321
        %v8678 = vsel %vm3918, %v8646, %v8323
        %v8679 = vsel %vm3918, %v8647, %v8325
        %vm8680 = vcmask 916480
        %v8681 = vsel %vm8680, %v8648, %v8391
        %v8682 = vsel %vm8680, %v8649, %v8393
        %v8683 = vsel %vm8680, %v8650, %v8395
        %v8684 = vsel %vm8680, %v8651, %v8397
        %v8685 = vsel %vm8680, %v8652, %v8399
        %v8686 = vsel %vm8680, %v8653, %v8401
        %v8687 = vsel %vm8680, %v8654, %v8403
        %v8688 = vsel %vm8680, %v8655, %v8405
        %v8689 = vsel %vm8680, %v8656, %v8407
        %v8690 = vsel %vm8680, %v8657, %v8409
        %v8691 = vsel %vm8680, %v8658, %v8411
        %v8692 = vsel %vm8680, %v8659, %v8413
        %v8693 = vsel %vm8680, %v8660, %v8415
        %v8694 = vsel %vm8680, %v8661, %v8417
        %v8695 = vsel %vm8680, %v8662, %v8419
        %v8696 = vsel %vm8680, %v8663, %v8421
        %v8697 = vsel %vm8680, %v8664, %v8423
        %v8698 = vsel %vm8680, %v8665, %v8425
        %v8699 = vsel %vm8680, %v8666, %v8427
        %v8700 = vsel %vm8680, %v8667, %v8429
        %v8701 = vsel %vm8680, %v8668, %v8431
        %v8702 = vsel %vm8680, %v8669, %v8433
        %v8703 = vsel %vm8680, %v8670, %v8435
        %v8704 = vsel %vm8680, %v8671, %v8437
        %v8705 = vsel %vm8680, %v8672, %v8439
        %v8706 = vsel %vm8680, %v8673, %v8441
        %v8707 = vsel %vm8680, %v8674, %v8443
        %v8708 = vsel %vm8680, %v8675, %v8445
        %v8709 = vsel %vm8680, %v8676, %v8447
        %v8710 = vsel %vm8680, %v8677, %v8449
        %v8711 = vsel %vm8680, %v8678, %v8451
        %v8712 = vsel %vm8680, %v8679, %v8453
        %v8713 = vld [vmem:[#allocation43] sm:$0xff]
        %v8714 = vld [vmem:[#allocation43 + $0x8] sm:$0xff]
        %v8715 = vld [vmem:[#allocation43 + $0x10] sm:$0xff]
        %v8716 = vld [vmem:[#allocation43 + $0x18] sm:$0xff]
        %v8717 = vld [vmem:[#allocation43 + $0x20] sm:$0xff]
        %v8718 = vld [vmem:[#allocation43 + $0x28] sm:$0xff]
        %v8719 = vld [vmem:[#allocation43 + $0x30] sm:$0xff]
        %v8720 = vld [vmem:[#allocation43 + $0x38] sm:$0xff]
        %v8721 = vld [vmem:[#allocation43 + $0x40] sm:$0xff]
        %v8722 = vld [vmem:[#allocation43 + $0x48] sm:$0xff]
        %v8723 = vld [vmem:[#allocation43 + $0x50] sm:$0xff]
        %v8724 = vld [vmem:[#allocation43 + $0x58] sm:$0xff]
        %v8725 = vld [vmem:[#allocation43 + $0x60] sm:$0xff]
        %v8726 = vld [vmem:[#allocation43 + $0x68] sm:$0xff]
        %v8727 = vld [vmem:[#allocation43 + $0x70] sm:$0xff]
        %v8728 = vld [vmem:[#allocation43 + $0x78] sm:$0xff]
        %v8729 = vld [vmem:[#allocation43 + $0x80] sm:$0xff]
        %v8730 = vld [vmem:[#allocation43 + $0x88] sm:$0xff]
        %v8731 = vpack.c.bf16 %v8682, %v8681
        %v8732 = vpack.c.bf16 %v7559, %v7558
        %v8733 = vpack.c.bf16 %v8684, %v8683
        %v8734 = vpack.c.bf16 %v7561, %v7560
        %v8735 = vpack.c.bf16 %v8686, %v8685
        %v8736 = vpack.c.bf16 %v7563, %v7562
        %v8737 = vpack.c.bf16 %v8688, %v8687
        %v8738 = vpack.c.bf16 %v7565, %v7564
        %v8739 = vpack.c.bf16 %v8690, %v8689
        %v8740 = vpack.c.bf16 %v7567, %v7566
        %v8741 = vpack.c.bf16 %v8692, %v8691
        %v8742 = vpack.c.bf16 %v7569, %v7568
        %v8743 = vpack.c.bf16 %v8694, %v8693
        %v8744 = vpack.c.bf16 %v7571, %v7570
        %v8745 = vpack.c.bf16 %v8696, %v8695
        %v8746 = vpack.c.bf16 %v7573, %v7572
        %v8747 = vpack.c.bf16 %v8698, %v8697
        %v8748 = vpack.c.bf16 %v7575, %v7574
        %v8749 = vpack.c.bf16 %v8700, %v8699
        %v8750 = vpack.c.bf16 %v7577, %v7576
        %v8751 = vpack.c.bf16 %v8702, %v8701
        %v8752 = vpack.c.bf16 %v7579, %v7578
        %v8753 = vpack.c.bf16 %v8704, %v8703
        %v8754 = vpack.c.bf16 %v7581, %v7580
        %v8755 = vpack.c.bf16 %v8706, %v8705
        %v8756 = vpack.c.bf16 %v7583, %v7582
        %v8757 = vpack.c.bf16 %v8708, %v8707
        %v8758 = vpack.c.bf16 %v7585, %v7584
        %v8759 = vpack.c.bf16 %v8710, %v8709
        %v8760 = vpack.c.bf16 %v7587, %v7586
        %v8761 = vpack.c.bf16 %v8712, %v8711
        %v8762 = vpack.c.bf16 %v7589, %v7588
        %v8763 = vpack.c.bf16 %v8714, %v8713
        %v8764 = vpack.c.bf16 %v8716, %v8715
        %v8765 = vpack.c.bf16 %v8718, %v8717
        %v8766 = vpack.c.bf16 %v8720, %v8719
        %v8767 = vpack.c.bf16 %v8722, %v8721
        %v8768 = vpack.c.bf16 %v8724, %v8723
        %v8769 = vpack.c.bf16 %v8726, %v8725
        %v8770 = vpack.c.bf16 %v8728, %v8727
        %v8771 = vpack.c.bf16 %v8730, %v8729
        %v8773 = vsel %vm2686, %v8732, 0
        %v8776 = vsel %vm2686, %v8734, 0
        %v8779 = vsel %vm2686, %v8736, 0
        %v8782 = vsel %vm2686, %v8738, 0
        %v8785 = vsel %vm2686, %v8740, 0
        %v8788 = vsel %vm2686, %v8742, 0
        %v8791 = vsel %vm2686, %v8744, 0
        %v8794 = vsel %vm2686, %v8746, 0
        %v8797 = vsel %vm2686, %v8748, 0
        %v8800 = vsel %vm2686, %v8750, 0
        %v8803 = vsel %vm2686, %v8752, 0
        %v8806 = vsel %vm2686, %v8754, 0
        %v8809 = vsel %vm2686, %v8756, 0
        %v8812 = vsel %vm2686, %v8758, 0
        %v8815 = vsel %vm2686, %v8760, 0
        %v8818 = vsel %vm2686, %v8762, 0
        %8820 = vmatprep.subr.bf16.mxu0 0
        %8821 = vmatpush1.bf16.msra.mxu0 %v8770
        %8822 = vmatprep.subr.bf16.mxu0 0
        %8823 = vmatpush1.bf16.msra.mxu0 %v8769
        %8824 = vmatprep.subr.bf16.mxu0 0
        %8825 = vmatpush1.bf16.msra.mxu0 %v8768
        %8826 = vmatprep.subr.bf16.mxu0 0
        %8827 = vmatpush1.bf16.msra.mxu0 %v8767
        %8828 = vmatprep.subr.bf16.mxu0 0
        %8829 = vmatpush1.bf16.msra.mxu0 %v8766
        %8830 = vmatprep.subr.bf16.mxu0 0
        %8831 = vmatpush1.bf16.msra.mxu0 %v8765
        %8832 = vmatprep.subr.bf16.mxu0 0
        %8833 = vmatpush1.bf16.msra.mxu0 %v8764
        %8834 = vmatprep.subr.bf16.mxu0 0
        %8835 = vmatpush1.bf16.msra.mxu0 %v8763
        %8836 = vmatprep.subr.bf16.mxu0 0
        %8837 = vmatpush2.bf16.msra.mxu0 0
        %8838 = vmatprep.subr.bf16.mxu0 0
        %8839 = vmatpush2.bf16.msra.mxu0 0
        %8840 = vmatprep.subr.bf16.mxu0 0
        %8841 = vmatpush2.bf16.msra.mxu0 0
        %8842 = vmatprep.subr.bf16.mxu0 0
        %8843 = vmatpush2.bf16.msra.mxu0 0
        %8844 = vmatprep.subr.bf16.mxu0 0
        %8845 = vmatpush2.bf16.msra.mxu0 0
        %8846 = vmatprep.subr.bf16.mxu0 0
        %8847 = vmatpush2.bf16.msra.mxu0 0
        %8848 = vmatprep.subr.bf16.mxu0 0
        %8849 = vmatpush2.bf16.msra.mxu0 0
        %8850 = vmatprep.subr.bf16.mxu0 0
        %8851 = vmatpush2.bf16.msra.mxu0 %v8771
        %8852 = vmatprep.mubr.bf16.mxu0 %v8773
        %8853 = vmatmul.mubr.bf16.gmra.mxu0 %v8731
        %v8854 = vpop.f32.mrf.mxu0
        %v8855 = vadd.f32 0.0, %v8854
        %v8856 = vpop.f32.mrf.mxu0
        %v8857 = vpop.f32.mrf.mxu0
        %v8858 = vadd.f32 0.0, %v8857
        %v8859 = vpop.f32.mrf.mxu0
        %8860 = vmatprep.mubr.bf16.mxu0 %v8776
        %8861 = vmatmul.mubr.bf16.gmra.mxu0 %v8733
        %v8862 = vpop.f32.mrf.mxu0
        %v8863 = vadd.f32 0.0, %v8862
        %v8864 = vpop.f32.mrf.mxu0
        %v8865 = vpop.f32.mrf.mxu0
        %v8866 = vadd.f32 0.0, %v8865
        %v8867 = vpop.f32.mrf.mxu0
        %8868 = vmatprep.mubr.bf16.mxu0 %v8779
        %8869 = vmatmul.mubr.bf16.gmra.mxu0 %v8735
        %v8870 = vpop.f32.mrf.mxu0
        %v8871 = vadd.f32 0.0, %v8870
        %v8872 = vpop.f32.mrf.mxu0
        %v8873 = vpop.f32.mrf.mxu0
        %v8874 = vadd.f32 0.0, %v8873
        %v8875 = vpop.f32.mrf.mxu0
        %8876 = vmatprep.mubr.bf16.mxu0 %v8782
        %8877 = vmatmul.mubr.bf16.gmra.mxu0 %v8737
        %v8878 = vpop.f32.mrf.mxu0
        %v8879 = vadd.f32 0.0, %v8878
        %v8880 = vpop.f32.mrf.mxu0
        %v8881 = vpop.f32.mrf.mxu0
        %v8882 = vadd.f32 0.0, %v8881
        %v8883 = vpop.f32.mrf.mxu0
        %8884 = vmatprep.mubr.bf16.mxu0 %v8785
        %8885 = vmatmul.mubr.bf16.gmra.mxu0 %v8739
        %v8886 = vpop.f32.mrf.mxu0
        %v8887 = vadd.f32 0.0, %v8886
        %v8888 = vpop.f32.mrf.mxu0
        %v8889 = vpop.f32.mrf.mxu0
        %v8890 = vadd.f32 0.0, %v8889
        %v8891 = vpop.f32.mrf.mxu0
        %8892 = vmatprep.mubr.bf16.mxu0 %v8788
        %8893 = vmatmul.mubr.bf16.gmra.mxu0 %v8741
        %v8894 = vpop.f32.mrf.mxu0
        %v8895 = vadd.f32 0.0, %v8894
        %v8896 = vpop.f32.mrf.mxu0
        %v8897 = vpop.f32.mrf.mxu0
        %v8898 = vadd.f32 0.0, %v8897
        %v8899 = vpop.f32.mrf.mxu0
        %8900 = vmatprep.mubr.bf16.mxu0 %v8791
        %8901 = vmatmul.mubr.bf16.gmra.mxu0 %v8743
        %v8902 = vpop.f32.mrf.mxu0
        %v8903 = vadd.f32 0.0, %v8902
        %v8904 = vpop.f32.mrf.mxu0
        %v8905 = vpop.f32.mrf.mxu0
        %v8906 = vadd.f32 0.0, %v8905
        %v8907 = vpop.f32.mrf.mxu0
        %8908 = vmatprep.mubr.bf16.mxu0 %v8794
        %8909 = vmatmul.mubr.bf16.gmra.mxu0 %v8745
        %v8910 = vpop.f32.mrf.mxu0
        %v8911 = vadd.f32 0.0, %v8910
        %v8912 = vpop.f32.mrf.mxu0
        %v8913 = vpop.f32.mrf.mxu0
        %v8914 = vadd.f32 0.0, %v8913
        %v8915 = vpop.f32.mrf.mxu0
        %8916 = vmatprep.mubr.bf16.mxu0 %v8797
        %8917 = vmatmul.mubr.bf16.gmra.mxu0 %v8747
        %v8918 = vpop.f32.mrf.mxu0
        %v8919 = vadd.f32 0.0, %v8918
        %v8920 = vpop.f32.mrf.mxu0
        %v8921 = vpop.f32.mrf.mxu0
        %v8922 = vadd.f32 0.0, %v8921
        %v8923 = vpop.f32.mrf.mxu0
        %8924 = vmatprep.mubr.bf16.mxu0 %v8800
        %8925 = vmatmul.mubr.bf16.gmra.mxu0 %v8749
        %v8926 = vpop.f32.mrf.mxu0
        %v8927 = vadd.f32 0.0, %v8926
        %v8928 = vpop.f32.mrf.mxu0
        %v8929 = vpop.f32.mrf.mxu0
        %v8930 = vadd.f32 0.0, %v8929
        %v8931 = vpop.f32.mrf.mxu0
        %8932 = vmatprep.mubr.bf16.mxu0 %v8803
        %8933 = vmatmul.mubr.bf16.gmra.mxu0 %v8751
        %v8934 = vpop.f32.mrf.mxu0
        %v8935 = vadd.f32 0.0, %v8934
        %v8936 = vpop.f32.mrf.mxu0
        %v8937 = vpop.f32.mrf.mxu0
        %v8938 = vadd.f32 0.0, %v8937
        %v8939 = vpop.f32.mrf.mxu0
        %8940 = vmatprep.mubr.bf16.mxu0 %v8806
        %8941 = vmatmul.mubr.bf16.gmra.mxu0 %v8753
        %v8942 = vpop.f32.mrf.mxu0
        %v8943 = vadd.f32 0.0, %v8942
        %v8944 = vpop.f32.mrf.mxu0
        %v8945 = vpop.f32.mrf.mxu0
        %v8946 = vadd.f32 0.0, %v8945
        %v8947 = vpop.f32.mrf.mxu0
        %8948 = vmatprep.mubr.bf16.mxu0 %v8809
        %8949 = vmatmul.mubr.bf16.gmra.mxu0 %v8755
        %v8950 = vpop.f32.mrf.mxu0
        %v8951 = vadd.f32 0.0, %v8950
        %v8952 = vpop.f32.mrf.mxu0
        %v8953 = vpop.f32.mrf.mxu0
        %v8954 = vadd.f32 0.0, %v8953
        %v8955 = vpop.f32.mrf.mxu0
        %8956 = vmatprep.mubr.bf16.mxu0 %v8812
        %8957 = vmatmul.mubr.bf16.gmra.mxu0 %v8757
        %v8958 = vpop.f32.mrf.mxu0
        %v8959 = vadd.f32 0.0, %v8958
        %v8960 = vpop.f32.mrf.mxu0
        %v8961 = vpop.f32.mrf.mxu0
        %v8962 = vadd.f32 0.0, %v8961
        %v8963 = vpop.f32.mrf.mxu0
        %8964 = vmatprep.mubr.bf16.mxu0 %v8815
        %8965 = vmatmul.mubr.bf16.gmra.mxu0 %v8759
        %v8966 = vpop.f32.mrf.mxu0
        %v8967 = vadd.f32 0.0, %v8966
        %v8968 = vpop.f32.mrf.mxu0
        %v8969 = vpop.f32.mrf.mxu0
        %v8970 = vadd.f32 0.0, %v8969
        %v8971 = vpop.f32.mrf.mxu0
        %8972 = vmatprep.mubr.bf16.mxu0 %v8818
        %8973 = vmatmul.mubr.bf16.gmra.mxu0 %v8761
        %v8974 = vpop.f32.mrf.mxu0
        %v8975 = vadd.f32 0.0, %v8974
        %v8976 = vpop.f32.mrf.mxu0
        %v8977 = vpop.f32.mrf.mxu0
        %v8978 = vadd.f32 0.0, %v8977
        %v8979 = vpop.f32.mrf.mxu0
        %8980 = vdwg.mxu0
        %v8981 = vmul.f32 %v2020, %v2020
        %v8982 = vld [vmem:[%s57] sm:$0xff]
        %v8983 = vld [vmem:[%s57 + $0x8] sm:$0xff]
        %v8985 = vsel %vm2686, %v8981, 0
        %8987 = vmatprep.subr.mxu0 0.0
        %8988 = vmatpush1.msra.mxu0 0.0
        %8989 = vmatprep.subr.mxu0 0.0
        %8990 = vmatpush1.msra.mxu0 0.0
        %8991 = vmatprep.subr.mxu0 0.0
        %8992 = vmatpush1.msra.mxu0 0.0
        %8993 = vmatprep.subr.mxu0 0.0
        %8994 = vmatpush1.msra.mxu0 0.0
        %8995 = vmatprep.subr.mxu0 0.0
        %8996 = vmatpush1.msra.mxu0 0.0
        %8997 = vmatprep.subr.mxu0 0.0
        %8998 = vmatpush1.msra.mxu0 0.0
        %8999 = vmatprep.subr.mxu0 0.0
        %9000 = vmatpush1.msra.mxu0 0.0
        %9001 = vmatprep.subr.mxu0 0.0
        %9002 = vmatpush1.msra.mxu0 0.0
        %9003 = vmatprep.subr.mxu0 0.0
        %9004 = vmatpush1.msra.mxu0 0.0
        %9005 = vmatprep.subr.mxu0 0.0
        %9006 = vmatpush1.msra.mxu0 0.0
        %9007 = vmatprep.subr.mxu0 0.0
        %9008 = vmatpush1.msra.mxu0 0.0
        %9009 = vmatprep.subr.mxu0 0.0
        %9010 = vmatpush1.msra.mxu0 0.0
        %9011 = vmatprep.subr.mxu0 0.0
        %9012 = vmatpush1.msra.mxu0 0.0
        %9013 = vmatprep.subr.mxu0 0.0
        %9014 = vmatpush1.msra.mxu0 0.0
        %9015 = vmatprep.subr.mxu0 0.0
        %9016 = vmatpush1.msra.mxu0 %v8983
        %9017 = vmatprep.subr.mxu0 0.0
        %9018 = vmatpush1.msra.mxu0 %v8982
        %9019 = vmatprep.subr.mxu0 0.0
        %9020 = vmatpush2.msra.mxu0 0.0
        %9021 = vmatprep.subr.mxu0 0.0
        %9022 = vmatpush2.msra.mxu0 0.0
        %9023 = vmatprep.subr.mxu0 0.0
        %9024 = vmatpush2.msra.mxu0 0.0
        %9025 = vmatprep.subr.mxu0 0.0
        %9026 = vmatpush2.msra.mxu0 0.0
        %9027 = vmatprep.subr.mxu0 0.0
        %9028 = vmatpush2.msra.mxu0 0.0
        %9029 = vmatprep.subr.mxu0 0.0
        %9030 = vmatpush2.msra.mxu0 0.0
        %9031 = vmatprep.subr.mxu0 0.0
        %9032 = vmatpush2.msra.mxu0 0.0
        %9033 = vmatprep.subr.mxu0 0.0
        %9034 = vmatpush2.msra.mxu0 0.0
        %9035 = vmatprep.subr.mxu0 0.0
        %9036 = vmatpush2.msra.mxu0 0.0
        %9037 = vmatprep.subr.mxu0 0.0
        %9038 = vmatpush2.msra.mxu0 0.0
        %9039 = vmatprep.subr.mxu0 0.0
        %9040 = vmatpush2.msra.mxu0 0.0
        %9041 = vmatprep.subr.mxu0 0.0
        %9042 = vmatpush2.msra.mxu0 0.0
        %9043 = vmatprep.subr.mxu0 0.0
        %9044 = vmatpush2.msra.mxu0 0.0
        %9045 = vmatprep.subr.mxu0 0.0
        %9046 = vmatpush2.msra.mxu0 0.0
        %9047 = vmatprep.subr.mxu0 0.0
        %9048 = vmatpush2.msra.mxu0 0.0
        %9049 = vmatprep.subr.mxu0 0.0
        %9050 = vmatpush2.msra.mxu0 0.0
        %9051 = vmatprep.mubr.f32.mxu0 0.0
        %9052 = vmatmul.mubr.f32.gmra.mxu0 %v8985
        %v9053 = vpop.f32.mrf.mxu0
        %v9054 = vadd.f32 1e-08, %v9053
        %v9055 = vpop.f32.mrf.mxu0
        %9056 = vdwg.mxu0
        %v9057 = vrsqrt.pop %v9054
        %v9058 = vlaneseq
        %v9059 = vshrl.u32 %v9058, 7
        %v9060 = vsub.s32 0, %v9059
        %v9061 = vrot.slane %v9057, %v9060
        %v9062 = vmul.f32 %v8855, %v9061
        %v9063 = vmul.f32 %v8858, %v9061
        %v9064 = vmul.f32 %v8863, %v9061
        %v9065 = vmul.f32 %v8866, %v9061
        %v9066 = vmul.f32 %v8871, %v9061
        %v9067 = vmul.f32 %v8874, %v9061
        %v9068 = vmul.f32 %v8879, %v9061
        %v9069 = vmul.f32 %v8882, %v9061
        %v9070 = vmul.f32 %v8887, %v9061
        %v9071 = vmul.f32 %v8890, %v9061
        %v9072 = vmul.f32 %v8895, %v9061
        %v9073 = vmul.f32 %v8898, %v9061
        %v9074 = vmul.f32 %v8903, %v9061
        %v9075 = vmul.f32 %v8906, %v9061
        %v9076 = vmul.f32 %v8911, %v9061
        %v9077 = vmul.f32 %v8914, %v9061
        %v9078 = vmul.f32 %v8919, %v9061
        %v9079 = vmul.f32 %v8922, %v9061
        %v9080 = vmul.f32 %v8927, %v9061
        %v9081 = vmul.f32 %v8930, %v9061
        %v9082 = vmul.f32 %v8935, %v9061
        %v9083 = vmul.f32 %v8938, %v9061
        %v9084 = vmul.f32 %v8943, %v9061
        %v9085 = vmul.f32 %v8946, %v9061
        %v9086 = vmul.f32 %v8951, %v9061
        %v9087 = vmul.f32 %v8954, %v9061
        %v9088 = vmul.f32 %v8959, %v9061
        %v9089 = vmul.f32 %v8962, %v9061
        %v9090 = vmul.f32 %v8967, %v9061
        %v9091 = vmul.f32 %v8970, %v9061
        %v9092 = vmul.f32 %v8975, %v9061
        %v9093 = vmul.f32 %v8978, %v9061
        %v9094 = vld [vmem:[#allocation44] sm:$0xff]
        %v9095 = vld [vmem:[#allocation44 + $0x8] sm:$0xff]
        %v9096 = vld [vmem:[#allocation44 + $0x10] sm:$0xff]
        %v9097 = vld [vmem:[#allocation44 + $0x18] sm:$0xff]
        %v9098 = vld [vmem:[#allocation44 + $0x20] sm:$0xff]
        %v9099 = vld [vmem:[#allocation44 + $0x28] sm:$0xff]
        %v9100 = vld [vmem:[#allocation44 + $0x30] sm:$0xff]
        %v9101 = vld [vmem:[#allocation44 + $0x38] sm:$0xff]
        %v9102 = vld [vmem:[#allocation44 + $0x40] sm:$0xff]
        %v9103 = vld [vmem:[#allocation44 + $0x48] sm:$0xff]
        %v9104 = vld [vmem:[#allocation44 + $0x50] sm:$0xff]
        %v9105 = vld [vmem:[#allocation44 + $0x58] sm:$0xff]
        %v9106 = vld [vmem:[#allocation44 + $0x60] sm:$0xff]
        %v9107 = vld [vmem:[#allocation44 + $0x68] sm:$0xff]
        %v9108 = vld [vmem:[#allocation44 + $0x70] sm:$0xff]
        %v9109 = vld [vmem:[#allocation44 + $0x78] sm:$0xff]
        %v9110 = vld [vmem:[#allocation44 + $0x80] sm:$0xff]
        %v9111 = vld [vmem:[#allocation44 + $0x88] sm:$0xff]
        %v9112 = vld [vmem:[#allocation44 + $0x90] sm:$0xff]
        %v9113 = vld [vmem:[#allocation44 + $0x98] sm:$0xff]
        %v9114 = vld [vmem:[#allocation44 + $0xa0] sm:$0xff]
        %v9115 = vld [vmem:[#allocation44 + $0xa8] sm:$0xff]
        %v9116 = vld [vmem:[#allocation44 + $0xb0] sm:$0xff]
        %v9117 = vld [vmem:[#allocation44 + $0xb8] sm:$0xff]
        %v9118 = vld [vmem:[#allocation44 + $0xc0] sm:$0xff]
        %v9119 = vld [vmem:[#allocation44 + $0xc8] sm:$0xff]
        %v9120 = vld [vmem:[#allocation44 + $0xd0] sm:$0xff]
        %v9121 = vld [vmem:[#allocation44 + $0xd8] sm:$0xff]
        %v9122 = vld [vmem:[#allocation44 + $0xe0] sm:$0xff]
        %v9123 = vld [vmem:[#allocation44 + $0xe8] sm:$0xff]
        %v9124 = vld [vmem:[#allocation44 + $0xf0] sm:$0xff]
        %v9125 = vld [vmem:[#allocation44 + $0xf8] sm:$0xff]
        %9127 = vset.pattern.permute.xlu0 0
        %9128 = vperm.xlu0 %9127, %v9094
        %v9129 = vpop.permute.xlu0 %9128
        %9132 = vset.pattern.permute.xlu0 0
        %9133 = vperm.xlu0 %9132, %v9095
        %v9134 = vpop.permute.xlu0 %9133
        %9137 = vset.pattern.permute.xlu0 0
        %9138 = vperm.xlu0 %9137, %v9096
        %v9139 = vpop.permute.xlu0 %9138
        %9142 = vset.pattern.permute.xlu0 0
        %9143 = vperm.xlu0 %9142, %v9097
        %v9144 = vpop.permute.xlu0 %9143
        %9147 = vset.pattern.permute.xlu0 0
        %9148 = vperm.xlu0 %9147, %v9098
        %v9149 = vpop.permute.xlu0 %9148
        %9152 = vset.pattern.permute.xlu0 0
        %9153 = vperm.xlu0 %9152, %v9099
        %v9154 = vpop.permute.xlu0 %9153
        %9157 = vset.pattern.permute.xlu0 0
        %9158 = vperm.xlu0 %9157, %v9100
        %v9159 = vpop.permute.xlu0 %9158
        %9162 = vset.pattern.permute.xlu0 0
        %9163 = vperm.xlu0 %9162, %v9101
        %v9164 = vpop.permute.xlu0 %9163
        %9167 = vset.pattern.permute.xlu0 0
        %9168 = vperm.xlu0 %9167, %v9102
        %v9169 = vpop.permute.xlu0 %9168
        %9172 = vset.pattern.permute.xlu0 0
        %9173 = vperm.xlu0 %9172, %v9103
        %v9174 = vpop.permute.xlu0 %9173
        %9177 = vset.pattern.permute.xlu0 0
        %9178 = vperm.xlu0 %9177, %v9104
        %v9179 = vpop.permute.xlu0 %9178
        %9182 = vset.pattern.permute.xlu0 0
        %9183 = vperm.xlu0 %9182, %v9105
        %v9184 = vpop.permute.xlu0 %9183
        %9187 = vset.pattern.permute.xlu0 0
        %9188 = vperm.xlu0 %9187, %v9106
        %v9189 = vpop.permute.xlu0 %9188
        %9192 = vset.pattern.permute.xlu0 0
        %9193 = vperm.xlu0 %9192, %v9107
        %v9194 = vpop.permute.xlu0 %9193
        %9197 = vset.pattern.permute.xlu0 0
        %9198 = vperm.xlu0 %9197, %v9108
        %v9199 = vpop.permute.xlu0 %9198
        %9202 = vset.pattern.permute.xlu0 0
        %9203 = vperm.xlu0 %9202, %v9109
        %v9204 = vpop.permute.xlu0 %9203
        %9207 = vset.pattern.permute.xlu0 0
        %9208 = vperm.xlu0 %9207, %v9110
        %v9209 = vpop.permute.xlu0 %9208
        %9212 = vset.pattern.permute.xlu0 0
        %9213 = vperm.xlu0 %9212, %v9111
        %v9214 = vpop.permute.xlu0 %9213
        %9217 = vset.pattern.permute.xlu0 0
        %9218 = vperm.xlu0 %9217, %v9112
        %v9219 = vpop.permute.xlu0 %9218
        %9222 = vset.pattern.permute.xlu0 0
        %9223 = vperm.xlu0 %9222, %v9113
        %v9224 = vpop.permute.xlu0 %9223
        %9227 = vset.pattern.permute.xlu0 0
        %9228 = vperm.xlu0 %9227, %v9114
        %v9229 = vpop.permute.xlu0 %9228
        %9232 = vset.pattern.permute.xlu0 0
        %9233 = vperm.xlu0 %9232, %v9115
        %v9234 = vpop.permute.xlu0 %9233
        %9237 = vset.pattern.permute.xlu0 0
        %9238 = vperm.xlu0 %9237, %v9116
        %v9239 = vpop.permute.xlu0 %9238
        %9242 = vset.pattern.permute.xlu0 0
        %9243 = vperm.xlu0 %9242, %v9117
        %v9244 = vpop.permute.xlu0 %9243
        %9247 = vset.pattern.permute.xlu0 0
        %9248 = vperm.xlu0 %9247, %v9118
        %v9249 = vpop.permute.xlu0 %9248
        %9252 = vset.pattern.permute.xlu0 0
        %9253 = vperm.xlu0 %9252, %v9119
        %v9254 = vpop.permute.xlu0 %9253
        %9257 = vset.pattern.permute.xlu0 0
        %9258 = vperm.xlu0 %9257, %v9120
        %v9259 = vpop.permute.xlu0 %9258
        %9262 = vset.pattern.permute.xlu0 0
        %9263 = vperm.xlu0 %9262, %v9121
        %v9264 = vpop.permute.xlu0 %9263
        %9267 = vset.pattern.permute.xlu0 0
        %9268 = vperm.xlu0 %9267, %v9122
        %v9269 = vpop.permute.xlu0 %9268
        %9272 = vset.pattern.permute.xlu0 0
        %9273 = vperm.xlu0 %9272, %v9123
        %v9274 = vpop.permute.xlu0 %9273
        %9277 = vset.pattern.permute.xlu0 0
        %9278 = vperm.xlu0 %9277, %v9124
        %v9279 = vpop.permute.xlu0 %9278
        %9282 = vset.pattern.permute.xlu0 0
        %9283 = vperm.xlu0 %9282, %v9125
        %v9284 = vpop.permute.xlu0 %9283
        %v9286 = vadd.f32 %v9062, %v9129
        %v9287 = vadd.f32 %v9063, %v9134
        %v9288 = vadd.f32 %v9064, %v9139
        %v9289 = vadd.f32 %v9065, %v9144
        %v9290 = vadd.f32 %v9066, %v9149
        %v9291 = vadd.f32 %v9067, %v9154
        %v9292 = vadd.f32 %v9068, %v9159
        %v9293 = vadd.f32 %v9069, %v9164
        %v9294 = vadd.f32 %v9070, %v9169
        %v9295 = vadd.f32 %v9071, %v9174
        %v9296 = vadd.f32 %v9072, %v9179
        %v9297 = vadd.f32 %v9073, %v9184
        %v9298 = vadd.f32 %v9074, %v9189
        %v9299 = vadd.f32 %v9075, %v9194
        %v9300 = vadd.f32 %v9076, %v9199
        %v9301 = vadd.f32 %v9077, %v9204
        %v9302 = vadd.f32 %v9078, %v9209
        %v9303 = vadd.f32 %v9079, %v9214
        %v9304 = vadd.f32 %v9080, %v9219
        %v9305 = vadd.f32 %v9081, %v9224
        %v9306 = vadd.f32 %v9082, %v9229
        %v9307 = vadd.f32 %v9083, %v9234
        %v9308 = vadd.f32 %v9084, %v9239
        %v9309 = vadd.f32 %v9085, %v9244
        %v9310 = vadd.f32 %v9086, %v9249
        %v9311 = vadd.f32 %v9087, %v9254
        %v9312 = vadd.f32 %v9088, %v9259
        %v9313 = vadd.f32 %v9089, %v9264
        %v9314 = vadd.f32 %v9090, %v9269
        %v9315 = vadd.f32 %v9091, %v9274
        %v9316 = vadd.f32 %v9092, %v9279
        %v9317 = vadd.f32 %v9093, %v9284
        %v9318 = vld [vmem:[#allocation46] sm:$0x1]
        %v9320 = vlaneseq
        %v9321 = vshrl.u32 %v9320, 7
        %v9322 = vsub.s32 0, %v9321
        %v9323 = vrot.slane %v9318, %v9322
        %v9325 = vadd.f32 %v9286, %v9323
        %v9326 = vadd.f32 %v9287, %v9323
        %v9327 = vadd.f32 %v9288, %v9323
        %v9328 = vadd.f32 %v9289, %v9323
        %v9329 = vadd.f32 %v9290, %v9323
        %v9330 = vadd.f32 %v9291, %v9323
        %v9331 = vadd.f32 %v9292, %v9323
        %v9332 = vadd.f32 %v9293, %v9323
        %v9333 = vadd.f32 %v9294, %v9323
        %v9334 = vadd.f32 %v9295, %v9323
        %v9335 = vadd.f32 %v9296, %v9323
        %v9336 = vadd.f32 %v9297, %v9323
        %v9337 = vadd.f32 %v9298, %v9323
        %v9338 = vadd.f32 %v9299, %v9323
        %v9339 = vadd.f32 %v9300, %v9323
        %v9340 = vadd.f32 %v9301, %v9323
        %v9341 = vadd.f32 %v9302, %v9323
        %v9342 = vadd.f32 %v9303, %v9323
        %v9343 = vadd.f32 %v9304, %v9323
        %v9344 = vadd.f32 %v9305, %v9323
        %v9345 = vadd.f32 %v9306, %v9323
        %v9346 = vadd.f32 %v9307, %v9323
        %v9347 = vadd.f32 %v9308, %v9323
        %v9348 = vadd.f32 %v9309, %v9323
        %v9349 = vadd.f32 %v9310, %v9323
        %v9350 = vadd.f32 %v9311, %v9323
        %v9351 = vadd.f32 %v9312, %v9323
        %v9352 = vadd.f32 %v9313, %v9323
        %v9353 = vadd.f32 %v9314, %v9323
        %v9354 = vadd.f32 %v9315, %v9323
        %v9355 = vadd.f32 %v9316, %v9323
        %v9356 = vadd.f32 %v9317, %v9323
        %vm9357 = vcmp.ge.f32.partialorder %v9325, 0.0
        %vm9358 = vcmp.ge.f32.partialorder %v9326, 0.0
        %vm9359 = vcmp.ge.f32.partialorder %v9327, 0.0
        %vm9360 = vcmp.ge.f32.partialorder %v9328, 0.0
        %vm9361 = vcmp.ge.f32.partialorder %v9329, 0.0
        %vm9362 = vcmp.ge.f32.partialorder %v9330, 0.0
        %vm9363 = vcmp.ge.f32.partialorder %v9331, 0.0
        %vm9364 = vcmp.ge.f32.partialorder %v9332, 0.0
        %vm9365 = vcmp.ge.f32.partialorder %v9333, 0.0
        %vm9366 = vcmp.ge.f32.partialorder %v9334, 0.0
        %vm9367 = vcmp.ge.f32.partialorder %v9335, 0.0
        %vm9368 = vcmp.ge.f32.partialorder %v9336, 0.0
        %vm9369 = vcmp.ge.f32.partialorder %v9337, 0.0
        %vm9370 = vcmp.ge.f32.partialorder %v9338, 0.0
        %vm9371 = vcmp.ge.f32.partialorder %v9339, 0.0
        %vm9372 = vcmp.ge.f32.partialorder %v9340, 0.0
        %vm9373 = vcmp.ge.f32.partialorder %v9341, 0.0
        %vm9374 = vcmp.ge.f32.partialorder %v9342, 0.0
        %vm9375 = vcmp.ge.f32.partialorder %v9343, 0.0
        %vm9376 = vcmp.ge.f32.partialorder %v9344, 0.0
        %vm9377 = vcmp.ge.f32.partialorder %v9345, 0.0
        %vm9378 = vcmp.ge.f32.partialorder %v9346, 0.0
        %vm9379 = vcmp.ge.f32.partialorder %v9347, 0.0
        %vm9380 = vcmp.ge.f32.partialorder %v9348, 0.0
        %vm9381 = vcmp.ge.f32.partialorder %v9349, 0.0
        %vm9382 = vcmp.ge.f32.partialorder %v9350, 0.0
        %vm9383 = vcmp.ge.f32.partialorder %v9351, 0.0
        %vm9384 = vcmp.ge.f32.partialorder %v9352, 0.0
        %vm9385 = vcmp.ge.f32.partialorder %v9353, 0.0
        %vm9386 = vcmp.ge.f32.partialorder %v9354, 0.0
        %vm9387 = vcmp.ge.f32.partialorder %v9355, 0.0
        %vm9388 = vcmp.ge.f32.partialorder %v9356, 0.0
        %v9389 = vmul.f32 %v9325, 0.2
        %v9390 = vmul.f32 %v9326, 0.2
        %v9391 = vmul.f32 %v9327, 0.2
        %v9392 = vmul.f32 %v9328, 0.2
        %v9393 = vmul.f32 %v9329, 0.2
        %v9394 = vmul.f32 %v9330, 0.2
        %v9395 = vmul.f32 %v9331, 0.2
        %v9396 = vmul.f32 %v9332, 0.2
        %v9397 = vmul.f32 %v9333, 0.2
        %v9398 = vmul.f32 %v9334, 0.2
        %v9399 = vmul.f32 %v9335, 0.2
        %v9400 = vmul.f32 %v9336, 0.2
        %v9401 = vmul.f32 %v9337, 0.2
        %v9402 = vmul.f32 %v9338, 0.2
        %v9403 = vmul.f32 %v9339, 0.2
        %v9404 = vmul.f32 %v9340, 0.2
        %v9405 = vmul.f32 %v9341, 0.2
        %v9406 = vmul.f32 %v9342, 0.2
        %v9407 = vmul.f32 %v9343, 0.2
        %v9408 = vmul.f32 %v9344, 0.2
        %v9409 = vmul.f32 %v9345, 0.2
        %v9410 = vmul.f32 %v9346, 0.2
        %v9411 = vmul.f32 %v9347, 0.2
        %v9412 = vmul.f32 %v9348, 0.2
        %v9413 = vmul.f32 %v9349, 0.2
        %v9414 = vmul.f32 %v9350, 0.2
        %v9415 = vmul.f32 %v9351, 0.2
        %v9416 = vmul.f32 %v9352, 0.2
        %v9417 = vmul.f32 %v9353, 0.2
        %v9418 = vmul.f32 %v9354, 0.2
        %v9419 = vmul.f32 %v9355, 0.2
        %v9420 = vmul.f32 %v9356, 0.2
        %v9421 = vsel %vm9357, %v9325, %v9389
        %v9422 = vsel %vm9358, %v9326, %v9390
        %v9423 = vsel %vm9359, %v9327, %v9391
        %v9424 = vsel %vm9360, %v9328, %v9392
        %v9425 = vsel %vm9361, %v9329, %v9393
        %v9426 = vsel %vm9362, %v9330, %v9394
        %v9427 = vsel %vm9363, %v9331, %v9395
        %v9428 = vsel %vm9364, %v9332, %v9396
        %v9429 = vsel %vm9365, %v9333, %v9397
        %v9430 = vsel %vm9366, %v9334, %v9398
        %v9431 = vsel %vm9367, %v9335, %v9399
        %v9432 = vsel %vm9368, %v9336, %v9400
        %v9433 = vsel %vm9369, %v9337, %v9401
        %v9434 = vsel %vm9370, %v9338, %v9402
        %v9435 = vsel %vm9371, %v9339, %v9403
        %v9436 = vsel %vm9372, %v9340, %v9404
        %v9437 = vsel %vm9373, %v9341, %v9405
        %v9438 = vsel %vm9374, %v9342, %v9406
        %v9439 = vsel %vm9375, %v9343, %v9407
        %v9440 = vsel %vm9376, %v9344, %v9408
        %v9441 = vsel %vm9377, %v9345, %v9409
        %v9442 = vsel %vm9378, %v9346, %v9410
        %v9443 = vsel %vm9379, %v9347, %v9411
        %v9444 = vsel %vm9380, %v9348, %v9412
        %v9445 = vsel %vm9381, %v9349, %v9413
        %v9446 = vsel %vm9382, %v9350, %v9414
        %v9447 = vsel %vm9383, %v9351, %v9415
        %v9448 = vsel %vm9384, %v9352, %v9416
        %v9449 = vsel %vm9385, %v9353, %v9417
        %v9450 = vsel %vm9386, %v9354, %v9418
        %v9451 = vsel %vm9387, %v9355, %v9419
        %v9452 = vsel %vm9388, %v9356, %v9420
        %v9453 = vmul.f32 %v9421, 1.4142135
        %v9454 = vmul.f32 %v9422, 1.4142135
        %v9455 = vmul.f32 %v9423, 1.4142135
        %v9456 = vmul.f32 %v9424, 1.4142135
        %v9457 = vmul.f32 %v9425, 1.4142135
        %v9458 = vmul.f32 %v9426, 1.4142135
        %v9459 = vmul.f32 %v9427, 1.4142135
        %v9460 = vmul.f32 %v9428, 1.4142135
        %v9461 = vmul.f32 %v9429, 1.4142135
        %v9462 = vmul.f32 %v9430, 1.4142135
        %v9463 = vmul.f32 %v9431, 1.4142135
        %v9464 = vmul.f32 %v9432, 1.4142135
        %v9465 = vmul.f32 %v9433, 1.4142135
        %v9466 = vmul.f32 %v9434, 1.4142135
        %v9467 = vmul.f32 %v9435, 1.4142135
        %v9468 = vmul.f32 %v9436, 1.4142135
        %v9469 = vmul.f32 %v9437, 1.4142135
        %v9470 = vmul.f32 %v9438, 1.4142135
        %v9471 = vmul.f32 %v9439, 1.4142135
        %v9472 = vmul.f32 %v9440, 1.4142135
        %v9473 = vmul.f32 %v9441, 1.4142135
        %v9474 = vmul.f32 %v9442, 1.4142135
        %v9475 = vmul.f32 %v9443, 1.4142135
        %v9476 = vmul.f32 %v9444, 1.4142135
        %v9477 = vmul.f32 %v9445, 1.4142135
        %v9478 = vmul.f32 %v9446, 1.4142135
        %v9479 = vmul.f32 %v9447, 1.4142135
        %v9480 = vmul.f32 %v9448, 1.4142135
        %v9481 = vmul.f32 %v9449, 1.4142135
        %v9482 = vmul.f32 %v9450, 1.4142135
        %v9483 = vmul.f32 %v9451, 1.4142135
        %v9484 = vmul.f32 %v9452, 1.4142135
        %v9485 = vmax.f32 %v9453, -256.0
        %v9486 = vmax.f32 %v9454, -256.0
        %v9487 = vmax.f32 %v9455, -256.0
        %v9488 = vmax.f32 %v9456, -256.0
        %v9489 = vmax.f32 %v9457, -256.0
        %v9490 = vmax.f32 %v9458, -256.0
        %v9491 = vmax.f32 %v9459, -256.0
        %v9492 = vmax.f32 %v9460, -256.0
        %v9493 = vmax.f32 %v9461, -256.0
        %v9494 = vmax.f32 %v9462, -256.0
        %v9495 = vmax.f32 %v9463, -256.0
        %v9496 = vmax.f32 %v9464, -256.0
        %v9497 = vmax.f32 %v9465, -256.0
        %v9498 = vmax.f32 %v9466, -256.0
        %v9499 = vmax.f32 %v9467, -256.0
        %v9500 = vmax.f32 %v9468, -256.0
        %v9501 = vmax.f32 %v9469, -256.0
        %v9502 = vmax.f32 %v9470, -256.0
        %v9503 = vmax.f32 %v9471, -256.0
        %v9504 = vmax.f32 %v9472, -256.0
        %v9505 = vmax.f32 %v9473, -256.0
        %v9506 = vmax.f32 %v9474, -256.0
        %v9507 = vmax.f32 %v9475, -256.0
        %v9508 = vmax.f32 %v9476, -256.0
        %v9509 = vmax.f32 %v9477, -256.0
        %v9510 = vmax.f32 %v9478, -256.0
        %v9511 = vmax.f32 %v9479, -256.0
        %v9512 = vmax.f32 %v9480, -256.0
        %v9513 = vmax.f32 %v9481, -256.0
        %v9514 = vmax.f32 %v9482, -256.0
        %v9515 = vmax.f32 %v9483, -256.0
        %v9516 = vmax.f32 %v9484, -256.0
        %v9517 = vmin.f32 %v9485, 256.0
        %v9518 = vmin.f32 %v9486, 256.0
        %v9519 = vmin.f32 %v9487, 256.0
        %v9520 = vmin.f32 %v9488, 256.0
        %v9521 = vmin.f32 %v9489, 256.0
        %v9522 = vmin.f32 %v9490, 256.0
        %v9523 = vmin.f32 %v9491, 256.0
        %v9524 = vmin.f32 %v9492, 256.0
        %v9525 = vmin.f32 %v9493, 256.0
        %v9526 = vmin.f32 %v9494, 256.0
        %v9527 = vmin.f32 %v9495, 256.0
        %v9528 = vmin.f32 %v9496, 256.0
        %v9529 = vmin.f32 %v9497, 256.0
        %v9530 = vmin.f32 %v9498, 256.0
        %v9531 = vmin.f32 %v9499, 256.0
        %v9532 = vmin.f32 %v9500, 256.0
        %v9533 = vmin.f32 %v9501, 256.0
        %v9534 = vmin.f32 %v9502, 256.0
        %v9535 = vmin.f32 %v9503, 256.0
        %v9536 = vmin.f32 %v9504, 256.0
        %v9537 = vmin.f32 %v9505, 256.0
        %v9538 = vmin.f32 %v9506, 256.0
        %v9539 = vmin.f32 %v9507, 256.0
        %v9540 = vmin.f32 %v9508, 256.0
        %v9541 = vmin.f32 %v9509, 256.0
        %v9542 = vmin.f32 %v9510, 256.0
        %v9543 = vmin.f32 %v9511, 256.0
        %v9544 = vmin.f32 %v9512, 256.0
        %v9545 = vmin.f32 %v9513, 256.0
        %v9546 = vmin.f32 %v9514, 256.0
        %v9547 = vmin.f32 %v9515, 256.0
        %v9548 = vmin.f32 %v9516, 256.0
        %v9549 = vlaneseq
        %v9550 = vshrl.u32 %v9549, 7
        %v9551 = vsub.s32 0, %v9550
        %v9552 = vrot.slane %v2063, %v9551
        %v9553 = vmul.f32 %v9517, %v9552
        %v9554 = vmul.f32 %v9518, %v9552
        %v9555 = vmul.f32 %v9519, %v9552
        %v9556 = vmul.f32 %v9520, %v9552
        %v9557 = vmul.f32 %v9521, %v9552
        %v9558 = vmul.f32 %v9522, %v9552
        %v9559 = vmul.f32 %v9523, %v9552
        %v9560 = vmul.f32 %v9524, %v9552
        %v9561 = vmul.f32 %v9525, %v9552
        %v9562 = vmul.f32 %v9526, %v9552
        %v9563 = vmul.f32 %v9527, %v9552
        %v9564 = vmul.f32 %v9528, %v9552
        %v9565 = vmul.f32 %v9529, %v9552
        %v9566 = vmul.f32 %v9530, %v9552
        %v9567 = vmul.f32 %v9531, %v9552
        %v9568 = vmul.f32 %v9532, %v9552
        %v9569 = vmul.f32 %v9533, %v9552
        %v9570 = vmul.f32 %v9534, %v9552
        %v9571 = vmul.f32 %v9535, %v9552
        %v9572 = vmul.f32 %v9536, %v9552
        %v9573 = vmul.f32 %v9537, %v9552
        %v9574 = vmul.f32 %v9538, %v9552
        %v9575 = vmul.f32 %v9539, %v9552
        %v9576 = vmul.f32 %v9540, %v9552
        %v9577 = vmul.f32 %v9541, %v9552
        %v9578 = vmul.f32 %v9542, %v9552
        %v9579 = vmul.f32 %v9543, %v9552
        %v9580 = vmul.f32 %v9544, %v9552
        %v9581 = vmul.f32 %v9545, %v9552
        %v9582 = vmul.f32 %v9546, %v9552
        %v9583 = vmul.f32 %v9547, %v9552
        %v9584 = vmul.f32 %v9548, %v9552
        %v9585 = vpack.c.bf16 %v9554, %v9553
        %v9586 = vpack.c.bf16 %v9556, %v9555
        %v9587 = vpack.c.bf16 %v9558, %v9557
        %v9588 = vpack.c.bf16 %v9560, %v9559
        %v9589 = vpack.c.bf16 %v9562, %v9561
        %v9590 = vpack.c.bf16 %v9564, %v9563
        %v9591 = vpack.c.bf16 %v9566, %v9565
        %v9592 = vpack.c.bf16 %v9568, %v9567
        %v9593 = vpack.c.bf16 %v9570, %v9569
        %v9594 = vpack.c.bf16 %v9572, %v9571
        %v9595 = vpack.c.bf16 %v9574, %v9573
        %v9596 = vpack.c.bf16 %v9576, %v9575
        %v9597 = vpack.c.bf16 %v9578, %v9577
        %v9598 = vpack.c.bf16 %v9580, %v9579
        %v9599 = vpack.c.bf16 %v9582, %v9581
        %v9600 = vpack.c.bf16 %v9584, %v9583
        %v9601 = vld [vmem:[%s71] sm:$0x7]
        %v9602 = vpack.c.bf16 %v9601, %v9601
        %v9603 = vld [vmem:[%s73] sm:$0x7]
        %9605 = vset.pattern.permute.xlu0 0
        %9606 = vperm.xlu0 %9605, %v9603
        %v9607 = vpop.permute.xlu0 %9606
        %v9610 = vsel %vm2686, %v9602, 0
        %v9613 = vsel %vm2686, %v9585, 0
        %v9616 = vsel %vm2686, %v9586, 0
        %v9619 = vsel %vm2686, %v9587, 0
        %v9622 = vsel %vm2686, %v9588, 0
        %v9625 = vsel %vm2686, %v9589, 0
        %v9628 = vsel %vm2686, %v9590, 0
        %v9631 = vsel %vm2686, %v9591, 0
        %v9634 = vsel %vm2686, %v9592, 0
        %v9637 = vsel %vm2686, %v9593, 0
        %v9640 = vsel %vm2686, %v9594, 0
        %v9643 = vsel %vm2686, %v9595, 0
        %v9646 = vsel %vm2686, %v9596, 0
        %v9649 = vsel %vm2686, %v9597, 0
        %v9652 = vsel %vm2686, %v9598, 0
        %v9655 = vsel %vm2686, %v9599, 0
        %v9658 = vsel %vm2686, %v9600, 0
        %9660 = vmatprep.subr.bf16.mxu0 0
        %9661 = vmatpush1.bf16.xpose.msra.mxu0 %v9634
        %9662 = vmatprep.subr.bf16.mxu0 0
        %9663 = vmatpush1.bf16.xpose.msra.mxu0 %v9631
        %9664 = vmatprep.subr.bf16.mxu0 0
        %9665 = vmatpush1.bf16.xpose.msra.mxu0 %v9628
        %9666 = vmatprep.subr.bf16.mxu0 0
        %9667 = vmatpush1.bf16.xpose.msra.mxu0 %v9625
        %9668 = vmatprep.subr.bf16.mxu0 0
        %9669 = vmatpush1.bf16.xpose.msra.mxu0 %v9622
        %9670 = vmatprep.subr.bf16.mxu0 0
        %9671 = vmatpush1.bf16.xpose.msra.mxu0 %v9619
        %9672 = vmatprep.subr.bf16.mxu0 0
        %9673 = vmatpush1.bf16.xpose.msra.mxu0 %v9616
        %9674 = vmatprep.subr.bf16.mxu0 0
        %9675 = vmatpush1.bf16.xpose.msra.mxu0 %v9613
        %9676 = vmatprep.subr.bf16.mxu0 0
        %9677 = vmatpush2.bf16.xpose.msra.mxu0 %v9658
        %9678 = vmatprep.subr.bf16.mxu0 0
        %9679 = vmatpush2.bf16.xpose.msra.mxu0 %v9655
        %9680 = vmatprep.subr.bf16.mxu0 0
        %9681 = vmatpush2.bf16.xpose.msra.mxu0 %v9652
        %9682 = vmatprep.subr.bf16.mxu0 0
        %9683 = vmatpush2.bf16.xpose.msra.mxu0 %v9649
        %9684 = vmatprep.subr.bf16.mxu0 0
        %9685 = vmatpush2.bf16.xpose.msra.mxu0 %v9646
        %9686 = vmatprep.subr.bf16.mxu0 0
        %9687 = vmatpush2.bf16.xpose.msra.mxu0 %v9643
        %9688 = vmatprep.subr.bf16.mxu0 0
        %9689 = vmatpush2.bf16.xpose.msra.mxu0 %v9640
        %9690 = vmatprep.subr.bf16.mxu0 0
        %9691 = vmatpush2.bf16.xpose.msra.mxu0 %v9637
        %9692 = vmatprep.mubr.bf16.mxu0 0
        %9693 = vmatmul.mubr.bf16.gmra.mxu0 %v9610
        %v9694 = vpop.f32.mrf.mxu0
        %v9695 = vadd.f32 %v9607, %v9694
        %v9696 = vpop.f32.mrf.mxu0
        %v9697 = vadd.f32 %v9607, %v9696
        %v9698 = vpop.f32.mrf.mxu0
        %v9699 = vpop.f32.mrf.mxu0
        %9700 = vdwg.mxu0
        %v9701 = vmax.f32 %v9695, -256.0
        %v9702 = vmax.f32 %v9697, -256.0
        %v9703 = vmin.f32 %v9701, 256.0
        %v9704 = vmin.f32 %v9702, 256.0
        %v9706 = vsel %vm1568, %v4520, 0
        %9708 = vmatprep.subr.mxu0 0.0
        %9709 = vmatpush1.xpose.msra.mxu0 %v4601
        %9710 = vmatprep.subr.mxu0 0.0
        %9711 = vmatpush1.xpose.msra.mxu0 %v4598
        %9712 = vmatprep.subr.mxu0 0.0
        %9713 = vmatpush1.xpose.msra.mxu0 %v4595
        %9714 = vmatprep.subr.mxu0 0.0
        %9715 = vmatpush1.xpose.msra.mxu0 %v4592
        %9716 = vmatprep.subr.mxu0 0.0
        %9717 = vmatpush1.xpose.msra.mxu0 %v4589
        %9718 = vmatprep.subr.mxu0 0.0
        %9719 = vmatpush1.xpose.msra.mxu0 %v4586
        %9720 = vmatprep.subr.mxu0 0.0
        %9721 = vmatpush1.xpose.msra.mxu0 %v4583
        %9722 = vmatprep.subr.mxu0 0.0
        %9723 = vmatpush1.xpose.msra.mxu0 %v4580
        %9724 = vmatprep.subr.mxu0 0.0
        %9725 = vmatpush1.xpose.msra.mxu0 %v4577
        %9726 = vmatprep.subr.mxu0 0.0
        %9727 = vmatpush1.xpose.msra.mxu0 %v4574
        %9728 = vmatprep.subr.mxu0 0.0
        %9729 = vmatpush1.xpose.msra.mxu0 %v4571
        %9730 = vmatprep.subr.mxu0 0.0
        %9731 = vmatpush1.xpose.msra.mxu0 %v4568
        %9732 = vmatprep.subr.mxu0 0.0
        %9733 = vmatpush1.xpose.msra.mxu0 %v4565
        %9734 = vmatprep.subr.mxu0 0.0
        %9735 = vmatpush1.xpose.msra.mxu0 %v4562
        %9736 = vmatprep.subr.mxu0 0.0
        %9737 = vmatpush1.xpose.msra.mxu0 %v4559
        %9738 = vmatprep.subr.mxu0 0.0
        %9739 = vmatpush1.xpose.msra.mxu0 %v4556
        %9740 = vmatprep.subr.mxu0 0.0
        %9741 = vmatpush2.xpose.msra.mxu0 %v4649
        %9742 = vmatprep.subr.mxu0 0.0
        %9743 = vmatpush2.xpose.msra.mxu0 %v4646
        %9744 = vmatprep.subr.mxu0 0.0
        %9745 = vmatpush2.xpose.msra.mxu0 %v4643
        %9746 = vmatprep.subr.mxu0 0.0
        %9747 = vmatpush2.xpose.msra.mxu0 %v4640
        %9748 = vmatprep.subr.mxu0 0.0
        %9749 = vmatpush2.xpose.msra.mxu0 %v4637
        %9750 = vmatprep.subr.mxu0 0.0
        %9751 = vmatpush2.xpose.msra.mxu0 %v4634
        %9752 = vmatprep.subr.mxu0 0.0
        %9753 = vmatpush2.xpose.msra.mxu0 %v4631
        %9754 = vmatprep.subr.mxu0 0.0
        %9755 = vmatpush2.xpose.msra.mxu0 %v4628
        %9756 = vmatprep.subr.mxu0 0.0
        %9757 = vmatpush2.xpose.msra.mxu0 %v4625
        %9758 = vmatprep.subr.mxu0 0.0
        %9759 = vmatpush2.xpose.msra.mxu0 %v4622
        %9760 = vmatprep.subr.mxu0 0.0
        %9761 = vmatpush2.xpose.msra.mxu0 %v4619
        %9762 = vmatprep.subr.mxu0 0.0
        %9763 = vmatpush2.xpose.msra.mxu0 %v4616
        %9764 = vmatprep.subr.mxu0 0.0
        %9765 = vmatpush2.xpose.msra.mxu0 %v4613
        %9766 = vmatprep.subr.mxu0 0.0
        %9767 = vmatpush2.xpose.msra.mxu0 %v4610
        %9768 = vmatprep.subr.mxu0 0.0
        %9769 = vmatpush2.xpose.msra.mxu0 %v4607
        %9770 = vmatprep.subr.mxu0 0.0
        %9771 = vmatpush2.xpose.msra.mxu0 %v4604
        %9772 = vmatprep.mubr.f32.mxu0 0.0
        %9773 = vmatmul.mubr.f32.gmra.mxu0 %v9706
        %v9774 = vpop.f32.mrf.mxu0
        %v9775 = vadd.f32 %v9703, %v9774
        %v9776 = vpop.f32.mrf.mxu0
        %v9777 = vadd.f32 %v9704, %v9776
        %9778 = vdwg.mxu0
        %v9779 = vadd.f32 %v9775, 1.0
        %v9780 = vadd.f32 %v9777, 1.0
        %v9781 = vmul.f32 %v9779, 0.5
        %v9782 = vmul.f32 %v9780, 0.5
        %v9785 = vcombine.low %v9781, %v9782
        %9787 = vst [vmem:[%s1566] sm:$0x77] %v9785
        %p9788 = scmp.lt.s32.totalorder %s105, 1
        %s9789 = scalar_select %p9788, %s105, 1
        %s9790 = smul.addr %s9789, 2
        %s9791 = smul.addr %s9790, 4
        %s9792 = scalar_lea.vmem %s75, %s9791
        // Predicated region
        $region297: #{_lambda_.1} parent=167 // pred_check
          %p9793 = pneg %p905
        $region298: #{_lambda_.1} parent=167 // pred_check_branch
          %9795 = sbr.rel (%p9793) target = $region300
        $region299: #{_lambda_.1} parent=167 // pred_region
          _
        $region300: #{_lambda_.1} parent=167 // pred_fallthru
          _
      $region168: #{_lambda_.1} parent=5 // pred_fallthru
        _
      %p9796 = scmp.le.s32.totalorder 2, %s100
      // Predicated region
      $region301: #{_lambda_.1} parent=5 // pred_check
        %p9797 = pneg %p9796
      $region302: #{_lambda_.1} parent=5 // pred_check_branch
        %9799 = sbr.rel (%p9797) target = $region304
      $region303: #{_lambda_.1} parent=5 // pred_region
        %s9800 = ssub.s32 %s100, 2
        // Predicated region
        $region305: #{_lambda_.1} parent=303 // pred_check
          %p9801 = pneg %p911
        $region306: #{_lambda_.1} parent=303 // pred_check_branch
          %9803 = sbr.rel (%p9801) target = $region308
        $region307: #{_lambda_.1} parent=303 // pred_region
          %p9804 = scmp.lt.s32.totalorder %s106, 1
          %s9805 = scalar_select %p9804, %s106, 1
          %s9806 = smul.addr %s9805, 2
          %s9807 = smul.addr %s9806, 4
          %s9808 = scalar_lea.vmem %s75, %s9807
        $region308: #{_lambda_.1} parent=303 // pred_fallthru
          _
      $region304: #{_lambda_.1} parent=5 // pred_fallthru
        _
    $region6: #{_lambda_.1} parent=1 // loop_footer
      %s104 = sadd.s32 1, %s100
    $region7: #{_lambda_.1} parent=1 // loop_footer_branch
      %99 = sbr.rel target = $region3
    $region8: #{_lambda_.1} parent=1 // loop_exit
      _
    %9809 = vsyncpa [#allocation4], 1
    %s9810 = scalar_lea.sflag [#allocation4], 1
    %9811 = vsyncpa %s9810, 1
    %9812 = vsyncpa [#allocation6], 1
    %9813 = vsyncpa [#allocation9], 1
    %9814 = vsyncpa [#allocation12], 1
    %9815 = vsyncpa [#allocation15], 1
    %9816 = vsyncpa [#allocation18], 1
    %9817 = vsyncpa [#allocation21], 1
    %9818 = vsyncpa [#allocation24], 1
    %9819 = vsyncpa [#allocation27], 1
    %9820 = vsyncpa [#allocation30], 1
    %9821 = vsyncpa [#allocation33], 1
    %9822 = vsyncpa [#allocation36], 1
    %9823 = vsyncpa [#allocation39], 1
    %9824 = vsyncpa [#allocation42], 1
    %9825 = vsyncpa [#allocation45], 1
    %9826 = vsyncpa [#allocation48], 1
    %9827 = vsyncpa [#allocation51], 1

</llo_original>
